<compile_context>
chip_gen: v5e
topology: v5e:2x2
jax: 0.10.0
libtpu: 0.0.40
codegen_flags: <defaults>
</compile_context>

<pallas_src>
import functools

import jax
import jax.numpy as jnp
from jax import lax
from jax.experimental import pallas as pl
from jax.experimental.pallas import tpu as pltpu


# ---------------------------------------------------------------------------
# Fused Pallas kernel (one grid step == one batch element)
# ---------------------------------------------------------------------------
def _resblock_kernel(xp_ref, add1_ref, w1_ref, w2_ref, ws_ref, b2_ref, bs_ref,
                     out_ref, xc1_ref, h1p_ref, xc2_ref, *, H, W, Wp):
    # xp_ref  : (Hp*Wp + 2, Cin)   bf16  zero-padded input, row-major flattened
    #                                    (data at padded rows 1..H, cols 1..W)
    # add1_ref: (1, Cout)          f32   per-sample add (bias+temb+class), BN1 folded
    # w1_ref  : (3, 3*Cin, Cout)   bf16  conv1 taps, kw-major along K, BN1 folded
    # w2_ref  : (3, 3*Cout, Cout)  bf16  conv2 taps, kw-major along K, BN2 folded
    # ws_ref  : (Cin, Cout)        bf16  1x1 shortcut weight, shortcut-BN folded
    # b2_ref  : (1, Cout)          f32   conv2 bias with BN2 folded
    # bs_ref  : (1, Cout)          f32   shortcut bias with BN folded
    # out_ref : (H*Wp, Cout)       f32   output on the (H, Wp) grid (pad cols = junk)
    # xc1_ref : (Hp*Wp, 3*Cin)     bf16  scratch: kw-concat of padded x
    # h1p_ref : ((H+4)*Wp, Cout)   bf16  scratch: zero-padded relu(h1)
    # xc2_ref : (Hp*Wp, 3*Cout)    bf16  scratch: kw-concat of padded relu(h1)
    HWp = H * Wp                    # output-grid rows (cols q >= W are junk)
    NXC = (H + 2) * Wp              # concat-buffer rows
    NH1 = h1p_ref.shape[0]
    Cin = xp_ref.shape[1]
    Cout = out_ref.shape[1]
    f32 = jnp.float32

    # Zero only the h1p halo rows (top / bottom padded rows).  4*Wp rows, cheap;
    # done every step (scratch is per-core, so a program_id==0 gate would break
    # under megacore batch sharding).
    h1p_ref[0:2 * Wp, :] = jnp.zeros((2 * Wp, Cout), h1p_ref.dtype)
    h1p_ref[(H + 2) * Wp:NH1, :] = jnp.zeros((NH1 - (H + 2) * Wp, Cout),
                                             h1p_ref.dtype)

    # ---- conv1 (3x3 SAME): concat 3 kw-shifted views once (K = 3*Cin), then
    #      3 MXU calls accumulating over kh at tile-aligned offsets kh*Wp. -----
    xc1_ref[...] = jnp.concatenate(
        [xp_ref[0:NXC, :], xp_ref[1:NXC + 1, :], xp_ref[2:NXC + 2, :]], axis=-1)
    acc = jnp.dot(xc1_ref[0:HWp, :], w1_ref[0], preferred_element_type=f32)
    acc += jnp.dot(xc1_ref[Wp:Wp + HWp, :], w1_ref[1], preferred_element_type=f32)
    acc += jnp.dot(xc1_ref[2 * Wp:2 * Wp + HWp, :], w1_ref[2],
                   preferred_element_type=f32)

    # + (conv1 bias + temb/class projections), BN1 affine, ReLU (dropout == id).
    # Junk columns (q >= W) are zeroed so they double as conv2's left/right zero
    # padding in the flattened layout.
    col = lax.broadcasted_iota(jnp.int32, (HWp, 1), 0) % Wp
    h1 = jnp.maximum(acc + add1_ref[...], 0.0)
    h1 = jnp.where(col < W, h1, 0.0).astype(h1p_ref.dtype)
    h1p_ref[2 * Wp:2 * Wp + HWp, :] = h1            # aligned store (2*Wp % 16 == 0)

    # ---- conv2 (BN2 folded): same concat trick on the resident relu(h1) ------
    xc2_ref[...] = jnp.concatenate(
        [h1p_ref[Wp - 1:Wp - 1 + NXC, :], h1p_ref[Wp:Wp + NXC, :],
         h1p_ref[Wp + 1:Wp + 1 + NXC, :]], axis=-1)
    acc2 = jnp.dot(xc2_ref[0:HWp, :], w2_ref[0], preferred_element_type=f32)
    acc2 += jnp.dot(xc2_ref[Wp:Wp + HWp, :], w2_ref[1], preferred_element_type=f32)
    acc2 += jnp.dot(xc2_ref[2 * Wp:2 * Wp + HWp, :], w2_ref[2],
                    preferred_element_type=f32)

    # ---- 1x1 shortcut (+ folded BN): the middle (kw=1) chunk of xc1 is exactly
    #      x on the output grid, read at the aligned row offset Wp. -------------
    sc = jnp.dot(xc1_ref[Wp:Wp + HWp, Cin:2 * Cin], ws_ref[...],
                 preferred_element_type=f32)

    out_ref[...] = jnp.maximum(acc2 + b2_ref[...] + sc + bs_ref[...], 0.0)


# ---------------------------------------------------------------------------
# Glue: BN folding, padding/flattening, pallas_call wrapper
# ---------------------------------------------------------------------------
def _bn_affine(gamma, beta, mean, var, eps=1e-5):
    scale = gamma / jnp.sqrt(var + eps)
    shift = beta - mean * scale
    return scale, shift


def resnet_block_forward(x_nchw, temb, y, p):
    """Fused Pallas implementation (eval-mode BN, dropout == identity)."""
    N, Cin, H, W = x_nchw.shape
    Cout = p['conv1_w'].shape[0]

    ALIGN = 16                                   # bf16 sublane packing
    Wp = ((W + 2 + ALIGN - 1) // ALIGN) * ALIGN  # aligned row stride (>= W+2)
    Hp = H + 2
    HWp = H * Wp
    NXC = Hp * Wp                                # concat-buffer rows
    NXP = NXC + 2                                # padded-x rows (+2: last taps in-bounds)
    NH1 = (H + 4) * Wp                           # relu(h1) scratch rows (2 halo rows each side)

    # layout: NCHW -> NHWC, zero-pad onto the (Hp, Wp) grid (data at rows 1..H,
    # cols 1..W; the extra right-pad cols make the row stride 16-aligned),
    # flatten spatial row-major, bf16 for the MXU.
    x = jnp.transpose(x_nchw, (0, 2, 3, 1))
    xp = jnp.pad(x, ((0, 0), (1, 1), (1, Wp - W - 1), (0, 0)))
    xp_flat = jnp.pad(xp.reshape(N, NXC, Cin), ((0, 0), (0, NXP - NXC), (0, 0)))
    xp_flat = xp_flat.astype(jnp.bfloat16)

    # fold BatchNorm affines (eval mode) into conv weights / biases (fold in f32)
    s1, o1 = _bn_affine(**p['bn1'])
    s2, o2 = _bn_affine(**p['bn2'])
    ss, os_ = _bn_affine(**p['bn_s'])

    def conv3x3_taps(w_pt, scale):
        # (Cout,Cin,3,3) -> (3 kh, 3*Cin, Cout); K is kw-major to match the
        # in-kernel lane concatenation order; BN scale folded in f32.
        c_out, c_in = w_pt.shape[0], w_pt.shape[1]
        w = jnp.transpose(w_pt, (2, 3, 1, 0)) * scale[None, None, None, :]
        return w.reshape(3, 3 * c_in, c_out).astype(jnp.bfloat16)

    w1 = conv3x3_taps(p['conv1_w'], s1)
    w2 = conv3x3_taps(p['conv2_w'], s2)
    if 'nin_w' in p:                             # in_ch != out_ch: 1x1 conv + BN
        ws = jnp.transpose(p['nin_w'].reshape(Cout, Cin)) * ss[None, :]
        bs = p['nin_b'] * ss + os_
    else:                                        # in_ch == out_ch: BN-only shortcut
        ws = jnp.eye(Cin, dtype=jnp.float32) * ss[None, :]
        bs = os_
    ws = ws.astype(jnp.bfloat16)
    bs = bs.reshape(1, Cout).astype(jnp.float32)
    b2 = (p['conv2_b'] * s2 + o2).reshape(1, Cout).astype(jnp.float32)

    # per-sample additive vector (conv1 bias + temb/class projections), BN1-folded
    add = (p['conv1_b'][None, :]
           + jnp.maximum(temb, 0.0) @ p['temb_w'].T + p['temb_b'][None, :]
           + y @ p['class_w'].T + p['class_b'][None, :])
    add1 = (add * s1[None, :] + o1[None, :]).reshape(N, 1, Cout).astype(jnp.float32)

    kernel = functools.partial(_resblock_kernel, H=H, W=W, Wp=Wp)

    flops = 2 * N * HWp * Cout * (9 * Cin + 9 * Cout + Cin)
    bytes_accessed = (xp_flat.size * 2 + (w1.size + w2.size + ws.size) * 2
                      + (add1.size + b2.size + bs.size) * 4
                      + N * HWp * Cout * 4)

    # explicit scoped-VMEM limit from the per-step footprint
    # (defaults are only 16 MiB on v5e / 32 MiB on v6e+)
    vmem_bytes = (2 * (NXP * Cin * 2 + Cout * 4 + HWp * Cout * 4)       # dbl-buffered I/O
                  + (w1.size + w2.size + ws.size) * 2
                  + (b2.size + bs.size) * 4
                  + (NXC * 3 * Cin + NH1 * Cout + NXC * 3 * Cout) * 2   # bf16 scratch
                  + 4 * HWp * Cout * 4)                                 # f32 accum temps
    vmem_limit = int(min(max(2 * vmem_bytes, 32 * 1024 * 1024),
                         127 * 1024 * 1024))

    const = dict(pipeline_mode=pl.Buffered(1))   # single-buffer grid-invariant inputs

    out_flat = pl.pallas_call(
        kernel,
        out_shape=jax.ShapeDtypeStruct((N, HWp, Cout), jnp.float32),
        grid=(N,),
        in_specs=[
            pl.BlockSpec((None, NXP, Cin), lambda n: (n, 0, 0)),             # x tile
            pl.BlockSpec((None, 1, Cout), lambda n: (n, 0, 0)),              # add1
            pl.BlockSpec((3, 3 * Cin, Cout), lambda n: (0, 0, 0), **const),  # conv1 taps
            pl.BlockSpec((3, 3 * Cout, Cout), lambda n: (0, 0, 0), **const), # conv2 taps
            pl.BlockSpec((Cin, Cout), lambda n: (0, 0), **const),            # shortcut w
            pl.BlockSpec((1, Cout), lambda n: (0, 0), **const),              # conv2 bias
            pl.BlockSpec((1, Cout), lambda n: (0, 0), **const),              # shortcut bias
        ],
        out_specs=pl.BlockSpec((None, HWp, Cout), lambda n: (n, 0, 0)),
        scratch_shapes=[
            pltpu.VMEM((NXC, 3 * Cin), jnp.bfloat16),    # kw-concat of padded x
            pltpu.VMEM((NH1, Cout), jnp.bfloat16),       # zero-padded relu(h1)
            pltpu.VMEM((NXC, 3 * Cout), jnp.bfloat16),   # kw-concat of padded relu(h1)
        ],
        compiler_params=pltpu.CompilerParams(
            dimension_semantics=("parallel",),
            vmem_limit_bytes=vmem_limit),
        cost_estimate=pl.CostEstimate(flops=flops, transcendentals=0,
                                      bytes_accessed=bytes_accessed),
    )(xp_flat, add1, w1, w2, ws, b2, bs)

    # strip the pad columns of the flat (H, Wp) output grid, back to NCHW
    # TODO(synk): emit bf16 NHWC directly when the consumer allows it (v5e HBM).
    out = out_flat.reshape(N, H, Wp, Cout)[:, :, :W, :]
    return jnp.transpose(out, (0, 3, 1, 2))


# ---------------------------------------------------------------------------
# Deterministic parameter init (shapes match the PyTorch module)
# ---------------------------------------------------------------------------
def init_params(key, in_ch, out_ch, temb_ch, class_ch):
    ks = jax.random.split(key, 13)

    def unif(k, shape, fan_in):
        b = 1.0 / jnp.sqrt(jnp.float32(fan_in))
        return jax.random.uniform(k, shape, jnp.float32, -b, b)

    def bn(k):
        k1, k2, k3, k4 = jax.random.split(k, 4)
        return dict(
            gamma=1.0 + 0.1 * jax.random.normal(k1, (out_ch,), jnp.float32),
            beta=0.1 * jax.random.normal(k2, (out_ch,), jnp.float32),
            mean=0.1 * jax.random.normal(k3, (out_ch,), jnp.float32),
            var=jnp.abs(1.0 + 0.1 * jax.random.normal(k4, (out_ch,), jnp.float32)),
        )

    return {
        'conv1_w': unif(ks[0], (out_ch, in_ch, 3, 3), in_ch * 9),
        'conv1_b': unif(ks[1], (out_ch,), in_ch * 9),
        'temb_w': unif(ks[2], (out_ch, temb_ch), temb_ch),   # nn.Linear weight (out, in)
        'temb_b': unif(ks[3], (out_ch,), temb_ch),
        'class_w': unif(ks[4], (out_ch, class_ch), class_ch),
        'class_b': unif(ks[5], (out_ch,), class_ch),
        'conv2_w': unif(ks[6], (out_ch, out_ch, 3, 3), out_ch * 9),
        'conv2_b': unif(ks[7], (out_ch,), out_ch * 9),
        'nin_w': unif(ks[8], (out_ch, in_ch, 1, 1), in_ch),
        'nin_b': unif(ks[9], (out_ch,), in_ch),
        'bn1': bn(ks[10]),
        'bn2': bn(ks[11]),
        'bn_s': bn(ks[12]),
    }


# ---------------------------------------------------------------------------
# Pure-JAX reference (for sanity check)
# ---------------------------------------------------------------------------
def reference_forward(x_nchw, temb, y, p, eps=1e-5):
    x = jnp.transpose(x_nchw, (0, 2, 3, 1))
    dn = ('NHWC', 'HWIO', 'NHWC')

    def conv(inp, w_pt, b):
        w = jnp.transpose(w_pt, (2, 3, 1, 0))
        out = lax.conv_general_dilated(inp, w, (1, 1), 'SAME', dimension_numbers=dn)
        return out + b.reshape(1, 1, 1, -1)

    def bn(h, d):
        return (h - d['mean']) / jnp.sqrt(d['var'] + eps) * d['gamma'] + d['beta']

    h = conv(x, p['conv1_w'], p['conv1_b'])
    h = h + (jnp.maximum(temb, 0.0) @ p['temb_w'].T + p['temb_b'])[:, None, None, :]
    h = h + (y @ p['class_w'].T + p['class_b'])[:, None, None, :]
    h = jnp.maximum(bn(h, p['bn1']), 0.0)
    h = bn(conv(h, p['conv2_w'], p['conv2_b']), p['bn2'])
    sc = bn(conv(x, p['nin_w'], p['nin_b']), p['bn_s'])
    return jnp.transpose(jnp.maximum(h + sc, 0.0), (0, 3, 1, 2))


if __name__ == "__main__":
    key = jax.random.PRNGKey(0)
    kx, kt, ky, kp = jax.random.split(key, 4)
    N, Cin, Cout, H, W = 2, 4, 8, 16, 16
    temb_ch, class_ch = 16, 12

    x = jax.random.normal(kx, (N, Cin, H, W), jnp.float32)
    temb = jax.random.normal(kt, (N, temb_ch), jnp.float32)
    y = jax.random.normal(ky, (N, class_ch), jnp.float32)
    params = init_params(kp, Cin, Cout, temb_ch, class_ch)

    out = jax.jit(resnet_block_forward)(x, temb, y, params)
    out = jax.block_until_ready(out)

    ref = reference_forward(x, temb, y, params)
    assert out.shape == (N, Cout, H, W), out.shape
    assert jnp.allclose(out, ref, rtol=2e-2, atol=2e-2), float(jnp.max(jnp.abs(out - ref)))
    print("KERNEL_OK")
</pallas_src>

<mosaic_0001>
module attributes {stable_mosaic.version = 11 : i64} {
  func.func @_resblock_kernel(%arg0: i32, %arg1: memref<1x578x4xbf16, #tpu.memory_space<vmem>>, %arg2: memref<1x1x8xf32, #tpu.memory_space<vmem>>, %arg3: memref<3x12x8xbf16, #tpu.memory_space<vmem>>, %arg4: memref<3x24x8xbf16, #tpu.memory_space<vmem>>, %arg5: memref<4x8xbf16, #tpu.memory_space<vmem>>, %arg6: memref<1x8xf32, #tpu.memory_space<vmem>>, %arg7: memref<1x8xf32, #tpu.memory_space<vmem>>, %arg8: memref<1x512x8xf32, #tpu.memory_space<vmem>>, %arg9: memref<576x12xbf16, #tpu.memory_space<vmem>>, %arg10: memref<640x8xbf16, #tpu.memory_space<vmem>>, %arg11: memref<576x24xbf16, #tpu.memory_space<vmem>>) attributes {dimension_semantics = [#tpu.dimension_semantics<parallel>], iteration_bounds = array<i64: 2>, scalar_prefetch = 0 : i64, scratch_operands = 3 : i64, tpu.core_type = #tpu.core_type<tc>, window_params = [{transform_indices = @transform_0, window_bounds = array<i64: 1, 578, 4>}, {transform_indices = @transform_1, window_bounds = array<i64: 1, 1, 8>}, {pipeline_mode = #tpu.pipeline_mode<synchronous>, transform_indices = @transform_2, window_bounds = array<i64: 3, 12, 8>}, {pipeline_mode = #tpu.pipeline_mode<synchronous>, transform_indices = @transform_3, window_bounds = array<i64: 3, 24, 8>}, {pipeline_mode = #tpu.pipeline_mode<synchronous>, transform_indices = @transform_4, window_bounds = array<i64: 4, 8>}, {pipeline_mode = #tpu.pipeline_mode<synchronous>, transform_indices = @transform_5, window_bounds = array<i64: 1, 8>}, {pipeline_mode = #tpu.pipeline_mode<synchronous>, transform_indices = @transform_6, window_bounds = array<i64: 1, 8>}, {transform_indices = @transform_7, window_bounds = array<i64: 1, 512, 8>}]} {
    %cst = arith.constant 0.000000e+00 : bf16
    %0 = vector.broadcast %cst : bf16 to vector<64x8xbf16>
    %c0 = arith.constant 0 : index
    %c0_0 = arith.constant 0 : index
    %1 = vector.load %arg10[%c0, %c0_0] : memref<640x8xbf16, #tpu.memory_space<vmem>>, vector<64x8xbf16>
    tpu.vector_store %arg10[%c0, %c0_0], %0 {strides = array<i32>} : memref<640x8xbf16, #tpu.memory_space<vmem>>, vector<64x8xbf16>,
    %cst_1 = arith.constant 0.000000e+00 : bf16
    %2 = vector.broadcast %cst_1 : bf16 to vector<64x8xbf16>
    %c576 = arith.constant 576 : index
    %c0_2 = arith.constant 0 : index
    %3 = vector.load %arg10[%c576, %c0_2] : memref<640x8xbf16, #tpu.memory_space<vmem>>, vector<64x8xbf16>
    tpu.vector_store %arg10[%c576, %c0_2], %2 {strides = array<i32>} : memref<640x8xbf16, #tpu.memory_space<vmem>>, vector<64x8xbf16>,
    %c0_3 = arith.constant 0 : index
    %c0_4 = arith.constant 0 : index
    %c0_5 = arith.constant 0 : index
    %4 = vector.load %arg1[%c0_3, %c0_4, %c0_5] : memref<1x578x4xbf16, #tpu.memory_space<vmem>>, vector<1x576x4xbf16>
    %5 = vector.shape_cast %4 : vector<1x576x4xbf16> to vector<576x4xbf16>
    %c0_6 = arith.constant 0 : index
    %c1 = arith.constant 1 : index
    %c0_7 = arith.constant 0 : index
    %6 = vector.load %arg1[%c0_6, %c1, %c0_7] : memref<1x578x4xbf16, #tpu.memory_space<vmem>>, vector<1x576x4xbf16>
    %7 = vector.shape_cast %6 : vector<1x576x4xbf16> to vector<576x4xbf16>
    %c0_8 = arith.constant 0 : index
    %c2 = arith.constant 2 : index
    %c0_9 = arith.constant 0 : index
    %8 = vector.load %arg1[%c0_8, %c2, %c0_9] : memref<1x578x4xbf16, #tpu.memory_space<vmem>>, vector<1x576x4xbf16>
    %9 = vector.shape_cast %8 : vector<1x576x4xbf16> to vector<576x4xbf16>
    %10 = tpu.concatenate %5, %7, %9 in 1 : vector<576x4xbf16>, vector<576x4xbf16>, vector<576x4xbf16> -> vector<576x12xbf16>
    %c0_10 = arith.constant 0 : index
    %c0_11 = arith.constant 0 : index
    %11 = vector.load %arg9[%c0_10, %c0_11] : memref<576x12xbf16, #tpu.memory_space<vmem>>, vector<576x12xbf16>
    tpu.vector_store %arg9[%c0_10, %c0_11], %10 {strides = array<i32>} : memref<576x12xbf16, #tpu.memory_space<vmem>>, vector<576x12xbf16>,
    %c0_12 = arith.constant 0 : index
    %c0_13 = arith.constant 0 : index
    %12 = vector.load %arg9[%c0_12, %c0_13] : memref<576x12xbf16, #tpu.memory_space<vmem>>, vector<512x12xbf16>
    %c0_14 = arith.constant 0 : index
    %c0_15 = arith.constant 0 : index
    %c0_16 = arith.constant 0 : index
    %13 = vector.load %arg3[%c0_14, %c0_15, %c0_16] : memref<3x12x8xbf16, #tpu.memory_space<vmem>>, vector<1x12x8xbf16>
    %14 = vector.shape_cast %13 : vector<1x12x8xbf16> to vector<12x8xbf16>
    %cst_17 = arith.constant dense<0.000000e+00> : vector<512x8xf32>
    %15 = tpu.matmul %12, %14, %cst_17 {dimension_numbers = #tpu.dot_dimension_numbers<[1], [0], [0], [1], [0, 0, 1, 1], [], []>} : vector<512x12xbf16>, vector<12x8xbf16>, vector<512x8xf32> -> vector<512x8xf32>
    %c32 = arith.constant 32 : index
    %c0_18 = arith.constant 0 : index
    %16 = vector.load %arg9[%c32, %c0_18] : memref<576x12xbf16, #tpu.memory_space<vmem>>, vector<512x12xbf16>
    %c1_19 = arith.constant 1 : index
    %c0_20 = arith.constant 0 : index
    %c0_21 = arith.constant 0 : index
    %17 = vector.load %arg3[%c1_19, %c0_20, %c0_21] : memref<3x12x8xbf16, #tpu.memory_space<vmem>>, vector<1x12x8xbf16>
    %18 = vector.shape_cast %17 : vector<1x12x8xbf16> to vector<12x8xbf16>
    %cst_22 = arith.constant dense<0.000000e+00> : vector<512x8xf32>
    %19 = tpu.matmul %16, %18, %cst_22 {dimension_numbers = #tpu.dot_dimension_numbers<[1], [0], [0], [1], [0, 0, 1, 1], [], []>} : vector<512x12xbf16>, vector<12x8xbf16>, vector<512x8xf32> -> vector<512x8xf32>
    %20 = arith.addf %15, %19 : vector<512x8xf32>
    %c64 = arith.constant 64 : index
    %c0_23 = arith.constant 0 : index
    %21 = vector.load %arg9[%c64, %c0_23] : memref<576x12xbf16, #tpu.memory_space<vmem>>, vector<512x12xbf16>
    %c2_24 = arith.constant 2 : index
    %c0_25 = arith.constant 0 : index
    %c0_26 = arith.constant 0 : index
    %22 = vector.load %arg3[%c2_24, %c0_25, %c0_26] : memref<3x12x8xbf16, #tpu.memory_space<vmem>>, vector<1x12x8xbf16>
    %23 = vector.shape_cast %22 : vector<1x12x8xbf16> to vector<12x8xbf16>
    %cst_27 = arith.constant dense<0.000000e+00> : vector<512x8xf32>
    %24 = tpu.matmul %21, %23, %cst_27 {dimension_numbers = #tpu.dot_dimension_numbers<[1], [0], [0], [1], [0, 0, 1, 1], [], []>} : vector<512x12xbf16>, vector<12x8xbf16>, vector<512x8xf32> -> vector<512x8xf32>
    %25 = arith.addf %20, %24 : vector<512x8xf32>
    %26 = tpu.iota {dimensions = array<i32: 0>} : vector<512x1xi32>
    %c32_i32 = arith.constant 32 : i32
    %c0_i32 = arith.constant 0 : i32
    %27 = arith.cmpi eq, %c32_i32, %c0_i32 : i32
    %c1_i32 = arith.constant 1 : i32
    %28 = arith.select %27, %c1_i32, %c32_i32 : i32
    %29 = vector.broadcast %28 : i32 to vector<512x1xi32>
    %30 = arith.remsi %26, %29 : vector<512x1xi32>
    %c0_i32_28 = arith.constant 0 : i32
    %31 = vector.broadcast %c0_i32_28 : i32 to vector<512x1xi32>
    %32 = arith.cmpi ne, %30, %31 : vector<512x1xi32>
    %c0_i32_29 = arith.constant 0 : i32
    %33 = vector.broadcast %c0_i32_29 : i32 to vector<512x1xi32>
    %34 = arith.cmpi slt, %30, %33 : vector<512x1xi32>
    %c0_i32_30 = arith.constant 0 : i32
    %35 = arith.cmpi slt, %28, %c0_i32_30 : i32
    %36 = vector.broadcast %35 : i1 to vector<512x1xi1>
    %37 = vector.broadcast %36 : vector<512x1xi1> to vector<512x1xi1>
    %38 = arith.xori %34, %37 : vector<512x1xi1>
    %39 = arith.andi %38, %32 : vector<512x1xi1>
    %40 = vector.broadcast %28 : i32 to vector<512x1xi32>
    %41 = arith.addi %30, %40 : vector<512x1xi32>
    %42 = arith.select %39, %41, %30 : vector<512x1xi1>, vector<512x1xi32>
    %c0_31 = arith.constant 0 : index
    %c0_32 = arith.constant 0 : index
    %c0_33 = arith.constant 0 : index
    %43 = vector.load %arg2[%c0_31, %c0_32, %c0_33] : memref<1x1x8xf32, #tpu.memory_space<vmem>>, vector<1x1x8xf32>
    %44 = vector.shape_cast %43 : vector<1x1x8xf32> to vector<1x8xf32>
    %45 = vector.broadcast %44 : vector<1x8xf32> to vector<512x8xf32>
    %46 = arith.addf %25, %45 : vector<512x8xf32>
    %cst_34 = arith.constant 0.000000e+00 : f32
    %47 = vector.broadcast %cst_34 : f32 to vector<512x8xf32>
    %48 = arith.maximumf %46, %47 : vector<512x8xf32>
    %c16_i32 = arith.constant 16 : i32
    %49 = vector.broadcast %c16_i32 : i32 to vector<512x1xi32>
    %50 = arith.cmpi slt, %42, %49 : vector<512x1xi32>
    %cst_35 = arith.constant 0.000000e+00 : f32
    %51 = vector.shape_cast %50 : vector<512x1xi1> to vector<512x1xi1>
    %52 = vector.broadcast %51 : vector<512x1xi1> to vector<512x8xi1>
    %53 = vector.broadcast %cst_35 : f32 to vector<512x8xf32>
    %54 = arith.select %52, %48, %53 : vector<512x8xi1>, vector<512x8xf32>
    %55 = arith.truncf %54 : vector<512x8xf32> to vector<512x8xbf16>
    %c64_36 = arith.constant 64 : index
    %c0_37 = arith.constant 0 : index
    %56 = vector.load %arg10[%c64_36, %c0_37] : memref<640x8xbf16, #tpu.memory_space<vmem>>, vector<512x8xbf16>
    tpu.vector_store %arg10[%c64_36, %c0_37], %55 {strides = array<i32>} : memref<640x8xbf16, #tpu.memory_space<vmem>>, vector<512x8xbf16>,
    %c31 = arith.constant 31 : index
    %c0_38 = arith.constant 0 : index
    %57 = vector.load %arg10[%c31, %c0_38] : memref<640x8xbf16, #tpu.memory_space<vmem>>, vector<576x8xbf16>
    %c32_39 = arith.constant 32 : index
    %c0_40 = arith.constant 0 : index
    %58 = vector.load %arg10[%c32_39, %c0_40] : memref<640x8xbf16, #tpu.memory_space<vmem>>, vector<576x8xbf16>
    %c33 = arith.constant 33 : index
    %c0_41 = arith.constant 0 : index
    %59 = vector.load %arg10[%c33, %c0_41] : memref<640x8xbf16, #tpu.memory_space<vmem>>, vector<576x8xbf16>
    %60 = tpu.concatenate %57, %58, %59 in 1 : vector<576x8xbf16>, vector<576x8xbf16>, vector<576x8xbf16> -> vector<576x24xbf16>
    %c0_42 = arith.constant 0 : index
    %c0_43 = arith.constant 0 : index
    %61 = vector.load %arg11[%c0_42, %c0_43] : memref<576x24xbf16, #tpu.memory_space<vmem>>, vector<576x24xbf16>
    tpu.vector_store %arg11[%c0_42, %c0_43], %60 {strides = array<i32>} : memref<576x24xbf16, #tpu.memory_space<vmem>>, vector<576x24xbf16>,
    %c0_44 = arith.constant 0 : index
    %c0_45 = arith.constant 0 : index
    %62 = vector.load %arg11[%c0_44, %c0_45] : memref<576x24xbf16, #tpu.memory_space<vmem>>, vector<512x24xbf16>
    %c0_46 = arith.constant 0 : index
    %c0_47 = arith.constant 0 : index
    %c0_48 = arith.constant 0 : index
    %63 = vector.load %arg4[%c0_46, %c0_47, %c0_48] : memref<3x24x8xbf16, #tpu.memory_space<vmem>>, vector<1x24x8xbf16>
    %64 = vector.shape_cast %63 : vector<1x24x8xbf16> to vector<24x8xbf16>
    %cst_49 = arith.constant dense<0.000000e+00> : vector<512x8xf32>
    %65 = tpu.matmul %62, %64, %cst_49 {dimension_numbers = #tpu.dot_dimension_numbers<[1], [0], [0], [1], [0, 0, 1, 1], [], []>} : vector<512x24xbf16>, vector<24x8xbf16>, vector<512x8xf32> -> vector<512x8xf32>
    %c32_50 = arith.constant 32 : index
    %c0_51 = arith.constant 0 : index
    %66 = vector.load %arg11[%c32_50, %c0_51] : memref<576x24xbf16, #tpu.memory_space<vmem>>, vector<512x24xbf16>
    %c1_52 = arith.constant 1 : index
    %c0_53 = arith.constant 0 : index
    %c0_54 = arith.constant 0 : index
    %67 = vector.load %arg4[%c1_52, %c0_53, %c0_54] : memref<3x24x8xbf16, #tpu.memory_space<vmem>>, vector<1x24x8xbf16>
    %68 = vector.shape_cast %67 : vector<1x24x8xbf16> to vector<24x8xbf16>
    %cst_55 = arith.constant dense<0.000000e+00> : vector<512x8xf32>
    %69 = tpu.matmul %66, %68, %cst_55 {dimension_numbers = #tpu.dot_dimension_numbers<[1], [0], [0], [1], [0, 0, 1, 1], [], []>} : vector<512x24xbf16>, vector<24x8xbf16>, vector<512x8xf32> -> vector<512x8xf32>
    %70 = arith.addf %65, %69 : vector<512x8xf32>
    %c64_56 = arith.constant 64 : index
    %c0_57 = arith.constant 0 : index
    %71 = vector.load %arg11[%c64_56, %c0_57] : memref<576x24xbf16, #tpu.memory_space<vmem>>, vector<512x24xbf16>
    %c2_58 = arith.constant 2 : index
    %c0_59 = arith.constant 0 : index
    %c0_60 = arith.constant 0 : index
    %72 = vector.load %arg4[%c2_58, %c0_59, %c0_60] : memref<3x24x8xbf16, #tpu.memory_space<vmem>>, vector<1x24x8xbf16>
    %73 = vector.shape_cast %72 : vector<1x24x8xbf16> to vector<24x8xbf16>
    %cst_61 = arith.constant dense<0.000000e+00> : vector<512x8xf32>
    %74 = tpu.matmul %71, %73, %cst_61 {dimension_numbers = #tpu.dot_dimension_numbers<[1], [0], [0], [1], [0, 0, 1, 1], [], []>} : vector<512x24xbf16>, vector<24x8xbf16>, vector<512x8xf32> -> vector<512x8xf32>
    %75 = arith.addf %70, %74 : vector<512x8xf32>
    %c32_62 = arith.constant 32 : index
    %c4 = arith.constant 4 : index
    %76 = vector.load %arg9[%c32_62, %c4] : memref<576x12xbf16, #tpu.memory_space<vmem>>, vector<512x4xbf16>
    %c0_63 = arith.constant 0 : index
    %c0_64 = arith.constant 0 : index
    %77 = vector.load %arg5[%c0_63, %c0_64] : memref<4x8xbf16, #tpu.memory_space<vmem>>, vector<4x8xbf16>
    %cst_65 = arith.constant dense<0.000000e+00> : vector<512x8xf32>
    %78 = tpu.matmul %76, %77, %cst_65 {dimension_numbers = #tpu.dot_dimension_numbers<[1], [0], [0], [1], [0, 0, 1, 1], [], []>} : vector<512x4xbf16>, vector<4x8xbf16>, vector<512x8xf32> -> vector<512x8xf32>
    %c0_66 = arith.constant 0 : index
    %c0_67 = arith.constant 0 : index
    %79 = vector.load %arg6[%c0_66, %c0_67] : memref<1x8xf32, #tpu.memory_space<vmem>>, vector<1x8xf32>
    %80 = vector.broadcast %79 : vector<1x8xf32> to vector<512x8xf32>
    %81 = arith.addf %75, %80 : vector<512x8xf32>
    %82 = arith.addf %81, %78 : vector<512x8xf32>
    %c0_68 = arith.constant 0 : index
    %c0_69 = arith.constant 0 : index
    %83 = vector.load %arg7[%c0_68, %c0_69] : memref<1x8xf32, #tpu.memory_space<vmem>>, vector<1x8xf32>
    %84 = vector.broadcast %83 : vector<1x8xf32> to vector<512x8xf32>
    %85 = arith.addf %82, %84 : vector<512x8xf32>
    %cst_70 = arith.constant 0.000000e+00 : f32
    %86 = vector.broadcast %cst_70 : f32 to vector<512x8xf32>
    %87 = arith.maximumf %85, %86 : vector<512x8xf32>
    %c0_71 = arith.constant 0 : index
    %c0_72 = arith.constant 0 : index
    %c0_73 = arith.constant 0 : index
    %88 = vector.load %arg8[%c0_71, %c0_72, %c0_73] : memref<1x512x8xf32, #tpu.memory_space<vmem>>, vector<1x512x8xf32>
    %89 = vector.shape_cast %88 : vector<1x512x8xf32> to vector<512x8xf32>
    %90 = vector.shape_cast %87 : vector<512x8xf32> to vector<1x512x8xf32>
    tpu.vector_store %arg8[%c0_71, %c0_72, %c0_73], %90 {strides = array<i32>} : memref<1x512x8xf32, #tpu.memory_space<vmem>>, vector<1x512x8xf32>,
    return
  }
  func.func @transform_0(%arg0: i32) -> (i32, i32, i32) {
    %c0_i32 = arith.constant 0 : i32
    %c0_i32_0 = arith.constant 0 : i32
    %c0_i32_1 = arith.constant 0 : i32
    return %arg0, %c0_i32, %c0_i32_0 : i32, i32, i32
  }
  func.func @transform_1(%arg0: i32) -> (i32, i32, i32) {
    %c0_i32 = arith.constant 0 : i32
    %c0_i32_0 = arith.constant 0 : i32
    %c0_i32_1 = arith.constant 0 : i32
    return %arg0, %c0_i32, %c0_i32_0 : i32, i32, i32
  }
  func.func @transform_2(%arg0: i32) -> (i32, i32, i32) {
    %c0_i32 = arith.constant 0 : i32
    %c0_i32_0 = arith.constant 0 : i32
    %c0_i32_1 = arith.constant 0 : i32
    %c0_i32_2 = arith.constant 0 : i32
    return %c0_i32, %c0_i32_0, %c0_i32_1 : i32, i32, i32
  }
  func.func @transform_3(%arg0: i32) -> (i32, i32, i32) {
    %c0_i32 = arith.constant 0 : i32
    %c0_i32_0 = arith.constant 0 : i32
    %c0_i32_1 = arith.constant 0 : i32
    %c0_i32_2 = arith.constant 0 : i32
    return %c0_i32, %c0_i32_0, %c0_i32_1 : i32, i32, i32
  }
  func.func @transform_4(%arg0: i32) -> (i32, i32) {
    %c0_i32 = arith.constant 0 : i32
    %c0_i32_0 = arith.constant 0 : i32
    %c0_i32_1 = arith.constant 0 : i32
    return %c0_i32, %c0_i32_0 : i32, i32
  }
  func.func @transform_5(%arg0: i32) -> (i32, i32) {
    %c0_i32 = arith.constant 0 : i32
    %c0_i32_0 = arith.constant 0 : i32
    %c0_i32_1 = arith.constant 0 : i32
    return %c0_i32, %c0_i32_0 : i32, i32
  }
  func.func @transform_6(%arg0: i32) -> (i32, i32) {
    %c0_i32 = arith.constant 0 : i32
    %c0_i32_0 = arith.constant 0 : i32
    %c0_i32_1 = arith.constant 0 : i32
    return %c0_i32, %c0_i32_0 : i32, i32
  }
  func.func @transform_7(%arg0: i32) -> (i32, i32, i32) {
    %c0_i32 = arith.constant 0 : i32
    %c0_i32_0 = arith.constant 0 : i32
    %c0_i32_1 = arith.constant 0 : i32
    return %arg0, %c0_i32, %c0_i32_0 : i32, i32, i32
  }
}

</mosaic_0001>

<llo_original>
// kernel: resnet_block_forward.1
$region0: #{resnet_block_forward.1}
  #allocation0 [shape = 'u32[]', space=smem, size = 0x4, offset = 0x4, fixed_abs, tag = 'smem constant byte address 0x4 - core index']
  #allocation1 [shape = 'u32[72,128]{1,0:T(1,128)}', space=vmem, size = 0x9000, scoped, tag = 'internal scratch']
  #allocation2 [shape = 'bf16[576,12]{1,0:T(8,128)(2,1)}', space=vmem, size = 0x24000, scoped, tag = 'scratch operand']
  #allocation3 [shape = 'bf16[640,8]{1,0:T(8,128)(2,1)}', space=vmem, size = 0x28000, scoped, tag = 'scratch operand']
  #allocation4 [shape = 'bf16[576,24]{1,0:T(8,128)(2,1)}', space=vmem, size = 0x24000, scoped, tag = 'scratch operand']
  %s0 = inlined_call_operand.vmem [shape: bf16[2,578,4], index: 0, kind: input, shape index: {}]
  %s1 = inlined_call_operand.vmem [shape: f32[2,1,8], index: 1, kind: input, shape index: {}]
  %s2 = inlined_call_operand.vmem [shape: bf16[3,12,8], index: 2, kind: input, shape index: {}]
  %s3 = inlined_call_operand.vmem [shape: bf16[3,24,8], index: 3, kind: input, shape index: {}]
  %s4 = inlined_call_operand.vmem [shape: bf16[4,8], index: 4, kind: input, shape index: {}]
  %s5 = inlined_call_operand.vmem [shape: f32[1,8], index: 5, kind: input, shape index: {}]
  %s6 = inlined_call_operand.vmem [shape: f32[1,8], index: 6, kind: input, shape index: {}]
  %s7 = inlined_call_operand.vmem [shape: f32[2,512,8], index: 7, kind: output, shape index: {}]
  %s8 = sld [smem:[#allocation0]]
  $region61: #{resnet_block_forward.1} parent=0
    _
  %s10 = ssub.s32 1, %s8
  %s11 = scalar_select 0, %s10, %s8
  loop: start=0, step=1, limit=4
  $region2: #{resnet_block_forward.1} parent=0 // loop_pre_header
    _
  $region3: #{resnet_block_forward.1} parent=0 // loop_header
    %s13 = sphi 0, %s17
    %p14 = scmp.ge.s32.totalorder %s13, 4
    %s23 = sphi 0, %s25
    %s26 = sphi 0, %s23
    %s27 = sphi 0, %s26
    %s43 = sphi 0, %s27
    %s49 = sphi 0, %s51
    %s52 = sphi 0, %s49
    %s53 = sphi 0, %s52
    %s69 = sphi 0, %s53
    %s73 = sphi 0, %s73
    %s75 = sphi 0, %s73
    %s76 = sphi 0, %s75
    %s90 = sphi 0, %s76
    %s94 = sphi 0, %s94
    %s96 = sphi 0, %s94
    %s97 = sphi 0, %s96
    %s111 = sphi 0, %s97
    %s115 = sphi 0, %s115
    %s117 = sphi 0, %s115
    %s118 = sphi 0, %s117
    %s132 = sphi 0, %s118
    %s136 = sphi 0, %s136
    %s138 = sphi 0, %s136
    %s139 = sphi 0, %s138
    %s153 = sphi 0, %s139
    %s157 = sphi 0, %s157
    %s159 = sphi 0, %s157
    %s160 = sphi 0, %s159
    %s174 = sphi 0, %s160
    %s180 = sphi 0, %s182
    %s183 = sphi 0, %s180
    %s184 = sphi 0, %s183
    %s200 = sphi 0, %s184
  $region4: #{resnet_block_forward.1} parent=0 // loop_header_branch
    %16 = sbr.rel (%p14) target = $region8
  $region5: #{resnet_block_forward.1} parent=0 // loop_body
    %s18 = ssub.s32 %s13, 1
    %s19 = ssub.s32 %s13, 2
    %s20 = sadd.s32 %s13, 1
    %s21 = ssub.s32 %s13, %s20
    %p22 = scmp.eq.s32.totalorder %s21, 0
    %s24 = sadd.s32 %s23, 1
    %s25 = scalar_select %p22, %s23, %s24
    %p28 = pneg %p22
    %p29 = scmp.eq.s32.totalorder %s13, 1
    %p30 = por %p28, %p29
    %p31 = scmp.ne.s32.totalorder %s23, %s26
    %p32 = scmp.eq.s32.totalorder %s13, 0
    %p33 = por %p31, %p32
    %p34 = scmp.ne.s32.totalorder %s23, %s26
    %p35 = scmp.eq.s32.totalorder %s18, 1
    %p36 = por %p34, %p35
    %p37 = scmp.ne.s32.totalorder %s26, %s27
    %p38 = scmp.eq.s32.totalorder %s18, 0
    %p39 = por %p37, %p38
    %p40 = scmp.ne.s32.totalorder %s26, %s27
    %p41 = scmp.eq.s32.totalorder %s19, 1
    %p42 = por %p40, %p41
    %p44 = scmp.ne.s32.totalorder %s27, %s43
    %p45 = scmp.eq.s32.totalorder %s19, 0
    %p46 = por %p44, %p45
    %s47 = ssub.s32 %s13, %s20
    %p48 = scmp.eq.s32.totalorder %s47, 0
    %s50 = sadd.s32 %s49, 1
    %s51 = scalar_select %p48, %s49, %s50
    %p54 = pneg %p48
    %p55 = scmp.eq.s32.totalorder %s13, 1
    %p56 = por %p54, %p55
    %p57 = scmp.ne.s32.totalorder %s49, %s52
    %p58 = scmp.eq.s32.totalorder %s13, 0
    %p59 = por %p57, %p58
    %p60 = scmp.ne.s32.totalorder %s49, %s52
    %p61 = scmp.eq.s32.totalorder %s18, 1
    %p62 = por %p60, %p61
    %p63 = scmp.ne.s32.totalorder %s52, %s53
    %p64 = scmp.eq.s32.totalorder %s18, 0
    %p65 = por %p63, %p64
    %p66 = scmp.ne.s32.totalorder %s52, %s53
    %p67 = scmp.eq.s32.totalorder %s19, 1
    %p68 = por %p66, %p67
    %p70 = scmp.ne.s32.totalorder %s53, %s69
    %p71 = scmp.eq.s32.totalorder %s19, 0
    %p72 = por %p70, %p71
    %s74 = sadd.s32 %s73, 1
    %p77 = scmp.eq.s32.totalorder %s13, 1
    %p78 = scmp.ne.s32.totalorder %s73, %s75
    %p79 = scmp.eq.s32.totalorder %s13, 0
    %p80 = por %p78, %p79
    %p81 = scmp.ne.s32.totalorder %s73, %s75
    %p82 = scmp.eq.s32.totalorder %s18, 1
    %p83 = por %p81, %p82
    %p84 = scmp.ne.s32.totalorder %s75, %s76
    %p85 = scmp.eq.s32.totalorder %s18, 0
    %p86 = por %p84, %p85
    %p87 = scmp.ne.s32.totalorder %s75, %s76
    %p88 = scmp.eq.s32.totalorder %s19, 1
    %p89 = por %p87, %p88
    %p91 = scmp.ne.s32.totalorder %s76, %s90
    %p92 = scmp.eq.s32.totalorder %s19, 0
    %p93 = por %p91, %p92
    %s95 = sadd.s32 %s94, 1
    %p98 = scmp.eq.s32.totalorder %s13, 1
    %p99 = scmp.ne.s32.totalorder %s94, %s96
    %p100 = scmp.eq.s32.totalorder %s13, 0
    %p101 = por %p99, %p100
    %p102 = scmp.ne.s32.totalorder %s94, %s96
    %p103 = scmp.eq.s32.totalorder %s18, 1
    %p104 = por %p102, %p103
    %p105 = scmp.ne.s32.totalorder %s96, %s97
    %p106 = scmp.eq.s32.totalorder %s18, 0
    %p107 = por %p105, %p106
    %p108 = scmp.ne.s32.totalorder %s96, %s97
    %p109 = scmp.eq.s32.totalorder %s19, 1
    %p110 = por %p108, %p109
    %p112 = scmp.ne.s32.totalorder %s97, %s111
    %p113 = scmp.eq.s32.totalorder %s19, 0
    %p114 = por %p112, %p113
    %s116 = sadd.s32 %s115, 1
    %p119 = scmp.eq.s32.totalorder %s13, 1
    %p120 = scmp.ne.s32.totalorder %s115, %s117
    %p121 = scmp.eq.s32.totalorder %s13, 0
    %p122 = por %p120, %p121
    %p123 = scmp.ne.s32.totalorder %s115, %s117
    %p124 = scmp.eq.s32.totalorder %s18, 1
    %p125 = por %p123, %p124
    %p126 = scmp.ne.s32.totalorder %s117, %s118
    %p127 = scmp.eq.s32.totalorder %s18, 0
    %p128 = por %p126, %p127
    %p129 = scmp.ne.s32.totalorder %s117, %s118
    %p130 = scmp.eq.s32.totalorder %s19, 1
    %p131 = por %p129, %p130
    %p133 = scmp.ne.s32.totalorder %s118, %s132
    %p134 = scmp.eq.s32.totalorder %s19, 0
    %p135 = por %p133, %p134
    %s137 = sadd.s32 %s136, 1
    %p140 = scmp.eq.s32.totalorder %s13, 1
    %p141 = scmp.ne.s32.totalorder %s136, %s138
    %p142 = scmp.eq.s32.totalorder %s13, 0
    %p143 = por %p141, %p142
    %p144 = scmp.ne.s32.totalorder %s136, %s138
    %p145 = scmp.eq.s32.totalorder %s18, 1
    %p146 = por %p144, %p145
    %p147 = scmp.ne.s32.totalorder %s138, %s139
    %p148 = scmp.eq.s32.totalorder %s18, 0
    %p149 = por %p147, %p148
    %p150 = scmp.ne.s32.totalorder %s138, %s139
    %p151 = scmp.eq.s32.totalorder %s19, 1
    %p152 = por %p150, %p151
    %p154 = scmp.ne.s32.totalorder %s139, %s153
    %p155 = scmp.eq.s32.totalorder %s19, 0
    %p156 = por %p154, %p155
    %s158 = sadd.s32 %s157, 1
    %p161 = scmp.eq.s32.totalorder %s13, 1
    %p162 = scmp.ne.s32.totalorder %s157, %s159
    %p163 = scmp.eq.s32.totalorder %s13, 0
    %p164 = por %p162, %p163
    %p165 = scmp.ne.s32.totalorder %s157, %s159
    %p166 = scmp.eq.s32.totalorder %s18, 1
    %p167 = por %p165, %p166
    %p168 = scmp.ne.s32.totalorder %s159, %s160
    %p169 = scmp.eq.s32.totalorder %s18, 0
    %p170 = por %p168, %p169
    %p171 = scmp.ne.s32.totalorder %s159, %s160
    %p172 = scmp.eq.s32.totalorder %s19, 1
    %p173 = por %p171, %p172
    %p175 = scmp.ne.s32.totalorder %s160, %s174
    %p176 = scmp.eq.s32.totalorder %s19, 0
    %p177 = por %p175, %p176
    %s178 = ssub.s32 %s13, %s20
    %p179 = scmp.eq.s32.totalorder %s178, 0
    %s181 = sadd.s32 %s180, 1
    %s182 = scalar_select %p179, %s180, %s181
    %p185 = pneg %p179
    %p186 = scmp.eq.s32.totalorder %s13, 1
    %p187 = por %p185, %p186
    %p188 = scmp.ne.s32.totalorder %s180, %s183
    %p189 = scmp.eq.s32.totalorder %s13, 0
    %p190 = por %p188, %p189
    %p191 = scmp.ne.s32.totalorder %s180, %s183
    %p192 = scmp.eq.s32.totalorder %s18, 1
    %p193 = por %p191, %p192
    %p194 = scmp.ne.s32.totalorder %s183, %s184
    %p195 = scmp.eq.s32.totalorder %s18, 0
    %p196 = por %p194, %p195
    %p197 = scmp.ne.s32.totalorder %s183, %s184
    %p198 = scmp.eq.s32.totalorder %s19, 1
    %p199 = por %p197, %p198
    %p201 = scmp.ne.s32.totalorder %s184, %s200
    %p202 = scmp.eq.s32.totalorder %s19, 0
    %p203 = por %p201, %p202
    %p204 = scmp.le.s32.totalorder 1, %s13
    %p205 = scmp.lt.s32.totalorder %s13, 3
    %p206 = pnand %p204, %p205
    %p207 = pneg %p206
    // Predicated region
    $region9: #{resnet_block_forward.1} parent=5 // pred_check
      _
    $region10: #{resnet_block_forward.1} parent=5 // pred_check_branch
      %209 = sbr.rel (%p206) target = $region12
    $region11: #{resnet_block_forward.1} parent=5 // pred_region
      %s210 = ssub.s32 %s13, 1
      // Predicated region
      $region13: #{resnet_block_forward.1} parent=11 // pred_check
        %p211 = pneg %p86
      $region14: #{resnet_block_forward.1} parent=11 // pred_check_branch
        %213 = sbr.rel (%p211) target = $region16
      $region15: #{resnet_block_forward.1} parent=11 // pred_region
        _
      $region16: #{resnet_block_forward.1} parent=11 // pred_fallthru
        _
      // Predicated region
      $region17: #{resnet_block_forward.1} parent=11 // pred_check
        %p214 = pneg %p107
      $region18: #{resnet_block_forward.1} parent=11 // pred_check_branch
        %216 = sbr.rel (%p214) target = $region20
      $region19: #{resnet_block_forward.1} parent=11 // pred_region
        _
      $region20: #{resnet_block_forward.1} parent=11 // pred_fallthru
        _
      // Predicated region
      $region21: #{resnet_block_forward.1} parent=11 // pred_check
        %p217 = pneg %p128
      $region22: #{resnet_block_forward.1} parent=11 // pred_check_branch
        %219 = sbr.rel (%p217) target = $region24
      $region23: #{resnet_block_forward.1} parent=11 // pred_region
        _
      $region24: #{resnet_block_forward.1} parent=11 // pred_fallthru
        _
      // Predicated region
      $region25: #{resnet_block_forward.1} parent=11 // pred_check
        %p220 = pneg %p149
      $region26: #{resnet_block_forward.1} parent=11 // pred_check_branch
        %222 = sbr.rel (%p220) target = $region28
      $region27: #{resnet_block_forward.1} parent=11 // pred_region
        _
      $region28: #{resnet_block_forward.1} parent=11 // pred_fallthru
        _
      // Predicated region
      $region29: #{resnet_block_forward.1} parent=11 // pred_check
        %p223 = pneg %p170
      $region30: #{resnet_block_forward.1} parent=11 // pred_check_branch
        %225 = sbr.rel (%p223) target = $region32
      $region31: #{resnet_block_forward.1} parent=11 // pred_region
        _
      $region32: #{resnet_block_forward.1} parent=11 // pred_fallthru
        _
    $region12: #{resnet_block_forward.1} parent=5 // pred_fallthru
      _
    %p226 = scmp.lt.s32.totalorder %s13, 2
    // Predicated region
    $region33: #{resnet_block_forward.1} parent=5 // pred_check
      %p227 = pneg %p226
    $region34: #{resnet_block_forward.1} parent=5 // pred_check_branch
      %229 = sbr.rel (%p227) target = $region36
    $region35: #{resnet_block_forward.1} parent=5 // pred_region
      // Predicated region
      $region37: #{resnet_block_forward.1} parent=35 // pred_check
        %p230 = pneg %p33
      $region38: #{resnet_block_forward.1} parent=35 // pred_check_branch
        %232 = sbr.rel (%p230) target = $region40
      $region39: #{resnet_block_forward.1} parent=35 // pred_region
        %p233 = scmp.lt.s32.totalorder %s13, 1
        %s234 = scalar_select %p233, %s13, 1
        %s235 = smul.addr %s234, 73
        %s236 = smul.addr %s235, 4
        %s237 = scalar_lea.vmem %s0, %s236
      $region40: #{resnet_block_forward.1} parent=35 // pred_fallthru
        _
      // Predicated region
      $region41: #{resnet_block_forward.1} parent=35 // pred_check
        %p238 = pneg %p59
      $region42: #{resnet_block_forward.1} parent=35 // pred_check_branch
        %240 = sbr.rel (%p238) target = $region44
      $region43: #{resnet_block_forward.1} parent=35 // pred_region
        %p241 = scmp.lt.s32.totalorder %s13, 1
        %s242 = scalar_select %p241, %s13, 1
        %s243 = scalar_lea.vmem %s1, %s242
      $region44: #{resnet_block_forward.1} parent=35 // pred_fallthru
        _
    $region36: #{resnet_block_forward.1} parent=5 // pred_fallthru
      _
    %p244 = scmp.le.s32.totalorder 1, %s13
    %p245 = scmp.lt.s32.totalorder %s13, 3
    %p246 = pnand %p244, %p245
    %p247 = pneg %p246
    // Predicated region
    $region45: #{resnet_block_forward.1} parent=5 // pred_check
      _
    $region46: #{resnet_block_forward.1} parent=5 // pred_check_branch
      %249 = sbr.rel (%p246) target = $region48
    $region47: #{resnet_block_forward.1} parent=5 // pred_region
      %s250 = ssub.s32 %s13, 1
      %p251 = scmp.lt.s32.totalorder %s18, 1
      %s252 = scalar_select %p251, %s18, 1
      %s253 = smul.addr %s252, 73
      %s254 = smul.addr %s253, 4
      %s255 = scalar_lea.vmem %s0, %s254
      %p256 = pneg %p39
      %p257 = pneg %p36
      %p258 = scmp.lt.s32.totalorder %s18, 1
      %s259 = scalar_select %p258, %s18, 1
      %s260 = scalar_lea.vmem %s1, %s259
      %p261 = pneg %p65
      %p262 = pneg %p62
      %p263 = pneg %p86
      %p264 = pneg %p83
      %p265 = pneg %p107
      %p266 = pneg %p104
      %p267 = pneg %p128
      %p268 = pneg %p125
      %p269 = pneg %p149
      %p270 = pneg %p146
      %p271 = pneg %p170
      %p272 = pneg %p167
      %p273 = pneg %p196
      %p274 = pneg %p193
      %p275 = scmp.lt.s32.totalorder %s18, 1
      %s276 = scalar_select %p275, %s18, 1
      %s277 = smul.addr %s276, 64
      %s278 = smul.addr %s277, 8
      %s279 = scalar_lea.vmem %s7, %s278
      %p280 = scmp.lt.s32.totalorder %s18, 1
      %s281 = scalar_select %p280, %s18, 1
      %s282 = smul.addr %s281, 73
      %s283 = smul.addr %s282, 4
      %s284 = scalar_lea.vmem %s0, %s283
      %p285 = scmp.lt.s32.totalorder %s18, 1
      %s286 = scalar_select %p285, %s18, 1
      %s287 = scalar_lea.vmem %s1, %s286
      %p288 = scmp.lt.s32.totalorder %s18, 1
      %s289 = scalar_select %p288, %s18, 1
      %s290 = smul.addr %s289, 64
      %s291 = smul.addr %s290, 8
      %s292 = scalar_lea.vmem %s7, %s291
      %vm294 = vcmask 60416
      %295 = vst.msk [vmem:[#allocation3] sm:$0xf] %vm294, 0
      %296 = vst.msk [vmem:[#allocation3 + $0x4] sm:$0xf] %vm294, 0
      %297 = vst.msk [vmem:[#allocation3 + $0x8] sm:$0xf] %vm294, 0
      %298 = vst.msk [vmem:[#allocation3 + $0xc] sm:$0xf] %vm294, 0
      %299 = vst.msk [vmem:[#allocation3 + $0x10] sm:$0xf] %vm294, 0
      %300 = vst.msk [vmem:[#allocation3 + $0x14] sm:$0xf] %vm294, 0
      %301 = vst.msk [vmem:[#allocation3 + $0x18] sm:$0xf] %vm294, 0
      %302 = vst.msk [vmem:[#allocation3 + $0x1c] sm:$0xf] %vm294, 0
      %303 = vst.msk [vmem:[#allocation3 + $0x120] sm:$0xf] %vm294, 0
      %304 = vst.msk [vmem:[#allocation3 + $0x124] sm:$0xf] %vm294, 0
      %305 = vst.msk [vmem:[#allocation3 + $0x128] sm:$0xf] %vm294, 0
      %306 = vst.msk [vmem:[#allocation3 + $0x12c] sm:$0xf] %vm294, 0
      %307 = vst.msk [vmem:[#allocation3 + $0x130] sm:$0xf] %vm294, 0
      %308 = vst.msk [vmem:[#allocation3 + $0x134] sm:$0xf] %vm294, 0
      %309 = vst.msk [vmem:[#allocation3 + $0x138] sm:$0xf] %vm294, 0
      %310 = vst.msk [vmem:[#allocation3 + $0x13c] sm:$0xf] %vm294, 0
      %v311 = vld [vmem:[%s284] sm:$0xf]
      %v312 = vld [vmem:[%s284 + $0x4] sm:$0xf]
      %v313 = vld [vmem:[%s284 + $0x8] sm:$0xf]
      %v314 = vld [vmem:[%s284 + $0xc] sm:$0xf]
      %v315 = vld [vmem:[%s284 + $0x10] sm:$0xf]
      %v316 = vld [vmem:[%s284 + $0x14] sm:$0xf]
      %v317 = vld [vmem:[%s284 + $0x18] sm:$0xf]
      %v318 = vld [vmem:[%s284 + $0x1c] sm:$0xf]
      %v319 = vld [vmem:[%s284 + $0x20] sm:$0xf]
      %v320 = vld [vmem:[%s284 + $0x24] sm:$0xf]
      %v321 = vld [vmem:[%s284 + $0x28] sm:$0xf]
      %v322 = vld [vmem:[%s284 + $0x2c] sm:$0xf]
      %v323 = vld [vmem:[%s284 + $0x30] sm:$0xf]
      %v324 = vld [vmem:[%s284 + $0x34] sm:$0xf]
      %v325 = vld [vmem:[%s284 + $0x38] sm:$0xf]
      %v326 = vld [vmem:[%s284 + $0x3c] sm:$0xf]
      %v327 = vld [vmem:[%s284 + $0x40] sm:$0xf]
      %v328 = vld [vmem:[%s284 + $0x44] sm:$0xf]
      %v329 = vld [vmem:[%s284 + $0x48] sm:$0xf]
      %v330 = vld [vmem:[%s284 + $0x4c] sm:$0xf]
      %v331 = vld [vmem:[%s284 + $0x50] sm:$0xf]
      %v332 = vld [vmem:[%s284 + $0x54] sm:$0xf]
      %v333 = vld [vmem:[%s284 + $0x58] sm:$0xf]
      %v334 = vld [vmem:[%s284 + $0x5c] sm:$0xf]
      %v335 = vld [vmem:[%s284 + $0x60] sm:$0xf]
      %v336 = vld [vmem:[%s284 + $0x64] sm:$0xf]
      %v337 = vld [vmem:[%s284 + $0x68] sm:$0xf]
      %v338 = vld [vmem:[%s284 + $0x6c] sm:$0xf]
      %v339 = vld [vmem:[%s284 + $0x70] sm:$0xf]
      %v340 = vld [vmem:[%s284 + $0x74] sm:$0xf]
      %v341 = vld [vmem:[%s284 + $0x78] sm:$0xf]
      %v342 = vld [vmem:[%s284 + $0x7c] sm:$0xf]
      %v343 = vld [vmem:[%s284 + $0x80] sm:$0xf]
      %v344 = vld [vmem:[%s284 + $0x84] sm:$0xf]
      %v345 = vld [vmem:[%s284 + $0x88] sm:$0xf]
      %v346 = vld [vmem:[%s284 + $0x8c] sm:$0xf]
      %v347 = vld [vmem:[%s284 + $0x90] sm:$0xf]
      %v348 = vld [vmem:[%s284 + $0x94] sm:$0xf]
      %v349 = vld [vmem:[%s284 + $0x98] sm:$0xf]
      %v350 = vld [vmem:[%s284 + $0x9c] sm:$0xf]
      %v351 = vld [vmem:[%s284 + $0xa0] sm:$0xf]
      %v352 = vld [vmem:[%s284 + $0xa4] sm:$0xf]
      %v353 = vld [vmem:[%s284 + $0xa8] sm:$0xf]
      %v354 = vld [vmem:[%s284 + $0xac] sm:$0xf]
      %v355 = vld [vmem:[%s284 + $0xb0] sm:$0xf]
      %v356 = vld [vmem:[%s284 + $0xb4] sm:$0xf]
      %v357 = vld [vmem:[%s284 + $0xb8] sm:$0xf]
      %v358 = vld [vmem:[%s284 + $0xbc] sm:$0xf]
      %v359 = vld [vmem:[%s284 + $0xc0] sm:$0xf]
      %v360 = vld [vmem:[%s284 + $0xc4] sm:$0xf]
      %v361 = vld [vmem:[%s284 + $0xc8] sm:$0xf]
      %v362 = vld [vmem:[%s284 + $0xcc] sm:$0xf]
      %v363 = vld [vmem:[%s284 + $0xd0] sm:$0xf]
      %v364 = vld [vmem:[%s284 + $0xd4] sm:$0xf]
      %v365 = vld [vmem:[%s284 + $0xd8] sm:$0xf]
      %v366 = vld [vmem:[%s284 + $0xdc] sm:$0xf]
      %v367 = vld [vmem:[%s284 + $0xe0] sm:$0xf]
      %v368 = vld [vmem:[%s284 + $0xe4] sm:$0xf]
      %v369 = vld [vmem:[%s284 + $0xe8] sm:$0xf]
      %v370 = vld [vmem:[%s284 + $0xec] sm:$0xf]
      %v371 = vld [vmem:[%s284 + $0xf0] sm:$0xf]
      %v372 = vld [vmem:[%s284 + $0xf4] sm:$0xf]
      %v373 = vld [vmem:[%s284 + $0xf8] sm:$0xf]
      %v374 = vld [vmem:[%s284 + $0xfc] sm:$0xf]
      %v375 = vld [vmem:[%s284 + $0x100] sm:$0xf]
      %v376 = vld [vmem:[%s284 + $0x104] sm:$0xf]
      %v377 = vld [vmem:[%s284 + $0x108] sm:$0xf]
      %v378 = vld [vmem:[%s284 + $0x10c] sm:$0xf]
      %v379 = vld [vmem:[%s284 + $0x110] sm:$0xf]
      %v380 = vld [vmem:[%s284 + $0x114] sm:$0xf]
      %v381 = vld [vmem:[%s284 + $0x118] sm:$0xf]
      %v382 = vld [vmem:[%s284 + $0x11c] sm:$0xf]
      %v383 = vld [vmem:[%s284 + $0x120] sm:$0x1]
      %v384 = vld [vmem:[%s284] sm:$0xe]
      %v457 = vunpack.c.l.b16 %v311
      %v458 = vunpack.c.l.b16 %v312
      %v459 = vunpack.c.l.b16 %v313
      %v460 = vunpack.c.l.b16 %v314
      %v461 = vunpack.c.l.b16 %v315
      %v462 = vunpack.c.l.b16 %v316
      %v463 = vunpack.c.l.b16 %v317
      %v464 = vunpack.c.l.b16 %v318
      %v465 = vunpack.c.l.b16 %v319
      %v466 = vunpack.c.l.b16 %v320
      %v467 = vunpack.c.l.b16 %v321
      %v468 = vunpack.c.l.b16 %v322
      %v469 = vunpack.c.l.b16 %v323
      %v470 = vunpack.c.l.b16 %v324
      %v471 = vunpack.c.l.b16 %v325
      %v472 = vunpack.c.l.b16 %v326
      %v473 = vunpack.c.l.b16 %v327
      %v474 = vunpack.c.l.b16 %v328
      %v475 = vunpack.c.l.b16 %v329
      %v476 = vunpack.c.l.b16 %v330
      %v477 = vunpack.c.l.b16 %v331
      %v478 = vunpack.c.l.b16 %v332
      %v479 = vunpack.c.l.b16 %v333
      %v480 = vunpack.c.l.b16 %v334
      %v481 = vunpack.c.l.b16 %v335
      %v482 = vunpack.c.l.b16 %v336
      %v483 = vunpack.c.l.b16 %v337
      %v484 = vunpack.c.l.b16 %v338
      %v485 = vunpack.c.l.b16 %v339
      %v486 = vunpack.c.l.b16 %v340
      %v487 = vunpack.c.l.b16 %v341
      %v488 = vunpack.c.l.b16 %v342
      %v489 = vunpack.c.l.b16 %v343
      %v490 = vunpack.c.l.b16 %v344
      %v491 = vunpack.c.l.b16 %v345
      %v492 = vunpack.c.l.b16 %v346
      %v493 = vunpack.c.l.b16 %v347
      %v494 = vunpack.c.l.b16 %v348
      %v495 = vunpack.c.l.b16 %v349
      %v496 = vunpack.c.l.b16 %v350
      %v497 = vunpack.c.l.b16 %v351
      %v498 = vunpack.c.l.b16 %v352
      %v499 = vunpack.c.l.b16 %v353
      %v500 = vunpack.c.l.b16 %v354
      %v501 = vunpack.c.l.b16 %v355
      %v502 = vunpack.c.l.b16 %v356
      %v503 = vunpack.c.l.b16 %v357
      %v504 = vunpack.c.l.b16 %v358
      %v505 = vunpack.c.l.b16 %v359
      %v506 = vunpack.c.l.b16 %v360
      %v507 = vunpack.c.l.b16 %v361
      %v508 = vunpack.c.l.b16 %v362
      %v509 = vunpack.c.l.b16 %v363
      %v510 = vunpack.c.l.b16 %v364
      %v511 = vunpack.c.l.b16 %v365
      %v512 = vunpack.c.l.b16 %v366
      %v513 = vunpack.c.l.b16 %v367
      %v514 = vunpack.c.l.b16 %v368
      %v515 = vunpack.c.l.b16 %v369
      %v516 = vunpack.c.l.b16 %v370
      %v517 = vunpack.c.l.b16 %v371
      %v518 = vunpack.c.l.b16 %v372
      %v519 = vunpack.c.l.b16 %v373
      %v520 = vunpack.c.l.b16 %v374
      %v521 = vunpack.c.l.b16 %v375
      %v522 = vunpack.c.l.b16 %v376
      %v523 = vunpack.c.l.b16 %v377
      %v524 = vunpack.c.l.b16 %v378
      %v525 = vunpack.c.l.b16 %v379
      %v526 = vunpack.c.l.b16 %v380
      %v527 = vunpack.c.l.b16 %v381
      %v528 = vunpack.c.l.b16 %v382
      %v529 = vpack.c.b16 %v458, %v457
      %v530 = vpack.c.b16 %v460, %v459
      %v531 = vpack.c.b16 %v462, %v461
      %v532 = vpack.c.b16 %v464, %v463
      %v533 = vpack.c.b16 %v466, %v465
      %v534 = vpack.c.b16 %v468, %v467
      %v535 = vpack.c.b16 %v470, %v469
      %v536 = vpack.c.b16 %v472, %v471
      %v537 = vpack.c.b16 %v474, %v473
      %v538 = vpack.c.b16 %v476, %v475
      %v539 = vpack.c.b16 %v478, %v477
      %v540 = vpack.c.b16 %v480, %v479
      %v541 = vpack.c.b16 %v482, %v481
      %v542 = vpack.c.b16 %v484, %v483
      %v543 = vpack.c.b16 %v486, %v485
      %v544 = vpack.c.b16 %v488, %v487
      %v545 = vpack.c.b16 %v490, %v489
      %v546 = vpack.c.b16 %v492, %v491
      %v547 = vpack.c.b16 %v494, %v493
      %v548 = vpack.c.b16 %v496, %v495
      %v549 = vpack.c.b16 %v498, %v497
      %v550 = vpack.c.b16 %v500, %v499
      %v551 = vpack.c.b16 %v502, %v501
      %v552 = vpack.c.b16 %v504, %v503
      %v553 = vpack.c.b16 %v506, %v505
      %v554 = vpack.c.b16 %v508, %v507
      %v555 = vpack.c.b16 %v510, %v509
      %v556 = vpack.c.b16 %v512, %v511
      %v557 = vpack.c.b16 %v514, %v513
      %v558 = vpack.c.b16 %v516, %v515
      %v559 = vpack.c.b16 %v518, %v517
      %v560 = vpack.c.b16 %v520, %v519
      %v561 = vpack.c.b16 %v522, %v521
      %v562 = vpack.c.b16 %v524, %v523
      %v563 = vpack.c.b16 %v526, %v525
      %v564 = vpack.c.b16 %v528, %v527
      %v566 = vunpack.c.l.b16 %v383
      %v567 = vpack.c.b16 %v566, %v566
      %vm568 = vsmask.f32 7424
      %v570 = vshrl.u32 %v529, 16
      %v572 = vshll.u32 %v529, 16
      %v574 = vrot.slane %v572, 1
      %v575 = vor.u32 %v570, %v574
      %v577 = vshll.u32 %v530, 16
      %v579 = vrot.slane %v577, 1
      %v580 = vsel %vm568, %v575, %v579
      %v581 = vshrl.u32 %v530, 16
      %v583 = vor.u32 %v581, %v579
      %v585 = vshll.u32 %v531, 16
      %v587 = vrot.slane %v585, 1
      %v588 = vsel %vm568, %v583, %v587
      %v589 = vshrl.u32 %v531, 16
      %v591 = vor.u32 %v589, %v587
      %v593 = vshll.u32 %v532, 16
      %v595 = vrot.slane %v593, 1
      %v596 = vsel %vm568, %v591, %v595
      %v597 = vshrl.u32 %v532, 16
      %v599 = vor.u32 %v597, %v595
      %v601 = vshll.u32 %v533, 16
      %v603 = vrot.slane %v601, 1
      %v604 = vsel %vm568, %v599, %v603
      %v605 = vshrl.u32 %v533, 16
      %v607 = vor.u32 %v605, %v603
      %v609 = vshll.u32 %v534, 16
      %v611 = vrot.slane %v609, 1
      %v612 = vsel %vm568, %v607, %v611
      %v613 = vshrl.u32 %v534, 16
      %v615 = vor.u32 %v613, %v611
      %v617 = vshll.u32 %v535, 16
      %v619 = vrot.slane %v617, 1
      %v620 = vsel %vm568, %v615, %v619
      %v621 = vshrl.u32 %v535, 16
      %v623 = vor.u32 %v621, %v619
      %v625 = vshll.u32 %v536, 16
      %v627 = vrot.slane %v625, 1
      %v628 = vsel %vm568, %v623, %v627
      %v629 = vshrl.u32 %v536, 16
      %v631 = vor.u32 %v629, %v627
      %v633 = vshll.u32 %v537, 16
      %v635 = vrot.slane %v633, 1
      %v636 = vsel %vm568, %v631, %v635
      %v637 = vshrl.u32 %v537, 16
      %v639 = vor.u32 %v637, %v635
      %v641 = vshll.u32 %v538, 16
      %v643 = vrot.slane %v641, 1
      %v644 = vsel %vm568, %v639, %v643
      %v645 = vshrl.u32 %v538, 16
      %v647 = vor.u32 %v645, %v643
      %v649 = vshll.u32 %v539, 16
      %v651 = vrot.slane %v649, 1
      %v652 = vsel %vm568, %v647, %v651
      %v653 = vshrl.u32 %v539, 16
      %v655 = vor.u32 %v653, %v651
      %v657 = vshll.u32 %v540, 16
      %v659 = vrot.slane %v657, 1
      %v660 = vsel %vm568, %v655, %v659
      %v661 = vshrl.u32 %v540, 16
      %v663 = vor.u32 %v661, %v659
      %v665 = vshll.u32 %v541, 16
      %v667 = vrot.slane %v665, 1
      %v668 = vsel %vm568, %v663, %v667
      %v669 = vshrl.u32 %v541, 16
      %v671 = vor.u32 %v669, %v667
      %v673 = vshll.u32 %v542, 16
      %v675 = vrot.slane %v673, 1
      %v676 = vsel %vm568, %v671, %v675
      %v677 = vshrl.u32 %v542, 16
      %v679 = vor.u32 %v677, %v675
      %v681 = vshll.u32 %v543, 16
      %v683 = vrot.slane %v681, 1
      %v684 = vsel %vm568, %v679, %v683
      %v685 = vshrl.u32 %v543, 16
      %v687 = vor.u32 %v685, %v683
      %v689 = vshll.u32 %v544, 16
      %v691 = vrot.slane %v689, 1
      %v692 = vsel %vm568, %v687, %v691
      %v693 = vshrl.u32 %v544, 16
      %v695 = vor.u32 %v693, %v691
      %v697 = vshll.u32 %v545, 16
      %v699 = vrot.slane %v697, 1
      %v700 = vsel %vm568, %v695, %v699
      %v701 = vshrl.u32 %v545, 16
      %v703 = vor.u32 %v701, %v699
      %v705 = vshll.u32 %v546, 16
      %v707 = vrot.slane %v705, 1
      %v708 = vsel %vm568, %v703, %v707
      %v709 = vshrl.u32 %v546, 16
      %v711 = vor.u32 %v709, %v707
      %v713 = vshll.u32 %v547, 16
      %v715 = vrot.slane %v713, 1
      %v716 = vsel %vm568, %v711, %v715
      %v717 = vshrl.u32 %v547, 16
      %v719 = vor.u32 %v717, %v715
      %v721 = vshll.u32 %v548, 16
      %v723 = vrot.slane %v721, 1
      %v724 = vsel %vm568, %v719, %v723
      %v725 = vshrl.u32 %v548, 16
      %v727 = vor.u32 %v725, %v723
      %v729 = vshll.u32 %v549, 16
      %v731 = vrot.slane %v729, 1
      %v732 = vsel %vm568, %v727, %v731
      %v733 = vshrl.u32 %v549, 16
      %v735 = vor.u32 %v733, %v731
      %v737 = vshll.u32 %v550, 16
      %v739 = vrot.slane %v737, 1
      %v740 = vsel %vm568, %v735, %v739
      %v741 = vshrl.u32 %v550, 16
      %v743 = vor.u32 %v741, %v739
      %v745 = vshll.u32 %v551, 16
      %v747 = vrot.slane %v745, 1
      %v748 = vsel %vm568, %v743, %v747
      %v749 = vshrl.u32 %v551, 16
      %v751 = vor.u32 %v749, %v747
      %v753 = vshll.u32 %v552, 16
      %v755 = vrot.slane %v753, 1
      %v756 = vsel %vm568, %v751, %v755
      %v757 = vshrl.u32 %v552, 16
      %v759 = vor.u32 %v757, %v755
      %v761 = vshll.u32 %v553, 16
      %v763 = vrot.slane %v761, 1
      %v764 = vsel %vm568, %v759, %v763
      %v765 = vshrl.u32 %v553, 16
      %v767 = vor.u32 %v765, %v763
      %v769 = vshll.u32 %v554, 16
      %v771 = vrot.slane %v769, 1
      %v772 = vsel %vm568, %v767, %v771
      %v773 = vshrl.u32 %v554, 16
      %v775 = vor.u32 %v773, %v771
      %v777 = vshll.u32 %v555, 16
      %v779 = vrot.slane %v777, 1
      %v780 = vsel %vm568, %v775, %v779
      %v781 = vshrl.u32 %v555, 16
      %v783 = vor.u32 %v781, %v779
      %v785 = vshll.u32 %v556, 16
      %v787 = vrot.slane %v785, 1
      %v788 = vsel %vm568, %v783, %v787
      %v789 = vshrl.u32 %v556, 16
      %v791 = vor.u32 %v789, %v787
      %v793 = vshll.u32 %v557, 16
      %v795 = vrot.slane %v793, 1
      %v796 = vsel %vm568, %v791, %v795
      %v797 = vshrl.u32 %v557, 16
      %v799 = vor.u32 %v797, %v795
      %v801 = vshll.u32 %v558, 16
      %v803 = vrot.slane %v801, 1
      %v804 = vsel %vm568, %v799, %v803
      %v805 = vshrl.u32 %v558, 16
      %v807 = vor.u32 %v805, %v803
      %v809 = vshll.u32 %v559, 16
      %v811 = vrot.slane %v809, 1
      %v812 = vsel %vm568, %v807, %v811
      %v813 = vshrl.u32 %v559, 16
      %v815 = vor.u32 %v813, %v811
      %v817 = vshll.u32 %v560, 16
      %v819 = vrot.slane %v817, 1
      %v820 = vsel %vm568, %v815, %v819
      %v821 = vshrl.u32 %v560, 16
      %v823 = vor.u32 %v821, %v819
      %v825 = vshll.u32 %v561, 16
      %v827 = vrot.slane %v825, 1
      %v828 = vsel %vm568, %v823, %v827
      %v829 = vshrl.u32 %v561, 16
      %v831 = vor.u32 %v829, %v827
      %v833 = vshll.u32 %v562, 16
      %v835 = vrot.slane %v833, 1
      %v836 = vsel %vm568, %v831, %v835
      %v837 = vshrl.u32 %v562, 16
      %v839 = vor.u32 %v837, %v835
      %v841 = vshll.u32 %v563, 16
      %v843 = vrot.slane %v841, 1
      %v844 = vsel %vm568, %v839, %v843
      %v845 = vshrl.u32 %v563, 16
      %v847 = vor.u32 %v845, %v843
      %v849 = vshll.u32 %v564, 16
      %v851 = vrot.slane %v849, 1
      %v852 = vsel %vm568, %v847, %v851
      %v853 = vshrl.u32 %v564, 16
      %v855 = vor.u32 %v853, %v851
      %v857 = vshll.u32 %v567, 16
      %v859 = vrot.slane %v857, 1
      %v860 = vsel %vm568, %v855, %v859
      %861 = vrot.lane.b32.xlu0 %v580, 4
      %v862 = vpop.permute.xlu0 %861
      %863 = vrot.lane.b32.xlu0 %v588, 4
      %v864 = vpop.permute.xlu0 %863
      %865 = vrot.lane.b32.xlu0 %v596, 4
      %v866 = vpop.permute.xlu0 %865
      %867 = vrot.lane.b32.xlu0 %v604, 4
      %v868 = vpop.permute.xlu0 %867
      %869 = vrot.lane.b32.xlu0 %v612, 4
      %v870 = vpop.permute.xlu0 %869
      %871 = vrot.lane.b32.xlu0 %v620, 4
      %v872 = vpop.permute.xlu0 %871
      %873 = vrot.lane.b32.xlu0 %v628, 4
      %v874 = vpop.permute.xlu0 %873
      %875 = vrot.lane.b32.xlu0 %v636, 4
      %v876 = vpop.permute.xlu0 %875
      %877 = vrot.lane.b32.xlu0 %v644, 4
      %v878 = vpop.permute.xlu0 %877
      %879 = vrot.lane.b32.xlu0 %v652, 4
      %v880 = vpop.permute.xlu0 %879
      %881 = vrot.lane.b32.xlu0 %v660, 4
      %v882 = vpop.permute.xlu0 %881
      %883 = vrot.lane.b32.xlu0 %v668, 4
      %v884 = vpop.permute.xlu0 %883
      %885 = vrot.lane.b32.xlu0 %v676, 4
      %v886 = vpop.permute.xlu0 %885
      %887 = vrot.lane.b32.xlu0 %v684, 4
      %v888 = vpop.permute.xlu0 %887
      %889 = vrot.lane.b32.xlu0 %v692, 4
      %v890 = vpop.permute.xlu0 %889
      %891 = vrot.lane.b32.xlu0 %v700, 4
      %v892 = vpop.permute.xlu0 %891
      %893 = vrot.lane.b32.xlu0 %v708, 4
      %v894 = vpop.permute.xlu0 %893
      %895 = vrot.lane.b32.xlu0 %v716, 4
      %v896 = vpop.permute.xlu0 %895
      %897 = vrot.lane.b32.xlu0 %v724, 4
      %v898 = vpop.permute.xlu0 %897
      %899 = vrot.lane.b32.xlu0 %v732, 4
      %v900 = vpop.permute.xlu0 %899
      %901 = vrot.lane.b32.xlu0 %v740, 4
      %v902 = vpop.permute.xlu0 %901
      %903 = vrot.lane.b32.xlu0 %v748, 4
      %v904 = vpop.permute.xlu0 %903
      %905 = vrot.lane.b32.xlu0 %v756, 4
      %v906 = vpop.permute.xlu0 %905
      %907 = vrot.lane.b32.xlu0 %v764, 4
      %v908 = vpop.permute.xlu0 %907
      %909 = vrot.lane.b32.xlu0 %v772, 4
      %v910 = vpop.permute.xlu0 %909
      %911 = vrot.lane.b32.xlu0 %v780, 4
      %v912 = vpop.permute.xlu0 %911
      %913 = vrot.lane.b32.xlu0 %v788, 4
      %v914 = vpop.permute.xlu0 %913
      %915 = vrot.lane.b32.xlu0 %v796, 4
      %v916 = vpop.permute.xlu0 %915
      %917 = vrot.lane.b32.xlu0 %v804, 4
      %v918 = vpop.permute.xlu0 %917
      %919 = vrot.lane.b32.xlu0 %v812, 4
      %v920 = vpop.permute.xlu0 %919
      %921 = vrot.lane.b32.xlu0 %v820, 4
      %v922 = vpop.permute.xlu0 %921
      %923 = vrot.lane.b32.xlu0 %v828, 4
      %v924 = vpop.permute.xlu0 %923
      %925 = vrot.lane.b32.xlu0 %v836, 4
      %v926 = vpop.permute.xlu0 %925
      %927 = vrot.lane.b32.xlu0 %v844, 4
      %v928 = vpop.permute.xlu0 %927
      %929 = vrot.lane.b32.xlu0 %v852, 4
      %v930 = vpop.permute.xlu0 %929
      %931 = vrot.lane.b32.xlu0 %v860, 4
      %v932 = vpop.permute.xlu0 %931
      %v934 = vunpack.c.l.b16 %v384
      %v935 = vpack.c.b16 %v458, %v934
      %vm936 = vcmask 1046528
      %v937 = vrot.slane %v935, 1
      %v938 = vrot.slane %v530, 1
      %v939 = vsel %vm936, %v937, %v938
      %v940 = vrot.slane %v531, 1
      %v941 = vsel %vm936, %v938, %v940
      %v942 = vrot.slane %v532, 1
      %v943 = vsel %vm936, %v940, %v942
      %v944 = vrot.slane %v533, 1
      %v945 = vsel %vm936, %v942, %v944
      %v946 = vrot.slane %v534, 1
      %v947 = vsel %vm936, %v944, %v946
      %v948 = vrot.slane %v535, 1
      %v949 = vsel %vm936, %v946, %v948
      %v950 = vrot.slane %v536, 1
      %v951 = vsel %vm936, %v948, %v950
      %v952 = vrot.slane %v537, 1
      %v953 = vsel %vm936, %v950, %v952
      %v954 = vrot.slane %v538, 1
      %v955 = vsel %vm936, %v952, %v954
      %v956 = vrot.slane %v539, 1
      %v957 = vsel %vm936, %v954, %v956
      %v958 = vrot.slane %v540, 1
      %v959 = vsel %vm936, %v956, %v958
      %v960 = vrot.slane %v541, 1
      %v961 = vsel %vm936, %v958, %v960
      %v962 = vrot.slane %v542, 1
      %v963 = vsel %vm936, %v960, %v962
      %v964 = vrot.slane %v543, 1
      %v965 = vsel %vm936, %v962, %v964
      %v966 = vrot.slane %v544, 1
      %v967 = vsel %vm936, %v964, %v966
      %v968 = vrot.slane %v545, 1
      %v969 = vsel %vm936, %v966, %v968
      %v970 = vrot.slane %v546, 1
      %v971 = vsel %vm936, %v968, %v970
      %v972 = vrot.slane %v547, 1
      %v973 = vsel %vm936, %v970, %v972
      %v974 = vrot.slane %v548, 1
      %v975 = vsel %vm936, %v972, %v974
      %v976 = vrot.slane %v549, 1
      %v977 = vsel %vm936, %v974, %v976
      %v978 = vrot.slane %v550, 1
      %v979 = vsel %vm936, %v976, %v978
      %v980 = vrot.slane %v551, 1
      %v981 = vsel %vm936, %v978, %v980
      %v982 = vrot.slane %v552, 1
      %v983 = vsel %vm936, %v980, %v982
      %v984 = vrot.slane %v553, 1
      %v985 = vsel %vm936, %v982, %v984
      %v986 = vrot.slane %v554, 1
      %v987 = vsel %vm936, %v984, %v986
      %v988 = vrot.slane %v555, 1
      %v989 = vsel %vm936, %v986, %v988
      %v990 = vrot.slane %v556, 1
      %v991 = vsel %vm936, %v988, %v990
      %v992 = vrot.slane %v557, 1
      %v993 = vsel %vm936, %v990, %v992
      %v994 = vrot.slane %v558, 1
      %v995 = vsel %vm936, %v992, %v994
      %v996 = vrot.slane %v559, 1
      %v997 = vsel %vm936, %v994, %v996
      %v998 = vrot.slane %v560, 1
      %v999 = vsel %vm936, %v996, %v998
      %v1000 = vrot.slane %v561, 1
      %v1001 = vsel %vm936, %v998, %v1000
      %v1002 = vrot.slane %v562, 1
      %v1003 = vsel %vm936, %v1000, %v1002
      %v1004 = vrot.slane %v563, 1
      %v1005 = vsel %vm936, %v1002, %v1004
      %v1006 = vrot.slane %v564, 1
      %v1007 = vsel %vm936, %v1004, %v1006
      %v1008 = vrot.slane %v567, 1
      %v1009 = vsel %vm936, %v1006, %v1008
      %1010 = vrot.lane.b32.xlu0 %v939, 8
      %v1011 = vpop.permute.xlu0 %1010
      %1012 = vrot.lane.b32.xlu0 %v941, 8
      %v1013 = vpop.permute.xlu0 %1012
      %1014 = vrot.lane.b32.xlu0 %v943, 8
      %v1015 = vpop.permute.xlu0 %1014
      %1016 = vrot.lane.b32.xlu0 %v945, 8
      %v1017 = vpop.permute.xlu0 %1016
      %1018 = vrot.lane.b32.xlu0 %v947, 8
      %v1019 = vpop.permute.xlu0 %1018
      %1020 = vrot.lane.b32.xlu0 %v949, 8
      %v1021 = vpop.permute.xlu0 %1020
      %1022 = vrot.lane.b32.xlu0 %v951, 8
      %v1023 = vpop.permute.xlu0 %1022
      %1024 = vrot.lane.b32.xlu0 %v953, 8
      %v1025 = vpop.permute.xlu0 %1024
      %1026 = vrot.lane.b32.xlu0 %v955, 8
      %v1027 = vpop.permute.xlu0 %1026
      %1028 = vrot.lane.b32.xlu0 %v957, 8
      %v1029 = vpop.permute.xlu0 %1028
      %1030 = vrot.lane.b32.xlu0 %v959, 8
      %v1031 = vpop.permute.xlu0 %1030
      %1032 = vrot.lane.b32.xlu0 %v961, 8
      %v1033 = vpop.permute.xlu0 %1032
      %1034 = vrot.lane.b32.xlu0 %v963, 8
      %v1035 = vpop.permute.xlu0 %1034
      %1036 = vrot.lane.b32.xlu0 %v965, 8
      %v1037 = vpop.permute.xlu0 %1036
      %1038 = vrot.lane.b32.xlu0 %v967, 8
      %v1039 = vpop.permute.xlu0 %1038
      %1040 = vrot.lane.b32.xlu0 %v969, 8
      %v1041 = vpop.permute.xlu0 %1040
      %1042 = vrot.lane.b32.xlu0 %v971, 8
      %v1043 = vpop.permute.xlu0 %1042
      %1044 = vrot.lane.b32.xlu0 %v973, 8
      %v1045 = vpop.permute.xlu0 %1044
      %1046 = vrot.lane.b32.xlu0 %v975, 8
      %v1047 = vpop.permute.xlu0 %1046
      %1048 = vrot.lane.b32.xlu0 %v977, 8
      %v1049 = vpop.permute.xlu0 %1048
      %1050 = vrot.lane.b32.xlu0 %v979, 8
      %v1051 = vpop.permute.xlu0 %1050
      %1052 = vrot.lane.b32.xlu0 %v981, 8
      %v1053 = vpop.permute.xlu0 %1052
      %1054 = vrot.lane.b32.xlu0 %v983, 8
      %v1055 = vpop.permute.xlu0 %1054
      %1056 = vrot.lane.b32.xlu0 %v985, 8
      %v1057 = vpop.permute.xlu0 %1056
      %1058 = vrot.lane.b32.xlu0 %v987, 8
      %v1059 = vpop.permute.xlu0 %1058
      %1060 = vrot.lane.b32.xlu0 %v989, 8
      %v1061 = vpop.permute.xlu0 %1060
      %1062 = vrot.lane.b32.xlu0 %v991, 8
      %v1063 = vpop.permute.xlu0 %1062
      %1064 = vrot.lane.b32.xlu0 %v993, 8
      %v1065 = vpop.permute.xlu0 %1064
      %1066 = vrot.lane.b32.xlu0 %v995, 8
      %v1067 = vpop.permute.xlu0 %1066
      %1068 = vrot.lane.b32.xlu0 %v997, 8
      %v1069 = vpop.permute.xlu0 %1068
      %1070 = vrot.lane.b32.xlu0 %v999, 8
      %v1071 = vpop.permute.xlu0 %1070
      %1072 = vrot.lane.b32.xlu0 %v1001, 8
      %v1073 = vpop.permute.xlu0 %1072
      %1074 = vrot.lane.b32.xlu0 %v1003, 8
      %v1075 = vpop.permute.xlu0 %1074
      %1076 = vrot.lane.b32.xlu0 %v1005, 8
      %v1077 = vpop.permute.xlu0 %1076
      %1078 = vrot.lane.b32.xlu0 %v1007, 8
      %v1079 = vpop.permute.xlu0 %1078
      %1080 = vrot.lane.b32.xlu0 %v1009, 8
      %v1081 = vpop.permute.xlu0 %1080
      %vm1082 = vcmask 31744
      %v1084 = vsel %vm1082, %v529, %v862
      %v1086 = vsel %vm1082, %v530, %v864
      %v1088 = vsel %vm1082, %v531, %v866
      %v1090 = vsel %vm1082, %v532, %v868
      %v1092 = vsel %vm1082, %v533, %v870
      %v1094 = vsel %vm1082, %v534, %v872
      %v1096 = vsel %vm1082, %v535, %v874
      %v1098 = vsel %vm1082, %v536, %v876
      %v1100 = vsel %vm1082, %v537, %v878
      %v1102 = vsel %vm1082, %v538, %v880
      %v1104 = vsel %vm1082, %v539, %v882
      %v1106 = vsel %vm1082, %v540, %v884
      %v1108 = vsel %vm1082, %v541, %v886
      %v1110 = vsel %vm1082, %v542, %v888
      %v1112 = vsel %vm1082, %v543, %v890
      %v1114 = vsel %vm1082, %v544, %v892
      %v1116 = vsel %vm1082, %v545, %v894
      %v1118 = vsel %vm1082, %v546, %v896
      %v1120 = vsel %vm1082, %v547, %v898
      %v1122 = vsel %vm1082, %v548, %v900
      %v1124 = vsel %vm1082, %v549, %v902
      %v1126 = vsel %vm1082, %v550, %v904
      %v1128 = vsel %vm1082, %v551, %v906
      %v1130 = vsel %vm1082, %v552, %v908
      %v1132 = vsel %vm1082, %v553, %v910
      %v1134 = vsel %vm1082, %v554, %v912
      %v1136 = vsel %vm1082, %v555, %v914
      %v1138 = vsel %vm1082, %v556, %v916
      %v1140 = vsel %vm1082, %v557, %v918
      %v1142 = vsel %vm1082, %v558, %v920
      %v1144 = vsel %vm1082, %v559, %v922
      %v1146 = vsel %vm1082, %v560, %v924
      %v1148 = vsel %vm1082, %v561, %v926
      %v1150 = vsel %vm1082, %v562, %v928
      %v1152 = vsel %vm1082, %v563, %v930
      %v1154 = vsel %vm1082, %v564, %v932
      %vm1155 = vcmask 64512
      %v1157 = vsel %vm1155, %v1084, %v1011
      %v1159 = vsel %vm1155, %v1086, %v1013
      %v1161 = vsel %vm1155, %v1088, %v1015
      %v1163 = vsel %vm1155, %v1090, %v1017
      %v1165 = vsel %vm1155, %v1092, %v1019
      %v1167 = vsel %vm1155, %v1094, %v1021
      %v1169 = vsel %vm1155, %v1096, %v1023
      %v1171 = vsel %vm1155, %v1098, %v1025
      %v1173 = vsel %vm1155, %v1100, %v1027
      %v1175 = vsel %vm1155, %v1102, %v1029
      %v1177 = vsel %vm1155, %v1104, %v1031
      %v1179 = vsel %vm1155, %v1106, %v1033
      %v1181 = vsel %vm1155, %v1108, %v1035
      %v1183 = vsel %vm1155, %v1110, %v1037
      %v1185 = vsel %vm1155, %v1112, %v1039
      %v1187 = vsel %vm1155, %v1114, %v1041
      %v1189 = vsel %vm1155, %v1116, %v1043
      %v1191 = vsel %vm1155, %v1118, %v1045
      %v1193 = vsel %vm1155, %v1120, %v1047
      %v1195 = vsel %vm1155, %v1122, %v1049
      %v1197 = vsel %vm1155, %v1124, %v1051
      %v1199 = vsel %vm1155, %v1126, %v1053
      %v1201 = vsel %vm1155, %v1128, %v1055
      %v1203 = vsel %vm1155, %v1130, %v1057
      %v1205 = vsel %vm1155, %v1132, %v1059
      %v1207 = vsel %vm1155, %v1134, %v1061
      %v1209 = vsel %vm1155, %v1136, %v1063
      %v1211 = vsel %vm1155, %v1138, %v1065
      %v1213 = vsel %vm1155, %v1140, %v1067
      %v1215 = vsel %vm1155, %v1142, %v1069
      %v1217 = vsel %vm1155, %v1144, %v1071
      %v1219 = vsel %vm1155, %v1146, %v1073
      %v1221 = vsel %vm1155, %v1148, %v1075
      %v1223 = vsel %vm1155, %v1150, %v1077
      %v1225 = vsel %vm1155, %v1152, %v1079
      %v1227 = vsel %vm1155, %v1154, %v1081
      %v1264 = vunpack.c.l.b16 %v1157
      %v1265 = vunpack.c.h.b16 %v1157
      %v1266 = vunpack.c.l.b16 %v1159
      %v1267 = vunpack.c.h.b16 %v1159
      %v1268 = vunpack.c.l.b16 %v1161
      %v1269 = vunpack.c.h.b16 %v1161
      %v1270 = vunpack.c.l.b16 %v1163
      %v1271 = vunpack.c.h.b16 %v1163
      %v1272 = vunpack.c.l.b16 %v1165
      %v1273 = vunpack.c.h.b16 %v1165
      %v1274 = vunpack.c.l.b16 %v1167
      %v1275 = vunpack.c.h.b16 %v1167
      %v1276 = vunpack.c.l.b16 %v1169
      %v1277 = vunpack.c.h.b16 %v1169
      %v1278 = vunpack.c.l.b16 %v1171
      %v1279 = vunpack.c.h.b16 %v1171
      %v1280 = vunpack.c.l.b16 %v1173
      %v1281 = vunpack.c.h.b16 %v1173
      %v1282 = vunpack.c.l.b16 %v1175
      %v1283 = vunpack.c.h.b16 %v1175
      %v1284 = vunpack.c.l.b16 %v1177
      %v1285 = vunpack.c.h.b16 %v1177
      %v1286 = vunpack.c.l.b16 %v1179
      %v1287 = vunpack.c.h.b16 %v1179
      %v1288 = vunpack.c.l.b16 %v1181
      %v1289 = vunpack.c.h.b16 %v1181
      %v1290 = vunpack.c.l.b16 %v1183
      %v1291 = vunpack.c.h.b16 %v1183
      %v1292 = vunpack.c.l.b16 %v1185
      %v1293 = vunpack.c.h.b16 %v1185
      %v1294 = vunpack.c.l.b16 %v1187
      %v1295 = vunpack.c.h.b16 %v1187
      %v1296 = vunpack.c.l.b16 %v1189
      %v1297 = vunpack.c.h.b16 %v1189
      %v1298 = vunpack.c.l.b16 %v1191
      %v1299 = vunpack.c.h.b16 %v1191
      %v1300 = vunpack.c.l.b16 %v1193
      %v1301 = vunpack.c.h.b16 %v1193
      %v1302 = vunpack.c.l.b16 %v1195
      %v1303 = vunpack.c.h.b16 %v1195
      %v1304 = vunpack.c.l.b16 %v1197
      %v1305 = vunpack.c.h.b16 %v1197
      %v1306 = vunpack.c.l.b16 %v1199
      %v1307 = vunpack.c.h.b16 %v1199
      %v1308 = vunpack.c.l.b16 %v1201
      %v1309 = vunpack.c.h.b16 %v1201
      %v1310 = vunpack.c.l.b16 %v1203
      %v1311 = vunpack.c.h.b16 %v1203
      %v1312 = vunpack.c.l.b16 %v1205
      %v1313 = vunpack.c.h.b16 %v1205
      %v1314 = vunpack.c.l.b16 %v1207
      %v1315 = vunpack.c.h.b16 %v1207
      %v1316 = vunpack.c.l.b16 %v1209
      %v1317 = vunpack.c.h.b16 %v1209
      %v1318 = vunpack.c.l.b16 %v1211
      %v1319 = vunpack.c.h.b16 %v1211
      %v1320 = vunpack.c.l.b16 %v1213
      %v1321 = vunpack.c.h.b16 %v1213
      %v1322 = vunpack.c.l.b16 %v1215
      %v1323 = vunpack.c.h.b16 %v1215
      %v1324 = vunpack.c.l.b16 %v1217
      %v1325 = vunpack.c.h.b16 %v1217
      %v1326 = vunpack.c.l.b16 %v1219
      %v1327 = vunpack.c.h.b16 %v1219
      %v1328 = vunpack.c.l.b16 %v1221
      %v1329 = vunpack.c.h.b16 %v1221
      %v1330 = vunpack.c.l.b16 %v1223
      %v1331 = vunpack.c.h.b16 %v1223
      %v1332 = vunpack.c.l.b16 %v1225
      %v1333 = vunpack.c.h.b16 %v1225
      %v1334 = vunpack.c.l.b16 %v1227
      %v1335 = vunpack.c.h.b16 %v1227
      %v1336 = vpack.c.b16 %v1264, %v1264
      %v1337 = vpack.c.b16 %v1265, %v1265
      %v1338 = vpack.c.b16 %v1266, %v1266
      %v1339 = vpack.c.b16 %v1267, %v1267
      %v1340 = vpack.c.b16 %v1268, %v1268
      %v1341 = vpack.c.b16 %v1269, %v1269
      %v1342 = vpack.c.b16 %v1270, %v1270
      %v1343 = vpack.c.b16 %v1271, %v1271
      %v1344 = vpack.c.b16 %v1272, %v1272
      %v1345 = vpack.c.b16 %v1273, %v1273
      %v1346 = vpack.c.b16 %v1274, %v1274
      %v1347 = vpack.c.b16 %v1275, %v1275
      %v1348 = vpack.c.b16 %v1276, %v1276
      %v1349 = vpack.c.b16 %v1277, %v1277
      %v1350 = vpack.c.b16 %v1278, %v1278
      %v1351 = vpack.c.b16 %v1279, %v1279
      %v1352 = vpack.c.b16 %v1280, %v1280
      %v1353 = vpack.c.b16 %v1281, %v1281
      %v1354 = vpack.c.b16 %v1282, %v1282
      %v1355 = vpack.c.b16 %v1283, %v1283
      %v1356 = vpack.c.b16 %v1284, %v1284
      %v1357 = vpack.c.b16 %v1285, %v1285
      %v1358 = vpack.c.b16 %v1286, %v1286
      %v1359 = vpack.c.b16 %v1287, %v1287
      %v1360 = vpack.c.b16 %v1288, %v1288
      %v1361 = vpack.c.b16 %v1289, %v1289
      %v1362 = vpack.c.b16 %v1290, %v1290
      %v1363 = vpack.c.b16 %v1291, %v1291
      %v1364 = vpack.c.b16 %v1292, %v1292
      %v1365 = vpack.c.b16 %v1293, %v1293
      %v1366 = vpack.c.b16 %v1294, %v1294
      %v1367 = vpack.c.b16 %v1295, %v1295
      %v1368 = vpack.c.b16 %v1296, %v1296
      %v1369 = vpack.c.b16 %v1297, %v1297
      %v1370 = vpack.c.b16 %v1298, %v1298
      %v1371 = vpack.c.b16 %v1299, %v1299
      %v1372 = vpack.c.b16 %v1300, %v1300
      %v1373 = vpack.c.b16 %v1301, %v1301
      %v1374 = vpack.c.b16 %v1302, %v1302
      %v1375 = vpack.c.b16 %v1303, %v1303
      %v1376 = vpack.c.b16 %v1304, %v1304
      %v1377 = vpack.c.b16 %v1305, %v1305
      %v1378 = vpack.c.b16 %v1306, %v1306
      %v1379 = vpack.c.b16 %v1307, %v1307
      %v1380 = vpack.c.b16 %v1308, %v1308
      %v1381 = vpack.c.b16 %v1309, %v1309
      %v1382 = vpack.c.b16 %v1310, %v1310
      %v1383 = vpack.c.b16 %v1311, %v1311
      %v1384 = vpack.c.b16 %v1312, %v1312
      %v1385 = vpack.c.b16 %v1313, %v1313
      %v1386 = vpack.c.b16 %v1314, %v1314
      %v1387 = vpack.c.b16 %v1315, %v1315
      %v1388 = vpack.c.b16 %v1316, %v1316
      %v1389 = vpack.c.b16 %v1317, %v1317
      %v1390 = vpack.c.b16 %v1318, %v1318
      %v1391 = vpack.c.b16 %v1319, %v1319
      %v1392 = vpack.c.b16 %v1320, %v1320
      %v1393 = vpack.c.b16 %v1321, %v1321
      %v1394 = vpack.c.b16 %v1322, %v1322
      %v1395 = vpack.c.b16 %v1323, %v1323
      %v1396 = vpack.c.b16 %v1324, %v1324
      %v1397 = vpack.c.b16 %v1325, %v1325
      %v1398 = vpack.c.b16 %v1326, %v1326
      %v1399 = vpack.c.b16 %v1327, %v1327
      %v1400 = vpack.c.b16 %v1328, %v1328
      %v1401 = vpack.c.b16 %v1329, %v1329
      %v1402 = vpack.c.b16 %v1330, %v1330
      %v1403 = vpack.c.b16 %v1331, %v1331
      %v1404 = vpack.c.b16 %v1332, %v1332
      %v1405 = vpack.c.b16 %v1333, %v1333
      %v1406 = vpack.c.b16 %v1334, %v1334
      %v1407 = vpack.c.b16 %v1335, %v1335
      %vm1480 = vcmask 93184
      %1481 = vst.msk [vmem:[#allocation2] sm:$0xf] %vm1480, %v1336
      %1482 = vst.msk [vmem:[#allocation2 + $0x4] sm:$0xf] %vm1480, %v1337
      %1483 = vst.msk [vmem:[#allocation2 + $0x8] sm:$0xf] %vm1480, %v1338
      %1484 = vst.msk [vmem:[#allocation2 + $0xc] sm:$0xf] %vm1480, %v1339
      %1485 = vst.msk [vmem:[#allocation2 + $0x10] sm:$0xf] %vm1480, %v1340
      %1486 = vst.msk [vmem:[#allocation2 + $0x14] sm:$0xf] %vm1480, %v1341
      %1487 = vst.msk [vmem:[#allocation2 + $0x18] sm:$0xf] %vm1480, %v1342
      %1488 = vst.msk [vmem:[#allocation2 + $0x1c] sm:$0xf] %vm1480, %v1343
      %1489 = vst.msk [vmem:[#allocation2 + $0x20] sm:$0xf] %vm1480, %v1344
      %1490 = vst.msk [vmem:[#allocation2 + $0x24] sm:$0xf] %vm1480, %v1345
      %1491 = vst.msk [vmem:[#allocation2 + $0x28] sm:$0xf] %vm1480, %v1346
      %1492 = vst.msk [vmem:[#allocation2 + $0x2c] sm:$0xf] %vm1480, %v1347
      %1493 = vst.msk [vmem:[#allocation2 + $0x30] sm:$0xf] %vm1480, %v1348
      %1494 = vst.msk [vmem:[#allocation2 + $0x34] sm:$0xf] %vm1480, %v1349
      %1495 = vst.msk [vmem:[#allocation2 + $0x38] sm:$0xf] %vm1480, %v1350
      %1496 = vst.msk [vmem:[#allocation2 + $0x3c] sm:$0xf] %vm1480, %v1351
      %1497 = vst.msk [vmem:[#allocation2 + $0x40] sm:$0xf] %vm1480, %v1352
      %1498 = vst.msk [vmem:[#allocation2 + $0x44] sm:$0xf] %vm1480, %v1353
      %1499 = vst.msk [vmem:[#allocation2 + $0x48] sm:$0xf] %vm1480, %v1354
      %1500 = vst.msk [vmem:[#allocation2 + $0x4c] sm:$0xf] %vm1480, %v1355
      %1501 = vst.msk [vmem:[#allocation2 + $0x50] sm:$0xf] %vm1480, %v1356
      %1502 = vst.msk [vmem:[#allocation2 + $0x54] sm:$0xf] %vm1480, %v1357
      %1503 = vst.msk [vmem:[#allocation2 + $0x58] sm:$0xf] %vm1480, %v1358
      %1504 = vst.msk [vmem:[#allocation2 + $0x5c] sm:$0xf] %vm1480, %v1359
      %1505 = vst.msk [vmem:[#allocation2 + $0x60] sm:$0xf] %vm1480, %v1360
      %1506 = vst.msk [vmem:[#allocation2 + $0x64] sm:$0xf] %vm1480, %v1361
      %1507 = vst.msk [vmem:[#allocation2 + $0x68] sm:$0xf] %vm1480, %v1362
      %1508 = vst.msk [vmem:[#allocation2 + $0x6c] sm:$0xf] %vm1480, %v1363
      %1509 = vst.msk [vmem:[#allocation2 + $0x70] sm:$0xf] %vm1480, %v1364
      %1510 = vst.msk [vmem:[#allocation2 + $0x74] sm:$0xf] %vm1480, %v1365
      %1511 = vst.msk [vmem:[#allocation2 + $0x78] sm:$0xf] %vm1480, %v1366
      %1512 = vst.msk [vmem:[#allocation2 + $0x7c] sm:$0xf] %vm1480, %v1367
      %1513 = vst.msk [vmem:[#allocation2 + $0x80] sm:$0xf] %vm1480, %v1368
      %1514 = vst.msk [vmem:[#allocation2 + $0x84] sm:$0xf] %vm1480, %v1369
      %1515 = vst.msk [vmem:[#allocation2 + $0x88] sm:$0xf] %vm1480, %v1370
      %1516 = vst.msk [vmem:[#allocation2 + $0x8c] sm:$0xf] %vm1480, %v1371
      %1517 = vst.msk [vmem:[#allocation2 + $0x90] sm:$0xf] %vm1480, %v1372
      %1518 = vst.msk [vmem:[#allocation2 + $0x94] sm:$0xf] %vm1480, %v1373
      %1519 = vst.msk [vmem:[#allocation2 + $0x98] sm:$0xf] %vm1480, %v1374
      %1520 = vst.msk [vmem:[#allocation2 + $0x9c] sm:$0xf] %vm1480, %v1375
      %1521 = vst.msk [vmem:[#allocation2 + $0xa0] sm:$0xf] %vm1480, %v1376
      %1522 = vst.msk [vmem:[#allocation2 + $0xa4] sm:$0xf] %vm1480, %v1377
      %1523 = vst.msk [vmem:[#allocation2 + $0xa8] sm:$0xf] %vm1480, %v1378
      %1524 = vst.msk [vmem:[#allocation2 + $0xac] sm:$0xf] %vm1480, %v1379
      %1525 = vst.msk [vmem:[#allocation2 + $0xb0] sm:$0xf] %vm1480, %v1380
      %1526 = vst.msk [vmem:[#allocation2 + $0xb4] sm:$0xf] %vm1480, %v1381
      %1527 = vst.msk [vmem:[#allocation2 + $0xb8] sm:$0xf] %vm1480, %v1382
      %1528 = vst.msk [vmem:[#allocation2 + $0xbc] sm:$0xf] %vm1480, %v1383
      %1529 = vst.msk [vmem:[#allocation2 + $0xc0] sm:$0xf] %vm1480, %v1384
      %1530 = vst.msk [vmem:[#allocation2 + $0xc4] sm:$0xf] %vm1480, %v1385
      %1531 = vst.msk [vmem:[#allocation2 + $0xc8] sm:$0xf] %vm1480, %v1386
      %1532 = vst.msk [vmem:[#allocation2 + $0xcc] sm:$0xf] %vm1480, %v1387
      %1533 = vst.msk [vmem:[#allocation2 + $0xd0] sm:$0xf] %vm1480, %v1388
      %1534 = vst.msk [vmem:[#allocation2 + $0xd4] sm:$0xf] %vm1480, %v1389
      %1535 = vst.msk [vmem:[#allocation2 + $0xd8] sm:$0xf] %vm1480, %v1390
      %1536 = vst.msk [vmem:[#allocation2 + $0xdc] sm:$0xf] %vm1480, %v1391
      %1537 = vst.msk [vmem:[#allocation2 + $0xe0] sm:$0xf] %vm1480, %v1392
      %1538 = vst.msk [vmem:[#allocation2 + $0xe4] sm:$0xf] %vm1480, %v1393
      %1539 = vst.msk [vmem:[#allocation2 + $0xe8] sm:$0xf] %vm1480, %v1394
      %1540 = vst.msk [vmem:[#allocation2 + $0xec] sm:$0xf] %vm1480, %v1395
      %1541 = vst.msk [vmem:[#allocation2 + $0xf0] sm:$0xf] %vm1480, %v1396
      %1542 = vst.msk [vmem:[#allocation2 + $0xf4] sm:$0xf] %vm1480, %v1397
      %1543 = vst.msk [vmem:[#allocation2 + $0xf8] sm:$0xf] %vm1480, %v1398
      %1544 = vst.msk [vmem:[#allocation2 + $0xfc] sm:$0xf] %vm1480, %v1399
      %1545 = vst.msk [vmem:[#allocation2 + $0x100] sm:$0xf] %vm1480, %v1400
      %1546 = vst.msk [vmem:[#allocation2 + $0x104] sm:$0xf] %vm1480, %v1401
      %1547 = vst.msk [vmem:[#allocation2 + $0x108] sm:$0xf] %vm1480, %v1402
      %1548 = vst.msk [vmem:[#allocation2 + $0x10c] sm:$0xf] %vm1480, %v1403
      %1549 = vst.msk [vmem:[#allocation2 + $0x110] sm:$0xf] %vm1480, %v1404
      %1550 = vst.msk [vmem:[#allocation2 + $0x114] sm:$0xf] %vm1480, %v1405
      %1551 = vst.msk [vmem:[#allocation2 + $0x118] sm:$0xf] %vm1480, %v1406
      %1552 = vst.msk [vmem:[#allocation2 + $0x11c] sm:$0xf] %vm1480, %v1407
      %v1553 = vld [vmem:[#allocation2] sm:$0xf]
      %v1554 = vld [vmem:[#allocation2 + $0x4] sm:$0xf]
      %v1555 = vld [vmem:[#allocation2 + $0x8] sm:$0xf]
      %v1556 = vld [vmem:[#allocation2 + $0xc] sm:$0xf]
      %v1557 = vld [vmem:[#allocation2 + $0x10] sm:$0xf]
      %v1558 = vld [vmem:[#allocation2 + $0x14] sm:$0xf]
      %v1559 = vld [vmem:[#allocation2 + $0x18] sm:$0xf]
      %v1560 = vld [vmem:[#allocation2 + $0x1c] sm:$0xf]
      %v1561 = vld [vmem:[#allocation2 + $0x20] sm:$0xf]
      %v1562 = vld [vmem:[#allocation2 + $0x24] sm:$0xf]
      %v1563 = vld [vmem:[#allocation2 + $0x28] sm:$0xf]
      %v1564 = vld [vmem:[#allocation2 + $0x2c] sm:$0xf]
      %v1565 = vld [vmem:[#allocation2 + $0x30] sm:$0xf]
      %v1566 = vld [vmem:[#allocation2 + $0x34] sm:$0xf]
      %v1567 = vld [vmem:[#allocation2 + $0x38] sm:$0xf]
      %v1568 = vld [vmem:[#allocation2 + $0x3c] sm:$0xf]
      %v1569 = vld [vmem:[#allocation2 + $0x40] sm:$0xf]
      %v1570 = vld [vmem:[#allocation2 + $0x44] sm:$0xf]
      %v1571 = vld [vmem:[#allocation2 + $0x48] sm:$0xf]
      %v1572 = vld [vmem:[#allocation2 + $0x4c] sm:$0xf]
      %v1573 = vld [vmem:[#allocation2 + $0x50] sm:$0xf]
      %v1574 = vld [vmem:[#allocation2 + $0x54] sm:$0xf]
      %v1575 = vld [vmem:[#allocation2 + $0x58] sm:$0xf]
      %v1576 = vld [vmem:[#allocation2 + $0x5c] sm:$0xf]
      %v1577 = vld [vmem:[#allocation2 + $0x60] sm:$0xf]
      %v1578 = vld [vmem:[#allocation2 + $0x64] sm:$0xf]
      %v1579 = vld [vmem:[#allocation2 + $0x68] sm:$0xf]
      %v1580 = vld [vmem:[#allocation2 + $0x6c] sm:$0xf]
      %v1581 = vld [vmem:[#allocation2 + $0x70] sm:$0xf]
      %v1582 = vld [vmem:[#allocation2 + $0x74] sm:$0xf]
      %v1583 = vld [vmem:[#allocation2 + $0x78] sm:$0xf]
      %v1584 = vld [vmem:[#allocation2 + $0x7c] sm:$0xf]
      %v1585 = vld [vmem:[#allocation2 + $0x80] sm:$0xf]
      %v1586 = vld [vmem:[#allocation2 + $0x84] sm:$0xf]
      %v1587 = vld [vmem:[#allocation2 + $0x88] sm:$0xf]
      %v1588 = vld [vmem:[#allocation2 + $0x8c] sm:$0xf]
      %v1589 = vld [vmem:[#allocation2 + $0x90] sm:$0xf]
      %v1590 = vld [vmem:[#allocation2 + $0x94] sm:$0xf]
      %v1591 = vld [vmem:[#allocation2 + $0x98] sm:$0xf]
      %v1592 = vld [vmem:[#allocation2 + $0x9c] sm:$0xf]
      %v1593 = vld [vmem:[#allocation2 + $0xa0] sm:$0xf]
      %v1594 = vld [vmem:[#allocation2 + $0xa4] sm:$0xf]
      %v1595 = vld [vmem:[#allocation2 + $0xa8] sm:$0xf]
      %v1596 = vld [vmem:[#allocation2 + $0xac] sm:$0xf]
      %v1597 = vld [vmem:[#allocation2 + $0xb0] sm:$0xf]
      %v1598 = vld [vmem:[#allocation2 + $0xb4] sm:$0xf]
      %v1599 = vld [vmem:[#allocation2 + $0xb8] sm:$0xf]
      %v1600 = vld [vmem:[#allocation2 + $0xbc] sm:$0xf]
      %v1601 = vld [vmem:[#allocation2 + $0xc0] sm:$0xf]
      %v1602 = vld [vmem:[#allocation2 + $0xc4] sm:$0xf]
      %v1603 = vld [vmem:[#allocation2 + $0xc8] sm:$0xf]
      %v1604 = vld [vmem:[#allocation2 + $0xcc] sm:$0xf]
      %v1605 = vld [vmem:[#allocation2 + $0xd0] sm:$0xf]
      %v1606 = vld [vmem:[#allocation2 + $0xd4] sm:$0xf]
      %v1607 = vld [vmem:[#allocation2 + $0xd8] sm:$0xf]
      %v1608 = vld [vmem:[#allocation2 + $0xdc] sm:$0xf]
      %v1609 = vld [vmem:[#allocation2 + $0xe0] sm:$0xf]
      %v1610 = vld [vmem:[#allocation2 + $0xe4] sm:$0xf]
      %v1611 = vld [vmem:[#allocation2 + $0xe8] sm:$0xf]
      %v1612 = vld [vmem:[#allocation2 + $0xec] sm:$0xf]
      %v1613 = vld [vmem:[#allocation2 + $0xf0] sm:$0xf]
      %v1614 = vld [vmem:[#allocation2 + $0xf4] sm:$0xf]
      %v1615 = vld [vmem:[#allocation2 + $0xf8] sm:$0xf]
      %v1616 = vld [vmem:[#allocation2 + $0xfc] sm:$0xf]
      %v1617 = vld [vmem:[%s2] sm:$0xf]
      %v1618 = vld [vmem:[%s2 + $0x4] sm:$0x3]
      %v1619 = vld [vmem:[#allocation2 + $0x100] sm:$0xf]
      %v1620 = vld [vmem:[#allocation2 + $0x104] sm:$0xf]
      %v1621 = vld [vmem:[#allocation2 + $0x108] sm:$0xf]
      %v1622 = vld [vmem:[#allocation2 + $0x10c] sm:$0xf]
      %s1623 = scalar_lea.vmem %s2, 8
      %v1624 = vld [vmem:[%s1623] sm:$0xf]
      %v1625 = vld [vmem:[%s1623 + $0x4] sm:$0x3]
      %v1690 = vunpack.c.l.b16 %v1557
      %v1691 = vunpack.c.l.b16 %v1558
      %v1692 = vunpack.c.l.b16 %v1559
      %v1693 = vunpack.c.l.b16 %v1560
      %v1694 = vunpack.c.l.b16 %v1561
      %v1695 = vunpack.c.l.b16 %v1562
      %v1696 = vunpack.c.l.b16 %v1563
      %v1697 = vunpack.c.l.b16 %v1564
      %v1698 = vunpack.c.l.b16 %v1565
      %v1699 = vunpack.c.l.b16 %v1566
      %v1700 = vunpack.c.l.b16 %v1567
      %v1701 = vunpack.c.l.b16 %v1568
      %v1702 = vunpack.c.l.b16 %v1569
      %v1703 = vunpack.c.l.b16 %v1570
      %v1704 = vunpack.c.l.b16 %v1571
      %v1705 = vunpack.c.l.b16 %v1572
      %v1706 = vunpack.c.l.b16 %v1573
      %v1707 = vunpack.c.l.b16 %v1574
      %v1708 = vunpack.c.l.b16 %v1575
      %v1709 = vunpack.c.l.b16 %v1576
      %v1710 = vunpack.c.l.b16 %v1577
      %v1711 = vunpack.c.l.b16 %v1578
      %v1712 = vunpack.c.l.b16 %v1579
      %v1713 = vunpack.c.l.b16 %v1580
      %v1714 = vunpack.c.l.b16 %v1581
      %v1715 = vunpack.c.l.b16 %v1582
      %v1716 = vunpack.c.l.b16 %v1583
      %v1717 = vunpack.c.l.b16 %v1584
      %v1718 = vunpack.c.l.b16 %v1585
      %v1719 = vunpack.c.l.b16 %v1586
      %v1720 = vunpack.c.l.b16 %v1587
      %v1721 = vunpack.c.l.b16 %v1588
      %v1722 = vunpack.c.l.b16 %v1589
      %v1723 = vunpack.c.l.b16 %v1590
      %v1724 = vunpack.c.l.b16 %v1591
      %v1725 = vunpack.c.l.b16 %v1592
      %v1726 = vunpack.c.l.b16 %v1593
      %v1727 = vunpack.c.l.b16 %v1594
      %v1728 = vunpack.c.l.b16 %v1595
      %v1729 = vunpack.c.l.b16 %v1596
      %v1730 = vunpack.c.l.b16 %v1597
      %v1731 = vunpack.c.l.b16 %v1598
      %v1732 = vunpack.c.l.b16 %v1599
      %v1733 = vunpack.c.l.b16 %v1600
      %v1734 = vunpack.c.l.b16 %v1601
      %v1735 = vunpack.c.l.b16 %v1602
      %v1736 = vunpack.c.l.b16 %v1603
      %v1737 = vunpack.c.l.b16 %v1604
      %v1738 = vunpack.c.l.b16 %v1605
      %v1739 = vunpack.c.l.b16 %v1606
      %v1740 = vunpack.c.l.b16 %v1607
      %v1741 = vunpack.c.l.b16 %v1608
      %v1742 = vunpack.c.l.b16 %v1609
      %v1743 = vunpack.c.l.b16 %v1610
      %v1744 = vunpack.c.l.b16 %v1611
      %v1745 = vunpack.c.l.b16 %v1612
      %v1746 = vunpack.c.l.b16 %v1613
      %v1747 = vunpack.c.l.b16 %v1614
      %v1748 = vunpack.c.l.b16 %v1615
      %v1749 = vunpack.c.l.b16 %v1616
      %v1750 = vunpack.c.l.b16 %v1619
      %v1751 = vunpack.c.l.b16 %v1620
      %v1752 = vunpack.c.l.b16 %v1621
      %v1753 = vunpack.c.l.b16 %v1622
      %v1754 = vpack.c.b16 %v1691, %v1690
      %v1755 = vpack.c.b16 %v1693, %v1692
      %v1756 = vpack.c.b16 %v1695, %v1694
      %v1757 = vpack.c.b16 %v1697, %v1696
      %v1758 = vpack.c.b16 %v1699, %v1698
      %v1759 = vpack.c.b16 %v1701, %v1700
      %v1760 = vpack.c.b16 %v1703, %v1702
      %v1761 = vpack.c.b16 %v1705, %v1704
      %v1762 = vpack.c.b16 %v1707, %v1706
      %v1763 = vpack.c.b16 %v1709, %v1708
      %v1764 = vpack.c.b16 %v1711, %v1710
      %v1765 = vpack.c.b16 %v1713, %v1712
      %v1766 = vpack.c.b16 %v1715, %v1714
      %v1767 = vpack.c.b16 %v1717, %v1716
      %v1768 = vpack.c.b16 %v1719, %v1718
      %v1769 = vpack.c.b16 %v1721, %v1720
      %v1770 = vpack.c.b16 %v1723, %v1722
      %v1771 = vpack.c.b16 %v1725, %v1724
      %v1772 = vpack.c.b16 %v1727, %v1726
      %v1773 = vpack.c.b16 %v1729, %v1728
      %v1774 = vpack.c.b16 %v1731, %v1730
      %v1775 = vpack.c.b16 %v1733, %v1732
      %v1776 = vpack.c.b16 %v1735, %v1734
      %v1777 = vpack.c.b16 %v1737, %v1736
      %v1778 = vpack.c.b16 %v1739, %v1738
      %v1779 = vpack.c.b16 %v1741, %v1740
      %v1780 = vpack.c.b16 %v1743, %v1742
      %v1781 = vpack.c.b16 %v1745, %v1744
      %v1782 = vpack.c.b16 %v1747, %v1746
      %v1783 = vpack.c.b16 %v1749, %v1748
      %v1784 = vpack.c.b16 %v1751, %v1750
      %v1785 = vpack.c.b16 %v1753, %v1752
      %v1788 = vunpack.c.l.b16 %v1624
      %v1789 = vunpack.c.l.b16 %v1625
      %v1790 = vpack.c.b16 %v1789, %v1788
      %vm1791 = vcmask 97280
      %v1793 = vsel %vm1791, %v1754, 0
      %v1796 = vsel %vm1791, %v1755, 0
      %v1799 = vsel %vm1791, %v1756, 0
      %v1802 = vsel %vm1791, %v1757, 0
      %v1805 = vsel %vm1791, %v1758, 0
      %v1808 = vsel %vm1791, %v1759, 0
      %v1811 = vsel %vm1791, %v1760, 0
      %v1814 = vsel %vm1791, %v1761, 0
      %v1817 = vsel %vm1791, %v1762, 0
      %v1820 = vsel %vm1791, %v1763, 0
      %v1823 = vsel %vm1791, %v1764, 0
      %v1826 = vsel %vm1791, %v1765, 0
      %v1829 = vsel %vm1791, %v1766, 0
      %v1832 = vsel %vm1791, %v1767, 0
      %v1835 = vsel %vm1791, %v1768, 0
      %v1838 = vsel %vm1791, %v1769, 0
      %v1841 = vsel %vm1791, %v1770, 0
      %v1844 = vsel %vm1791, %v1771, 0
      %v1847 = vsel %vm1791, %v1772, 0
      %v1850 = vsel %vm1791, %v1773, 0
      %v1853 = vsel %vm1791, %v1774, 0
      %v1856 = vsel %vm1791, %v1775, 0
      %v1859 = vsel %vm1791, %v1776, 0
      %v1862 = vsel %vm1791, %v1777, 0
      %v1865 = vsel %vm1791, %v1778, 0
      %v1868 = vsel %vm1791, %v1779, 0
      %v1871 = vsel %vm1791, %v1780, 0
      %v1874 = vsel %vm1791, %v1781, 0
      %v1877 = vsel %vm1791, %v1782, 0
      %v1880 = vsel %vm1791, %v1783, 0
      %v1883 = vsel %vm1791, %v1784, 0
      %v1886 = vsel %vm1791, %v1785, 0
      %vm1888 = vcmask 1045504
      %v1890 = vsel %vm1888, %v1790, 0
      %1892 = vmatpush.bf16.msra.mxu0 0
      %1893 = vmatpush.bf16.msra.mxu0 0
      %1894 = vmatpush.bf16.msra.mxu0 0
      %1895 = vmatpush.bf16.msra.mxu0 0
      %1896 = vmatpush.bf16.msra.mxu0 0
      %1897 = vmatpush.bf16.msra.mxu0 0
      %1898 = vmatpush.bf16.msra.mxu0 0
      %1899 = vmatpush.bf16.msra.mxu0 %v1890
      %1900 = vmatmul.bf16.gmra.mxu0 %v1793
      %v1901 = vpop.f32.mrf.mxu0
      %v1902 = vadd.f32 0.0, %v1901
      %v1903 = vpop.f32.mrf.mxu0
      %v1904 = vadd.f32 0.0, %v1903
      %1905 = vmatmul.bf16.gmra.mxu0 %v1796
      %v1906 = vpop.f32.mrf.mxu0
      %v1907 = vadd.f32 0.0, %v1906
      %v1908 = vpop.f32.mrf.mxu0
      %v1909 = vadd.f32 0.0, %v1908
      %1910 = vmatmul.bf16.gmra.mxu0 %v1799
      %v1911 = vpop.f32.mrf.mxu0
      %v1912 = vadd.f32 0.0, %v1911
      %v1913 = vpop.f32.mrf.mxu0
      %v1914 = vadd.f32 0.0, %v1913
      %1915 = vmatmul.bf16.gmra.mxu0 %v1802
      %v1916 = vpop.f32.mrf.mxu0
      %v1917 = vadd.f32 0.0, %v1916
      %v1918 = vpop.f32.mrf.mxu0
      %v1919 = vadd.f32 0.0, %v1918
      %1920 = vmatmul.bf16.gmra.mxu0 %v1805
      %v1921 = vpop.f32.mrf.mxu0
      %v1922 = vadd.f32 0.0, %v1921
      %v1923 = vpop.f32.mrf.mxu0
      %v1924 = vadd.f32 0.0, %v1923
      %1925 = vmatmul.bf16.gmra.mxu0 %v1808
      %v1926 = vpop.f32.mrf.mxu0
      %v1927 = vadd.f32 0.0, %v1926
      %v1928 = vpop.f32.mrf.mxu0
      %v1929 = vadd.f32 0.0, %v1928
      %1930 = vmatmul.bf16.gmra.mxu0 %v1811
      %v1931 = vpop.f32.mrf.mxu0
      %v1932 = vadd.f32 0.0, %v1931
      %v1933 = vpop.f32.mrf.mxu0
      %v1934 = vadd.f32 0.0, %v1933
      %1935 = vmatmul.bf16.gmra.mxu0 %v1814
      %v1936 = vpop.f32.mrf.mxu0
      %v1937 = vadd.f32 0.0, %v1936
      %v1938 = vpop.f32.mrf.mxu0
      %v1939 = vadd.f32 0.0, %v1938
      %1940 = vmatmul.bf16.gmra.mxu0 %v1817
      %v1941 = vpop.f32.mrf.mxu0
      %v1942 = vadd.f32 0.0, %v1941
      %v1943 = vpop.f32.mrf.mxu0
      %v1944 = vadd.f32 0.0, %v1943
      %1945 = vmatmul.bf16.gmra.mxu0 %v1820
      %v1946 = vpop.f32.mrf.mxu0
      %v1947 = vadd.f32 0.0, %v1946
      %v1948 = vpop.f32.mrf.mxu0
      %v1949 = vadd.f32 0.0, %v1948
      %1950 = vmatmul.bf16.gmra.mxu0 %v1823
      %v1951 = vpop.f32.mrf.mxu0
      %v1952 = vadd.f32 0.0, %v1951
      %v1953 = vpop.f32.mrf.mxu0
      %v1954 = vadd.f32 0.0, %v1953
      %1955 = vmatmul.bf16.gmra.mxu0 %v1826
      %v1956 = vpop.f32.mrf.mxu0
      %v1957 = vadd.f32 0.0, %v1956
      %v1958 = vpop.f32.mrf.mxu0
      %v1959 = vadd.f32 0.0, %v1958
      %1960 = vmatmul.bf16.gmra.mxu0 %v1829
      %v1961 = vpop.f32.mrf.mxu0
      %v1962 = vadd.f32 0.0, %v1961
      %v1963 = vpop.f32.mrf.mxu0
      %v1964 = vadd.f32 0.0, %v1963
      %1965 = vmatmul.bf16.gmra.mxu0 %v1832
      %v1966 = vpop.f32.mrf.mxu0
      %v1967 = vadd.f32 0.0, %v1966
      %v1968 = vpop.f32.mrf.mxu0
      %v1969 = vadd.f32 0.0, %v1968
      %1970 = vmatmul.bf16.gmra.mxu0 %v1835
      %v1971 = vpop.f32.mrf.mxu0
      %v1972 = vadd.f32 0.0, %v1971
      %v1973 = vpop.f32.mrf.mxu0
      %v1974 = vadd.f32 0.0, %v1973
      %1975 = vmatmul.bf16.gmra.mxu0 %v1838
      %v1976 = vpop.f32.mrf.mxu0
      %v1977 = vadd.f32 0.0, %v1976
      %v1978 = vpop.f32.mrf.mxu0
      %v1979 = vadd.f32 0.0, %v1978
      %1980 = vmatmul.bf16.gmra.mxu0 %v1841
      %v1981 = vpop.f32.mrf.mxu0
      %v1982 = vadd.f32 0.0, %v1981
      %v1983 = vpop.f32.mrf.mxu0
      %v1984 = vadd.f32 0.0, %v1983
      %1985 = vmatmul.bf16.gmra.mxu0 %v1844
      %v1986 = vpop.f32.mrf.mxu0
      %v1987 = vadd.f32 0.0, %v1986
      %v1988 = vpop.f32.mrf.mxu0
      %v1989 = vadd.f32 0.0, %v1988
      %1990 = vmatmul.bf16.gmra.mxu0 %v1847
      %v1991 = vpop.f32.mrf.mxu0
      %v1992 = vadd.f32 0.0, %v1991
      %v1993 = vpop.f32.mrf.mxu0
      %v1994 = vadd.f32 0.0, %v1993
      %1995 = vmatmul.bf16.gmra.mxu0 %v1850
      %v1996 = vpop.f32.mrf.mxu0
      %v1997 = vadd.f32 0.0, %v1996
      %v1998 = vpop.f32.mrf.mxu0
      %v1999 = vadd.f32 0.0, %v1998
      %2000 = vmatmul.bf16.gmra.mxu0 %v1853
      %v2001 = vpop.f32.mrf.mxu0
      %v2002 = vadd.f32 0.0, %v2001
      %v2003 = vpop.f32.mrf.mxu0
      %v2004 = vadd.f32 0.0, %v2003
      %2005 = vmatmul.bf16.gmra.mxu0 %v1856
      %v2006 = vpop.f32.mrf.mxu0
      %v2007 = vadd.f32 0.0, %v2006
      %v2008 = vpop.f32.mrf.mxu0
      %v2009 = vadd.f32 0.0, %v2008
      %2010 = vmatmul.bf16.gmra.mxu0 %v1859
      %v2011 = vpop.f32.mrf.mxu0
      %v2012 = vadd.f32 0.0, %v2011
      %v2013 = vpop.f32.mrf.mxu0
      %v2014 = vadd.f32 0.0, %v2013
      %2015 = vmatmul.bf16.gmra.mxu0 %v1862
      %v2016 = vpop.f32.mrf.mxu0
      %v2017 = vadd.f32 0.0, %v2016
      %v2018 = vpop.f32.mrf.mxu0
      %v2019 = vadd.f32 0.0, %v2018
      %2020 = vmatmul.bf16.gmra.mxu0 %v1865
      %v2021 = vpop.f32.mrf.mxu0
      %v2022 = vadd.f32 0.0, %v2021
      %v2023 = vpop.f32.mrf.mxu0
      %v2024 = vadd.f32 0.0, %v2023
      %2025 = vmatmul.bf16.gmra.mxu0 %v1868
      %v2026 = vpop.f32.mrf.mxu0
      %v2027 = vadd.f32 0.0, %v2026
      %v2028 = vpop.f32.mrf.mxu0
      %v2029 = vadd.f32 0.0, %v2028
      %2030 = vmatmul.bf16.gmra.mxu0 %v1871
      %v2031 = vpop.f32.mrf.mxu0
      %v2032 = vadd.f32 0.0, %v2031
      %v2033 = vpop.f32.mrf.mxu0
      %v2034 = vadd.f32 0.0, %v2033
      %2035 = vmatmul.bf16.gmra.mxu0 %v1874
      %v2036 = vpop.f32.mrf.mxu0
      %v2037 = vadd.f32 0.0, %v2036
      %v2038 = vpop.f32.mrf.mxu0
      %v2039 = vadd.f32 0.0, %v2038
      %2040 = vmatmul.bf16.gmra.mxu0 %v1877
      %v2041 = vpop.f32.mrf.mxu0
      %v2042 = vadd.f32 0.0, %v2041
      %v2043 = vpop.f32.mrf.mxu0
      %v2044 = vadd.f32 0.0, %v2043
      %2045 = vmatmul.bf16.gmra.mxu0 %v1880
      %v2046 = vpop.f32.mrf.mxu0
      %v2047 = vadd.f32 0.0, %v2046
      %v2048 = vpop.f32.mrf.mxu0
      %v2049 = vadd.f32 0.0, %v2048
      %2050 = vmatmul.bf16.gmra.mxu0 %v1883
      %v2051 = vpop.f32.mrf.mxu0
      %v2052 = vadd.f32 0.0, %v2051
      %v2053 = vpop.f32.mrf.mxu0
      %v2054 = vadd.f32 0.0, %v2053
      %2055 = vmatmul.bf16.gmra.mxu0 %v1886
      %v2056 = vpop.f32.mrf.mxu0
      %v2057 = vadd.f32 0.0, %v2056
      %v2058 = vpop.f32.mrf.mxu0
      %v2059 = vadd.f32 0.0, %v2058
      %2060 = vdwg.mxu0
      %v2065 = vunpack.c.l.b16 %v1553
      %v2066 = vunpack.c.l.b16 %v1554
      %v2067 = vunpack.c.l.b16 %v1555
      %v2068 = vunpack.c.l.b16 %v1556
      %v2069 = vpack.c.b16 %v2066, %v2065
      %v2070 = vpack.c.b16 %v2068, %v2067
      %v2073 = vunpack.c.l.b16 %v1617
      %v2074 = vunpack.c.l.b16 %v1618
      %v2075 = vpack.c.b16 %v2074, %v2073
      %v2077 = vsel %vm1791, %v2069, 0
      %v2080 = vsel %vm1791, %v2070, 0
      %v2083 = vsel %vm1888, %v2075, 0
      %2085 = vmatpush.bf16.msra.mxu0 0
      %2086 = vmatpush.bf16.msra.mxu0 0
      %2087 = vmatpush.bf16.msra.mxu0 0
      %2088 = vmatpush.bf16.msra.mxu0 0
      %2089 = vmatpush.bf16.msra.mxu0 0
      %2090 = vmatpush.bf16.msra.mxu0 0
      %2091 = vmatpush.bf16.msra.mxu0 0
      %2092 = vmatpush.bf16.msra.mxu0 %v2083
      %2093 = vmatmul.bf16.gmra.mxu0 %v2077
      %v2094 = vpop.f32.mrf.mxu0
      %v2095 = vadd.f32 %v1902, %v2094
      %v2096 = vpop.f32.mrf.mxu0
      %v2097 = vadd.f32 %v1904, %v2096
      %2098 = vmatmul.bf16.gmra.mxu0 %v2080
      %v2099 = vpop.f32.mrf.mxu0
      %v2100 = vadd.f32 %v1907, %v2099
      %v2101 = vpop.f32.mrf.mxu0
      %v2102 = vadd.f32 %v1909, %v2101
      %2103 = vmatmul.bf16.gmra.mxu0 %v1793
      %v2104 = vpop.f32.mrf.mxu0
      %v2105 = vadd.f32 %v1912, %v2104
      %v2106 = vpop.f32.mrf.mxu0
      %v2107 = vadd.f32 %v1914, %v2106
      %2108 = vmatmul.bf16.gmra.mxu0 %v1796
      %v2109 = vpop.f32.mrf.mxu0
      %v2110 = vadd.f32 %v1917, %v2109
      %v2111 = vpop.f32.mrf.mxu0
      %v2112 = vadd.f32 %v1919, %v2111
      %2113 = vmatmul.bf16.gmra.mxu0 %v1799
      %v2114 = vpop.f32.mrf.mxu0
      %v2115 = vadd.f32 %v1922, %v2114
      %v2116 = vpop.f32.mrf.mxu0
      %v2117 = vadd.f32 %v1924, %v2116
      %2118 = vmatmul.bf16.gmra.mxu0 %v1802
      %v2119 = vpop.f32.mrf.mxu0
      %v2120 = vadd.f32 %v1927, %v2119
      %v2121 = vpop.f32.mrf.mxu0
      %v2122 = vadd.f32 %v1929, %v2121
      %2123 = vmatmul.bf16.gmra.mxu0 %v1805
      %v2124 = vpop.f32.mrf.mxu0
      %v2125 = vadd.f32 %v1932, %v2124
      %v2126 = vpop.f32.mrf.mxu0
      %v2127 = vadd.f32 %v1934, %v2126
      %2128 = vmatmul.bf16.gmra.mxu0 %v1808
      %v2129 = vpop.f32.mrf.mxu0
      %v2130 = vadd.f32 %v1937, %v2129
      %v2131 = vpop.f32.mrf.mxu0
      %v2132 = vadd.f32 %v1939, %v2131
      %2133 = vmatmul.bf16.gmra.mxu0 %v1811
      %v2134 = vpop.f32.mrf.mxu0
      %v2135 = vadd.f32 %v1942, %v2134
      %v2136 = vpop.f32.mrf.mxu0
      %v2137 = vadd.f32 %v1944, %v2136
      %2138 = vmatmul.bf16.gmra.mxu0 %v1814
      %v2139 = vpop.f32.mrf.mxu0
      %v2140 = vadd.f32 %v1947, %v2139
      %v2141 = vpop.f32.mrf.mxu0
      %v2142 = vadd.f32 %v1949, %v2141
      %2143 = vmatmul.bf16.gmra.mxu0 %v1817
      %v2144 = vpop.f32.mrf.mxu0
      %v2145 = vadd.f32 %v1952, %v2144
      %v2146 = vpop.f32.mrf.mxu0
      %v2147 = vadd.f32 %v1954, %v2146
      %2148 = vmatmul.bf16.gmra.mxu0 %v1820
      %v2149 = vpop.f32.mrf.mxu0
      %v2150 = vadd.f32 %v1957, %v2149
      %v2151 = vpop.f32.mrf.mxu0
      %v2152 = vadd.f32 %v1959, %v2151
      %2153 = vmatmul.bf16.gmra.mxu0 %v1823
      %v2154 = vpop.f32.mrf.mxu0
      %v2155 = vadd.f32 %v1962, %v2154
      %v2156 = vpop.f32.mrf.mxu0
      %v2157 = vadd.f32 %v1964, %v2156
      %2158 = vmatmul.bf16.gmra.mxu0 %v1826
      %v2159 = vpop.f32.mrf.mxu0
      %v2160 = vadd.f32 %v1967, %v2159
      %v2161 = vpop.f32.mrf.mxu0
      %v2162 = vadd.f32 %v1969, %v2161
      %2163 = vmatmul.bf16.gmra.mxu0 %v1829
      %v2164 = vpop.f32.mrf.mxu0
      %v2165 = vadd.f32 %v1972, %v2164
      %v2166 = vpop.f32.mrf.mxu0
      %v2167 = vadd.f32 %v1974, %v2166
      %2168 = vmatmul.bf16.gmra.mxu0 %v1832
      %v2169 = vpop.f32.mrf.mxu0
      %v2170 = vadd.f32 %v1977, %v2169
      %v2171 = vpop.f32.mrf.mxu0
      %v2172 = vadd.f32 %v1979, %v2171
      %2173 = vmatmul.bf16.gmra.mxu0 %v1835
      %v2174 = vpop.f32.mrf.mxu0
      %v2175 = vadd.f32 %v1982, %v2174
      %v2176 = vpop.f32.mrf.mxu0
      %v2177 = vadd.f32 %v1984, %v2176
      %2178 = vmatmul.bf16.gmra.mxu0 %v1838
      %v2179 = vpop.f32.mrf.mxu0
      %v2180 = vadd.f32 %v1987, %v2179
      %v2181 = vpop.f32.mrf.mxu0
      %v2182 = vadd.f32 %v1989, %v2181
      %2183 = vmatmul.bf16.gmra.mxu0 %v1841
      %v2184 = vpop.f32.mrf.mxu0
      %v2185 = vadd.f32 %v1992, %v2184
      %v2186 = vpop.f32.mrf.mxu0
      %v2187 = vadd.f32 %v1994, %v2186
      %2188 = vmatmul.bf16.gmra.mxu0 %v1844
      %v2189 = vpop.f32.mrf.mxu0
      %v2190 = vadd.f32 %v1997, %v2189
      %v2191 = vpop.f32.mrf.mxu0
      %v2192 = vadd.f32 %v1999, %v2191
      %2193 = vmatmul.bf16.gmra.mxu0 %v1847
      %v2194 = vpop.f32.mrf.mxu0
      %v2195 = vadd.f32 %v2002, %v2194
      %v2196 = vpop.f32.mrf.mxu0
      %v2197 = vadd.f32 %v2004, %v2196
      %2198 = vmatmul.bf16.gmra.mxu0 %v1850
      %v2199 = vpop.f32.mrf.mxu0
      %v2200 = vadd.f32 %v2007, %v2199
      %v2201 = vpop.f32.mrf.mxu0
      %v2202 = vadd.f32 %v2009, %v2201
      %2203 = vmatmul.bf16.gmra.mxu0 %v1853
      %v2204 = vpop.f32.mrf.mxu0
      %v2205 = vadd.f32 %v2012, %v2204
      %v2206 = vpop.f32.mrf.mxu0
      %v2207 = vadd.f32 %v2014, %v2206
      %2208 = vmatmul.bf16.gmra.mxu0 %v1856
      %v2209 = vpop.f32.mrf.mxu0
      %v2210 = vadd.f32 %v2017, %v2209
      %v2211 = vpop.f32.mrf.mxu0
      %v2212 = vadd.f32 %v2019, %v2211
      %2213 = vmatmul.bf16.gmra.mxu0 %v1859
      %v2214 = vpop.f32.mrf.mxu0
      %v2215 = vadd.f32 %v2022, %v2214
      %v2216 = vpop.f32.mrf.mxu0
      %v2217 = vadd.f32 %v2024, %v2216
      %2218 = vmatmul.bf16.gmra.mxu0 %v1862
      %v2219 = vpop.f32.mrf.mxu0
      %v2220 = vadd.f32 %v2027, %v2219
      %v2221 = vpop.f32.mrf.mxu0
      %v2222 = vadd.f32 %v2029, %v2221
      %2223 = vmatmul.bf16.gmra.mxu0 %v1865
      %v2224 = vpop.f32.mrf.mxu0
      %v2225 = vadd.f32 %v2032, %v2224
      %v2226 = vpop.f32.mrf.mxu0
      %v2227 = vadd.f32 %v2034, %v2226
      %2228 = vmatmul.bf16.gmra.mxu0 %v1868
      %v2229 = vpop.f32.mrf.mxu0
      %v2230 = vadd.f32 %v2037, %v2229
      %v2231 = vpop.f32.mrf.mxu0
      %v2232 = vadd.f32 %v2039, %v2231
      %2233 = vmatmul.bf16.gmra.mxu0 %v1871
      %v2234 = vpop.f32.mrf.mxu0
      %v2235 = vadd.f32 %v2042, %v2234
      %v2236 = vpop.f32.mrf.mxu0
      %v2237 = vadd.f32 %v2044, %v2236
      %2238 = vmatmul.bf16.gmra.mxu0 %v1874
      %v2239 = vpop.f32.mrf.mxu0
      %v2240 = vadd.f32 %v2047, %v2239
      %v2241 = vpop.f32.mrf.mxu0
      %v2242 = vadd.f32 %v2049, %v2241
      %2243 = vmatmul.bf16.gmra.mxu0 %v1877
      %v2244 = vpop.f32.mrf.mxu0
      %v2245 = vadd.f32 %v2052, %v2244
      %v2246 = vpop.f32.mrf.mxu0
      %v2247 = vadd.f32 %v2054, %v2246
      %2248 = vmatmul.bf16.gmra.mxu0 %v1880
      %v2249 = vpop.f32.mrf.mxu0
      %v2250 = vadd.f32 %v2057, %v2249
      %v2251 = vpop.f32.mrf.mxu0
      %v2252 = vadd.f32 %v2059, %v2251
      %2253 = vdwg.mxu0
      %v2254 = vld [vmem:[#allocation2 + $0x20] sm:$0xf]
      %v2255 = vld [vmem:[#allocation2 + $0x24] sm:$0xf]
      %v2256 = vld [vmem:[#allocation2 + $0x28] sm:$0xf]
      %v2257 = vld [vmem:[#allocation2 + $0x2c] sm:$0xf]
      %v2258 = vld [vmem:[#allocation2 + $0x30] sm:$0xf]
      %v2259 = vld [vmem:[#allocation2 + $0x34] sm:$0xf]
      %v2260 = vld [vmem:[#allocation2 + $0x38] sm:$0xf]
      %v2261 = vld [vmem:[#allocation2 + $0x3c] sm:$0xf]
      %v2262 = vld [vmem:[#allocation2 + $0x40] sm:$0xf]
      %v2263 = vld [vmem:[#allocation2 + $0x44] sm:$0xf]
      %v2264 = vld [vmem:[#allocation2 + $0x48] sm:$0xf]
      %v2265 = vld [vmem:[#allocation2 + $0x4c] sm:$0xf]
      %v2266 = vld [vmem:[#allocation2 + $0x50] sm:$0xf]
      %v2267 = vld [vmem:[#allocation2 + $0x54] sm:$0xf]
      %v2268 = vld [vmem:[#allocation2 + $0x58] sm:$0xf]
      %v2269 = vld [vmem:[#allocation2 + $0x5c] sm:$0xf]
      %v2270 = vld [vmem:[#allocation2 + $0x60] sm:$0xf]
      %v2271 = vld [vmem:[#allocation2 + $0x64] sm:$0xf]
      %v2272 = vld [vmem:[#allocation2 + $0x68] sm:$0xf]
      %v2273 = vld [vmem:[#allocation2 + $0x6c] sm:$0xf]
      %v2274 = vld [vmem:[#allocation2 + $0x70] sm:$0xf]
      %v2275 = vld [vmem:[#allocation2 + $0x74] sm:$0xf]
      %v2276 = vld [vmem:[#allocation2 + $0x78] sm:$0xf]
      %v2277 = vld [vmem:[#allocation2 + $0x7c] sm:$0xf]
      %v2278 = vld [vmem:[#allocation2 + $0x80] sm:$0xf]
      %v2279 = vld [vmem:[#allocation2 + $0x84] sm:$0xf]
      %v2280 = vld [vmem:[#allocation2 + $0x88] sm:$0xf]
      %v2281 = vld [vmem:[#allocation2 + $0x8c] sm:$0xf]
      %v2282 = vld [vmem:[#allocation2 + $0x90] sm:$0xf]
      %v2283 = vld [vmem:[#allocation2 + $0x94] sm:$0xf]
      %v2284 = vld [vmem:[#allocation2 + $0x98] sm:$0xf]
      %v2285 = vld [vmem:[#allocation2 + $0x9c] sm:$0xf]
      %v2286 = vld [vmem:[#allocation2 + $0xa0] sm:$0xf]
      %v2287 = vld [vmem:[#allocation2 + $0xa4] sm:$0xf]
      %v2288 = vld [vmem:[#allocation2 + $0xa8] sm:$0xf]
      %v2289 = vld [vmem:[#allocation2 + $0xac] sm:$0xf]
      %v2290 = vld [vmem:[#allocation2 + $0xb0] sm:$0xf]
      %v2291 = vld [vmem:[#allocation2 + $0xb4] sm:$0xf]
      %v2292 = vld [vmem:[#allocation2 + $0xb8] sm:$0xf]
      %v2293 = vld [vmem:[#allocation2 + $0xbc] sm:$0xf]
      %v2294 = vld [vmem:[#allocation2 + $0xc0] sm:$0xf]
      %v2295 = vld [vmem:[#allocation2 + $0xc4] sm:$0xf]
      %v2296 = vld [vmem:[#allocation2 + $0xc8] sm:$0xf]
      %v2297 = vld [vmem:[#allocation2 + $0xcc] sm:$0xf]
      %v2298 = vld [vmem:[#allocation2 + $0xd0] sm:$0xf]
      %v2299 = vld [vmem:[#allocation2 + $0xd4] sm:$0xf]
      %v2300 = vld [vmem:[#allocation2 + $0xd8] sm:$0xf]
      %v2301 = vld [vmem:[#allocation2 + $0xdc] sm:$0xf]
      %v2302 = vld [vmem:[#allocation2 + $0xe0] sm:$0xf]
      %v2303 = vld [vmem:[#allocation2 + $0xe4] sm:$0xf]
      %v2304 = vld [vmem:[#allocation2 + $0xe8] sm:$0xf]
      %v2305 = vld [vmem:[#allocation2 + $0xec] sm:$0xf]
      %v2306 = vld [vmem:[#allocation2 + $0xf0] sm:$0xf]
      %v2307 = vld [vmem:[#allocation2 + $0xf4] sm:$0xf]
      %v2308 = vld [vmem:[#allocation2 + $0xf8] sm:$0xf]
      %v2309 = vld [vmem:[#allocation2 + $0xfc] sm:$0xf]
      %v2310 = vld [vmem:[#allocation2 + $0x100] sm:$0xf]
      %v2311 = vld [vmem:[#allocation2 + $0x104] sm:$0xf]
      %v2312 = vld [vmem:[#allocation2 + $0x108] sm:$0xf]
      %v2313 = vld [vmem:[#allocation2 + $0x10c] sm:$0xf]
      %v2314 = vld [vmem:[#allocation2 + $0x110] sm:$0xf]
      %v2315 = vld [vmem:[#allocation2 + $0x114] sm:$0xf]
      %v2316 = vld [vmem:[#allocation2 + $0x118] sm:$0xf]
      %v2317 = vld [vmem:[#allocation2 + $0x11c] sm:$0xf]
      %s2318 = scalar_lea.vmem %s2, 16
      %v2319 = vld [vmem:[%s2318] sm:$0xf]
      %v2320 = vld [vmem:[%s2318 + $0x4] sm:$0x3]
      %v2385 = vunpack.c.l.b16 %v2254
      %v2386 = vunpack.c.l.b16 %v2255
      %v2387 = vunpack.c.l.b16 %v2256
      %v2388 = vunpack.c.l.b16 %v2257
      %v2389 = vunpack.c.l.b16 %v2258
      %v2390 = vunpack.c.l.b16 %v2259
      %v2391 = vunpack.c.l.b16 %v2260
      %v2392 = vunpack.c.l.b16 %v2261
      %v2393 = vunpack.c.l.b16 %v2262
      %v2394 = vunpack.c.l.b16 %v2263
      %v2395 = vunpack.c.l.b16 %v2264
      %v2396 = vunpack.c.l.b16 %v2265
      %v2397 = vunpack.c.l.b16 %v2266
      %v2398 = vunpack.c.l.b16 %v2267
      %v2399 = vunpack.c.l.b16 %v2268
      %v2400 = vunpack.c.l.b16 %v2269
      %v2401 = vunpack.c.l.b16 %v2270
      %v2402 = vunpack.c.l.b16 %v2271
      %v2403 = vunpack.c.l.b16 %v2272
      %v2404 = vunpack.c.l.b16 %v2273
      %v2405 = vunpack.c.l.b16 %v2274
      %v2406 = vunpack.c.l.b16 %v2275
      %v2407 = vunpack.c.l.b16 %v2276
      %v2408 = vunpack.c.l.b16 %v2277
      %v2409 = vunpack.c.l.b16 %v2278
      %v2410 = vunpack.c.l.b16 %v2279
      %v2411 = vunpack.c.l.b16 %v2280
      %v2412 = vunpack.c.l.b16 %v2281
      %v2413 = vunpack.c.l.b16 %v2282
      %v2414 = vunpack.c.l.b16 %v2283
      %v2415 = vunpack.c.l.b16 %v2284
      %v2416 = vunpack.c.l.b16 %v2285
      %v2417 = vunpack.c.l.b16 %v2286
      %v2418 = vunpack.c.l.b16 %v2287
      %v2419 = vunpack.c.l.b16 %v2288
      %v2420 = vunpack.c.l.b16 %v2289
      %v2421 = vunpack.c.l.b16 %v2290
      %v2422 = vunpack.c.l.b16 %v2291
      %v2423 = vunpack.c.l.b16 %v2292
      %v2424 = vunpack.c.l.b16 %v2293
      %v2425 = vunpack.c.l.b16 %v2294
      %v2426 = vunpack.c.l.b16 %v2295
      %v2427 = vunpack.c.l.b16 %v2296
      %v2428 = vunpack.c.l.b16 %v2297
      %v2429 = vunpack.c.l.b16 %v2298
      %v2430 = vunpack.c.l.b16 %v2299
      %v2431 = vunpack.c.l.b16 %v2300
      %v2432 = vunpack.c.l.b16 %v2301
      %v2433 = vunpack.c.l.b16 %v2302
      %v2434 = vunpack.c.l.b16 %v2303
      %v2435 = vunpack.c.l.b16 %v2304
      %v2436 = vunpack.c.l.b16 %v2305
      %v2437 = vunpack.c.l.b16 %v2306
      %v2438 = vunpack.c.l.b16 %v2307
      %v2439 = vunpack.c.l.b16 %v2308
      %v2440 = vunpack.c.l.b16 %v2309
      %v2441 = vunpack.c.l.b16 %v2310
      %v2442 = vunpack.c.l.b16 %v2311
      %v2443 = vunpack.c.l.b16 %v2312
      %v2444 = vunpack.c.l.b16 %v2313
      %v2445 = vunpack.c.l.b16 %v2314
      %v2446 = vunpack.c.l.b16 %v2315
      %v2447 = vunpack.c.l.b16 %v2316
      %v2448 = vunpack.c.l.b16 %v2317
      %v2449 = vpack.c.b16 %v2386, %v2385
      %v2450 = vpack.c.b16 %v2388, %v2387
      %v2451 = vpack.c.b16 %v2390, %v2389
      %v2452 = vpack.c.b16 %v2392, %v2391
      %v2453 = vpack.c.b16 %v2394, %v2393
      %v2454 = vpack.c.b16 %v2396, %v2395
      %v2455 = vpack.c.b16 %v2398, %v2397
      %v2456 = vpack.c.b16 %v2400, %v2399
      %v2457 = vpack.c.b16 %v2402, %v2401
      %v2458 = vpack.c.b16 %v2404, %v2403
      %v2459 = vpack.c.b16 %v2406, %v2405
      %v2460 = vpack.c.b16 %v2408, %v2407
      %v2461 = vpack.c.b16 %v2410, %v2409
      %v2462 = vpack.c.b16 %v2412, %v2411
      %v2463 = vpack.c.b16 %v2414, %v2413
      %v2464 = vpack.c.b16 %v2416, %v2415
      %v2465 = vpack.c.b16 %v2418, %v2417
      %v2466 = vpack.c.b16 %v2420, %v2419
      %v2467 = vpack.c.b16 %v2422, %v2421
      %v2468 = vpack.c.b16 %v2424, %v2423
      %v2469 = vpack.c.b16 %v2426, %v2425
      %v2470 = vpack.c.b16 %v2428, %v2427
      %v2471 = vpack.c.b16 %v2430, %v2429
      %v2472 = vpack.c.b16 %v2432, %v2431
      %v2473 = vpack.c.b16 %v2434, %v2433
      %v2474 = vpack.c.b16 %v2436, %v2435
      %v2475 = vpack.c.b16 %v2438, %v2437
      %v2476 = vpack.c.b16 %v2440, %v2439
      %v2477 = vpack.c.b16 %v2442, %v2441
      %v2478 = vpack.c.b16 %v2444, %v2443
      %v2479 = vpack.c.b16 %v2446, %v2445
      %v2480 = vpack.c.b16 %v2448, %v2447
      %v2483 = vunpack.c.l.b16 %v2319
      %v2484 = vunpack.c.l.b16 %v2320
      %v2485 = vpack.c.b16 %v2484, %v2483
      %v2487 = vsel %vm1791, %v2449, 0
      %v2490 = vsel %vm1791, %v2450, 0
      %v2493 = vsel %vm1791, %v2451, 0
      %v2496 = vsel %vm1791, %v2452, 0
      %v2499 = vsel %vm1791, %v2453, 0
      %v2502 = vsel %vm1791, %v2454, 0
      %v2505 = vsel %vm1791, %v2455, 0
      %v2508 = vsel %vm1791, %v2456, 0
      %v2511 = vsel %vm1791, %v2457, 0
      %v2514 = vsel %vm1791, %v2458, 0
      %v2517 = vsel %vm1791, %v2459, 0
      %v2520 = vsel %vm1791, %v2460, 0
      %v2523 = vsel %vm1791, %v2461, 0
      %v2526 = vsel %vm1791, %v2462, 0
      %v2529 = vsel %vm1791, %v2463, 0
      %v2532 = vsel %vm1791, %v2464, 0
      %v2535 = vsel %vm1791, %v2465, 0
      %v2538 = vsel %vm1791, %v2466, 0
      %v2541 = vsel %vm1791, %v2467, 0
      %v2544 = vsel %vm1791, %v2468, 0
      %v2547 = vsel %vm1791, %v2469, 0
      %v2550 = vsel %vm1791, %v2470, 0
      %v2553 = vsel %vm1791, %v2471, 0
      %v2556 = vsel %vm1791, %v2472, 0
      %v2559 = vsel %vm1791, %v2473, 0
      %v2562 = vsel %vm1791, %v2474, 0
      %v2565 = vsel %vm1791, %v2475, 0
      %v2568 = vsel %vm1791, %v2476, 0
      %v2571 = vsel %vm1791, %v2477, 0
      %v2574 = vsel %vm1791, %v2478, 0
      %v2577 = vsel %vm1791, %v2479, 0
      %v2580 = vsel %vm1791, %v2480, 0
      %v2583 = vsel %vm1888, %v2485, 0
      %2585 = vmatpush.bf16.msra.mxu0 0
      %2586 = vmatpush.bf16.msra.mxu0 0
      %2587 = vmatpush.bf16.msra.mxu0 0
      %2588 = vmatpush.bf16.msra.mxu0 0
      %2589 = vmatpush.bf16.msra.mxu0 0
      %2590 = vmatpush.bf16.msra.mxu0 0
      %2591 = vmatpush.bf16.msra.mxu0 0
      %2592 = vmatpush.bf16.msra.mxu0 %v2583
      %2593 = vmatmul.bf16.gmra.mxu0 %v2487
      %v2594 = vpop.f32.mrf.mxu0
      %v2595 = vadd.f32 0.0, %v2594
      %v2596 = vpop.f32.mrf.mxu0
      %v2597 = vadd.f32 0.0, %v2596
      %2598 = vmatmul.bf16.gmra.mxu0 %v2490
      %v2599 = vpop.f32.mrf.mxu0
      %v2600 = vadd.f32 0.0, %v2599
      %v2601 = vpop.f32.mrf.mxu0
      %v2602 = vadd.f32 0.0, %v2601
      %2603 = vmatmul.bf16.gmra.mxu0 %v2493
      %v2604 = vpop.f32.mrf.mxu0
      %v2605 = vadd.f32 0.0, %v2604
      %v2606 = vpop.f32.mrf.mxu0
      %v2607 = vadd.f32 0.0, %v2606
      %2608 = vmatmul.bf16.gmra.mxu0 %v2496
      %v2609 = vpop.f32.mrf.mxu0
      %v2610 = vadd.f32 0.0, %v2609
      %v2611 = vpop.f32.mrf.mxu0
      %v2612 = vadd.f32 0.0, %v2611
      %2613 = vmatmul.bf16.gmra.mxu0 %v2499
      %v2614 = vpop.f32.mrf.mxu0
      %v2615 = vadd.f32 0.0, %v2614
      %v2616 = vpop.f32.mrf.mxu0
      %v2617 = vadd.f32 0.0, %v2616
      %2618 = vmatmul.bf16.gmra.mxu0 %v2502
      %v2619 = vpop.f32.mrf.mxu0
      %v2620 = vadd.f32 0.0, %v2619
      %v2621 = vpop.f32.mrf.mxu0
      %v2622 = vadd.f32 0.0, %v2621
      %2623 = vmatmul.bf16.gmra.mxu0 %v2505
      %v2624 = vpop.f32.mrf.mxu0
      %v2625 = vadd.f32 0.0, %v2624
      %v2626 = vpop.f32.mrf.mxu0
      %v2627 = vadd.f32 0.0, %v2626
      %2628 = vmatmul.bf16.gmra.mxu0 %v2508
      %v2629 = vpop.f32.mrf.mxu0
      %v2630 = vadd.f32 0.0, %v2629
      %v2631 = vpop.f32.mrf.mxu0
      %v2632 = vadd.f32 0.0, %v2631
      %2633 = vmatmul.bf16.gmra.mxu0 %v2511
      %v2634 = vpop.f32.mrf.mxu0
      %v2635 = vadd.f32 0.0, %v2634
      %v2636 = vpop.f32.mrf.mxu0
      %v2637 = vadd.f32 0.0, %v2636
      %2638 = vmatmul.bf16.gmra.mxu0 %v2514
      %v2639 = vpop.f32.mrf.mxu0
      %v2640 = vadd.f32 0.0, %v2639
      %v2641 = vpop.f32.mrf.mxu0
      %v2642 = vadd.f32 0.0, %v2641
      %2643 = vmatmul.bf16.gmra.mxu0 %v2517
      %v2644 = vpop.f32.mrf.mxu0
      %v2645 = vadd.f32 0.0, %v2644
      %v2646 = vpop.f32.mrf.mxu0
      %v2647 = vadd.f32 0.0, %v2646
      %2648 = vmatmul.bf16.gmra.mxu0 %v2520
      %v2649 = vpop.f32.mrf.mxu0
      %v2650 = vadd.f32 0.0, %v2649
      %v2651 = vpop.f32.mrf.mxu0
      %v2652 = vadd.f32 0.0, %v2651
      %2653 = vmatmul.bf16.gmra.mxu0 %v2523
      %v2654 = vpop.f32.mrf.mxu0
      %v2655 = vadd.f32 0.0, %v2654
      %v2656 = vpop.f32.mrf.mxu0
      %v2657 = vadd.f32 0.0, %v2656
      %2658 = vmatmul.bf16.gmra.mxu0 %v2526
      %v2659 = vpop.f32.mrf.mxu0
      %v2660 = vadd.f32 0.0, %v2659
      %v2661 = vpop.f32.mrf.mxu0
      %v2662 = vadd.f32 0.0, %v2661
      %2663 = vmatmul.bf16.gmra.mxu0 %v2529
      %v2664 = vpop.f32.mrf.mxu0
      %v2665 = vadd.f32 0.0, %v2664
      %v2666 = vpop.f32.mrf.mxu0
      %v2667 = vadd.f32 0.0, %v2666
      %2668 = vmatmul.bf16.gmra.mxu0 %v2532
      %v2669 = vpop.f32.mrf.mxu0
      %v2670 = vadd.f32 0.0, %v2669
      %v2671 = vpop.f32.mrf.mxu0
      %v2672 = vadd.f32 0.0, %v2671
      %2673 = vmatmul.bf16.gmra.mxu0 %v2535
      %v2674 = vpop.f32.mrf.mxu0
      %v2675 = vadd.f32 0.0, %v2674
      %v2676 = vpop.f32.mrf.mxu0
      %v2677 = vadd.f32 0.0, %v2676
      %2678 = vmatmul.bf16.gmra.mxu0 %v2538
      %v2679 = vpop.f32.mrf.mxu0
      %v2680 = vadd.f32 0.0, %v2679
      %v2681 = vpop.f32.mrf.mxu0
      %v2682 = vadd.f32 0.0, %v2681
      %2683 = vmatmul.bf16.gmra.mxu0 %v2541
      %v2684 = vpop.f32.mrf.mxu0
      %v2685 = vadd.f32 0.0, %v2684
      %v2686 = vpop.f32.mrf.mxu0
      %v2687 = vadd.f32 0.0, %v2686
      %2688 = vmatmul.bf16.gmra.mxu0 %v2544
      %v2689 = vpop.f32.mrf.mxu0
      %v2690 = vadd.f32 0.0, %v2689
      %v2691 = vpop.f32.mrf.mxu0
      %v2692 = vadd.f32 0.0, %v2691
      %2693 = vmatmul.bf16.gmra.mxu0 %v2547
      %v2694 = vpop.f32.mrf.mxu0
      %v2695 = vadd.f32 0.0, %v2694
      %v2696 = vpop.f32.mrf.mxu0
      %v2697 = vadd.f32 0.0, %v2696
      %2698 = vmatmul.bf16.gmra.mxu0 %v2550
      %v2699 = vpop.f32.mrf.mxu0
      %v2700 = vadd.f32 0.0, %v2699
      %v2701 = vpop.f32.mrf.mxu0
      %v2702 = vadd.f32 0.0, %v2701
      %2703 = vmatmul.bf16.gmra.mxu0 %v2553
      %v2704 = vpop.f32.mrf.mxu0
      %v2705 = vadd.f32 0.0, %v2704
      %v2706 = vpop.f32.mrf.mxu0
      %v2707 = vadd.f32 0.0, %v2706
      %2708 = vmatmul.bf16.gmra.mxu0 %v2556
      %v2709 = vpop.f32.mrf.mxu0
      %v2710 = vadd.f32 0.0, %v2709
      %v2711 = vpop.f32.mrf.mxu0
      %v2712 = vadd.f32 0.0, %v2711
      %2713 = vmatmul.bf16.gmra.mxu0 %v2559
      %v2714 = vpop.f32.mrf.mxu0
      %v2715 = vadd.f32 0.0, %v2714
      %v2716 = vpop.f32.mrf.mxu0
      %v2717 = vadd.f32 0.0, %v2716
      %2718 = vmatmul.bf16.gmra.mxu0 %v2562
      %v2719 = vpop.f32.mrf.mxu0
      %v2720 = vadd.f32 0.0, %v2719
      %v2721 = vpop.f32.mrf.mxu0
      %v2722 = vadd.f32 0.0, %v2721
      %2723 = vmatmul.bf16.gmra.mxu0 %v2565
      %v2724 = vpop.f32.mrf.mxu0
      %v2725 = vadd.f32 0.0, %v2724
      %v2726 = vpop.f32.mrf.mxu0
      %v2727 = vadd.f32 0.0, %v2726
      %2728 = vmatmul.bf16.gmra.mxu0 %v2568
      %v2729 = vpop.f32.mrf.mxu0
      %v2730 = vadd.f32 0.0, %v2729
      %v2731 = vpop.f32.mrf.mxu0
      %v2732 = vadd.f32 0.0, %v2731
      %2733 = vmatmul.bf16.gmra.mxu0 %v2571
      %v2734 = vpop.f32.mrf.mxu0
      %v2735 = vadd.f32 0.0, %v2734
      %v2736 = vpop.f32.mrf.mxu0
      %v2737 = vadd.f32 0.0, %v2736
      %2738 = vmatmul.bf16.gmra.mxu0 %v2574
      %v2739 = vpop.f32.mrf.mxu0
      %v2740 = vadd.f32 0.0, %v2739
      %v2741 = vpop.f32.mrf.mxu0
      %v2742 = vadd.f32 0.0, %v2741
      %2743 = vmatmul.bf16.gmra.mxu0 %v2577
      %v2744 = vpop.f32.mrf.mxu0
      %v2745 = vadd.f32 0.0, %v2744
      %v2746 = vpop.f32.mrf.mxu0
      %v2747 = vadd.f32 0.0, %v2746
      %2748 = vmatmul.bf16.gmra.mxu0 %v2580
      %v2749 = vpop.f32.mrf.mxu0
      %v2750 = vadd.f32 0.0, %v2749
      %v2751 = vpop.f32.mrf.mxu0
      %v2752 = vadd.f32 0.0, %v2751
      %2753 = vdwg.mxu0
      %v2754 = vadd.f32 %v2095, %v2595
      %v2755 = vadd.f32 %v2097, %v2597
      %v2756 = vadd.f32 %v2100, %v2600
      %v2757 = vadd.f32 %v2102, %v2602
      %v2758 = vadd.f32 %v2105, %v2605
      %v2759 = vadd.f32 %v2107, %v2607
      %v2760 = vadd.f32 %v2110, %v2610
      %v2761 = vadd.f32 %v2112, %v2612
      %v2762 = vadd.f32 %v2115, %v2615
      %v2763 = vadd.f32 %v2117, %v2617
      %v2764 = vadd.f32 %v2120, %v2620
      %v2765 = vadd.f32 %v2122, %v2622
      %v2766 = vadd.f32 %v2125, %v2625
      %v2767 = vadd.f32 %v2127, %v2627
      %v2768 = vadd.f32 %v2130, %v2630
      %v2769 = vadd.f32 %v2132, %v2632
      %v2770 = vadd.f32 %v2135, %v2635
      %v2771 = vadd.f32 %v2137, %v2637
      %v2772 = vadd.f32 %v2140, %v2640
      %v2773 = vadd.f32 %v2142, %v2642
      %v2774 = vadd.f32 %v2145, %v2645
      %v2775 = vadd.f32 %v2147, %v2647
      %v2776 = vadd.f32 %v2150, %v2650
      %v2777 = vadd.f32 %v2152, %v2652
      %v2778 = vadd.f32 %v2155, %v2655
      %v2779 = vadd.f32 %v2157, %v2657
      %v2780 = vadd.f32 %v2160, %v2660
      %v2781 = vadd.f32 %v2162, %v2662
      %v2782 = vadd.f32 %v2165, %v2665
      %v2783 = vadd.f32 %v2167, %v2667
      %v2784 = vadd.f32 %v2170, %v2670
      %v2785 = vadd.f32 %v2172, %v2672
      %v2786 = vadd.f32 %v2175, %v2675
      %v2787 = vadd.f32 %v2177, %v2677
      %v2788 = vadd.f32 %v2180, %v2680
      %v2789 = vadd.f32 %v2182, %v2682
      %v2790 = vadd.f32 %v2185, %v2685
      %v2791 = vadd.f32 %v2187, %v2687
      %v2792 = vadd.f32 %v2190, %v2690
      %v2793 = vadd.f32 %v2192, %v2692
      %v2794 = vadd.f32 %v2195, %v2695
      %v2795 = vadd.f32 %v2197, %v2697
      %v2796 = vadd.f32 %v2200, %v2700
      %v2797 = vadd.f32 %v2202, %v2702
      %v2798 = vadd.f32 %v2205, %v2705
      %v2799 = vadd.f32 %v2207, %v2707
      %v2800 = vadd.f32 %v2210, %v2710
      %v2801 = vadd.f32 %v2212, %v2712
      %v2802 = vadd.f32 %v2215, %v2715
      %v2803 = vadd.f32 %v2217, %v2717
      %v2804 = vadd.f32 %v2220, %v2720
      %v2805 = vadd.f32 %v2222, %v2722
      %v2806 = vadd.f32 %v2225, %v2725
      %v2807 = vadd.f32 %v2227, %v2727
      %v2808 = vadd.f32 %v2230, %v2730
      %v2809 = vadd.f32 %v2232, %v2732
      %v2810 = vadd.f32 %v2235, %v2735
      %v2811 = vadd.f32 %v2237, %v2737
      %v2812 = vadd.f32 %v2240, %v2740
      %v2813 = vadd.f32 %v2242, %v2742
      %v2814 = vadd.f32 %v2245, %v2745
      %v2815 = vadd.f32 %v2247, %v2747
      %v2816 = vadd.f32 %v2250, %v2750
      %v2817 = vadd.f32 %v2252, %v2752
      %v2818 = vlaneseq
      %v2819 = vshrl.u32 %v2818, 7
      %v2820 = vadd.s32 %v2819, 8
      %v2821 = vadd.s32 %v2819, 16
      %v2822 = vadd.s32 %v2819, 24
      %v2823 = vadd.s32 %v2819, 32
      %v2824 = vadd.s32 %v2819, 40
      %v2825 = vadd.s32 %v2819, 48
      %v2826 = vadd.s32 %v2819, 56
      %v2827 = vadd.s32 %v2819, 64
      %v2828 = vadd.s32 %v2819, 72
      %v2829 = vadd.s32 %v2819, 80
      %v2830 = vadd.s32 %v2819, 88
      %v2831 = vadd.s32 %v2819, 96
      %v2832 = vadd.s32 %v2819, 104
      %v2833 = vadd.s32 %v2819, 112
      %v2834 = vadd.s32 %v2819, 120
      %v2835 = vadd.s32 %v2819, 128
      %v2836 = vadd.s32 %v2819, 136
      %v2837 = vadd.s32 %v2819, 144
      %v2838 = vadd.s32 %v2819, 152
      %v2839 = vadd.s32 %v2819, 160
      %v2840 = vadd.s32 %v2819, 168
      %v2841 = vadd.s32 %v2819, 176
      %v2842 = vadd.s32 %v2819, 184
      %v2843 = vadd.s32 %v2819, 192
      %v2844 = vadd.s32 %v2819, 200
      %v2845 = vadd.s32 %v2819, 208
      %v2846 = vadd.s32 %v2819, 216
      %v2847 = vadd.s32 %v2819, 224
      %v2848 = vadd.s32 %v2819, 232
      %v2849 = vadd.s32 %v2819, 240
      %v2850 = vadd.s32 %v2819, 248
      %v2851 = vadd.s32 %v2819, 256
      %v2852 = vadd.s32 %v2819, 264
      %v2853 = vadd.s32 %v2819, 272
      %v2854 = vadd.s32 %v2819, 280
      %v2855 = vadd.s32 %v2819, 288
      %v2856 = vadd.s32 %v2819, 296
      %v2857 = vadd.s32 %v2819, 304
      %v2858 = vadd.s32 %v2819, 312
      %v2859 = vadd.s32 %v2819, 320
      %v2860 = vadd.s32 %v2819, 328
      %v2861 = vadd.s32 %v2819, 336
      %v2862 = vadd.s32 %v2819, 344
      %v2863 = vadd.s32 %v2819, 352
      %v2864 = vadd.s32 %v2819, 360
      %v2865 = vadd.s32 %v2819, 368
      %v2866 = vadd.s32 %v2819, 376
      %v2867 = vadd.s32 %v2819, 384
      %v2868 = vadd.s32 %v2819, 392
      %v2869 = vadd.s32 %v2819, 400
      %v2870 = vadd.s32 %v2819, 408
      %v2871 = vadd.s32 %v2819, 416
      %v2872 = vadd.s32 %v2819, 424
      %v2873 = vadd.s32 %v2819, 432
      %v2874 = vadd.s32 %v2819, 440
      %v2875 = vadd.s32 %v2819, 448
      %v2876 = vadd.s32 %v2819, 456
      %v2877 = vadd.s32 %v2819, 464
      %v2878 = vadd.s32 %v2819, 472
      %v2879 = vadd.s32 %v2819, 480
      %v2880 = vadd.s32 %v2819, 488
      %v2881 = vadd.s32 %v2819, 496
      %v2882 = vadd.s32 %v2819, 504
      %vm2883 = vcmp.lt.s32.totalorder %v2819, 0
      %v2884 = vsub.s32 0, %v2819
      %v2885 = vsel %vm2883, %v2884, %v2819
      %v2886 = vshrl.u32 %v2885, 5
      %v2887 = vand.u32 %v2885, 31
      %v2888 = vsub.s32 0, %v2887
      %v2889 = vsel %vm2883, %v2888, %v2887
      %vm2890 = vcmp.lt.s32.totalorder %v2820, 0
      %v2891 = vsub.s32 0, %v2820
      %v2892 = vsel %vm2890, %v2891, %v2820
      %v2893 = vshrl.u32 %v2892, 5
      %v2894 = vand.u32 %v2892, 31
      %v2895 = vsub.s32 0, %v2894
      %v2896 = vsel %vm2890, %v2895, %v2894
      %vm2897 = vcmp.lt.s32.totalorder %v2821, 0
      %v2898 = vsub.s32 0, %v2821
      %v2899 = vsel %vm2897, %v2898, %v2821
      %v2900 = vshrl.u32 %v2899, 5
      %v2901 = vand.u32 %v2899, 31
      %v2902 = vsub.s32 0, %v2901
      %v2903 = vsel %vm2897, %v2902, %v2901
      %vm2904 = vcmp.lt.s32.totalorder %v2822, 0
      %v2905 = vsub.s32 0, %v2822
      %v2906 = vsel %vm2904, %v2905, %v2822
      %v2907 = vshrl.u32 %v2906, 5
      %v2908 = vand.u32 %v2906, 31
      %v2909 = vsub.s32 0, %v2908
      %v2910 = vsel %vm2904, %v2909, %v2908
      %vm2911 = vcmp.lt.s32.totalorder %v2823, 0
      %v2912 = vsub.s32 0, %v2823
      %v2913 = vsel %vm2911, %v2912, %v2823
      %v2914 = vshrl.u32 %v2913, 5
      %v2915 = vand.u32 %v2913, 31
      %v2916 = vsub.s32 0, %v2915
      %v2917 = vsel %vm2911, %v2916, %v2915
      %vm2918 = vcmp.lt.s32.totalorder %v2824, 0
      %v2919 = vsub.s32 0, %v2824
      %v2920 = vsel %vm2918, %v2919, %v2824
      %v2921 = vshrl.u32 %v2920, 5
      %v2922 = vand.u32 %v2920, 31
      %v2923 = vsub.s32 0, %v2922
      %v2924 = vsel %vm2918, %v2923, %v2922
      %vm2925 = vcmp.lt.s32.totalorder %v2825, 0
      %v2926 = vsub.s32 0, %v2825
      %v2927 = vsel %vm2925, %v2926, %v2825
      %v2928 = vshrl.u32 %v2927, 5
      %v2929 = vand.u32 %v2927, 31
      %v2930 = vsub.s32 0, %v2929
      %v2931 = vsel %vm2925, %v2930, %v2929
      %vm2932 = vcmp.lt.s32.totalorder %v2826, 0
      %v2933 = vsub.s32 0, %v2826
      %v2934 = vsel %vm2932, %v2933, %v2826
      %v2935 = vshrl.u32 %v2934, 5
      %v2936 = vand.u32 %v2934, 31
      %v2937 = vsub.s32 0, %v2936
      %v2938 = vsel %vm2932, %v2937, %v2936
      %vm2939 = vcmp.lt.s32.totalorder %v2827, 0
      %v2940 = vsub.s32 0, %v2827
      %v2941 = vsel %vm2939, %v2940, %v2827
      %v2942 = vshrl.u32 %v2941, 5
      %v2943 = vand.u32 %v2941, 31
      %v2944 = vsub.s32 0, %v2943
      %v2945 = vsel %vm2939, %v2944, %v2943
      %vm2946 = vcmp.lt.s32.totalorder %v2828, 0
      %v2947 = vsub.s32 0, %v2828
      %v2948 = vsel %vm2946, %v2947, %v2828
      %v2949 = vshrl.u32 %v2948, 5
      %v2950 = vand.u32 %v2948, 31
      %v2951 = vsub.s32 0, %v2950
      %v2952 = vsel %vm2946, %v2951, %v2950
      %vm2953 = vcmp.lt.s32.totalorder %v2829, 0
      %v2954 = vsub.s32 0, %v2829
      %v2955 = vsel %vm2953, %v2954, %v2829
      %v2956 = vshrl.u32 %v2955, 5
      %v2957 = vand.u32 %v2955, 31
      %v2958 = vsub.s32 0, %v2957
      %v2959 = vsel %vm2953, %v2958, %v2957
      %vm2960 = vcmp.lt.s32.totalorder %v2830, 0
      %v2961 = vsub.s32 0, %v2830
      %v2962 = vsel %vm2960, %v2961, %v2830
      %v2963 = vshrl.u32 %v2962, 5
      %v2964 = vand.u32 %v2962, 31
      %v2965 = vsub.s32 0, %v2964
      %v2966 = vsel %vm2960, %v2965, %v2964
      %vm2967 = vcmp.lt.s32.totalorder %v2831, 0
      %v2968 = vsub.s32 0, %v2831
      %v2969 = vsel %vm2967, %v2968, %v2831
      %v2970 = vshrl.u32 %v2969, 5
      %v2971 = vand.u32 %v2969, 31
      %v2972 = vsub.s32 0, %v2971
      %v2973 = vsel %vm2967, %v2972, %v2971
      %vm2974 = vcmp.lt.s32.totalorder %v2832, 0
      %v2975 = vsub.s32 0, %v2832
      %v2976 = vsel %vm2974, %v2975, %v2832
      %v2977 = vshrl.u32 %v2976, 5
      %v2978 = vand.u32 %v2976, 31
      %v2979 = vsub.s32 0, %v2978
      %v2980 = vsel %vm2974, %v2979, %v2978
      %vm2981 = vcmp.lt.s32.totalorder %v2833, 0
      %v2982 = vsub.s32 0, %v2833
      %v2983 = vsel %vm2981, %v2982, %v2833
      %v2984 = vshrl.u32 %v2983, 5
      %v2985 = vand.u32 %v2983, 31
      %v2986 = vsub.s32 0, %v2985
      %v2987 = vsel %vm2981, %v2986, %v2985
      %vm2988 = vcmp.lt.s32.totalorder %v2834, 0
      %v2989 = vsub.s32 0, %v2834
      %v2990 = vsel %vm2988, %v2989, %v2834
      %v2991 = vshrl.u32 %v2990, 5
      %v2992 = vand.u32 %v2990, 31
      %v2993 = vsub.s32 0, %v2992
      %v2994 = vsel %vm2988, %v2993, %v2992
      %vm2995 = vcmp.lt.s32.totalorder %v2835, 0
      %v2996 = vsub.s32 0, %v2835
      %v2997 = vsel %vm2995, %v2996, %v2835
      %v2998 = vshrl.u32 %v2997, 5
      %v2999 = vand.u32 %v2997, 31
      %v3000 = vsub.s32 0, %v2999
      %v3001 = vsel %vm2995, %v3000, %v2999
      %vm3002 = vcmp.lt.s32.totalorder %v2836, 0
      %v3003 = vsub.s32 0, %v2836
      %v3004 = vsel %vm3002, %v3003, %v2836
      %v3005 = vshrl.u32 %v3004, 5
      %v3006 = vand.u32 %v3004, 31
      %v3007 = vsub.s32 0, %v3006
      %v3008 = vsel %vm3002, %v3007, %v3006
      %vm3009 = vcmp.lt.s32.totalorder %v2837, 0
      %v3010 = vsub.s32 0, %v2837
      %v3011 = vsel %vm3009, %v3010, %v2837
      %v3012 = vshrl.u32 %v3011, 5
      %v3013 = vand.u32 %v3011, 31
      %v3014 = vsub.s32 0, %v3013
      %v3015 = vsel %vm3009, %v3014, %v3013
      %vm3016 = vcmp.lt.s32.totalorder %v2838, 0
      %v3017 = vsub.s32 0, %v2838
      %v3018 = vsel %vm3016, %v3017, %v2838
      %v3019 = vshrl.u32 %v3018, 5
      %v3020 = vand.u32 %v3018, 31
      %v3021 = vsub.s32 0, %v3020
      %v3022 = vsel %vm3016, %v3021, %v3020
      %vm3023 = vcmp.lt.s32.totalorder %v2839, 0
      %v3024 = vsub.s32 0, %v2839
      %v3025 = vsel %vm3023, %v3024, %v2839
      %v3026 = vshrl.u32 %v3025, 5
      %v3027 = vand.u32 %v3025, 31
      %v3028 = vsub.s32 0, %v3027
      %v3029 = vsel %vm3023, %v3028, %v3027
      %vm3030 = vcmp.lt.s32.totalorder %v2840, 0
      %v3031 = vsub.s32 0, %v2840
      %v3032 = vsel %vm3030, %v3031, %v2840
      %v3033 = vshrl.u32 %v3032, 5
      %v3034 = vand.u32 %v3032, 31
      %v3035 = vsub.s32 0, %v3034
      %v3036 = vsel %vm3030, %v3035, %v3034
      %vm3037 = vcmp.lt.s32.totalorder %v2841, 0
      %v3038 = vsub.s32 0, %v2841
      %v3039 = vsel %vm3037, %v3038, %v2841
      %v3040 = vshrl.u32 %v3039, 5
      %v3041 = vand.u32 %v3039, 31
      %v3042 = vsub.s32 0, %v3041
      %v3043 = vsel %vm3037, %v3042, %v3041
      %vm3044 = vcmp.lt.s32.totalorder %v2842, 0
      %v3045 = vsub.s32 0, %v2842
      %v3046 = vsel %vm3044, %v3045, %v2842
      %v3047 = vshrl.u32 %v3046, 5
      %v3048 = vand.u32 %v3046, 31
      %v3049 = vsub.s32 0, %v3048
      %v3050 = vsel %vm3044, %v3049, %v3048
      %vm3051 = vcmp.lt.s32.totalorder %v2843, 0
      %v3052 = vsub.s32 0, %v2843
      %v3053 = vsel %vm3051, %v3052, %v2843
      %v3054 = vshrl.u32 %v3053, 5
      %v3055 = vand.u32 %v3053, 31
      %v3056 = vsub.s32 0, %v3055
      %v3057 = vsel %vm3051, %v3056, %v3055
      %vm3058 = vcmp.lt.s32.totalorder %v2844, 0
      %v3059 = vsub.s32 0, %v2844
      %v3060 = vsel %vm3058, %v3059, %v2844
      %v3061 = vshrl.u32 %v3060, 5
      %v3062 = vand.u32 %v3060, 31
      %v3063 = vsub.s32 0, %v3062
      %v3064 = vsel %vm3058, %v3063, %v3062
      %vm3065 = vcmp.lt.s32.totalorder %v2845, 0
      %v3066 = vsub.s32 0, %v2845
      %v3067 = vsel %vm3065, %v3066, %v2845
      %v3068 = vshrl.u32 %v3067, 5
      %v3069 = vand.u32 %v3067, 31
      %v3070 = vsub.s32 0, %v3069
      %v3071 = vsel %vm3065, %v3070, %v3069
      %vm3072 = vcmp.lt.s32.totalorder %v2846, 0
      %v3073 = vsub.s32 0, %v2846
      %v3074 = vsel %vm3072, %v3073, %v2846
      %v3075 = vshrl.u32 %v3074, 5
      %v3076 = vand.u32 %v3074, 31
      %v3077 = vsub.s32 0, %v3076
      %v3078 = vsel %vm3072, %v3077, %v3076
      %vm3079 = vcmp.lt.s32.totalorder %v2847, 0
      %v3080 = vsub.s32 0, %v2847
      %v3081 = vsel %vm3079, %v3080, %v2847
      %v3082 = vshrl.u32 %v3081, 5
      %v3083 = vand.u32 %v3081, 31
      %v3084 = vsub.s32 0, %v3083
      %v3085 = vsel %vm3079, %v3084, %v3083
      %vm3086 = vcmp.lt.s32.totalorder %v2848, 0
      %v3087 = vsub.s32 0, %v2848
      %v3088 = vsel %vm3086, %v3087, %v2848
      %v3089 = vshrl.u32 %v3088, 5
      %v3090 = vand.u32 %v3088, 31
      %v3091 = vsub.s32 0, %v3090
      %v3092 = vsel %vm3086, %v3091, %v3090
      %vm3093 = vcmp.lt.s32.totalorder %v2849, 0
      %v3094 = vsub.s32 0, %v2849
      %v3095 = vsel %vm3093, %v3094, %v2849
      %v3096 = vshrl.u32 %v3095, 5
      %v3097 = vand.u32 %v3095, 31
      %v3098 = vsub.s32 0, %v3097
      %v3099 = vsel %vm3093, %v3098, %v3097
      %vm3100 = vcmp.lt.s32.totalorder %v2850, 0
      %v3101 = vsub.s32 0, %v2850
      %v3102 = vsel %vm3100, %v3101, %v2850
      %v3103 = vshrl.u32 %v3102, 5
      %v3104 = vand.u32 %v3102, 31
      %v3105 = vsub.s32 0, %v3104
      %v3106 = vsel %vm3100, %v3105, %v3104
      %vm3107 = vcmp.lt.s32.totalorder %v2851, 0
      %v3108 = vsub.s32 0, %v2851
      %v3109 = vsel %vm3107, %v3108, %v2851
      %v3110 = vshrl.u32 %v3109, 5
      %v3111 = vand.u32 %v3109, 31
      %v3112 = vsub.s32 0, %v3111
      %v3113 = vsel %vm3107, %v3112, %v3111
      %vm3114 = vcmp.lt.s32.totalorder %v2852, 0
      %v3115 = vsub.s32 0, %v2852
      %v3116 = vsel %vm3114, %v3115, %v2852
      %v3117 = vshrl.u32 %v3116, 5
      %v3118 = vand.u32 %v3116, 31
      %v3119 = vsub.s32 0, %v3118
      %v3120 = vsel %vm3114, %v3119, %v3118
      %vm3121 = vcmp.lt.s32.totalorder %v2853, 0
      %v3122 = vsub.s32 0, %v2853
      %v3123 = vsel %vm3121, %v3122, %v2853
      %v3124 = vshrl.u32 %v3123, 5
      %v3125 = vand.u32 %v3123, 31
      %v3126 = vsub.s32 0, %v3125
      %v3127 = vsel %vm3121, %v3126, %v3125
      %vm3128 = vcmp.lt.s32.totalorder %v2854, 0
      %v3129 = vsub.s32 0, %v2854
      %v3130 = vsel %vm3128, %v3129, %v2854
      %v3131 = vshrl.u32 %v3130, 5
      %v3132 = vand.u32 %v3130, 31
      %v3133 = vsub.s32 0, %v3132
      %v3134 = vsel %vm3128, %v3133, %v3132
      %vm3135 = vcmp.lt.s32.totalorder %v2855, 0
      %v3136 = vsub.s32 0, %v2855
      %v3137 = vsel %vm3135, %v3136, %v2855
      %v3138 = vshrl.u32 %v3137, 5
      %v3139 = vand.u32 %v3137, 31
      %v3140 = vsub.s32 0, %v3139
      %v3141 = vsel %vm3135, %v3140, %v3139
      %vm3142 = vcmp.lt.s32.totalorder %v2856, 0
      %v3143 = vsub.s32 0, %v2856
      %v3144 = vsel %vm3142, %v3143, %v2856
      %v3145 = vshrl.u32 %v3144, 5
      %v3146 = vand.u32 %v3144, 31
      %v3147 = vsub.s32 0, %v3146
      %v3148 = vsel %vm3142, %v3147, %v3146
      %vm3149 = vcmp.lt.s32.totalorder %v2857, 0
      %v3150 = vsub.s32 0, %v2857
      %v3151 = vsel %vm3149, %v3150, %v2857
      %v3152 = vshrl.u32 %v3151, 5
      %v3153 = vand.u32 %v3151, 31
      %v3154 = vsub.s32 0, %v3153
      %v3155 = vsel %vm3149, %v3154, %v3153
      %vm3156 = vcmp.lt.s32.totalorder %v2858, 0
      %v3157 = vsub.s32 0, %v2858
      %v3158 = vsel %vm3156, %v3157, %v2858
      %v3159 = vshrl.u32 %v3158, 5
      %v3160 = vand.u32 %v3158, 31
      %v3161 = vsub.s32 0, %v3160
      %v3162 = vsel %vm3156, %v3161, %v3160
      %vm3163 = vcmp.lt.s32.totalorder %v2859, 0
      %v3164 = vsub.s32 0, %v2859
      %v3165 = vsel %vm3163, %v3164, %v2859
      %v3166 = vshrl.u32 %v3165, 5
      %v3167 = vand.u32 %v3165, 31
      %v3168 = vsub.s32 0, %v3167
      %v3169 = vsel %vm3163, %v3168, %v3167
      %vm3170 = vcmp.lt.s32.totalorder %v2860, 0
      %v3171 = vsub.s32 0, %v2860
      %v3172 = vsel %vm3170, %v3171, %v2860
      %v3173 = vshrl.u32 %v3172, 5
      %v3174 = vand.u32 %v3172, 31
      %v3175 = vsub.s32 0, %v3174
      %v3176 = vsel %vm3170, %v3175, %v3174
      %vm3177 = vcmp.lt.s32.totalorder %v2861, 0
      %v3178 = vsub.s32 0, %v2861
      %v3179 = vsel %vm3177, %v3178, %v2861
      %v3180 = vshrl.u32 %v3179, 5
      %v3181 = vand.u32 %v3179, 31
      %v3182 = vsub.s32 0, %v3181
      %v3183 = vsel %vm3177, %v3182, %v3181
      %vm3184 = vcmp.lt.s32.totalorder %v2862, 0
      %v3185 = vsub.s32 0, %v2862
      %v3186 = vsel %vm3184, %v3185, %v2862
      %v3187 = vshrl.u32 %v3186, 5
      %v3188 = vand.u32 %v3186, 31
      %v3189 = vsub.s32 0, %v3188
      %v3190 = vsel %vm3184, %v3189, %v3188
      %vm3191 = vcmp.lt.s32.totalorder %v2863, 0
      %v3192 = vsub.s32 0, %v2863
      %v3193 = vsel %vm3191, %v3192, %v2863
      %v3194 = vshrl.u32 %v3193, 5
      %v3195 = vand.u32 %v3193, 31
      %v3196 = vsub.s32 0, %v3195
      %v3197 = vsel %vm3191, %v3196, %v3195
      %vm3198 = vcmp.lt.s32.totalorder %v2864, 0
      %v3199 = vsub.s32 0, %v2864
      %v3200 = vsel %vm3198, %v3199, %v2864
      %v3201 = vshrl.u32 %v3200, 5
      %v3202 = vand.u32 %v3200, 31
      %v3203 = vsub.s32 0, %v3202
      %v3204 = vsel %vm3198, %v3203, %v3202
      %vm3205 = vcmp.lt.s32.totalorder %v2865, 0
      %v3206 = vsub.s32 0, %v2865
      %v3207 = vsel %vm3205, %v3206, %v2865
      %v3208 = vshrl.u32 %v3207, 5
      %v3209 = vand.u32 %v3207, 31
      %v3210 = vsub.s32 0, %v3209
      %v3211 = vsel %vm3205, %v3210, %v3209
      %vm3212 = vcmp.lt.s32.totalorder %v2866, 0
      %v3213 = vsub.s32 0, %v2866
      %v3214 = vsel %vm3212, %v3213, %v2866
      %v3215 = vshrl.u32 %v3214, 5
      %v3216 = vand.u32 %v3214, 31
      %v3217 = vsub.s32 0, %v3216
      %v3218 = vsel %vm3212, %v3217, %v3216
      %vm3219 = vcmp.lt.s32.totalorder %v2867, 0
      %v3220 = vsub.s32 0, %v2867
      %v3221 = vsel %vm3219, %v3220, %v2867
      %v3222 = vshrl.u32 %v3221, 5
      %v3223 = vand.u32 %v3221, 31
      %v3224 = vsub.s32 0, %v3223
      %v3225 = vsel %vm3219, %v3224, %v3223
      %vm3226 = vcmp.lt.s32.totalorder %v2868, 0
      %v3227 = vsub.s32 0, %v2868
      %v3228 = vsel %vm3226, %v3227, %v2868
      %v3229 = vshrl.u32 %v3228, 5
      %v3230 = vand.u32 %v3228, 31
      %v3231 = vsub.s32 0, %v3230
      %v3232 = vsel %vm3226, %v3231, %v3230
      %vm3233 = vcmp.lt.s32.totalorder %v2869, 0
      %v3234 = vsub.s32 0, %v2869
      %v3235 = vsel %vm3233, %v3234, %v2869
      %v3236 = vshrl.u32 %v3235, 5
      %v3237 = vand.u32 %v3235, 31
      %v3238 = vsub.s32 0, %v3237
      %v3239 = vsel %vm3233, %v3238, %v3237
      %vm3240 = vcmp.lt.s32.totalorder %v2870, 0
      %v3241 = vsub.s32 0, %v2870
      %v3242 = vsel %vm3240, %v3241, %v2870
      %v3243 = vshrl.u32 %v3242, 5
      %v3244 = vand.u32 %v3242, 31
      %v3245 = vsub.s32 0, %v3244
      %v3246 = vsel %vm3240, %v3245, %v3244
      %vm3247 = vcmp.lt.s32.totalorder %v2871, 0
      %v3248 = vsub.s32 0, %v2871
      %v3249 = vsel %vm3247, %v3248, %v2871
      %v3250 = vshrl.u32 %v3249, 5
      %v3251 = vand.u32 %v3249, 31
      %v3252 = vsub.s32 0, %v3251
      %v3253 = vsel %vm3247, %v3252, %v3251
      %vm3254 = vcmp.lt.s32.totalorder %v2872, 0
      %v3255 = vsub.s32 0, %v2872
      %v3256 = vsel %vm3254, %v3255, %v2872
      %v3257 = vshrl.u32 %v3256, 5
      %v3258 = vand.u32 %v3256, 31
      %v3259 = vsub.s32 0, %v3258
      %v3260 = vsel %vm3254, %v3259, %v3258
      %vm3261 = vcmp.lt.s32.totalorder %v2873, 0
      %v3262 = vsub.s32 0, %v2873
      %v3263 = vsel %vm3261, %v3262, %v2873
      %v3264 = vshrl.u32 %v3263, 5
      %v3265 = vand.u32 %v3263, 31
      %v3266 = vsub.s32 0, %v3265
      %v3267 = vsel %vm3261, %v3266, %v3265
      %vm3268 = vcmp.lt.s32.totalorder %v2874, 0
      %v3269 = vsub.s32 0, %v2874
      %v3270 = vsel %vm3268, %v3269, %v2874
      %v3271 = vshrl.u32 %v3270, 5
      %v3272 = vand.u32 %v3270, 31
      %v3273 = vsub.s32 0, %v3272
      %v3274 = vsel %vm3268, %v3273, %v3272
      %vm3275 = vcmp.lt.s32.totalorder %v2875, 0
      %v3276 = vsub.s32 0, %v2875
      %v3277 = vsel %vm3275, %v3276, %v2875
      %v3278 = vshrl.u32 %v3277, 5
      %v3279 = vand.u32 %v3277, 31
      %v3280 = vsub.s32 0, %v3279
      %v3281 = vsel %vm3275, %v3280, %v3279
      %vm3282 = vcmp.lt.s32.totalorder %v2876, 0
      %v3283 = vsub.s32 0, %v2876
      %v3284 = vsel %vm3282, %v3283, %v2876
      %v3285 = vshrl.u32 %v3284, 5
      %v3286 = vand.u32 %v3284, 31
      %v3287 = vsub.s32 0, %v3286
      %v3288 = vsel %vm3282, %v3287, %v3286
      %vm3289 = vcmp.lt.s32.totalorder %v2877, 0
      %v3290 = vsub.s32 0, %v2877
      %v3291 = vsel %vm3289, %v3290, %v2877
      %v3292 = vshrl.u32 %v3291, 5
      %v3293 = vand.u32 %v3291, 31
      %v3294 = vsub.s32 0, %v3293
      %v3295 = vsel %vm3289, %v3294, %v3293
      %vm3296 = vcmp.lt.s32.totalorder %v2878, 0
      %v3297 = vsub.s32 0, %v2878
      %v3298 = vsel %vm3296, %v3297, %v2878
      %v3299 = vshrl.u32 %v3298, 5
      %v3300 = vand.u32 %v3298, 31
      %v3301 = vsub.s32 0, %v3300
      %v3302 = vsel %vm3296, %v3301, %v3300
      %vm3303 = vcmp.lt.s32.totalorder %v2879, 0
      %v3304 = vsub.s32 0, %v2879
      %v3305 = vsel %vm3303, %v3304, %v2879
      %v3306 = vshrl.u32 %v3305, 5
      %v3307 = vand.u32 %v3305, 31
      %v3308 = vsub.s32 0, %v3307
      %v3309 = vsel %vm3303, %v3308, %v3307
      %vm3310 = vcmp.lt.s32.totalorder %v2880, 0
      %v3311 = vsub.s32 0, %v2880
      %v3312 = vsel %vm3310, %v3311, %v2880
      %v3313 = vshrl.u32 %v3312, 5
      %v3314 = vand.u32 %v3312, 31
      %v3315 = vsub.s32 0, %v3314
      %v3316 = vsel %vm3310, %v3315, %v3314
      %vm3317 = vcmp.lt.s32.totalorder %v2881, 0
      %v3318 = vsub.s32 0, %v2881
      %v3319 = vsel %vm3317, %v3318, %v2881
      %v3320 = vshrl.u32 %v3319, 5
      %v3321 = vand.u32 %v3319, 31
      %v3322 = vsub.s32 0, %v3321
      %v3323 = vsel %vm3317, %v3322, %v3321
      %vm3324 = vcmp.lt.s32.totalorder %v2882, 0
      %v3325 = vsub.s32 0, %v2882
      %v3326 = vsel %vm3324, %v3325, %v2882
      %v3327 = vshrl.u32 %v3326, 5
      %v3328 = vand.u32 %v3326, 31
      %v3329 = vsub.s32 0, %v3328
      %v3330 = vsel %vm3324, %v3329, %v3328
      %vm3331 = vcmp.ne.s32.totalorder %v2889, 0
      %vm3332 = vcmp.ne.s32.totalorder %v2896, 0
      %vm3333 = vcmp.ne.s32.totalorder %v2903, 0
      %vm3334 = vcmp.ne.s32.totalorder %v2910, 0
      %vm3335 = vcmp.ne.s32.totalorder %v2917, 0
      %vm3336 = vcmp.ne.s32.totalorder %v2924, 0
      %vm3337 = vcmp.ne.s32.totalorder %v2931, 0
      %vm3338 = vcmp.ne.s32.totalorder %v2938, 0
      %vm3339 = vcmp.ne.s32.totalorder %v2945, 0
      %vm3340 = vcmp.ne.s32.totalorder %v2952, 0
      %vm3341 = vcmp.ne.s32.totalorder %v2959, 0
      %vm3342 = vcmp.ne.s32.totalorder %v2966, 0
      %vm3343 = vcmp.ne.s32.totalorder %v2973, 0
      %vm3344 = vcmp.ne.s32.totalorder %v2980, 0
      %vm3345 = vcmp.ne.s32.totalorder %v2987, 0
      %vm3346 = vcmp.ne.s32.totalorder %v2994, 0
      %vm3347 = vcmp.ne.s32.totalorder %v3001, 0
      %vm3348 = vcmp.ne.s32.totalorder %v3008, 0
      %vm3349 = vcmp.ne.s32.totalorder %v3015, 0
      %vm3350 = vcmp.ne.s32.totalorder %v3022, 0
      %vm3351 = vcmp.ne.s32.totalorder %v3029, 0
      %vm3352 = vcmp.ne.s32.totalorder %v3036, 0
      %vm3353 = vcmp.ne.s32.totalorder %v3043, 0
      %vm3354 = vcmp.ne.s32.totalorder %v3050, 0
      %vm3355 = vcmp.ne.s32.totalorder %v3057, 0
      %vm3356 = vcmp.ne.s32.totalorder %v3064, 0
      %vm3357 = vcmp.ne.s32.totalorder %v3071, 0
      %vm3358 = vcmp.ne.s32.totalorder %v3078, 0
      %vm3359 = vcmp.ne.s32.totalorder %v3085, 0
      %vm3360 = vcmp.ne.s32.totalorder %v3092, 0
      %vm3361 = vcmp.ne.s32.totalorder %v3099, 0
      %vm3362 = vcmp.ne.s32.totalorder %v3106, 0
      %vm3363 = vcmp.ne.s32.totalorder %v3113, 0
      %vm3364 = vcmp.ne.s32.totalorder %v3120, 0
      %vm3365 = vcmp.ne.s32.totalorder %v3127, 0
      %vm3366 = vcmp.ne.s32.totalorder %v3134, 0
      %vm3367 = vcmp.ne.s32.totalorder %v3141, 0
      %vm3368 = vcmp.ne.s32.totalorder %v3148, 0
      %vm3369 = vcmp.ne.s32.totalorder %v3155, 0
      %vm3370 = vcmp.ne.s32.totalorder %v3162, 0
      %vm3371 = vcmp.ne.s32.totalorder %v3169, 0
      %vm3372 = vcmp.ne.s32.totalorder %v3176, 0
      %vm3373 = vcmp.ne.s32.totalorder %v3183, 0
      %vm3374 = vcmp.ne.s32.totalorder %v3190, 0
      %vm3375 = vcmp.ne.s32.totalorder %v3197, 0
      %vm3376 = vcmp.ne.s32.totalorder %v3204, 0
      %vm3377 = vcmp.ne.s32.totalorder %v3211, 0
      %vm3378 = vcmp.ne.s32.totalorder %v3218, 0
      %vm3379 = vcmp.ne.s32.totalorder %v3225, 0
      %vm3380 = vcmp.ne.s32.totalorder %v3232, 0
      %vm3381 = vcmp.ne.s32.totalorder %v3239, 0
      %vm3382 = vcmp.ne.s32.totalorder %v3246, 0
      %vm3383 = vcmp.ne.s32.totalorder %v3253, 0
      %vm3384 = vcmp.ne.s32.totalorder %v3260, 0
      %vm3385 = vcmp.ne.s32.totalorder %v3267, 0
      %vm3386 = vcmp.ne.s32.totalorder %v3274, 0
      %vm3387 = vcmp.ne.s32.totalorder %v3281, 0
      %vm3388 = vcmp.ne.s32.totalorder %v3288, 0
      %vm3389 = vcmp.ne.s32.totalorder %v3295, 0
      %vm3390 = vcmp.ne.s32.totalorder %v3302, 0
      %vm3391 = vcmp.ne.s32.totalorder %v3309, 0
      %vm3392 = vcmp.ne.s32.totalorder %v3316, 0
      %vm3393 = vcmp.ne.s32.totalorder %v3323, 0
      %vm3394 = vcmp.ne.s32.totalorder %v3330, 0
      %vm3395 = vcmp.lt.s32.totalorder %v2889, 0
      %vm3396 = vcmp.lt.s32.totalorder %v2896, 0
      %vm3397 = vcmp.lt.s32.totalorder %v2903, 0
      %vm3398 = vcmp.lt.s32.totalorder %v2910, 0
      %vm3399 = vcmp.lt.s32.totalorder %v2917, 0
      %vm3400 = vcmp.lt.s32.totalorder %v2924, 0
      %vm3401 = vcmp.lt.s32.totalorder %v2931, 0
      %vm3402 = vcmp.lt.s32.totalorder %v2938, 0
      %vm3403 = vcmp.lt.s32.totalorder %v2945, 0
      %vm3404 = vcmp.lt.s32.totalorder %v2952, 0
      %vm3405 = vcmp.lt.s32.totalorder %v2959, 0
      %vm3406 = vcmp.lt.s32.totalorder %v2966, 0
      %vm3407 = vcmp.lt.s32.totalorder %v2973, 0
      %vm3408 = vcmp.lt.s32.totalorder %v2980, 0
      %vm3409 = vcmp.lt.s32.totalorder %v2987, 0
      %vm3410 = vcmp.lt.s32.totalorder %v2994, 0
      %vm3411 = vcmp.lt.s32.totalorder %v3001, 0
      %vm3412 = vcmp.lt.s32.totalorder %v3008, 0
      %vm3413 = vcmp.lt.s32.totalorder %v3015, 0
      %vm3414 = vcmp.lt.s32.totalorder %v3022, 0
      %vm3415 = vcmp.lt.s32.totalorder %v3029, 0
      %vm3416 = vcmp.lt.s32.totalorder %v3036, 0
      %vm3417 = vcmp.lt.s32.totalorder %v3043, 0
      %vm3418 = vcmp.lt.s32.totalorder %v3050, 0
      %vm3419 = vcmp.lt.s32.totalorder %v3057, 0
      %vm3420 = vcmp.lt.s32.totalorder %v3064, 0
      %vm3421 = vcmp.lt.s32.totalorder %v3071, 0
      %vm3422 = vcmp.lt.s32.totalorder %v3078, 0
      %vm3423 = vcmp.lt.s32.totalorder %v3085, 0
      %vm3424 = vcmp.lt.s32.totalorder %v3092, 0
      %vm3425 = vcmp.lt.s32.totalorder %v3099, 0
      %vm3426 = vcmp.lt.s32.totalorder %v3106, 0
      %vm3427 = vcmp.lt.s32.totalorder %v3113, 0
      %vm3428 = vcmp.lt.s32.totalorder %v3120, 0
      %vm3429 = vcmp.lt.s32.totalorder %v3127, 0
      %vm3430 = vcmp.lt.s32.totalorder %v3134, 0
      %vm3431 = vcmp.lt.s32.totalorder %v3141, 0
      %vm3432 = vcmp.lt.s32.totalorder %v3148, 0
      %vm3433 = vcmp.lt.s32.totalorder %v3155, 0
      %vm3434 = vcmp.lt.s32.totalorder %v3162, 0
      %vm3435 = vcmp.lt.s32.totalorder %v3169, 0
      %vm3436 = vcmp.lt.s32.totalorder %v3176, 0
      %vm3437 = vcmp.lt.s32.totalorder %v3183, 0
      %vm3438 = vcmp.lt.s32.totalorder %v3190, 0
      %vm3439 = vcmp.lt.s32.totalorder %v3197, 0
      %vm3440 = vcmp.lt.s32.totalorder %v3204, 0
      %vm3441 = vcmp.lt.s32.totalorder %v3211, 0
      %vm3442 = vcmp.lt.s32.totalorder %v3218, 0
      %vm3443 = vcmp.lt.s32.totalorder %v3225, 0
      %vm3444 = vcmp.lt.s32.totalorder %v3232, 0
      %vm3445 = vcmp.lt.s32.totalorder %v3239, 0
      %vm3446 = vcmp.lt.s32.totalorder %v3246, 0
      %vm3447 = vcmp.lt.s32.totalorder %v3253, 0
      %vm3448 = vcmp.lt.s32.totalorder %v3260, 0
      %vm3449 = vcmp.lt.s32.totalorder %v3267, 0
      %vm3450 = vcmp.lt.s32.totalorder %v3274, 0
      %vm3451 = vcmp.lt.s32.totalorder %v3281, 0
      %vm3452 = vcmp.lt.s32.totalorder %v3288, 0
      %vm3453 = vcmp.lt.s32.totalorder %v3295, 0
      %vm3454 = vcmp.lt.s32.totalorder %v3302, 0
      %vm3455 = vcmp.lt.s32.totalorder %v3309, 0
      %vm3456 = vcmp.lt.s32.totalorder %v3316, 0
      %vm3457 = vcmp.lt.s32.totalorder %v3323, 0
      %vm3458 = vcmp.lt.s32.totalorder %v3330, 0
      %vm3459 = vmand %vm3395, %vm3331
      %vm3460 = vmand %vm3396, %vm3332
      %vm3461 = vmand %vm3397, %vm3333
      %vm3462 = vmand %vm3398, %vm3334
      %vm3463 = vmand %vm3399, %vm3335
      %vm3464 = vmand %vm3400, %vm3336
      %vm3465 = vmand %vm3401, %vm3337
      %vm3466 = vmand %vm3402, %vm3338
      %vm3467 = vmand %vm3403, %vm3339
      %vm3468 = vmand %vm3404, %vm3340
      %vm3469 = vmand %vm3405, %vm3341
      %vm3470 = vmand %vm3406, %vm3342
      %vm3471 = vmand %vm3407, %vm3343
      %vm3472 = vmand %vm3408, %vm3344
      %vm3473 = vmand %vm3409, %vm3345
      %vm3474 = vmand %vm3410, %vm3346
      %vm3475 = vmand %vm3411, %vm3347
      %vm3476 = vmand %vm3412, %vm3348
      %vm3477 = vmand %vm3413, %vm3349
      %vm3478 = vmand %vm3414, %vm3350
      %vm3479 = vmand %vm3415, %vm3351
      %vm3480 = vmand %vm3416, %vm3352
      %vm3481 = vmand %vm3417, %vm3353
      %vm3482 = vmand %vm3418, %vm3354
      %vm3483 = vmand %vm3419, %vm3355
      %vm3484 = vmand %vm3420, %vm3356
      %vm3485 = vmand %vm3421, %vm3357
      %vm3486 = vmand %vm3422, %vm3358
      %vm3487 = vmand %vm3423, %vm3359
      %vm3488 = vmand %vm3424, %vm3360
      %vm3489 = vmand %vm3425, %vm3361
      %vm3490 = vmand %vm3426, %vm3362
      %vm3491 = vmand %vm3427, %vm3363
      %vm3492 = vmand %vm3428, %vm3364
      %vm3493 = vmand %vm3429, %vm3365
      %vm3494 = vmand %vm3430, %vm3366
      %vm3495 = vmand %vm3431, %vm3367
      %vm3496 = vmand %vm3432, %vm3368
      %vm3497 = vmand %vm3433, %vm3369
      %vm3498 = vmand %vm3434, %vm3370
      %vm3499 = vmand %vm3435, %vm3371
      %vm3500 = vmand %vm3436, %vm3372
      %vm3501 = vmand %vm3437, %vm3373
      %vm3502 = vmand %vm3438, %vm3374
      %vm3503 = vmand %vm3439, %vm3375
      %vm3504 = vmand %vm3440, %vm3376
      %vm3505 = vmand %vm3441, %vm3377
      %vm3506 = vmand %vm3442, %vm3378
      %vm3507 = vmand %vm3443, %vm3379
      %vm3508 = vmand %vm3444, %vm3380
      %vm3509 = vmand %vm3445, %vm3381
      %vm3510 = vmand %vm3446, %vm3382
      %vm3511 = vmand %vm3447, %vm3383
      %vm3512 = vmand %vm3448, %vm3384
      %vm3513 = vmand %vm3449, %vm3385
      %vm3514 = vmand %vm3450, %vm3386
      %vm3515 = vmand %vm3451, %vm3387
      %vm3516 = vmand %vm3452, %vm3388
      %vm3517 = vmand %vm3453, %vm3389
      %vm3518 = vmand %vm3454, %vm3390
      %vm3519 = vmand %vm3455, %vm3391
      %vm3520 = vmand %vm3456, %vm3392
      %vm3521 = vmand %vm3457, %vm3393
      %vm3522 = vmand %vm3458, %vm3394
      %v3523 = vadd.s32 %v2889, 32
      %v3524 = vadd.s32 %v2896, 32
      %v3525 = vadd.s32 %v2903, 32
      %v3526 = vadd.s32 %v2910, 32
      %v3527 = vadd.s32 %v2917, 32
      %v3528 = vadd.s32 %v2924, 32
      %v3529 = vadd.s32 %v2931, 32
      %v3530 = vadd.s32 %v2938, 32
      %v3531 = vadd.s32 %v2945, 32
      %v3532 = vadd.s32 %v2952, 32
      %v3533 = vadd.s32 %v2959, 32
      %v3534 = vadd.s32 %v2966, 32
      %v3535 = vadd.s32 %v2973, 32
      %v3536 = vadd.s32 %v2980, 32
      %v3537 = vadd.s32 %v2987, 32
      %v3538 = vadd.s32 %v2994, 32
      %v3539 = vadd.s32 %v3001, 32
      %v3540 = vadd.s32 %v3008, 32
      %v3541 = vadd.s32 %v3015, 32
      %v3542 = vadd.s32 %v3022, 32
      %v3543 = vadd.s32 %v3029, 32
      %v3544 = vadd.s32 %v3036, 32
      %v3545 = vadd.s32 %v3043, 32
      %v3546 = vadd.s32 %v3050, 32
      %v3547 = vadd.s32 %v3057, 32
      %v3548 = vadd.s32 %v3064, 32
      %v3549 = vadd.s32 %v3071, 32
      %v3550 = vadd.s32 %v3078, 32
      %v3551 = vadd.s32 %v3085, 32
      %v3552 = vadd.s32 %v3092, 32
      %v3553 = vadd.s32 %v3099, 32
      %v3554 = vadd.s32 %v3106, 32
      %v3555 = vadd.s32 %v3113, 32
      %v3556 = vadd.s32 %v3120, 32
      %v3557 = vadd.s32 %v3127, 32
      %v3558 = vadd.s32 %v3134, 32
      %v3559 = vadd.s32 %v3141, 32
      %v3560 = vadd.s32 %v3148, 32
      %v3561 = vadd.s32 %v3155, 32
      %v3562 = vadd.s32 %v3162, 32
      %v3563 = vadd.s32 %v3169, 32
      %v3564 = vadd.s32 %v3176, 32
      %v3565 = vadd.s32 %v3183, 32
      %v3566 = vadd.s32 %v3190, 32
      %v3567 = vadd.s32 %v3197, 32
      %v3568 = vadd.s32 %v3204, 32
      %v3569 = vadd.s32 %v3211, 32
      %v3570 = vadd.s32 %v3218, 32
      %v3571 = vadd.s32 %v3225, 32
      %v3572 = vadd.s32 %v3232, 32
      %v3573 = vadd.s32 %v3239, 32
      %v3574 = vadd.s32 %v3246, 32
      %v3575 = vadd.s32 %v3253, 32
      %v3576 = vadd.s32 %v3260, 32
      %v3577 = vadd.s32 %v3267, 32
      %v3578 = vadd.s32 %v3274, 32
      %v3579 = vadd.s32 %v3281, 32
      %v3580 = vadd.s32 %v3288, 32
      %v3581 = vadd.s32 %v3295, 32
      %v3582 = vadd.s32 %v3302, 32
      %v3583 = vadd.s32 %v3309, 32
      %v3584 = vadd.s32 %v3316, 32
      %v3585 = vadd.s32 %v3323, 32
      %v3586 = vadd.s32 %v3330, 32
      %v3587 = vsel %vm3459, %v3523, %v2889
      %v3588 = vsel %vm3460, %v3524, %v2896
      %v3589 = vsel %vm3461, %v3525, %v2903
      %v3590 = vsel %vm3462, %v3526, %v2910
      %v3591 = vsel %vm3463, %v3527, %v2917
      %v3592 = vsel %vm3464, %v3528, %v2924
      %v3593 = vsel %vm3465, %v3529, %v2931
      %v3594 = vsel %vm3466, %v3530, %v2938
      %v3595 = vsel %vm3467, %v3531, %v2945
      %v3596 = vsel %vm3468, %v3532, %v2952
      %v3597 = vsel %vm3469, %v3533, %v2959
      %v3598 = vsel %vm3470, %v3534, %v2966
      %v3599 = vsel %vm3471, %v3535, %v2973
      %v3600 = vsel %vm3472, %v3536, %v2980
      %v3601 = vsel %vm3473, %v3537, %v2987
      %v3602 = vsel %vm3474, %v3538, %v2994
      %v3603 = vsel %vm3475, %v3539, %v3001
      %v3604 = vsel %vm3476, %v3540, %v3008
      %v3605 = vsel %vm3477, %v3541, %v3015
      %v3606 = vsel %vm3478, %v3542, %v3022
      %v3607 = vsel %vm3479, %v3543, %v3029
      %v3608 = vsel %vm3480, %v3544, %v3036
      %v3609 = vsel %vm3481, %v3545, %v3043
      %v3610 = vsel %vm3482, %v3546, %v3050
      %v3611 = vsel %vm3483, %v3547, %v3057
      %v3612 = vsel %vm3484, %v3548, %v3064
      %v3613 = vsel %vm3485, %v3549, %v3071
      %v3614 = vsel %vm3486, %v3550, %v3078
      %v3615 = vsel %vm3487, %v3551, %v3085
      %v3616 = vsel %vm3488, %v3552, %v3092
      %v3617 = vsel %vm3489, %v3553, %v3099
      %v3618 = vsel %vm3490, %v3554, %v3106
      %v3619 = vsel %vm3491, %v3555, %v3113
      %v3620 = vsel %vm3492, %v3556, %v3120
      %v3621 = vsel %vm3493, %v3557, %v3127
      %v3622 = vsel %vm3494, %v3558, %v3134
      %v3623 = vsel %vm3495, %v3559, %v3141
      %v3624 = vsel %vm3496, %v3560, %v3148
      %v3625 = vsel %vm3497, %v3561, %v3155
      %v3626 = vsel %vm3498, %v3562, %v3162
      %v3627 = vsel %vm3499, %v3563, %v3169
      %v3628 = vsel %vm3500, %v3564, %v3176
      %v3629 = vsel %vm3501, %v3565, %v3183
      %v3630 = vsel %vm3502, %v3566, %v3190
      %v3631 = vsel %vm3503, %v3567, %v3197
      %v3632 = vsel %vm3504, %v3568, %v3204
      %v3633 = vsel %vm3505, %v3569, %v3211
      %v3634 = vsel %vm3506, %v3570, %v3218
      %v3635 = vsel %vm3507, %v3571, %v3225
      %v3636 = vsel %vm3508, %v3572, %v3232
      %v3637 = vsel %vm3509, %v3573, %v3239
      %v3638 = vsel %vm3510, %v3574, %v3246
      %v3639 = vsel %vm3511, %v3575, %v3253
      %v3640 = vsel %vm3512, %v3576, %v3260
      %v3641 = vsel %vm3513, %v3577, %v3267
      %v3642 = vsel %vm3514, %v3578, %v3274
      %v3643 = vsel %vm3515, %v3579, %v3281
      %v3644 = vsel %vm3516, %v3580, %v3288
      %v3645 = vsel %vm3517, %v3581, %v3295
      %v3646 = vsel %vm3518, %v3582, %v3302
      %v3647 = vsel %vm3519, %v3583, %v3309
      %v3648 = vsel %vm3520, %v3584, %v3316
      %v3649 = vsel %vm3521, %v3585, %v3323
      %v3650 = vsel %vm3522, %v3586, %v3330
      %v3651 = vld [vmem:[%s287] sm:$0x1]
      %v3653 = vperm.slane %v3651, 0
      %v3655 = vadd.f32 %v2754, %v3653
      %v3656 = vadd.f32 %v2755, %v3653
      %v3657 = vadd.f32 %v2756, %v3653
      %v3658 = vadd.f32 %v2757, %v3653
      %v3659 = vadd.f32 %v2758, %v3653
      %v3660 = vadd.f32 %v2759, %v3653
      %v3661 = vadd.f32 %v2760, %v3653
      %v3662 = vadd.f32 %v2761, %v3653
      %v3663 = vadd.f32 %v2762, %v3653
      %v3664 = vadd.f32 %v2763, %v3653
      %v3665 = vadd.f32 %v2764, %v3653
      %v3666 = vadd.f32 %v2765, %v3653
      %v3667 = vadd.f32 %v2766, %v3653
      %v3668 = vadd.f32 %v2767, %v3653
      %v3669 = vadd.f32 %v2768, %v3653
      %v3670 = vadd.f32 %v2769, %v3653
      %v3671 = vadd.f32 %v2770, %v3653
      %v3672 = vadd.f32 %v2771, %v3653
      %v3673 = vadd.f32 %v2772, %v3653
      %v3674 = vadd.f32 %v2773, %v3653
      %v3675 = vadd.f32 %v2774, %v3653
      %v3676 = vadd.f32 %v2775, %v3653
      %v3677 = vadd.f32 %v2776, %v3653
      %v3678 = vadd.f32 %v2777, %v3653
      %v3679 = vadd.f32 %v2778, %v3653
      %v3680 = vadd.f32 %v2779, %v3653
      %v3681 = vadd.f32 %v2780, %v3653
      %v3682 = vadd.f32 %v2781, %v3653
      %v3683 = vadd.f32 %v2782, %v3653
      %v3684 = vadd.f32 %v2783, %v3653
      %v3685 = vadd.f32 %v2784, %v3653
      %v3686 = vadd.f32 %v2785, %v3653
      %v3687 = vadd.f32 %v2786, %v3653
      %v3688 = vadd.f32 %v2787, %v3653
      %v3689 = vadd.f32 %v2788, %v3653
      %v3690 = vadd.f32 %v2789, %v3653
      %v3691 = vadd.f32 %v2790, %v3653
      %v3692 = vadd.f32 %v2791, %v3653
      %v3693 = vadd.f32 %v2792, %v3653
      %v3694 = vadd.f32 %v2793, %v3653
      %v3695 = vadd.f32 %v2794, %v3653
      %v3696 = vadd.f32 %v2795, %v3653
      %v3697 = vadd.f32 %v2796, %v3653
      %v3698 = vadd.f32 %v2797, %v3653
      %v3699 = vadd.f32 %v2798, %v3653
      %v3700 = vadd.f32 %v2799, %v3653
      %v3701 = vadd.f32 %v2800, %v3653
      %v3702 = vadd.f32 %v2801, %v3653
      %v3703 = vadd.f32 %v2802, %v3653
      %v3704 = vadd.f32 %v2803, %v3653
      %v3705 = vadd.f32 %v2804, %v3653
      %v3706 = vadd.f32 %v2805, %v3653
      %v3707 = vadd.f32 %v2806, %v3653
      %v3708 = vadd.f32 %v2807, %v3653
      %v3709 = vadd.f32 %v2808, %v3653
      %v3710 = vadd.f32 %v2809, %v3653
      %v3711 = vadd.f32 %v2810, %v3653
      %v3712 = vadd.f32 %v2811, %v3653
      %v3713 = vadd.f32 %v2812, %v3653
      %v3714 = vadd.f32 %v2813, %v3653
      %v3715 = vadd.f32 %v2814, %v3653
      %v3716 = vadd.f32 %v2815, %v3653
      %v3717 = vadd.f32 %v2816, %v3653
      %v3718 = vadd.f32 %v2817, %v3653
      %v3719 = vmax.f32 %v3655, 0.0
      %v3720 = vmax.f32 %v3656, 0.0
      %v3721 = vmax.f32 %v3657, 0.0
      %v3722 = vmax.f32 %v3658, 0.0
      %v3723 = vmax.f32 %v3659, 0.0
      %v3724 = vmax.f32 %v3660, 0.0
      %v3725 = vmax.f32 %v3661, 0.0
      %v3726 = vmax.f32 %v3662, 0.0
      %v3727 = vmax.f32 %v3663, 0.0
      %v3728 = vmax.f32 %v3664, 0.0
      %v3729 = vmax.f32 %v3665, 0.0
      %v3730 = vmax.f32 %v3666, 0.0
      %v3731 = vmax.f32 %v3667, 0.0
      %v3732 = vmax.f32 %v3668, 0.0
      %v3733 = vmax.f32 %v3669, 0.0
      %v3734 = vmax.f32 %v3670, 0.0
      %v3735 = vmax.f32 %v3671, 0.0
      %v3736 = vmax.f32 %v3672, 0.0
      %v3737 = vmax.f32 %v3673, 0.0
      %v3738 = vmax.f32 %v3674, 0.0
      %v3739 = vmax.f32 %v3675, 0.0
      %v3740 = vmax.f32 %v3676, 0.0
      %v3741 = vmax.f32 %v3677, 0.0
      %v3742 = vmax.f32 %v3678, 0.0
      %v3743 = vmax.f32 %v3679, 0.0
      %v3744 = vmax.f32 %v3680, 0.0
      %v3745 = vmax.f32 %v3681, 0.0
      %v3746 = vmax.f32 %v3682, 0.0
      %v3747 = vmax.f32 %v3683, 0.0
      %v3748 = vmax.f32 %v3684, 0.0
      %v3749 = vmax.f32 %v3685, 0.0
      %v3750 = vmax.f32 %v3686, 0.0
      %v3751 = vmax.f32 %v3687, 0.0
      %v3752 = vmax.f32 %v3688, 0.0
      %v3753 = vmax.f32 %v3689, 0.0
      %v3754 = vmax.f32 %v3690, 0.0
      %v3755 = vmax.f32 %v3691, 0.0
      %v3756 = vmax.f32 %v3692, 0.0
      %v3757 = vmax.f32 %v3693, 0.0
      %v3758 = vmax.f32 %v3694, 0.0
      %v3759 = vmax.f32 %v3695, 0.0
      %v3760 = vmax.f32 %v3696, 0.0
      %v3761 = vmax.f32 %v3697, 0.0
      %v3762 = vmax.f32 %v3698, 0.0
      %v3763 = vmax.f32 %v3699, 0.0
      %v3764 = vmax.f32 %v3700, 0.0
      %v3765 = vmax.f32 %v3701, 0.0
      %v3766 = vmax.f32 %v3702, 0.0
      %v3767 = vmax.f32 %v3703, 0.0
      %v3768 = vmax.f32 %v3704, 0.0
      %v3769 = vmax.f32 %v3705, 0.0
      %v3770 = vmax.f32 %v3706, 0.0
      %v3771 = vmax.f32 %v3707, 0.0
      %v3772 = vmax.f32 %v3708, 0.0
      %v3773 = vmax.f32 %v3709, 0.0
      %v3774 = vmax.f32 %v3710, 0.0
      %v3775 = vmax.f32 %v3711, 0.0
      %v3776 = vmax.f32 %v3712, 0.0
      %v3777 = vmax.f32 %v3713, 0.0
      %v3778 = vmax.f32 %v3714, 0.0
      %v3779 = vmax.f32 %v3715, 0.0
      %v3780 = vmax.f32 %v3716, 0.0
      %v3781 = vmax.f32 %v3717, 0.0
      %v3782 = vmax.f32 %v3718, 0.0
      %vm3783 = vcmp.lt.s32.totalorder %v3587, 16
      %vm3784 = vcmp.lt.s32.totalorder %v3588, 16
      %vm3785 = vcmp.lt.s32.totalorder %v3589, 16
      %vm3786 = vcmp.lt.s32.totalorder %v3590, 16
      %vm3787 = vcmp.lt.s32.totalorder %v3591, 16
      %vm3788 = vcmp.lt.s32.totalorder %v3592, 16
      %vm3789 = vcmp.lt.s32.totalorder %v3593, 16
      %vm3790 = vcmp.lt.s32.totalorder %v3594, 16
      %vm3791 = vcmp.lt.s32.totalorder %v3595, 16
      %vm3792 = vcmp.lt.s32.totalorder %v3596, 16
      %vm3793 = vcmp.lt.s32.totalorder %v3597, 16
      %vm3794 = vcmp.lt.s32.totalorder %v3598, 16
      %vm3795 = vcmp.lt.s32.totalorder %v3599, 16
      %vm3796 = vcmp.lt.s32.totalorder %v3600, 16
      %vm3797 = vcmp.lt.s32.totalorder %v3601, 16
      %vm3798 = vcmp.lt.s32.totalorder %v3602, 16
      %vm3799 = vcmp.lt.s32.totalorder %v3603, 16
      %vm3800 = vcmp.lt.s32.totalorder %v3604, 16
      %vm3801 = vcmp.lt.s32.totalorder %v3605, 16
      %vm3802 = vcmp.lt.s32.totalorder %v3606, 16
      %vm3803 = vcmp.lt.s32.totalorder %v3607, 16
      %vm3804 = vcmp.lt.s32.totalorder %v3608, 16
      %vm3805 = vcmp.lt.s32.totalorder %v3609, 16
      %vm3806 = vcmp.lt.s32.totalorder %v3610, 16
      %vm3807 = vcmp.lt.s32.totalorder %v3611, 16
      %vm3808 = vcmp.lt.s32.totalorder %v3612, 16
      %vm3809 = vcmp.lt.s32.totalorder %v3613, 16
      %vm3810 = vcmp.lt.s32.totalorder %v3614, 16
      %vm3811 = vcmp.lt.s32.totalorder %v3615, 16
      %vm3812 = vcmp.lt.s32.totalorder %v3616, 16
      %vm3813 = vcmp.lt.s32.totalorder %v3617, 16
      %vm3814 = vcmp.lt.s32.totalorder %v3618, 16
      %vm3815 = vcmp.lt.s32.totalorder %v3619, 16
      %vm3816 = vcmp.lt.s32.totalorder %v3620, 16
      %vm3817 = vcmp.lt.s32.totalorder %v3621, 16
      %vm3818 = vcmp.lt.s32.totalorder %v3622, 16
      %vm3819 = vcmp.lt.s32.totalorder %v3623, 16
      %vm3820 = vcmp.lt.s32.totalorder %v3624, 16
      %vm3821 = vcmp.lt.s32.totalorder %v3625, 16
      %vm3822 = vcmp.lt.s32.totalorder %v3626, 16
      %vm3823 = vcmp.lt.s32.totalorder %v3627, 16
      %vm3824 = vcmp.lt.s32.totalorder %v3628, 16
      %vm3825 = vcmp.lt.s32.totalorder %v3629, 16
      %vm3826 = vcmp.lt.s32.totalorder %v3630, 16
      %vm3827 = vcmp.lt.s32.totalorder %v3631, 16
      %vm3828 = vcmp.lt.s32.totalorder %v3632, 16
      %vm3829 = vcmp.lt.s32.totalorder %v3633, 16
      %vm3830 = vcmp.lt.s32.totalorder %v3634, 16
      %vm3831 = vcmp.lt.s32.totalorder %v3635, 16
      %vm3832 = vcmp.lt.s32.totalorder %v3636, 16
      %vm3833 = vcmp.lt.s32.totalorder %v3637, 16
      %vm3834 = vcmp.lt.s32.totalorder %v3638, 16
      %vm3835 = vcmp.lt.s32.totalorder %v3639, 16
      %vm3836 = vcmp.lt.s32.totalorder %v3640, 16
      %vm3837 = vcmp.lt.s32.totalorder %v3641, 16
      %vm3838 = vcmp.lt.s32.totalorder %v3642, 16
      %vm3839 = vcmp.lt.s32.totalorder %v3643, 16
      %vm3840 = vcmp.lt.s32.totalorder %v3644, 16
      %vm3841 = vcmp.lt.s32.totalorder %v3645, 16
      %vm3842 = vcmp.lt.s32.totalorder %v3646, 16
      %vm3843 = vcmp.lt.s32.totalorder %v3647, 16
      %vm3844 = vcmp.lt.s32.totalorder %v3648, 16
      %vm3845 = vcmp.lt.s32.totalorder %v3649, 16
      %vm3846 = vcmp.lt.s32.totalorder %v3650, 16
      %v3847 = vsel %vm3783, 1, 0
      %v3848 = vsel %vm3784, 1, 0
      %v3849 = vsel %vm3785, 1, 0
      %v3850 = vsel %vm3786, 1, 0
      %v3851 = vsel %vm3787, 1, 0
      %v3852 = vsel %vm3788, 1, 0
      %v3853 = vsel %vm3789, 1, 0
      %v3854 = vsel %vm3790, 1, 0
      %v3855 = vsel %vm3791, 1, 0
      %v3856 = vsel %vm3792, 1, 0
      %v3857 = vsel %vm3793, 1, 0
      %v3858 = vsel %vm3794, 1, 0
      %v3859 = vsel %vm3795, 1, 0
      %v3860 = vsel %vm3796, 1, 0
      %v3861 = vsel %vm3797, 1, 0
      %v3862 = vsel %vm3798, 1, 0
      %v3863 = vsel %vm3799, 1, 0
      %v3864 = vsel %vm3800, 1, 0
      %v3865 = vsel %vm3801, 1, 0
      %v3866 = vsel %vm3802, 1, 0
      %v3867 = vsel %vm3803, 1, 0
      %v3868 = vsel %vm3804, 1, 0
      %v3869 = vsel %vm3805, 1, 0
      %v3870 = vsel %vm3806, 1, 0
      %v3871 = vsel %vm3807, 1, 0
      %v3872 = vsel %vm3808, 1, 0
      %v3873 = vsel %vm3809, 1, 0
      %v3874 = vsel %vm3810, 1, 0
      %v3875 = vsel %vm3811, 1, 0
      %v3876 = vsel %vm3812, 1, 0
      %v3877 = vsel %vm3813, 1, 0
      %v3878 = vsel %vm3814, 1, 0
      %v3879 = vsel %vm3815, 1, 0
      %v3880 = vsel %vm3816, 1, 0
      %v3881 = vsel %vm3817, 1, 0
      %v3882 = vsel %vm3818, 1, 0
      %v3883 = vsel %vm3819, 1, 0
      %v3884 = vsel %vm3820, 1, 0
      %v3885 = vsel %vm3821, 1, 0
      %v3886 = vsel %vm3822, 1, 0
      %v3887 = vsel %vm3823, 1, 0
      %v3888 = vsel %vm3824, 1, 0
      %v3889 = vsel %vm3825, 1, 0
      %v3890 = vsel %vm3826, 1, 0
      %v3891 = vsel %vm3827, 1, 0
      %v3892 = vsel %vm3828, 1, 0
      %v3893 = vsel %vm3829, 1, 0
      %v3894 = vsel %vm3830, 1, 0
      %v3895 = vsel %vm3831, 1, 0
      %v3896 = vsel %vm3832, 1, 0
      %v3897 = vsel %vm3833, 1, 0
      %v3898 = vsel %vm3834, 1, 0
      %v3899 = vsel %vm3835, 1, 0
      %v3900 = vsel %vm3836, 1, 0
      %v3901 = vsel %vm3837, 1, 0
      %v3902 = vsel %vm3838, 1, 0
      %v3903 = vsel %vm3839, 1, 0
      %v3904 = vsel %vm3840, 1, 0
      %v3905 = vsel %vm3841, 1, 0
      %v3906 = vsel %vm3842, 1, 0
      %v3907 = vsel %vm3843, 1, 0
      %v3908 = vsel %vm3844, 1, 0
      %v3909 = vsel %vm3845, 1, 0
      %v3910 = vsel %vm3846, 1, 0
      %vm3911 = vcmp.eq.s32.totalorder %v3847, 1
      %vm3912 = vcmp.eq.s32.totalorder %v3848, 1
      %vm3913 = vcmp.eq.s32.totalorder %v3849, 1
      %vm3914 = vcmp.eq.s32.totalorder %v3850, 1
      %vm3915 = vcmp.eq.s32.totalorder %v3851, 1
      %vm3916 = vcmp.eq.s32.totalorder %v3852, 1
      %vm3917 = vcmp.eq.s32.totalorder %v3853, 1
      %vm3918 = vcmp.eq.s32.totalorder %v3854, 1
      %vm3919 = vcmp.eq.s32.totalorder %v3855, 1
      %vm3920 = vcmp.eq.s32.totalorder %v3856, 1
      %vm3921 = vcmp.eq.s32.totalorder %v3857, 1
      %vm3922 = vcmp.eq.s32.totalorder %v3858, 1
      %vm3923 = vcmp.eq.s32.totalorder %v3859, 1
      %vm3924 = vcmp.eq.s32.totalorder %v3860, 1
      %vm3925 = vcmp.eq.s32.totalorder %v3861, 1
      %vm3926 = vcmp.eq.s32.totalorder %v3862, 1
      %vm3927 = vcmp.eq.s32.totalorder %v3863, 1
      %vm3928 = vcmp.eq.s32.totalorder %v3864, 1
      %vm3929 = vcmp.eq.s32.totalorder %v3865, 1
      %vm3930 = vcmp.eq.s32.totalorder %v3866, 1
      %vm3931 = vcmp.eq.s32.totalorder %v3867, 1
      %vm3932 = vcmp.eq.s32.totalorder %v3868, 1
      %vm3933 = vcmp.eq.s32.totalorder %v3869, 1
      %vm3934 = vcmp.eq.s32.totalorder %v3870, 1
      %vm3935 = vcmp.eq.s32.totalorder %v3871, 1
      %vm3936 = vcmp.eq.s32.totalorder %v3872, 1
      %vm3937 = vcmp.eq.s32.totalorder %v3873, 1
      %vm3938 = vcmp.eq.s32.totalorder %v3874, 1
      %vm3939 = vcmp.eq.s32.totalorder %v3875, 1
      %vm3940 = vcmp.eq.s32.totalorder %v3876, 1
      %vm3941 = vcmp.eq.s32.totalorder %v3877, 1
      %vm3942 = vcmp.eq.s32.totalorder %v3878, 1
      %vm3943 = vcmp.eq.s32.totalorder %v3879, 1
      %vm3944 = vcmp.eq.s32.totalorder %v3880, 1
      %vm3945 = vcmp.eq.s32.totalorder %v3881, 1
      %vm3946 = vcmp.eq.s32.totalorder %v3882, 1
      %vm3947 = vcmp.eq.s32.totalorder %v3883, 1
      %vm3948 = vcmp.eq.s32.totalorder %v3884, 1
      %vm3949 = vcmp.eq.s32.totalorder %v3885, 1
      %vm3950 = vcmp.eq.s32.totalorder %v3886, 1
      %vm3951 = vcmp.eq.s32.totalorder %v3887, 1
      %vm3952 = vcmp.eq.s32.totalorder %v3888, 1
      %vm3953 = vcmp.eq.s32.totalorder %v3889, 1
      %vm3954 = vcmp.eq.s32.totalorder %v3890, 1
      %vm3955 = vcmp.eq.s32.totalorder %v3891, 1
      %vm3956 = vcmp.eq.s32.totalorder %v3892, 1
      %vm3957 = vcmp.eq.s32.totalorder %v3893, 1
      %vm3958 = vcmp.eq.s32.totalorder %v3894, 1
      %vm3959 = vcmp.eq.s32.totalorder %v3895, 1
      %vm3960 = vcmp.eq.s32.totalorder %v3896, 1
      %vm3961 = vcmp.eq.s32.totalorder %v3897, 1
      %vm3962 = vcmp.eq.s32.totalorder %v3898, 1
      %vm3963 = vcmp.eq.s32.totalorder %v3899, 1
      %vm3964 = vcmp.eq.s32.totalorder %v3900, 1
      %vm3965 = vcmp.eq.s32.totalorder %v3901, 1
      %vm3966 = vcmp.eq.s32.totalorder %v3902, 1
      %vm3967 = vcmp.eq.s32.totalorder %v3903, 1
      %vm3968 = vcmp.eq.s32.totalorder %v3904, 1
      %vm3969 = vcmp.eq.s32.totalorder %v3905, 1
      %vm3970 = vcmp.eq.s32.totalorder %v3906, 1
      %vm3971 = vcmp.eq.s32.totalorder %v3907, 1
      %vm3972 = vcmp.eq.s32.totalorder %v3908, 1
      %vm3973 = vcmp.eq.s32.totalorder %v3909, 1
      %vm3974 = vcmp.eq.s32.totalorder %v3910, 1
      %v3975 = vsel %vm3911, %v3719, 0.0
      %v3976 = vsel %vm3912, %v3720, 0.0
      %v3977 = vsel %vm3913, %v3721, 0.0
      %v3978 = vsel %vm3914, %v3722, 0.0
      %v3979 = vsel %vm3915, %v3723, 0.0
      %v3980 = vsel %vm3916, %v3724, 0.0
      %v3981 = vsel %vm3917, %v3725, 0.0
      %v3982 = vsel %vm3918, %v3726, 0.0
      %v3983 = vsel %vm3919, %v3727, 0.0
      %v3984 = vsel %vm3920, %v3728, 0.0
      %v3985 = vsel %vm3921, %v3729, 0.0
      %v3986 = vsel %vm3922, %v3730, 0.0
      %v3987 = vsel %vm3923, %v3731, 0.0
      %v3988 = vsel %vm3924, %v3732, 0.0
      %v3989 = vsel %vm3925, %v3733, 0.0
      %v3990 = vsel %vm3926, %v3734, 0.0
      %v3991 = vsel %vm3927, %v3735, 0.0
      %v3992 = vsel %vm3928, %v3736, 0.0
      %v3993 = vsel %vm3929, %v3737, 0.0
      %v3994 = vsel %vm3930, %v3738, 0.0
      %v3995 = vsel %vm3931, %v3739, 0.0
      %v3996 = vsel %vm3932, %v3740, 0.0
      %v3997 = vsel %vm3933, %v3741, 0.0
      %v3998 = vsel %vm3934, %v3742, 0.0
      %v3999 = vsel %vm3935, %v3743, 0.0
      %v4000 = vsel %vm3936, %v3744, 0.0
      %v4001 = vsel %vm3937, %v3745, 0.0
      %v4002 = vsel %vm3938, %v3746, 0.0
      %v4003 = vsel %vm3939, %v3747, 0.0
      %v4004 = vsel %vm3940, %v3748, 0.0
      %v4005 = vsel %vm3941, %v3749, 0.0
      %v4006 = vsel %vm3942, %v3750, 0.0
      %v4007 = vsel %vm3943, %v3751, 0.0
      %v4008 = vsel %vm3944, %v3752, 0.0
      %v4009 = vsel %vm3945, %v3753, 0.0
      %v4010 = vsel %vm3946, %v3754, 0.0
      %v4011 = vsel %vm3947, %v3755, 0.0
      %v4012 = vsel %vm3948, %v3756, 0.0
      %v4013 = vsel %vm3949, %v3757, 0.0
      %v4014 = vsel %vm3950, %v3758, 0.0
      %v4015 = vsel %vm3951, %v3759, 0.0
      %v4016 = vsel %vm3952, %v3760, 0.0
      %v4017 = vsel %vm3953, %v3761, 0.0
      %v4018 = vsel %vm3954, %v3762, 0.0
      %v4019 = vsel %vm3955, %v3763, 0.0
      %v4020 = vsel %vm3956, %v3764, 0.0
      %v4021 = vsel %vm3957, %v3765, 0.0
      %v4022 = vsel %vm3958, %v3766, 0.0
      %v4023 = vsel %vm3959, %v3767, 0.0
      %v4024 = vsel %vm3960, %v3768, 0.0
      %v4025 = vsel %vm3961, %v3769, 0.0
      %v4026 = vsel %vm3962, %v3770, 0.0
      %v4027 = vsel %vm3963, %v3771, 0.0
      %v4028 = vsel %vm3964, %v3772, 0.0
      %v4029 = vsel %vm3965, %v3773, 0.0
      %v4030 = vsel %vm3966, %v3774, 0.0
      %v4031 = vsel %vm3967, %v3775, 0.0
      %v4032 = vsel %vm3968, %v3776, 0.0
      %v4033 = vsel %vm3969, %v3777, 0.0
      %v4034 = vsel %vm3970, %v3778, 0.0
      %v4035 = vsel %vm3971, %v3779, 0.0
      %v4036 = vsel %vm3972, %v3780, 0.0
      %v4037 = vsel %vm3973, %v3781, 0.0
      %v4038 = vsel %vm3974, %v3782, 0.0
      %v4039 = vpack.c.bf16 %v3975, %v3975
      %v4040 = vpack.c.bf16 %v3976, %v3976
      %v4041 = vpack.c.bf16 %v3977, %v3977
      %v4042 = vpack.c.bf16 %v3978, %v3978
      %v4043 = vpack.c.bf16 %v3979, %v3979
      %v4044 = vpack.c.bf16 %v3980, %v3980
      %v4045 = vpack.c.bf16 %v3981, %v3981
      %v4046 = vpack.c.bf16 %v3982, %v3982
      %v4047 = vpack.c.bf16 %v3983, %v3983
      %v4048 = vpack.c.bf16 %v3984, %v3984
      %v4049 = vpack.c.bf16 %v3985, %v3985
      %v4050 = vpack.c.bf16 %v3986, %v3986
      %v4051 = vpack.c.bf16 %v3987, %v3987
      %v4052 = vpack.c.bf16 %v3988, %v3988
      %v4053 = vpack.c.bf16 %v3989, %v3989
      %v4054 = vpack.c.bf16 %v3990, %v3990
      %v4055 = vpack.c.bf16 %v3991, %v3991
      %v4056 = vpack.c.bf16 %v3992, %v3992
      %v4057 = vpack.c.bf16 %v3993, %v3993
      %v4058 = vpack.c.bf16 %v3994, %v3994
      %v4059 = vpack.c.bf16 %v3995, %v3995
      %v4060 = vpack.c.bf16 %v3996, %v3996
      %v4061 = vpack.c.bf16 %v3997, %v3997
      %v4062 = vpack.c.bf16 %v3998, %v3998
      %v4063 = vpack.c.bf16 %v3999, %v3999
      %v4064 = vpack.c.bf16 %v4000, %v4000
      %v4065 = vpack.c.bf16 %v4001, %v4001
      %v4066 = vpack.c.bf16 %v4002, %v4002
      %v4067 = vpack.c.bf16 %v4003, %v4003
      %v4068 = vpack.c.bf16 %v4004, %v4004
      %v4069 = vpack.c.bf16 %v4005, %v4005
      %v4070 = vpack.c.bf16 %v4006, %v4006
      %v4071 = vpack.c.bf16 %v4007, %v4007
      %v4072 = vpack.c.bf16 %v4008, %v4008
      %v4073 = vpack.c.bf16 %v4009, %v4009
      %v4074 = vpack.c.bf16 %v4010, %v4010
      %v4075 = vpack.c.bf16 %v4011, %v4011
      %v4076 = vpack.c.bf16 %v4012, %v4012
      %v4077 = vpack.c.bf16 %v4013, %v4013
      %v4078 = vpack.c.bf16 %v4014, %v4014
      %v4079 = vpack.c.bf16 %v4015, %v4015
      %v4080 = vpack.c.bf16 %v4016, %v4016
      %v4081 = vpack.c.bf16 %v4017, %v4017
      %v4082 = vpack.c.bf16 %v4018, %v4018
      %v4083 = vpack.c.bf16 %v4019, %v4019
      %v4084 = vpack.c.bf16 %v4020, %v4020
      %v4085 = vpack.c.bf16 %v4021, %v4021
      %v4086 = vpack.c.bf16 %v4022, %v4022
      %v4087 = vpack.c.bf16 %v4023, %v4023
      %v4088 = vpack.c.bf16 %v4024, %v4024
      %v4089 = vpack.c.bf16 %v4025, %v4025
      %v4090 = vpack.c.bf16 %v4026, %v4026
      %v4091 = vpack.c.bf16 %v4027, %v4027
      %v4092 = vpack.c.bf16 %v4028, %v4028
      %v4093 = vpack.c.bf16 %v4029, %v4029
      %v4094 = vpack.c.bf16 %v4030, %v4030
      %v4095 = vpack.c.bf16 %v4031, %v4031
      %v4096 = vpack.c.bf16 %v4032, %v4032
      %v4097 = vpack.c.bf16 %v4033, %v4033
      %v4098 = vpack.c.bf16 %v4034, %v4034
      %v4099 = vpack.c.bf16 %v4035, %v4035
      %v4100 = vpack.c.bf16 %v4036, %v4036
      %v4101 = vpack.c.bf16 %v4037, %v4037
      %v4102 = vpack.c.bf16 %v4038, %v4038
      %4103 = vst.msk [vmem:[#allocation3 + $0x20] sm:$0xf] %vm294, %v4039
      %4104 = vst.msk [vmem:[#allocation3 + $0x24] sm:$0xf] %vm294, %v4040
      %4105 = vst.msk [vmem:[#allocation3 + $0x28] sm:$0xf] %vm294, %v4041
      %4106 = vst.msk [vmem:[#allocation3 + $0x2c] sm:$0xf] %vm294, %v4042
      %4107 = vst.msk [vmem:[#allocation3 + $0x30] sm:$0xf] %vm294, %v4043
      %4108 = vst.msk [vmem:[#allocation3 + $0x34] sm:$0xf] %vm294, %v4044
      %4109 = vst.msk [vmem:[#allocation3 + $0x38] sm:$0xf] %vm294, %v4045
      %4110 = vst.msk [vmem:[#allocation3 + $0x3c] sm:$0xf] %vm294, %v4046
      %4111 = vst.msk [vmem:[#allocation3 + $0x40] sm:$0xf] %vm294, %v4047
      %4112 = vst.msk [vmem:[#allocation3 + $0x44] sm:$0xf] %vm294, %v4048
      %4113 = vst.msk [vmem:[#allocation3 + $0x48] sm:$0xf] %vm294, %v4049
      %4114 = vst.msk [vmem:[#allocation3 + $0x4c] sm:$0xf] %vm294, %v4050
      %4115 = vst.msk [vmem:[#allocation3 + $0x50] sm:$0xf] %vm294, %v4051
      %4116 = vst.msk [vmem:[#allocation3 + $0x54] sm:$0xf] %vm294, %v4052
      %4117 = vst.msk [vmem:[#allocation3 + $0x58] sm:$0xf] %vm294, %v4053
      %4118 = vst.msk [vmem:[#allocation3 + $0x5c] sm:$0xf] %vm294, %v4054
      %4119 = vst.msk [vmem:[#allocation3 + $0x60] sm:$0xf] %vm294, %v4055
      %4120 = vst.msk [vmem:[#allocation3 + $0x64] sm:$0xf] %vm294, %v4056
      %4121 = vst.msk [vmem:[#allocation3 + $0x68] sm:$0xf] %vm294, %v4057
      %4122 = vst.msk [vmem:[#allocation3 + $0x6c] sm:$0xf] %vm294, %v4058
      %4123 = vst.msk [vmem:[#allocation3 + $0x70] sm:$0xf] %vm294, %v4059
      %4124 = vst.msk [vmem:[#allocation3 + $0x74] sm:$0xf] %vm294, %v4060
      %4125 = vst.msk [vmem:[#allocation3 + $0x78] sm:$0xf] %vm294, %v4061
      %4126 = vst.msk [vmem:[#allocation3 + $0x7c] sm:$0xf] %vm294, %v4062
      %4127 = vst.msk [vmem:[#allocation3 + $0x80] sm:$0xf] %vm294, %v4063
      %4128 = vst.msk [vmem:[#allocation3 + $0x84] sm:$0xf] %vm294, %v4064
      %4129 = vst.msk [vmem:[#allocation3 + $0x88] sm:$0xf] %vm294, %v4065
      %4130 = vst.msk [vmem:[#allocation3 + $0x8c] sm:$0xf] %vm294, %v4066
      %4131 = vst.msk [vmem:[#allocation3 + $0x90] sm:$0xf] %vm294, %v4067
      %4132 = vst.msk [vmem:[#allocation3 + $0x94] sm:$0xf] %vm294, %v4068
      %4133 = vst.msk [vmem:[#allocation3 + $0x98] sm:$0xf] %vm294, %v4069
      %4134 = vst.msk [vmem:[#allocation3 + $0x9c] sm:$0xf] %vm294, %v4070
      %4135 = vst.msk [vmem:[#allocation3 + $0xa0] sm:$0xf] %vm294, %v4071
      %4136 = vst.msk [vmem:[#allocation3 + $0xa4] sm:$0xf] %vm294, %v4072
      %4137 = vst.msk [vmem:[#allocation3 + $0xa8] sm:$0xf] %vm294, %v4073
      %4138 = vst.msk [vmem:[#allocation3 + $0xac] sm:$0xf] %vm294, %v4074
      %4139 = vst.msk [vmem:[#allocation3 + $0xb0] sm:$0xf] %vm294, %v4075
      %4140 = vst.msk [vmem:[#allocation3 + $0xb4] sm:$0xf] %vm294, %v4076
      %4141 = vst.msk [vmem:[#allocation3 + $0xb8] sm:$0xf] %vm294, %v4077
      %4142 = vst.msk [vmem:[#allocation3 + $0xbc] sm:$0xf] %vm294, %v4078
      %4143 = vst.msk [vmem:[#allocation3 + $0xc0] sm:$0xf] %vm294, %v4079
      %4144 = vst.msk [vmem:[#allocation3 + $0xc4] sm:$0xf] %vm294, %v4080
      %4145 = vst.msk [vmem:[#allocation3 + $0xc8] sm:$0xf] %vm294, %v4081
      %4146 = vst.msk [vmem:[#allocation3 + $0xcc] sm:$0xf] %vm294, %v4082
      %4147 = vst.msk [vmem:[#allocation3 + $0xd0] sm:$0xf] %vm294, %v4083
      %4148 = vst.msk [vmem:[#allocation3 + $0xd4] sm:$0xf] %vm294, %v4084
      %4149 = vst.msk [vmem:[#allocation3 + $0xd8] sm:$0xf] %vm294, %v4085
      %4150 = vst.msk [vmem:[#allocation3 + $0xdc] sm:$0xf] %vm294, %v4086
      %4151 = vst.msk [vmem:[#allocation3 + $0xe0] sm:$0xf] %vm294, %v4087
      %4152 = vst.msk [vmem:[#allocation3 + $0xe4] sm:$0xf] %vm294, %v4088
      %4153 = vst.msk [vmem:[#allocation3 + $0xe8] sm:$0xf] %vm294, %v4089
      %4154 = vst.msk [vmem:[#allocation3 + $0xec] sm:$0xf] %vm294, %v4090
      %4155 = vst.msk [vmem:[#allocation3 + $0xf0] sm:$0xf] %vm294, %v4091
      %4156 = vst.msk [vmem:[#allocation3 + $0xf4] sm:$0xf] %vm294, %v4092
      %4157 = vst.msk [vmem:[#allocation3 + $0xf8] sm:$0xf] %vm294, %v4093
      %4158 = vst.msk [vmem:[#allocation3 + $0xfc] sm:$0xf] %vm294, %v4094
      %4159 = vst.msk [vmem:[#allocation3 + $0x100] sm:$0xf] %vm294, %v4095
      %4160 = vst.msk [vmem:[#allocation3 + $0x104] sm:$0xf] %vm294, %v4096
      %4161 = vst.msk [vmem:[#allocation3 + $0x108] sm:$0xf] %vm294, %v4097
      %4162 = vst.msk [vmem:[#allocation3 + $0x10c] sm:$0xf] %vm294, %v4098
      %4163 = vst.msk [vmem:[#allocation3 + $0x110] sm:$0xf] %vm294, %v4099
      %4164 = vst.msk [vmem:[#allocation3 + $0x114] sm:$0xf] %vm294, %v4100
      %4165 = vst.msk [vmem:[#allocation3 + $0x118] sm:$0xf] %vm294, %v4101
      %4166 = vst.msk [vmem:[#allocation3 + $0x11c] sm:$0xf] %vm294, %v4102
      %v4167 = vld [vmem:[#allocation3 + $0xc] sm:$0x8]
      %v4168 = vld [vmem:[#allocation3 + $0x10] sm:$0xf]
      %v4169 = vld [vmem:[#allocation3 + $0x14] sm:$0xf]
      %v4170 = vld [vmem:[#allocation3 + $0x18] sm:$0xf]
      %v4171 = vld [vmem:[#allocation3 + $0x1c] sm:$0xf]
      %v4172 = vld [vmem:[#allocation3 + $0x20] sm:$0xf]
      %v4173 = vld [vmem:[#allocation3 + $0x24] sm:$0xf]
      %v4174 = vld [vmem:[#allocation3 + $0x28] sm:$0xf]
      %v4175 = vld [vmem:[#allocation3 + $0x2c] sm:$0xf]
      %v4176 = vld [vmem:[#allocation3 + $0x30] sm:$0xf]
      %v4177 = vld [vmem:[#allocation3 + $0x34] sm:$0xf]
      %v4178 = vld [vmem:[#allocation3 + $0x38] sm:$0xf]
      %v4179 = vld [vmem:[#allocation3 + $0x3c] sm:$0xf]
      %v4180 = vld [vmem:[#allocation3 + $0x40] sm:$0xf]
      %v4181 = vld [vmem:[#allocation3 + $0x44] sm:$0xf]
      %v4182 = vld [vmem:[#allocation3 + $0x48] sm:$0xf]
      %v4183 = vld [vmem:[#allocation3 + $0x4c] sm:$0xf]
      %v4184 = vld [vmem:[#allocation3 + $0x50] sm:$0xf]
      %v4185 = vld [vmem:[#allocation3 + $0x54] sm:$0xf]
      %v4186 = vld [vmem:[#allocation3 + $0x58] sm:$0xf]
      %v4187 = vld [vmem:[#allocation3 + $0x5c] sm:$0xf]
      %v4188 = vld [vmem:[#allocation3 + $0x60] sm:$0xf]
      %v4189 = vld [vmem:[#allocation3 + $0x64] sm:$0xf]
      %v4190 = vld [vmem:[#allocation3 + $0x68] sm:$0xf]
      %v4191 = vld [vmem:[#allocation3 + $0x6c] sm:$0xf]
      %v4192 = vld [vmem:[#allocation3 + $0x70] sm:$0xf]
      %v4193 = vld [vmem:[#allocation3 + $0x74] sm:$0xf]
      %v4194 = vld [vmem:[#allocation3 + $0x78] sm:$0xf]
      %v4195 = vld [vmem:[#allocation3 + $0x7c] sm:$0xf]
      %v4196 = vld [vmem:[#allocation3 + $0x80] sm:$0xf]
      %v4197 = vld [vmem:[#allocation3 + $0x84] sm:$0xf]
      %v4198 = vld [vmem:[#allocation3 + $0x88] sm:$0xf]
      %v4199 = vld [vmem:[#allocation3 + $0x8c] sm:$0xf]
      %v4200 = vld [vmem:[#allocation3 + $0x90] sm:$0xf]
      %v4201 = vld [vmem:[#allocation3 + $0x94] sm:$0xf]
      %v4202 = vld [vmem:[#allocation3 + $0x98] sm:$0xf]
      %v4203 = vld [vmem:[#allocation3 + $0x9c] sm:$0xf]
      %v4204 = vld [vmem:[#allocation3 + $0xa0] sm:$0xf]
      %v4205 = vld [vmem:[#allocation3 + $0xa4] sm:$0xf]
      %v4206 = vld [vmem:[#allocation3 + $0xa8] sm:$0xf]
      %v4207 = vld [vmem:[#allocation3 + $0xac] sm:$0xf]
      %v4208 = vld [vmem:[#allocation3 + $0xb0] sm:$0xf]
      %v4209 = vld [vmem:[#allocation3 + $0xb4] sm:$0xf]
      %v4210 = vld [vmem:[#allocation3 + $0xb8] sm:$0xf]
      %v4211 = vld [vmem:[#allocation3 + $0xbc] sm:$0xf]
      %v4212 = vld [vmem:[#allocation3 + $0xc0] sm:$0xf]
      %v4213 = vld [vmem:[#allocation3 + $0xc4] sm:$0xf]
      %v4214 = vld [vmem:[#allocation3 + $0xc8] sm:$0xf]
      %v4215 = vld [vmem:[#allocation3 + $0xcc] sm:$0xf]
      %v4216 = vld [vmem:[#allocation3 + $0xd0] sm:$0xf]
      %v4217 = vld [vmem:[#allocation3 + $0xd4] sm:$0xf]
      %v4218 = vld [vmem:[#allocation3 + $0xd8] sm:$0xf]
      %v4219 = vld [vmem:[#allocation3 + $0xdc] sm:$0xf]
      %v4220 = vld [vmem:[#allocation3 + $0xe0] sm:$0xf]
      %v4221 = vld [vmem:[#allocation3 + $0xe4] sm:$0xf]
      %v4222 = vld [vmem:[#allocation3 + $0xe8] sm:$0xf]
      %v4223 = vld [vmem:[#allocation3 + $0xec] sm:$0xf]
      %v4224 = vld [vmem:[#allocation3 + $0xf0] sm:$0xf]
      %v4225 = vld [vmem:[#allocation3 + $0xf4] sm:$0xf]
      %v4226 = vld [vmem:[#allocation3 + $0xf8] sm:$0xf]
      %v4227 = vld [vmem:[#allocation3 + $0xfc] sm:$0xf]
      %v4228 = vld [vmem:[#allocation3 + $0x100] sm:$0xf]
      %v4229 = vld [vmem:[#allocation3 + $0x104] sm:$0xf]
      %v4230 = vld [vmem:[#allocation3 + $0x108] sm:$0xf]
      %v4231 = vld [vmem:[#allocation3 + $0x10c] sm:$0xf]
      %v4232 = vld [vmem:[#allocation3 + $0x110] sm:$0xf]
      %v4233 = vld [vmem:[#allocation3 + $0x114] sm:$0xf]
      %v4234 = vld [vmem:[#allocation3 + $0x118] sm:$0xf]
      %v4235 = vld [vmem:[#allocation3 + $0x11c] sm:$0xf]
      %v4236 = vld [vmem:[#allocation3 + $0x120] sm:$0xf]
      %v4237 = vld [vmem:[#allocation3 + $0x124] sm:$0xf]
      %v4238 = vld [vmem:[#allocation3 + $0x128] sm:$0xf]
      %v4239 = vld [vmem:[#allocation3 + $0x12c] sm:$0xf]
      %v4240 = vld [vmem:[#allocation3 + $0x130] sm:$0x1]
      %v4314 = vunpack.c.l.b16 %v4167
      %v4315 = vunpack.c.l.b16 %v4168
      %v4316 = vunpack.c.l.b16 %v4169
      %v4317 = vunpack.c.l.b16 %v4170
      %v4318 = vunpack.c.l.b16 %v4171
      %v4319 = vunpack.c.l.b16 %v4172
      %v4320 = vunpack.c.l.b16 %v4173
      %v4321 = vunpack.c.l.b16 %v4174
      %v4322 = vunpack.c.l.b16 %v4175
      %v4323 = vunpack.c.l.b16 %v4176
      %v4324 = vunpack.c.l.b16 %v4177
      %v4325 = vunpack.c.l.b16 %v4178
      %v4326 = vunpack.c.l.b16 %v4179
      %v4327 = vunpack.c.l.b16 %v4180
      %v4328 = vunpack.c.l.b16 %v4181
      %v4329 = vunpack.c.l.b16 %v4182
      %v4330 = vunpack.c.l.b16 %v4183
      %v4331 = vunpack.c.l.b16 %v4184
      %v4332 = vunpack.c.l.b16 %v4185
      %v4333 = vunpack.c.l.b16 %v4186
      %v4334 = vunpack.c.l.b16 %v4187
      %v4335 = vunpack.c.l.b16 %v4188
      %v4336 = vunpack.c.l.b16 %v4189
      %v4337 = vunpack.c.l.b16 %v4190
      %v4338 = vunpack.c.l.b16 %v4191
      %v4339 = vunpack.c.l.b16 %v4192
      %v4340 = vunpack.c.l.b16 %v4193
      %v4341 = vunpack.c.l.b16 %v4194
      %v4342 = vunpack.c.l.b16 %v4195
      %v4343 = vunpack.c.l.b16 %v4196
      %v4344 = vunpack.c.l.b16 %v4197
      %v4345 = vunpack.c.l.b16 %v4198
      %v4346 = vunpack.c.l.b16 %v4199
      %v4347 = vunpack.c.l.b16 %v4200
      %v4348 = vunpack.c.l.b16 %v4201
      %v4349 = vunpack.c.l.b16 %v4202
      %v4350 = vunpack.c.l.b16 %v4203
      %v4351 = vunpack.c.l.b16 %v4204
      %v4352 = vunpack.c.l.b16 %v4205
      %v4353 = vunpack.c.l.b16 %v4206
      %v4354 = vunpack.c.l.b16 %v4207
      %v4355 = vunpack.c.l.b16 %v4208
      %v4356 = vunpack.c.l.b16 %v4209
      %v4357 = vunpack.c.l.b16 %v4210
      %v4358 = vunpack.c.l.b16 %v4211
      %v4359 = vunpack.c.l.b16 %v4212
      %v4360 = vunpack.c.l.b16 %v4213
      %v4361 = vunpack.c.l.b16 %v4214
      %v4362 = vunpack.c.l.b16 %v4215
      %v4363 = vunpack.c.l.b16 %v4216
      %v4364 = vunpack.c.l.b16 %v4217
      %v4365 = vunpack.c.l.b16 %v4218
      %v4366 = vunpack.c.l.b16 %v4219
      %v4367 = vunpack.c.l.b16 %v4220
      %v4368 = vunpack.c.l.b16 %v4221
      %v4369 = vunpack.c.l.b16 %v4222
      %v4370 = vunpack.c.l.b16 %v4223
      %v4371 = vunpack.c.l.b16 %v4224
      %v4372 = vunpack.c.l.b16 %v4225
      %v4373 = vunpack.c.l.b16 %v4226
      %v4374 = vunpack.c.l.b16 %v4227
      %v4375 = vunpack.c.l.b16 %v4228
      %v4376 = vunpack.c.l.b16 %v4229
      %v4377 = vunpack.c.l.b16 %v4230
      %v4378 = vunpack.c.l.b16 %v4231
      %v4379 = vunpack.c.l.b16 %v4232
      %v4380 = vunpack.c.l.b16 %v4233
      %v4381 = vunpack.c.l.b16 %v4234
      %v4382 = vunpack.c.l.b16 %v4235
      %v4383 = vunpack.c.l.b16 %v4236
      %v4384 = vunpack.c.l.b16 %v4237
      %v4385 = vunpack.c.l.b16 %v4238
      %v4386 = vunpack.c.l.b16 %v4239
      %v4387 = vpack.c.b16 %v4315, %v4314
      %v4388 = vpack.c.b16 %v4317, %v4316
      %v4389 = vpack.c.b16 %v4319, %v4318
      %v4390 = vpack.c.b16 %v4321, %v4320
      %v4391 = vpack.c.b16 %v4323, %v4322
      %v4392 = vpack.c.b16 %v4325, %v4324
      %v4393 = vpack.c.b16 %v4327, %v4326
      %v4394 = vpack.c.b16 %v4329, %v4328
      %v4395 = vpack.c.b16 %v4331, %v4330
      %v4396 = vpack.c.b16 %v4333, %v4332
      %v4397 = vpack.c.b16 %v4335, %v4334
      %v4398 = vpack.c.b16 %v4337, %v4336
      %v4399 = vpack.c.b16 %v4339, %v4338
      %v4400 = vpack.c.b16 %v4341, %v4340
      %v4401 = vpack.c.b16 %v4343, %v4342
      %v4402 = vpack.c.b16 %v4345, %v4344
      %v4403 = vpack.c.b16 %v4347, %v4346
      %v4404 = vpack.c.b16 %v4349, %v4348
      %v4405 = vpack.c.b16 %v4351, %v4350
      %v4406 = vpack.c.b16 %v4353, %v4352
      %v4407 = vpack.c.b16 %v4355, %v4354
      %v4408 = vpack.c.b16 %v4357, %v4356
      %v4409 = vpack.c.b16 %v4359, %v4358
      %v4410 = vpack.c.b16 %v4361, %v4360
      %v4411 = vpack.c.b16 %v4363, %v4362
      %v4412 = vpack.c.b16 %v4365, %v4364
      %v4413 = vpack.c.b16 %v4367, %v4366
      %v4414 = vpack.c.b16 %v4369, %v4368
      %v4415 = vpack.c.b16 %v4371, %v4370
      %v4416 = vpack.c.b16 %v4373, %v4372
      %v4417 = vpack.c.b16 %v4375, %v4374
      %v4418 = vpack.c.b16 %v4377, %v4376
      %v4419 = vpack.c.b16 %v4379, %v4378
      %v4420 = vpack.c.b16 %v4381, %v4380
      %v4421 = vpack.c.b16 %v4383, %v4382
      %v4422 = vpack.c.b16 %v4385, %v4384
      %v4423 = vpack.c.b16 %v4386, %v4386
      %v4424 = vpack.c.b16 %v4316, %v4315
      %v4425 = vpack.c.b16 %v4318, %v4317
      %v4426 = vpack.c.b16 %v4320, %v4319
      %v4427 = vpack.c.b16 %v4322, %v4321
      %v4428 = vpack.c.b16 %v4324, %v4323
      %v4429 = vpack.c.b16 %v4326, %v4325
      %v4430 = vpack.c.b16 %v4328, %v4327
      %v4431 = vpack.c.b16 %v4330, %v4329
      %v4432 = vpack.c.b16 %v4332, %v4331
      %v4433 = vpack.c.b16 %v4334, %v4333
      %v4434 = vpack.c.b16 %v4336, %v4335
      %v4435 = vpack.c.b16 %v4338, %v4337
      %v4436 = vpack.c.b16 %v4340, %v4339
      %v4437 = vpack.c.b16 %v4342, %v4341
      %v4438 = vpack.c.b16 %v4344, %v4343
      %v4439 = vpack.c.b16 %v4346, %v4345
      %v4440 = vpack.c.b16 %v4348, %v4347
      %v4441 = vpack.c.b16 %v4350, %v4349
      %v4442 = vpack.c.b16 %v4352, %v4351
      %v4443 = vpack.c.b16 %v4354, %v4353
      %v4444 = vpack.c.b16 %v4356, %v4355
      %v4445 = vpack.c.b16 %v4358, %v4357
      %v4446 = vpack.c.b16 %v4360, %v4359
      %v4447 = vpack.c.b16 %v4362, %v4361
      %v4448 = vpack.c.b16 %v4364, %v4363
      %v4449 = vpack.c.b16 %v4366, %v4365
      %v4450 = vpack.c.b16 %v4368, %v4367
      %v4451 = vpack.c.b16 %v4370, %v4369
      %v4452 = vpack.c.b16 %v4372, %v4371
      %v4453 = vpack.c.b16 %v4374, %v4373
      %v4454 = vpack.c.b16 %v4376, %v4375
      %v4455 = vpack.c.b16 %v4378, %v4377
      %v4456 = vpack.c.b16 %v4380, %v4379
      %v4457 = vpack.c.b16 %v4382, %v4381
      %v4458 = vpack.c.b16 %v4384, %v4383
      %v4459 = vpack.c.b16 %v4386, %v4385
      %vm4460 = vsmask.f32 3328
      %v4462 = vshrl.u32 %v4424, 16
      %v4464 = vrot.slane %v4462, 4
      %v4465 = vshll.u32 %v4424, 16
      %v4467 = vrot.slane %v4465, 5
      %v4468 = vor.u32 %v4464, %v4467
      %v4470 = vshrl.u32 %v4425, 16
      %v4472 = vrot.slane %v4470, 4
      %v4473 = vshll.u32 %v4425, 16
      %v4475 = vrot.slane %v4473, 5
      %v4476 = vor.u32 %v4472, %v4475
      %v4477 = vsel %vm4460, %v4468, %v4476
      %v4479 = vshrl.u32 %v4426, 16
      %v4481 = vrot.slane %v4479, 4
      %v4482 = vshll.u32 %v4426, 16
      %v4484 = vrot.slane %v4482, 5
      %v4485 = vor.u32 %v4481, %v4484
      %v4486 = vsel %vm4460, %v4476, %v4485
      %v4488 = vshrl.u32 %v4427, 16
      %v4490 = vrot.slane %v4488, 4
      %v4491 = vshll.u32 %v4427, 16
      %v4493 = vrot.slane %v4491, 5
      %v4494 = vor.u32 %v4490, %v4493
      %v4495 = vsel %vm4460, %v4485, %v4494
      %v4497 = vshrl.u32 %v4428, 16
      %v4499 = vrot.slane %v4497, 4
      %v4500 = vshll.u32 %v4428, 16
      %v4502 = vrot.slane %v4500, 5
      %v4503 = vor.u32 %v4499, %v4502
      %v4504 = vsel %vm4460, %v4494, %v4503
      %v4506 = vshrl.u32 %v4429, 16
      %v4508 = vrot.slane %v4506, 4
      %v4509 = vshll.u32 %v4429, 16
      %v4511 = vrot.slane %v4509, 5
      %v4512 = vor.u32 %v4508, %v4511
      %v4513 = vsel %vm4460, %v4503, %v4512
      %v4515 = vshrl.u32 %v4430, 16
      %v4517 = vrot.slane %v4515, 4
      %v4518 = vshll.u32 %v4430, 16
      %v4520 = vrot.slane %v4518, 5
      %v4521 = vor.u32 %v4517, %v4520
      %v4522 = vsel %vm4460, %v4512, %v4521
      %v4524 = vshrl.u32 %v4431, 16
      %v4526 = vrot.slane %v4524, 4
      %v4527 = vshll.u32 %v4431, 16
      %v4529 = vrot.slane %v4527, 5
      %v4530 = vor.u32 %v4526, %v4529
      %v4531 = vsel %vm4460, %v4521, %v4530
      %v4533 = vshrl.u32 %v4432, 16
      %v4535 = vrot.slane %v4533, 4
      %v4536 = vshll.u32 %v4432, 16
      %v4538 = vrot.slane %v4536, 5
      %v4539 = vor.u32 %v4535, %v4538
      %v4540 = vsel %vm4460, %v4530, %v4539
      %v4542 = vshrl.u32 %v4433, 16
      %v4544 = vrot.slane %v4542, 4
      %v4545 = vshll.u32 %v4433, 16
      %v4547 = vrot.slane %v4545, 5
      %v4548 = vor.u32 %v4544, %v4547
      %v4549 = vsel %vm4460, %v4539, %v4548
      %v4551 = vshrl.u32 %v4434, 16
      %v4553 = vrot.slane %v4551, 4
      %v4554 = vshll.u32 %v4434, 16
      %v4556 = vrot.slane %v4554, 5
      %v4557 = vor.u32 %v4553, %v4556
      %v4558 = vsel %vm4460, %v4548, %v4557
      %v4560 = vshrl.u32 %v4435, 16
      %v4562 = vrot.slane %v4560, 4
      %v4563 = vshll.u32 %v4435, 16
      %v4565 = vrot.slane %v4563, 5
      %v4566 = vor.u32 %v4562, %v4565
      %v4567 = vsel %vm4460, %v4557, %v4566
      %v4569 = vshrl.u32 %v4436, 16
      %v4571 = vrot.slane %v4569, 4
      %v4572 = vshll.u32 %v4436, 16
      %v4574 = vrot.slane %v4572, 5
      %v4575 = vor.u32 %v4571, %v4574
      %v4576 = vsel %vm4460, %v4566, %v4575
      %v4578 = vshrl.u32 %v4437, 16
      %v4580 = vrot.slane %v4578, 4
      %v4581 = vshll.u32 %v4437, 16
      %v4583 = vrot.slane %v4581, 5
      %v4584 = vor.u32 %v4580, %v4583
      %v4585 = vsel %vm4460, %v4575, %v4584
      %v4587 = vshrl.u32 %v4438, 16
      %v4589 = vrot.slane %v4587, 4
      %v4590 = vshll.u32 %v4438, 16
      %v4592 = vrot.slane %v4590, 5
      %v4593 = vor.u32 %v4589, %v4592
      %v4594 = vsel %vm4460, %v4584, %v4593
      %v4596 = vshrl.u32 %v4439, 16
      %v4598 = vrot.slane %v4596, 4
      %v4599 = vshll.u32 %v4439, 16
      %v4601 = vrot.slane %v4599, 5
      %v4602 = vor.u32 %v4598, %v4601
      %v4603 = vsel %vm4460, %v4593, %v4602
      %v4605 = vshrl.u32 %v4440, 16
      %v4607 = vrot.slane %v4605, 4
      %v4608 = vshll.u32 %v4440, 16
      %v4610 = vrot.slane %v4608, 5
      %v4611 = vor.u32 %v4607, %v4610
      %v4612 = vsel %vm4460, %v4602, %v4611
      %v4614 = vshrl.u32 %v4441, 16
      %v4616 = vrot.slane %v4614, 4
      %v4617 = vshll.u32 %v4441, 16
      %v4619 = vrot.slane %v4617, 5
      %v4620 = vor.u32 %v4616, %v4619
      %v4621 = vsel %vm4460, %v4611, %v4620
      %v4623 = vshrl.u32 %v4442, 16
      %v4625 = vrot.slane %v4623, 4
      %v4626 = vshll.u32 %v4442, 16
      %v4628 = vrot.slane %v4626, 5
      %v4629 = vor.u32 %v4625, %v4628
      %v4630 = vsel %vm4460, %v4620, %v4629
      %v4632 = vshrl.u32 %v4443, 16
      %v4634 = vrot.slane %v4632, 4
      %v4635 = vshll.u32 %v4443, 16
      %v4637 = vrot.slane %v4635, 5
      %v4638 = vor.u32 %v4634, %v4637
      %v4639 = vsel %vm4460, %v4629, %v4638
      %v4641 = vshrl.u32 %v4444, 16
      %v4643 = vrot.slane %v4641, 4
      %v4644 = vshll.u32 %v4444, 16
      %v4646 = vrot.slane %v4644, 5
      %v4647 = vor.u32 %v4643, %v4646
      %v4648 = vsel %vm4460, %v4638, %v4647
      %v4650 = vshrl.u32 %v4445, 16
      %v4652 = vrot.slane %v4650, 4
      %v4653 = vshll.u32 %v4445, 16
      %v4655 = vrot.slane %v4653, 5
      %v4656 = vor.u32 %v4652, %v4655
      %v4657 = vsel %vm4460, %v4647, %v4656
      %v4659 = vshrl.u32 %v4446, 16
      %v4661 = vrot.slane %v4659, 4
      %v4662 = vshll.u32 %v4446, 16
      %v4664 = vrot.slane %v4662, 5
      %v4665 = vor.u32 %v4661, %v4664
      %v4666 = vsel %vm4460, %v4656, %v4665
      %v4668 = vshrl.u32 %v4447, 16
      %v4670 = vrot.slane %v4668, 4
      %v4671 = vshll.u32 %v4447, 16
      %v4673 = vrot.slane %v4671, 5
      %v4674 = vor.u32 %v4670, %v4673
      %v4675 = vsel %vm4460, %v4665, %v4674
      %v4677 = vshrl.u32 %v4448, 16
      %v4679 = vrot.slane %v4677, 4
      %v4680 = vshll.u32 %v4448, 16
      %v4682 = vrot.slane %v4680, 5
      %v4683 = vor.u32 %v4679, %v4682
      %v4684 = vsel %vm4460, %v4674, %v4683
      %v4686 = vshrl.u32 %v4449, 16
      %v4688 = vrot.slane %v4686, 4
      %v4689 = vshll.u32 %v4449, 16
      %v4691 = vrot.slane %v4689, 5
      %v4692 = vor.u32 %v4688, %v4691
      %v4693 = vsel %vm4460, %v4683, %v4692
      %v4695 = vshrl.u32 %v4450, 16
      %v4697 = vrot.slane %v4695, 4
      %v4698 = vshll.u32 %v4450, 16
      %v4700 = vrot.slane %v4698, 5
      %v4701 = vor.u32 %v4697, %v4700
      %v4702 = vsel %vm4460, %v4692, %v4701
      %v4704 = vshrl.u32 %v4451, 16
      %v4706 = vrot.slane %v4704, 4
      %v4707 = vshll.u32 %v4451, 16
      %v4709 = vrot.slane %v4707, 5
      %v4710 = vor.u32 %v4706, %v4709
      %v4711 = vsel %vm4460, %v4701, %v4710
      %v4713 = vshrl.u32 %v4452, 16
      %v4715 = vrot.slane %v4713, 4
      %v4716 = vshll.u32 %v4452, 16
      %v4718 = vrot.slane %v4716, 5
      %v4719 = vor.u32 %v4715, %v4718
      %v4720 = vsel %vm4460, %v4710, %v4719
      %v4722 = vshrl.u32 %v4453, 16
      %v4724 = vrot.slane %v4722, 4
      %v4725 = vshll.u32 %v4453, 16
      %v4727 = vrot.slane %v4725, 5
      %v4728 = vor.u32 %v4724, %v4727
      %v4729 = vsel %vm4460, %v4719, %v4728
      %v4731 = vshrl.u32 %v4454, 16
      %v4733 = vrot.slane %v4731, 4
      %v4734 = vshll.u32 %v4454, 16
      %v4736 = vrot.slane %v4734, 5
      %v4737 = vor.u32 %v4733, %v4736
      %v4738 = vsel %vm4460, %v4728, %v4737
      %v4740 = vshrl.u32 %v4455, 16
      %v4742 = vrot.slane %v4740, 4
      %v4743 = vshll.u32 %v4455, 16
      %v4745 = vrot.slane %v4743, 5
      %v4746 = vor.u32 %v4742, %v4745
      %v4747 = vsel %vm4460, %v4737, %v4746
      %v4749 = vshrl.u32 %v4456, 16
      %v4751 = vrot.slane %v4749, 4
      %v4752 = vshll.u32 %v4456, 16
      %v4754 = vrot.slane %v4752, 5
      %v4755 = vor.u32 %v4751, %v4754
      %v4756 = vsel %vm4460, %v4746, %v4755
      %v4758 = vshrl.u32 %v4457, 16
      %v4760 = vrot.slane %v4758, 4
      %v4761 = vshll.u32 %v4457, 16
      %v4763 = vrot.slane %v4761, 5
      %v4764 = vor.u32 %v4760, %v4763
      %v4765 = vsel %vm4460, %v4755, %v4764
      %v4767 = vshrl.u32 %v4458, 16
      %v4769 = vrot.slane %v4767, 4
      %v4770 = vshll.u32 %v4458, 16
      %v4772 = vrot.slane %v4770, 5
      %v4773 = vor.u32 %v4769, %v4772
      %v4774 = vsel %vm4460, %v4764, %v4773
      %v4776 = vshrl.u32 %v4459, 16
      %v4778 = vrot.slane %v4776, 4
      %v4779 = vshll.u32 %v4459, 16
      %v4781 = vrot.slane %v4779, 5
      %v4782 = vor.u32 %v4778, %v4781
      %v4783 = vsel %vm4460, %v4773, %v4782
      %4784 = vrot.lane.b32.xlu0 %v4468, 8
      %v4785 = vpop.permute.xlu0 %4784
      %4786 = vrot.lane.b32.xlu0 %v4477, 8
      %v4787 = vpop.permute.xlu0 %4786
      %4788 = vrot.lane.b32.xlu0 %v4486, 8
      %v4789 = vpop.permute.xlu0 %4788
      %4790 = vrot.lane.b32.xlu0 %v4495, 8
      %v4791 = vpop.permute.xlu0 %4790
      %4792 = vrot.lane.b32.xlu0 %v4504, 8
      %v4793 = vpop.permute.xlu0 %4792
      %4794 = vrot.lane.b32.xlu0 %v4513, 8
      %v4795 = vpop.permute.xlu0 %4794
      %4796 = vrot.lane.b32.xlu0 %v4522, 8
      %v4797 = vpop.permute.xlu0 %4796
      %4798 = vrot.lane.b32.xlu0 %v4531, 8
      %v4799 = vpop.permute.xlu0 %4798
      %4800 = vrot.lane.b32.xlu0 %v4540, 8
      %v4801 = vpop.permute.xlu0 %4800
      %4802 = vrot.lane.b32.xlu0 %v4549, 8
      %v4803 = vpop.permute.xlu0 %4802
      %4804 = vrot.lane.b32.xlu0 %v4558, 8
      %v4805 = vpop.permute.xlu0 %4804
      %4806 = vrot.lane.b32.xlu0 %v4567, 8
      %v4807 = vpop.permute.xlu0 %4806
      %4808 = vrot.lane.b32.xlu0 %v4576, 8
      %v4809 = vpop.permute.xlu0 %4808
      %4810 = vrot.lane.b32.xlu0 %v4585, 8
      %v4811 = vpop.permute.xlu0 %4810
      %4812 = vrot.lane.b32.xlu0 %v4594, 8
      %v4813 = vpop.permute.xlu0 %4812
      %4814 = vrot.lane.b32.xlu0 %v4603, 8
      %v4815 = vpop.permute.xlu0 %4814
      %4816 = vrot.lane.b32.xlu0 %v4612, 8
      %v4817 = vpop.permute.xlu0 %4816
      %4818 = vrot.lane.b32.xlu0 %v4621, 8
      %v4819 = vpop.permute.xlu0 %4818
      %4820 = vrot.lane.b32.xlu0 %v4630, 8
      %v4821 = vpop.permute.xlu0 %4820
      %4822 = vrot.lane.b32.xlu0 %v4639, 8
      %v4823 = vpop.permute.xlu0 %4822
      %4824 = vrot.lane.b32.xlu0 %v4648, 8
      %v4825 = vpop.permute.xlu0 %4824
      %4826 = vrot.lane.b32.xlu0 %v4657, 8
      %v4827 = vpop.permute.xlu0 %4826
      %4828 = vrot.lane.b32.xlu0 %v4666, 8
      %v4829 = vpop.permute.xlu0 %4828
      %4830 = vrot.lane.b32.xlu0 %v4675, 8
      %v4831 = vpop.permute.xlu0 %4830
      %4832 = vrot.lane.b32.xlu0 %v4684, 8
      %v4833 = vpop.permute.xlu0 %4832
      %4834 = vrot.lane.b32.xlu0 %v4693, 8
      %v4835 = vpop.permute.xlu0 %4834
      %4836 = vrot.lane.b32.xlu0 %v4702, 8
      %v4837 = vpop.permute.xlu0 %4836
      %4838 = vrot.lane.b32.xlu0 %v4711, 8
      %v4839 = vpop.permute.xlu0 %4838
      %4840 = vrot.lane.b32.xlu0 %v4720, 8
      %v4841 = vpop.permute.xlu0 %4840
      %4842 = vrot.lane.b32.xlu0 %v4729, 8
      %v4843 = vpop.permute.xlu0 %4842
      %4844 = vrot.lane.b32.xlu0 %v4738, 8
      %v4845 = vpop.permute.xlu0 %4844
      %4846 = vrot.lane.b32.xlu0 %v4747, 8
      %v4847 = vpop.permute.xlu0 %4846
      %4848 = vrot.lane.b32.xlu0 %v4756, 8
      %v4849 = vpop.permute.xlu0 %4848
      %4850 = vrot.lane.b32.xlu0 %v4765, 8
      %v4851 = vpop.permute.xlu0 %4850
      %4852 = vrot.lane.b32.xlu0 %v4774, 8
      %v4853 = vpop.permute.xlu0 %4852
      %4854 = vrot.lane.b32.xlu0 %v4783, 8
      %v4855 = vpop.permute.xlu0 %4854
      %4856 = vrot.lane.b32.xlu0 %v4782, 8
      %v4857 = vpop.permute.xlu0 %4856
      %v4859 = vunpack.c.l.b16 %v4240
      %v4860 = vpack.c.b16 %v4859, %v4859
      %vm4861 = vcmask 1042432
      %v4862 = vrot.slane %v4424, 5
      %v4863 = vrot.slane %v4425, 5
      %v4864 = vsel %vm4861, %v4862, %v4863
      %v4865 = vrot.slane %v4426, 5
      %v4866 = vsel %vm4861, %v4863, %v4865
      %v4867 = vrot.slane %v4427, 5
      %v4868 = vsel %vm4861, %v4865, %v4867
      %v4869 = vrot.slane %v4428, 5
      %v4870 = vsel %vm4861, %v4867, %v4869
      %v4871 = vrot.slane %v4429, 5
      %v4872 = vsel %vm4861, %v4869, %v4871
      %v4873 = vrot.slane %v4430, 5
      %v4874 = vsel %vm4861, %v4871, %v4873
      %v4875 = vrot.slane %v4431, 5
      %v4876 = vsel %vm4861, %v4873, %v4875
      %v4877 = vrot.slane %v4432, 5
      %v4878 = vsel %vm4861, %v4875, %v4877
      %v4879 = vrot.slane %v4433, 5
      %v4880 = vsel %vm4861, %v4877, %v4879
      %v4881 = vrot.slane %v4434, 5
      %v4882 = vsel %vm4861, %v4879, %v4881
      %v4883 = vrot.slane %v4435, 5
      %v4884 = vsel %vm4861, %v4881, %v4883
      %v4885 = vrot.slane %v4436, 5
      %v4886 = vsel %vm4861, %v4883, %v4885
      %v4887 = vrot.slane %v4437, 5
      %v4888 = vsel %vm4861, %v4885, %v4887
      %v4889 = vrot.slane %v4438, 5
      %v4890 = vsel %vm4861, %v4887, %v4889
      %v4891 = vrot.slane %v4439, 5
      %v4892 = vsel %vm4861, %v4889, %v4891
      %v4893 = vrot.slane %v4440, 5
      %v4894 = vsel %vm4861, %v4891, %v4893
      %v4895 = vrot.slane %v4441, 5
      %v4896 = vsel %vm4861, %v4893, %v4895
      %v4897 = vrot.slane %v4442, 5
      %v4898 = vsel %vm4861, %v4895, %v4897
      %v4899 = vrot.slane %v4443, 5
      %v4900 = vsel %vm4861, %v4897, %v4899
      %v4901 = vrot.slane %v4444, 5
      %v4902 = vsel %vm4861, %v4899, %v4901
      %v4903 = vrot.slane %v4445, 5
      %v4904 = vsel %vm4861, %v4901, %v4903
      %v4905 = vrot.slane %v4446, 5
      %v4906 = vsel %vm4861, %v4903, %v4905
      %v4907 = vrot.slane %v4447, 5
      %v4908 = vsel %vm4861, %v4905, %v4907
      %v4909 = vrot.slane %v4448, 5
      %v4910 = vsel %vm4861, %v4907, %v4909
      %v4911 = vrot.slane %v4449, 5
      %v4912 = vsel %vm4861, %v4909, %v4911
      %v4913 = vrot.slane %v4450, 5
      %v4914 = vsel %vm4861, %v4911, %v4913
      %v4915 = vrot.slane %v4451, 5
      %v4916 = vsel %vm4861, %v4913, %v4915
      %v4917 = vrot.slane %v4452, 5
      %v4918 = vsel %vm4861, %v4915, %v4917
      %v4919 = vrot.slane %v4453, 5
      %v4920 = vsel %vm4861, %v4917, %v4919
      %v4921 = vrot.slane %v4454, 5
      %v4922 = vsel %vm4861, %v4919, %v4921
      %v4923 = vrot.slane %v4455, 5
      %v4924 = vsel %vm4861, %v4921, %v4923
      %v4925 = vrot.slane %v4456, 5
      %v4926 = vsel %vm4861, %v4923, %v4925
      %v4927 = vrot.slane %v4457, 5
      %v4928 = vsel %vm4861, %v4925, %v4927
      %v4929 = vrot.slane %v4458, 5
      %v4930 = vsel %vm4861, %v4927, %v4929
      %v4931 = vrot.slane %v4459, 5
      %v4932 = vsel %vm4861, %v4929, %v4931
      %v4933 = vrot.slane %v4860, 5
      %v4934 = vsel %vm4861, %v4931, %v4933
      %4935 = vrot.lane.b32.xlu0 %v4862, 16
      %v4936 = vpop.permute.xlu0 %4935
      %4937 = vrot.lane.b32.xlu0 %v4864, 16
      %v4938 = vpop.permute.xlu0 %4937
      %4939 = vrot.lane.b32.xlu0 %v4866, 16
      %v4940 = vpop.permute.xlu0 %4939
      %4941 = vrot.lane.b32.xlu0 %v4868, 16
      %v4942 = vpop.permute.xlu0 %4941
      %4943 = vrot.lane.b32.xlu0 %v4870, 16
      %v4944 = vpop.permute.xlu0 %4943
      %4945 = vrot.lane.b32.xlu0 %v4872, 16
      %v4946 = vpop.permute.xlu0 %4945
      %4947 = vrot.lane.b32.xlu0 %v4874, 16
      %v4948 = vpop.permute.xlu0 %4947
      %4949 = vrot.lane.b32.xlu0 %v4876, 16
      %v4950 = vpop.permute.xlu0 %4949
      %4951 = vrot.lane.b32.xlu0 %v4878, 16
      %v4952 = vpop.permute.xlu0 %4951
      %4953 = vrot.lane.b32.xlu0 %v4880, 16
      %v4954 = vpop.permute.xlu0 %4953
      %4955 = vrot.lane.b32.xlu0 %v4882, 16
      %v4956 = vpop.permute.xlu0 %4955
      %4957 = vrot.lane.b32.xlu0 %v4884, 16
      %v4958 = vpop.permute.xlu0 %4957
      %4959 = vrot.lane.b32.xlu0 %v4886, 16
      %v4960 = vpop.permute.xlu0 %4959
      %4961 = vrot.lane.b32.xlu0 %v4888, 16
      %v4962 = vpop.permute.xlu0 %4961
      %4963 = vrot.lane.b32.xlu0 %v4890, 16
      %v4964 = vpop.permute.xlu0 %4963
      %4965 = vrot.lane.b32.xlu0 %v4892, 16
      %v4966 = vpop.permute.xlu0 %4965
      %4967 = vrot.lane.b32.xlu0 %v4894, 16
      %v4968 = vpop.permute.xlu0 %4967
      %4969 = vrot.lane.b32.xlu0 %v4896, 16
      %v4970 = vpop.permute.xlu0 %4969
      %4971 = vrot.lane.b32.xlu0 %v4898, 16
      %v4972 = vpop.permute.xlu0 %4971
      %4973 = vrot.lane.b32.xlu0 %v4900, 16
      %v4974 = vpop.permute.xlu0 %4973
      %4975 = vrot.lane.b32.xlu0 %v4902, 16
      %v4976 = vpop.permute.xlu0 %4975
      %4977 = vrot.lane.b32.xlu0 %v4904, 16
      %v4978 = vpop.permute.xlu0 %4977
      %4979 = vrot.lane.b32.xlu0 %v4906, 16
      %v4980 = vpop.permute.xlu0 %4979
      %4981 = vrot.lane.b32.xlu0 %v4908, 16
      %v4982 = vpop.permute.xlu0 %4981
      %4983 = vrot.lane.b32.xlu0 %v4910, 16
      %v4984 = vpop.permute.xlu0 %4983
      %4985 = vrot.lane.b32.xlu0 %v4912, 16
      %v4986 = vpop.permute.xlu0 %4985
      %4987 = vrot.lane.b32.xlu0 %v4914, 16
      %v4988 = vpop.permute.xlu0 %4987
      %4989 = vrot.lane.b32.xlu0 %v4916, 16
      %v4990 = vpop.permute.xlu0 %4989
      %4991 = vrot.lane.b32.xlu0 %v4918, 16
      %v4992 = vpop.permute.xlu0 %4991
      %4993 = vrot.lane.b32.xlu0 %v4920, 16
      %v4994 = vpop.permute.xlu0 %4993
      %4995 = vrot.lane.b32.xlu0 %v4922, 16
      %v4996 = vpop.permute.xlu0 %4995
      %4997 = vrot.lane.b32.xlu0 %v4924, 16
      %v4998 = vpop.permute.xlu0 %4997
      %4999 = vrot.lane.b32.xlu0 %v4926, 16
      %v5000 = vpop.permute.xlu0 %4999
      %5001 = vrot.lane.b32.xlu0 %v4928, 16
      %v5002 = vpop.permute.xlu0 %5001
      %5003 = vrot.lane.b32.xlu0 %v4930, 16
      %v5004 = vpop.permute.xlu0 %5003
      %5005 = vrot.lane.b32.xlu0 %v4932, 16
      %v5006 = vpop.permute.xlu0 %5005
      %5007 = vrot.lane.b32.xlu0 %v4934, 16
      %v5008 = vpop.permute.xlu0 %5007
      %v5011 = vsel %vm1155, %v4387, %v4785
      %v5014 = vsel %vm1155, %v4388, %v4787
      %v5017 = vsel %vm1155, %v4389, %v4789
      %v5020 = vsel %vm1155, %v4390, %v4791
      %v5023 = vsel %vm1155, %v4391, %v4793
      %v5026 = vsel %vm1155, %v4392, %v4795
      %v5029 = vsel %vm1155, %v4393, %v4797
      %v5032 = vsel %vm1155, %v4394, %v4799
      %v5035 = vsel %vm1155, %v4395, %v4801
      %v5038 = vsel %vm1155, %v4396, %v4803
      %v5041 = vsel %vm1155, %v4397, %v4805
      %v5044 = vsel %vm1155, %v4398, %v4807
      %v5047 = vsel %vm1155, %v4399, %v4809
      %v5050 = vsel %vm1155, %v4400, %v4811
      %v5053 = vsel %vm1155, %v4401, %v4813
      %v5056 = vsel %vm1155, %v4402, %v4815
      %v5059 = vsel %vm1155, %v4403, %v4817
      %v5062 = vsel %vm1155, %v4404, %v4819
      %v5065 = vsel %vm1155, %v4405, %v4821
      %v5068 = vsel %vm1155, %v4406, %v4823
      %v5071 = vsel %vm1155, %v4407, %v4825
      %v5074 = vsel %vm1155, %v4408, %v4827
      %v5077 = vsel %vm1155, %v4409, %v4829
      %v5080 = vsel %vm1155, %v4410, %v4831
      %v5083 = vsel %vm1155, %v4411, %v4833
      %v5086 = vsel %vm1155, %v4412, %v4835
      %v5089 = vsel %vm1155, %v4413, %v4837
      %v5092 = vsel %vm1155, %v4414, %v4839
      %v5095 = vsel %vm1155, %v4415, %v4841
      %v5098 = vsel %vm1155, %v4416, %v4843
      %v5101 = vsel %vm1155, %v4417, %v4845
      %v5104 = vsel %vm1155, %v4418, %v4847
      %v5107 = vsel %vm1155, %v4419, %v4849
      %v5110 = vsel %vm1155, %v4420, %v4851
      %v5113 = vsel %vm1155, %v4421, %v4853
      %v5116 = vsel %vm1155, %v4422, %v4855
      %v5119 = vsel %vm1155, %v4423, %v4857
      %vm5120 = vcmask 130048
      %v5122 = vsel %vm5120, %v5011, %v4936
      %v5124 = vsel %vm5120, %v5014, %v4938
      %v5126 = vsel %vm5120, %v5017, %v4940
      %v5128 = vsel %vm5120, %v5020, %v4942
      %v5130 = vsel %vm5120, %v5023, %v4944
      %v5132 = vsel %vm5120, %v5026, %v4946
      %v5134 = vsel %vm5120, %v5029, %v4948
      %v5136 = vsel %vm5120, %v5032, %v4950
      %v5138 = vsel %vm5120, %v5035, %v4952
      %v5140 = vsel %vm5120, %v5038, %v4954
      %v5142 = vsel %vm5120, %v5041, %v4956
      %v5144 = vsel %vm5120, %v5044, %v4958
      %v5146 = vsel %vm5120, %v5047, %v4960
      %v5148 = vsel %vm5120, %v5050, %v4962
      %v5150 = vsel %vm5120, %v5053, %v4964
      %v5152 = vsel %vm5120, %v5056, %v4966
      %v5154 = vsel %vm5120, %v5059, %v4968
      %v5156 = vsel %vm5120, %v5062, %v4970
      %v5158 = vsel %vm5120, %v5065, %v4972
      %v5160 = vsel %vm5120, %v5068, %v4974
      %v5162 = vsel %vm5120, %v5071, %v4976
      %v5164 = vsel %vm5120, %v5074, %v4978
      %v5166 = vsel %vm5120, %v5077, %v4980
      %v5168 = vsel %vm5120, %v5080, %v4982
      %v5170 = vsel %vm5120, %v5083, %v4984
      %v5172 = vsel %vm5120, %v5086, %v4986
      %v5174 = vsel %vm5120, %v5089, %v4988
      %v5176 = vsel %vm5120, %v5092, %v4990
      %v5178 = vsel %vm5120, %v5095, %v4992
      %v5180 = vsel %vm5120, %v5098, %v4994
      %v5182 = vsel %vm5120, %v5101, %v4996
      %v5184 = vsel %vm5120, %v5104, %v4998
      %v5186 = vsel %vm5120, %v5107, %v5000
      %v5188 = vsel %vm5120, %v5110, %v5002
      %v5190 = vsel %vm5120, %v5113, %v5004
      %v5192 = vsel %vm5120, %v5116, %v5006
      %v5194 = vsel %vm5120, %v5119, %v5008
      %v5232 = vunpack.c.l.b16 %v5122
      %v5233 = vunpack.c.h.b16 %v5122
      %v5234 = vunpack.c.l.b16 %v5124
      %v5235 = vunpack.c.h.b16 %v5124
      %v5236 = vunpack.c.l.b16 %v5126
      %v5237 = vunpack.c.h.b16 %v5126
      %v5238 = vunpack.c.l.b16 %v5128
      %v5239 = vunpack.c.h.b16 %v5128
      %v5240 = vunpack.c.l.b16 %v5130
      %v5241 = vunpack.c.h.b16 %v5130
      %v5242 = vunpack.c.l.b16 %v5132
      %v5243 = vunpack.c.h.b16 %v5132
      %v5244 = vunpack.c.l.b16 %v5134
      %v5245 = vunpack.c.h.b16 %v5134
      %v5246 = vunpack.c.l.b16 %v5136
      %v5247 = vunpack.c.h.b16 %v5136
      %v5248 = vunpack.c.l.b16 %v5138
      %v5249 = vunpack.c.h.b16 %v5138
      %v5250 = vunpack.c.l.b16 %v5140
      %v5251 = vunpack.c.h.b16 %v5140
      %v5252 = vunpack.c.l.b16 %v5142
      %v5253 = vunpack.c.h.b16 %v5142
      %v5254 = vunpack.c.l.b16 %v5144
      %v5255 = vunpack.c.h.b16 %v5144
      %v5256 = vunpack.c.l.b16 %v5146
      %v5257 = vunpack.c.h.b16 %v5146
      %v5258 = vunpack.c.l.b16 %v5148
      %v5259 = vunpack.c.h.b16 %v5148
      %v5260 = vunpack.c.l.b16 %v5150
      %v5261 = vunpack.c.h.b16 %v5150
      %v5262 = vunpack.c.l.b16 %v5152
      %v5263 = vunpack.c.h.b16 %v5152
      %v5264 = vunpack.c.l.b16 %v5154
      %v5265 = vunpack.c.h.b16 %v5154
      %v5266 = vunpack.c.l.b16 %v5156
      %v5267 = vunpack.c.h.b16 %v5156
      %v5268 = vunpack.c.l.b16 %v5158
      %v5269 = vunpack.c.h.b16 %v5158
      %v5270 = vunpack.c.l.b16 %v5160
      %v5271 = vunpack.c.h.b16 %v5160
      %v5272 = vunpack.c.l.b16 %v5162
      %v5273 = vunpack.c.h.b16 %v5162
      %v5274 = vunpack.c.l.b16 %v5164
      %v5275 = vunpack.c.h.b16 %v5164
      %v5276 = vunpack.c.l.b16 %v5166
      %v5277 = vunpack.c.h.b16 %v5166
      %v5278 = vunpack.c.l.b16 %v5168
      %v5279 = vunpack.c.h.b16 %v5168
      %v5280 = vunpack.c.l.b16 %v5170
      %v5281 = vunpack.c.h.b16 %v5170
      %v5282 = vunpack.c.l.b16 %v5172
      %v5283 = vunpack.c.h.b16 %v5172
      %v5284 = vunpack.c.l.b16 %v5174
      %v5285 = vunpack.c.h.b16 %v5174
      %v5286 = vunpack.c.l.b16 %v5176
      %v5287 = vunpack.c.h.b16 %v5176
      %v5288 = vunpack.c.l.b16 %v5178
      %v5289 = vunpack.c.h.b16 %v5178
      %v5290 = vunpack.c.l.b16 %v5180
      %v5291 = vunpack.c.h.b16 %v5180
      %v5292 = vunpack.c.l.b16 %v5182
      %v5293 = vunpack.c.h.b16 %v5182
      %v5294 = vunpack.c.l.b16 %v5184
      %v5295 = vunpack.c.h.b16 %v5184
      %v5296 = vunpack.c.l.b16 %v5186
      %v5297 = vunpack.c.h.b16 %v5186
      %v5298 = vunpack.c.l.b16 %v5188
      %v5299 = vunpack.c.h.b16 %v5188
      %v5300 = vunpack.c.l.b16 %v5190
      %v5301 = vunpack.c.h.b16 %v5190
      %v5302 = vunpack.c.l.b16 %v5192
      %v5303 = vunpack.c.h.b16 %v5192
      %v5304 = vunpack.c.l.b16 %v5194
      %v5305 = vpack.c.b16 %v5232, %v5232
      %v5306 = vpack.c.b16 %v5233, %v5233
      %v5307 = vpack.c.b16 %v5234, %v5234
      %v5308 = vpack.c.b16 %v5235, %v5235
      %v5309 = vpack.c.b16 %v5236, %v5236
      %v5310 = vpack.c.b16 %v5237, %v5237
      %v5311 = vpack.c.b16 %v5238, %v5238
      %v5312 = vpack.c.b16 %v5239, %v5239
      %v5313 = vpack.c.b16 %v5240, %v5240
      %v5314 = vpack.c.b16 %v5241, %v5241
      %v5315 = vpack.c.b16 %v5242, %v5242
      %v5316 = vpack.c.b16 %v5243, %v5243
      %v5317 = vpack.c.b16 %v5244, %v5244
      %v5318 = vpack.c.b16 %v5245, %v5245
      %v5319 = vpack.c.b16 %v5246, %v5246
      %v5320 = vpack.c.b16 %v5247, %v5247
      %v5321 = vpack.c.b16 %v5248, %v5248
      %v5322 = vpack.c.b16 %v5249, %v5249
      %v5323 = vpack.c.b16 %v5250, %v5250
      %v5324 = vpack.c.b16 %v5251, %v5251
      %v5325 = vpack.c.b16 %v5252, %v5252
      %v5326 = vpack.c.b16 %v5253, %v5253
      %v5327 = vpack.c.b16 %v5254, %v5254
      %v5328 = vpack.c.b16 %v5255, %v5255
      %v5329 = vpack.c.b16 %v5256, %v5256
      %v5330 = vpack.c.b16 %v5257, %v5257
      %v5331 = vpack.c.b16 %v5258, %v5258
      %v5332 = vpack.c.b16 %v5259, %v5259
      %v5333 = vpack.c.b16 %v5260, %v5260
      %v5334 = vpack.c.b16 %v5261, %v5261
      %v5335 = vpack.c.b16 %v5262, %v5262
      %v5336 = vpack.c.b16 %v5263, %v5263
      %v5337 = vpack.c.b16 %v5264, %v5264
      %v5338 = vpack.c.b16 %v5265, %v5265
      %v5339 = vpack.c.b16 %v5266, %v5266
      %v5340 = vpack.c.b16 %v5267, %v5267
      %v5341 = vpack.c.b16 %v5268, %v5268
      %v5342 = vpack.c.b16 %v5269, %v5269
      %v5343 = vpack.c.b16 %v5270, %v5270
      %v5344 = vpack.c.b16 %v5271, %v5271
      %v5345 = vpack.c.b16 %v5272, %v5272
      %v5346 = vpack.c.b16 %v5273, %v5273
      %v5347 = vpack.c.b16 %v5274, %v5274
      %v5348 = vpack.c.b16 %v5275, %v5275
      %v5349 = vpack.c.b16 %v5276, %v5276
      %v5350 = vpack.c.b16 %v5277, %v5277
      %v5351 = vpack.c.b16 %v5278, %v5278
      %v5352 = vpack.c.b16 %v5279, %v5279
      %v5353 = vpack.c.b16 %v5280, %v5280
      %v5354 = vpack.c.b16 %v5281, %v5281
      %v5355 = vpack.c.b16 %v5282, %v5282
      %v5356 = vpack.c.b16 %v5283, %v5283
      %v5357 = vpack.c.b16 %v5284, %v5284
      %v5358 = vpack.c.b16 %v5285, %v5285
      %v5359 = vpack.c.b16 %v5286, %v5286
      %v5360 = vpack.c.b16 %v5287, %v5287
      %v5361 = vpack.c.b16 %v5288, %v5288
      %v5362 = vpack.c.b16 %v5289, %v5289
      %v5363 = vpack.c.b16 %v5290, %v5290
      %v5364 = vpack.c.b16 %v5291, %v5291
      %v5365 = vpack.c.b16 %v5292, %v5292
      %v5366 = vpack.c.b16 %v5293, %v5293
      %v5367 = vpack.c.b16 %v5294, %v5294
      %v5368 = vpack.c.b16 %v5295, %v5295
      %v5369 = vpack.c.b16 %v5296, %v5296
      %v5370 = vpack.c.b16 %v5297, %v5297
      %v5371 = vpack.c.b16 %v5298, %v5298
      %v5372 = vpack.c.b16 %v5299, %v5299
      %v5373 = vpack.c.b16 %v5300, %v5300
      %v5374 = vpack.c.b16 %v5301, %v5301
      %v5375 = vpack.c.b16 %v5302, %v5302
      %v5376 = vpack.c.b16 %v5303, %v5303
      %v5377 = vpack.c.b16 %v5304, %v5304
      %vm5378 = vsmask.f32 256
      %vm5379 = vsmask.f32 4368
      %vm5380 = vmor %vm5378, %vm5379
      %v5382 = vshrl.u32 %v5305, 16
      %v5384 = vrot.slane %v5382, 7
      %v5385 = vrot.slane %v5384, 4
      %v5387 = vshrl.u32 %v5306, 16
      %v5389 = vrot.slane %v5387, 7
      %v5390 = vshll.u32 %v5306, 16
      %v5392 = vor.u32 %v5389, %v5390
      %v5393 = vsel %vm5380, %v5385, %v5392
      %v5394 = vrot.slane %v5389, 4
      %v5396 = vshrl.u32 %v5307, 16
      %v5398 = vrot.slane %v5396, 7
      %v5399 = vshll.u32 %v5307, 16
      %v5401 = vor.u32 %v5398, %v5399
      %v5402 = vsel %vm5380, %v5394, %v5401
      %v5403 = vrot.slane %v5398, 4
      %v5405 = vshrl.u32 %v5308, 16
      %v5407 = vrot.slane %v5405, 7
      %v5408 = vshll.u32 %v5308, 16
      %v5410 = vor.u32 %v5407, %v5408
      %v5411 = vsel %vm5380, %v5403, %v5410
      %v5412 = vrot.slane %v5407, 4
      %v5414 = vshrl.u32 %v5309, 16
      %v5416 = vrot.slane %v5414, 7
      %v5417 = vshll.u32 %v5309, 16
      %v5419 = vor.u32 %v5416, %v5417
      %v5420 = vsel %vm5380, %v5412, %v5419
      %v5421 = vrot.slane %v5416, 4
      %v5423 = vshrl.u32 %v5310, 16
      %v5425 = vrot.slane %v5423, 7
      %v5426 = vshll.u32 %v5310, 16
      %v5428 = vor.u32 %v5425, %v5426
      %v5429 = vsel %vm5380, %v5421, %v5428
      %v5430 = vrot.slane %v5425, 4
      %v5432 = vshrl.u32 %v5311, 16
      %v5434 = vrot.slane %v5432, 7
      %v5435 = vshll.u32 %v5311, 16
      %v5437 = vor.u32 %v5434, %v5435
      %v5438 = vsel %vm5380, %v5430, %v5437
      %v5439 = vrot.slane %v5434, 4
      %v5441 = vshrl.u32 %v5312, 16
      %v5443 = vrot.slane %v5441, 7
      %v5444 = vshll.u32 %v5312, 16
      %v5446 = vor.u32 %v5443, %v5444
      %v5447 = vsel %vm5380, %v5439, %v5446
      %v5448 = vrot.slane %v5443, 4
      %v5450 = vshrl.u32 %v5313, 16
      %v5452 = vrot.slane %v5450, 7
      %v5453 = vshll.u32 %v5313, 16
      %v5455 = vor.u32 %v5452, %v5453
      %v5456 = vsel %vm5380, %v5448, %v5455
      %v5457 = vrot.slane %v5452, 4
      %v5459 = vshrl.u32 %v5314, 16
      %v5461 = vrot.slane %v5459, 7
      %v5462 = vshll.u32 %v5314, 16
      %v5464 = vor.u32 %v5461, %v5462
      %v5465 = vsel %vm5380, %v5457, %v5464
      %v5466 = vrot.slane %v5461, 4
      %v5468 = vshrl.u32 %v5315, 16
      %v5470 = vrot.slane %v5468, 7
      %v5471 = vshll.u32 %v5315, 16
      %v5473 = vor.u32 %v5470, %v5471
      %v5474 = vsel %vm5380, %v5466, %v5473
      %v5475 = vrot.slane %v5470, 4
      %v5477 = vshrl.u32 %v5316, 16
      %v5479 = vrot.slane %v5477, 7
      %v5480 = vshll.u32 %v5316, 16
      %v5482 = vor.u32 %v5479, %v5480
      %v5483 = vsel %vm5380, %v5475, %v5482
      %v5484 = vrot.slane %v5479, 4
      %v5486 = vshrl.u32 %v5317, 16
      %v5488 = vrot.slane %v5486, 7
      %v5489 = vshll.u32 %v5317, 16
      %v5491 = vor.u32 %v5488, %v5489
      %v5492 = vsel %vm5380, %v5484, %v5491
      %v5493 = vrot.slane %v5488, 4
      %v5495 = vshrl.u32 %v5318, 16
      %v5497 = vrot.slane %v5495, 7
      %v5498 = vshll.u32 %v5318, 16
      %v5500 = vor.u32 %v5497, %v5498
      %v5501 = vsel %vm5380, %v5493, %v5500
      %v5502 = vrot.slane %v5497, 4
      %v5504 = vshrl.u32 %v5319, 16
      %v5506 = vrot.slane %v5504, 7
      %v5507 = vshll.u32 %v5319, 16
      %v5509 = vor.u32 %v5506, %v5507
      %v5510 = vsel %vm5380, %v5502, %v5509
      %v5511 = vrot.slane %v5506, 4
      %v5513 = vshrl.u32 %v5320, 16
      %v5515 = vrot.slane %v5513, 7
      %v5516 = vshll.u32 %v5320, 16
      %v5518 = vor.u32 %v5515, %v5516
      %v5519 = vsel %vm5380, %v5511, %v5518
      %v5520 = vrot.slane %v5515, 4
      %v5522 = vshrl.u32 %v5321, 16
      %v5524 = vrot.slane %v5522, 7
      %v5525 = vshll.u32 %v5321, 16
      %v5527 = vor.u32 %v5524, %v5525
      %v5528 = vsel %vm5380, %v5520, %v5527
      %v5529 = vrot.slane %v5524, 4
      %v5531 = vshrl.u32 %v5322, 16
      %v5533 = vrot.slane %v5531, 7
      %v5534 = vshll.u32 %v5322, 16
      %v5536 = vor.u32 %v5533, %v5534
      %v5537 = vsel %vm5380, %v5529, %v5536
      %v5538 = vrot.slane %v5533, 4
      %v5540 = vshrl.u32 %v5323, 16
      %v5542 = vrot.slane %v5540, 7
      %v5543 = vshll.u32 %v5323, 16
      %v5545 = vor.u32 %v5542, %v5543
      %v5546 = vsel %vm5380, %v5538, %v5545
      %v5547 = vrot.slane %v5542, 4
      %v5549 = vshrl.u32 %v5324, 16
      %v5551 = vrot.slane %v5549, 7
      %v5552 = vshll.u32 %v5324, 16
      %v5554 = vor.u32 %v5551, %v5552
      %v5555 = vsel %vm5380, %v5547, %v5554
      %v5556 = vrot.slane %v5551, 4
      %v5558 = vshrl.u32 %v5325, 16
      %v5560 = vrot.slane %v5558, 7
      %v5561 = vshll.u32 %v5325, 16
      %v5563 = vor.u32 %v5560, %v5561
      %v5564 = vsel %vm5380, %v5556, %v5563
      %v5565 = vrot.slane %v5560, 4
      %v5567 = vshrl.u32 %v5326, 16
      %v5569 = vrot.slane %v5567, 7
      %v5570 = vshll.u32 %v5326, 16
      %v5572 = vor.u32 %v5569, %v5570
      %v5573 = vsel %vm5380, %v5565, %v5572
      %v5574 = vrot.slane %v5569, 4
      %v5576 = vshrl.u32 %v5327, 16
      %v5578 = vrot.slane %v5576, 7
      %v5579 = vshll.u32 %v5327, 16
      %v5581 = vor.u32 %v5578, %v5579
      %v5582 = vsel %vm5380, %v5574, %v5581
      %v5583 = vrot.slane %v5578, 4
      %v5585 = vshrl.u32 %v5328, 16
      %v5587 = vrot.slane %v5585, 7
      %v5588 = vshll.u32 %v5328, 16
      %v5590 = vor.u32 %v5587, %v5588
      %v5591 = vsel %vm5380, %v5583, %v5590
      %v5592 = vrot.slane %v5587, 4
      %v5594 = vshrl.u32 %v5329, 16
      %v5596 = vrot.slane %v5594, 7
      %v5597 = vshll.u32 %v5329, 16
      %v5599 = vor.u32 %v5596, %v5597
      %v5600 = vsel %vm5380, %v5592, %v5599
      %v5601 = vrot.slane %v5596, 4
      %v5603 = vshrl.u32 %v5330, 16
      %v5605 = vrot.slane %v5603, 7
      %v5606 = vshll.u32 %v5330, 16
      %v5608 = vor.u32 %v5605, %v5606
      %v5609 = vsel %vm5380, %v5601, %v5608
      %v5610 = vrot.slane %v5605, 4
      %v5612 = vshrl.u32 %v5331, 16
      %v5614 = vrot.slane %v5612, 7
      %v5615 = vshll.u32 %v5331, 16
      %v5617 = vor.u32 %v5614, %v5615
      %v5618 = vsel %vm5380, %v5610, %v5617
      %v5619 = vrot.slane %v5614, 4
      %v5621 = vshrl.u32 %v5332, 16
      %v5623 = vrot.slane %v5621, 7
      %v5624 = vshll.u32 %v5332, 16
      %v5626 = vor.u32 %v5623, %v5624
      %v5627 = vsel %vm5380, %v5619, %v5626
      %v5628 = vrot.slane %v5623, 4
      %v5630 = vshrl.u32 %v5333, 16
      %v5632 = vrot.slane %v5630, 7
      %v5633 = vshll.u32 %v5333, 16
      %v5635 = vor.u32 %v5632, %v5633
      %v5636 = vsel %vm5380, %v5628, %v5635
      %v5637 = vrot.slane %v5632, 4
      %v5639 = vshrl.u32 %v5334, 16
      %v5641 = vrot.slane %v5639, 7
      %v5642 = vshll.u32 %v5334, 16
      %v5644 = vor.u32 %v5641, %v5642
      %v5645 = vsel %vm5380, %v5637, %v5644
      %v5646 = vrot.slane %v5641, 4
      %v5648 = vshrl.u32 %v5335, 16
      %v5650 = vrot.slane %v5648, 7
      %v5651 = vshll.u32 %v5335, 16
      %v5653 = vor.u32 %v5650, %v5651
      %v5654 = vsel %vm5380, %v5646, %v5653
      %v5655 = vrot.slane %v5650, 4
      %v5657 = vshrl.u32 %v5336, 16
      %v5659 = vrot.slane %v5657, 7
      %v5660 = vshll.u32 %v5336, 16
      %v5662 = vor.u32 %v5659, %v5660
      %v5663 = vsel %vm5380, %v5655, %v5662
      %v5664 = vrot.slane %v5659, 4
      %v5666 = vshrl.u32 %v5337, 16
      %v5668 = vrot.slane %v5666, 7
      %v5669 = vshll.u32 %v5337, 16
      %v5671 = vor.u32 %v5668, %v5669
      %v5672 = vsel %vm5380, %v5664, %v5671
      %v5673 = vrot.slane %v5668, 4
      %v5675 = vshrl.u32 %v5338, 16
      %v5677 = vrot.slane %v5675, 7
      %v5678 = vshll.u32 %v5338, 16
      %v5680 = vor.u32 %v5677, %v5678
      %v5681 = vsel %vm5380, %v5673, %v5680
      %v5682 = vrot.slane %v5677, 4
      %v5684 = vshrl.u32 %v5339, 16
      %v5686 = vrot.slane %v5684, 7
      %v5687 = vshll.u32 %v5339, 16
      %v5689 = vor.u32 %v5686, %v5687
      %v5690 = vsel %vm5380, %v5682, %v5689
      %v5691 = vrot.slane %v5686, 4
      %v5693 = vshrl.u32 %v5340, 16
      %v5695 = vrot.slane %v5693, 7
      %v5696 = vshll.u32 %v5340, 16
      %v5698 = vor.u32 %v5695, %v5696
      %v5699 = vsel %vm5380, %v5691, %v5698
      %v5700 = vrot.slane %v5695, 4
      %v5702 = vshrl.u32 %v5341, 16
      %v5704 = vrot.slane %v5702, 7
      %v5705 = vshll.u32 %v5341, 16
      %v5707 = vor.u32 %v5704, %v5705
      %v5708 = vsel %vm5380, %v5700, %v5707
      %v5709 = vrot.slane %v5704, 4
      %v5711 = vshrl.u32 %v5342, 16
      %v5713 = vrot.slane %v5711, 7
      %v5714 = vshll.u32 %v5342, 16
      %v5716 = vor.u32 %v5713, %v5714
      %v5717 = vsel %vm5380, %v5709, %v5716
      %v5718 = vrot.slane %v5713, 4
      %v5720 = vshrl.u32 %v5343, 16
      %v5722 = vrot.slane %v5720, 7
      %v5723 = vshll.u32 %v5343, 16
      %v5725 = vor.u32 %v5722, %v5723
      %v5726 = vsel %vm5380, %v5718, %v5725
      %v5727 = vrot.slane %v5722, 4
      %v5729 = vshrl.u32 %v5344, 16
      %v5731 = vrot.slane %v5729, 7
      %v5732 = vshll.u32 %v5344, 16
      %v5734 = vor.u32 %v5731, %v5732
      %v5735 = vsel %vm5380, %v5727, %v5734
      %v5736 = vrot.slane %v5731, 4
      %v5738 = vshrl.u32 %v5345, 16
      %v5740 = vrot.slane %v5738, 7
      %v5741 = vshll.u32 %v5345, 16
      %v5743 = vor.u32 %v5740, %v5741
      %v5744 = vsel %vm5380, %v5736, %v5743
      %v5745 = vrot.slane %v5740, 4
      %v5747 = vshrl.u32 %v5346, 16
      %v5749 = vrot.slane %v5747, 7
      %v5750 = vshll.u32 %v5346, 16
      %v5752 = vor.u32 %v5749, %v5750
      %v5753 = vsel %vm5380, %v5745, %v5752
      %v5754 = vrot.slane %v5749, 4
      %v5756 = vshrl.u32 %v5347, 16
      %v5758 = vrot.slane %v5756, 7
      %v5759 = vshll.u32 %v5347, 16
      %v5761 = vor.u32 %v5758, %v5759
      %v5762 = vsel %vm5380, %v5754, %v5761
      %v5763 = vrot.slane %v5758, 4
      %v5765 = vshrl.u32 %v5348, 16
      %v5767 = vrot.slane %v5765, 7
      %v5768 = vshll.u32 %v5348, 16
      %v5770 = vor.u32 %v5767, %v5768
      %v5771 = vsel %vm5380, %v5763, %v5770
      %v5772 = vrot.slane %v5767, 4
      %v5774 = vshrl.u32 %v5349, 16
      %v5776 = vrot.slane %v5774, 7
      %v5777 = vshll.u32 %v5349, 16
      %v5779 = vor.u32 %v5776, %v5777
      %v5780 = vsel %vm5380, %v5772, %v5779
      %v5781 = vrot.slane %v5776, 4
      %v5783 = vshrl.u32 %v5350, 16
      %v5785 = vrot.slane %v5783, 7
      %v5786 = vshll.u32 %v5350, 16
      %v5788 = vor.u32 %v5785, %v5786
      %v5789 = vsel %vm5380, %v5781, %v5788
      %v5790 = vrot.slane %v5785, 4
      %v5792 = vshrl.u32 %v5351, 16
      %v5794 = vrot.slane %v5792, 7
      %v5795 = vshll.u32 %v5351, 16
      %v5797 = vor.u32 %v5794, %v5795
      %v5798 = vsel %vm5380, %v5790, %v5797
      %v5799 = vrot.slane %v5794, 4
      %v5801 = vshrl.u32 %v5352, 16
      %v5803 = vrot.slane %v5801, 7
      %v5804 = vshll.u32 %v5352, 16
      %v5806 = vor.u32 %v5803, %v5804
      %v5807 = vsel %vm5380, %v5799, %v5806
      %v5808 = vrot.slane %v5803, 4
      %v5810 = vshrl.u32 %v5353, 16
      %v5812 = vrot.slane %v5810, 7
      %v5813 = vshll.u32 %v5353, 16
      %v5815 = vor.u32 %v5812, %v5813
      %v5816 = vsel %vm5380, %v5808, %v5815
      %v5817 = vrot.slane %v5812, 4
      %v5819 = vshrl.u32 %v5354, 16
      %v5821 = vrot.slane %v5819, 7
      %v5822 = vshll.u32 %v5354, 16
      %v5824 = vor.u32 %v5821, %v5822
      %v5825 = vsel %vm5380, %v5817, %v5824
      %v5826 = vrot.slane %v5821, 4
      %v5828 = vshrl.u32 %v5355, 16
      %v5830 = vrot.slane %v5828, 7
      %v5831 = vshll.u32 %v5355, 16
      %v5833 = vor.u32 %v5830, %v5831
      %v5834 = vsel %vm5380, %v5826, %v5833
      %v5835 = vrot.slane %v5830, 4
      %v5837 = vshrl.u32 %v5356, 16
      %v5839 = vrot.slane %v5837, 7
      %v5840 = vshll.u32 %v5356, 16
      %v5842 = vor.u32 %v5839, %v5840
      %v5843 = vsel %vm5380, %v5835, %v5842
      %v5844 = vrot.slane %v5839, 4
      %v5846 = vshrl.u32 %v5357, 16
      %v5848 = vrot.slane %v5846, 7
      %v5849 = vshll.u32 %v5357, 16
      %v5851 = vor.u32 %v5848, %v5849
      %v5852 = vsel %vm5380, %v5844, %v5851
      %v5853 = vrot.slane %v5848, 4
      %v5855 = vshrl.u32 %v5358, 16
      %v5857 = vrot.slane %v5855, 7
      %v5858 = vshll.u32 %v5358, 16
      %v5860 = vor.u32 %v5857, %v5858
      %v5861 = vsel %vm5380, %v5853, %v5860
      %v5862 = vrot.slane %v5857, 4
      %v5864 = vshrl.u32 %v5359, 16
      %v5866 = vrot.slane %v5864, 7
      %v5867 = vshll.u32 %v5359, 16
      %v5869 = vor.u32 %v5866, %v5867
      %v5870 = vsel %vm5380, %v5862, %v5869
      %v5871 = vrot.slane %v5866, 4
      %v5873 = vshrl.u32 %v5360, 16
      %v5875 = vrot.slane %v5873, 7
      %v5876 = vshll.u32 %v5360, 16
      %v5878 = vor.u32 %v5875, %v5876
      %v5879 = vsel %vm5380, %v5871, %v5878
      %v5880 = vrot.slane %v5875, 4
      %v5882 = vshrl.u32 %v5361, 16
      %v5884 = vrot.slane %v5882, 7
      %v5885 = vshll.u32 %v5361, 16
      %v5887 = vor.u32 %v5884, %v5885
      %v5888 = vsel %vm5380, %v5880, %v5887
      %v5889 = vrot.slane %v5884, 4
      %v5891 = vshrl.u32 %v5362, 16
      %v5893 = vrot.slane %v5891, 7
      %v5894 = vshll.u32 %v5362, 16
      %v5896 = vor.u32 %v5893, %v5894
      %v5897 = vsel %vm5380, %v5889, %v5896
      %v5898 = vrot.slane %v5893, 4
      %v5900 = vshrl.u32 %v5363, 16
      %v5902 = vrot.slane %v5900, 7
      %v5903 = vshll.u32 %v5363, 16
      %v5905 = vor.u32 %v5902, %v5903
      %v5906 = vsel %vm5380, %v5898, %v5905
      %v5907 = vrot.slane %v5902, 4
      %v5909 = vshrl.u32 %v5364, 16
      %v5911 = vrot.slane %v5909, 7
      %v5912 = vshll.u32 %v5364, 16
      %v5914 = vor.u32 %v5911, %v5912
      %v5915 = vsel %vm5380, %v5907, %v5914
      %v5916 = vrot.slane %v5911, 4
      %v5918 = vshrl.u32 %v5365, 16
      %v5920 = vrot.slane %v5918, 7
      %v5921 = vshll.u32 %v5365, 16
      %v5923 = vor.u32 %v5920, %v5921
      %v5924 = vsel %vm5380, %v5916, %v5923
      %v5925 = vrot.slane %v5920, 4
      %v5927 = vshrl.u32 %v5366, 16
      %v5929 = vrot.slane %v5927, 7
      %v5930 = vshll.u32 %v5366, 16
      %v5932 = vor.u32 %v5929, %v5930
      %v5933 = vsel %vm5380, %v5925, %v5932
      %v5934 = vrot.slane %v5929, 4
      %v5936 = vshrl.u32 %v5367, 16
      %v5938 = vrot.slane %v5936, 7
      %v5939 = vshll.u32 %v5367, 16
      %v5941 = vor.u32 %v5938, %v5939
      %v5942 = vsel %vm5380, %v5934, %v5941
      %v5943 = vrot.slane %v5938, 4
      %v5945 = vshrl.u32 %v5368, 16
      %v5947 = vrot.slane %v5945, 7
      %v5948 = vshll.u32 %v5368, 16
      %v5950 = vor.u32 %v5947, %v5948
      %v5951 = vsel %vm5380, %v5943, %v5950
      %v5952 = vrot.slane %v5947, 4
      %v5954 = vshrl.u32 %v5369, 16
      %v5956 = vrot.slane %v5954, 7
      %v5957 = vshll.u32 %v5369, 16
      %v5959 = vor.u32 %v5956, %v5957
      %v5960 = vsel %vm5380, %v5952, %v5959
      %v5961 = vrot.slane %v5956, 4
      %v5963 = vshrl.u32 %v5370, 16
      %v5965 = vrot.slane %v5963, 7
      %v5966 = vshll.u32 %v5370, 16
      %v5968 = vor.u32 %v5965, %v5966
      %v5969 = vsel %vm5380, %v5961, %v5968
      %v5970 = vrot.slane %v5965, 4
      %v5972 = vshrl.u32 %v5371, 16
      %v5974 = vrot.slane %v5972, 7
      %v5975 = vshll.u32 %v5371, 16
      %v5977 = vor.u32 %v5974, %v5975
      %v5978 = vsel %vm5380, %v5970, %v5977
      %v5979 = vrot.slane %v5974, 4
      %v5981 = vshrl.u32 %v5372, 16
      %v5983 = vrot.slane %v5981, 7
      %v5984 = vshll.u32 %v5372, 16
      %v5986 = vor.u32 %v5983, %v5984
      %v5987 = vsel %vm5380, %v5979, %v5986
      %v5988 = vrot.slane %v5983, 4
      %v5990 = vshrl.u32 %v5373, 16
      %v5992 = vrot.slane %v5990, 7
      %v5993 = vshll.u32 %v5373, 16
      %v5995 = vor.u32 %v5992, %v5993
      %v5996 = vsel %vm5380, %v5988, %v5995
      %v5997 = vrot.slane %v5992, 4
      %v5999 = vshrl.u32 %v5374, 16
      %v6001 = vrot.slane %v5999, 7
      %v6002 = vshll.u32 %v5374, 16
      %v6004 = vor.u32 %v6001, %v6002
      %v6005 = vsel %vm5380, %v5997, %v6004
      %v6006 = vrot.slane %v6001, 4
      %v6008 = vshrl.u32 %v5375, 16
      %v6010 = vrot.slane %v6008, 7
      %v6011 = vshll.u32 %v5375, 16
      %v6013 = vor.u32 %v6010, %v6011
      %v6014 = vsel %vm5380, %v6006, %v6013
      %v6015 = vrot.slane %v6010, 4
      %v6017 = vshrl.u32 %v5376, 16
      %v6019 = vrot.slane %v6017, 7
      %v6020 = vshll.u32 %v5376, 16
      %v6022 = vor.u32 %v6019, %v6020
      %v6023 = vsel %vm5380, %v6015, %v6022
      %v6024 = vrot.slane %v6019, 4
      %v6026 = vshrl.u32 %v5377, 16
      %v6028 = vrot.slane %v6026, 7
      %v6029 = vshll.u32 %v5377, 16
      %v6031 = vor.u32 %v6028, %v6029
      %v6032 = vsel %vm5380, %v6024, %v6031
      %vm6105 = vcmask 191488
      %6106 = vst.msk [vmem:[#allocation4] sm:$0xf] %vm6105, %v5393
      %6107 = vst.msk [vmem:[#allocation4 + $0x4] sm:$0xf] %vm6105, %v5402
      %6108 = vst.msk [vmem:[#allocation4 + $0x8] sm:$0xf] %vm6105, %v5411
      %6109 = vst.msk [vmem:[#allocation4 + $0xc] sm:$0xf] %vm6105, %v5420
      %6110 = vst.msk [vmem:[#allocation4 + $0x10] sm:$0xf] %vm6105, %v5429
      %6111 = vst.msk [vmem:[#allocation4 + $0x14] sm:$0xf] %vm6105, %v5438
      %6112 = vst.msk [vmem:[#allocation4 + $0x18] sm:$0xf] %vm6105, %v5447
      %6113 = vst.msk [vmem:[#allocation4 + $0x1c] sm:$0xf] %vm6105, %v5456
      %6114 = vst.msk [vmem:[#allocation4 + $0x20] sm:$0xf] %vm6105, %v5465
      %6115 = vst.msk [vmem:[#allocation4 + $0x24] sm:$0xf] %vm6105, %v5474
      %6116 = vst.msk [vmem:[#allocation4 + $0x28] sm:$0xf] %vm6105, %v5483
      %6117 = vst.msk [vmem:[#allocation4 + $0x2c] sm:$0xf] %vm6105, %v5492
      %6118 = vst.msk [vmem:[#allocation4 + $0x30] sm:$0xf] %vm6105, %v5501
      %6119 = vst.msk [vmem:[#allocation4 + $0x34] sm:$0xf] %vm6105, %v5510
      %6120 = vst.msk [vmem:[#allocation4 + $0x38] sm:$0xf] %vm6105, %v5519
      %6121 = vst.msk [vmem:[#allocation4 + $0x3c] sm:$0xf] %vm6105, %v5528
      %6122 = vst.msk [vmem:[#allocation4 + $0x40] sm:$0xf] %vm6105, %v5537
      %6123 = vst.msk [vmem:[#allocation4 + $0x44] sm:$0xf] %vm6105, %v5546
      %6124 = vst.msk [vmem:[#allocation4 + $0x48] sm:$0xf] %vm6105, %v5555
      %6125 = vst.msk [vmem:[#allocation4 + $0x4c] sm:$0xf] %vm6105, %v5564
      %6126 = vst.msk [vmem:[#allocation4 + $0x50] sm:$0xf] %vm6105, %v5573
      %6127 = vst.msk [vmem:[#allocation4 + $0x54] sm:$0xf] %vm6105, %v5582
      %6128 = vst.msk [vmem:[#allocation4 + $0x58] sm:$0xf] %vm6105, %v5591
      %6129 = vst.msk [vmem:[#allocation4 + $0x5c] sm:$0xf] %vm6105, %v5600
      %6130 = vst.msk [vmem:[#allocation4 + $0x60] sm:$0xf] %vm6105, %v5609
      %6131 = vst.msk [vmem:[#allocation4 + $0x64] sm:$0xf] %vm6105, %v5618
      %6132 = vst.msk [vmem:[#allocation4 + $0x68] sm:$0xf] %vm6105, %v5627
      %6133 = vst.msk [vmem:[#allocation4 + $0x6c] sm:$0xf] %vm6105, %v5636
      %6134 = vst.msk [vmem:[#allocation4 + $0x70] sm:$0xf] %vm6105, %v5645
      %6135 = vst.msk [vmem:[#allocation4 + $0x74] sm:$0xf] %vm6105, %v5654
      %6136 = vst.msk [vmem:[#allocation4 + $0x78] sm:$0xf] %vm6105, %v5663
      %6137 = vst.msk [vmem:[#allocation4 + $0x7c] sm:$0xf] %vm6105, %v5672
      %6138 = vst.msk [vmem:[#allocation4 + $0x80] sm:$0xf] %vm6105, %v5681
      %6139 = vst.msk [vmem:[#allocation4 + $0x84] sm:$0xf] %vm6105, %v5690
      %6140 = vst.msk [vmem:[#allocation4 + $0x88] sm:$0xf] %vm6105, %v5699
      %6141 = vst.msk [vmem:[#allocation4 + $0x8c] sm:$0xf] %vm6105, %v5708
      %6142 = vst.msk [vmem:[#allocation4 + $0x90] sm:$0xf] %vm6105, %v5717
      %6143 = vst.msk [vmem:[#allocation4 + $0x94] sm:$0xf] %vm6105, %v5726
      %6144 = vst.msk [vmem:[#allocation4 + $0x98] sm:$0xf] %vm6105, %v5735
      %6145 = vst.msk [vmem:[#allocation4 + $0x9c] sm:$0xf] %vm6105, %v5744
      %6146 = vst.msk [vmem:[#allocation4 + $0xa0] sm:$0xf] %vm6105, %v5753
      %6147 = vst.msk [vmem:[#allocation4 + $0xa4] sm:$0xf] %vm6105, %v5762
      %6148 = vst.msk [vmem:[#allocation4 + $0xa8] sm:$0xf] %vm6105, %v5771
      %6149 = vst.msk [vmem:[#allocation4 + $0xac] sm:$0xf] %vm6105, %v5780
      %6150 = vst.msk [vmem:[#allocation4 + $0xb0] sm:$0xf] %vm6105, %v5789
      %6151 = vst.msk [vmem:[#allocation4 + $0xb4] sm:$0xf] %vm6105, %v5798
      %6152 = vst.msk [vmem:[#allocation4 + $0xb8] sm:$0xf] %vm6105, %v5807
      %6153 = vst.msk [vmem:[#allocation4 + $0xbc] sm:$0xf] %vm6105, %v5816
      %6154 = vst.msk [vmem:[#allocation4 + $0xc0] sm:$0xf] %vm6105, %v5825
      %6155 = vst.msk [vmem:[#allocation4 + $0xc4] sm:$0xf] %vm6105, %v5834
      %6156 = vst.msk [vmem:[#allocation4 + $0xc8] sm:$0xf] %vm6105, %v5843
      %6157 = vst.msk [vmem:[#allocation4 + $0xcc] sm:$0xf] %vm6105, %v5852
      %6158 = vst.msk [vmem:[#allocation4 + $0xd0] sm:$0xf] %vm6105, %v5861
      %6159 = vst.msk [vmem:[#allocation4 + $0xd4] sm:$0xf] %vm6105, %v5870
      %6160 = vst.msk [vmem:[#allocation4 + $0xd8] sm:$0xf] %vm6105, %v5879
      %6161 = vst.msk [vmem:[#allocation4 + $0xdc] sm:$0xf] %vm6105, %v5888
      %6162 = vst.msk [vmem:[#allocation4 + $0xe0] sm:$0xf] %vm6105, %v5897
      %6163 = vst.msk [vmem:[#allocation4 + $0xe4] sm:$0xf] %vm6105, %v5906
      %6164 = vst.msk [vmem:[#allocation4 + $0xe8] sm:$0xf] %vm6105, %v5915
      %6165 = vst.msk [vmem:[#allocation4 + $0xec] sm:$0xf] %vm6105, %v5924
      %6166 = vst.msk [vmem:[#allocation4 + $0xf0] sm:$0xf] %vm6105, %v5933
      %6167 = vst.msk [vmem:[#allocation4 + $0xf4] sm:$0xf] %vm6105, %v5942
      %6168 = vst.msk [vmem:[#allocation4 + $0xf8] sm:$0xf] %vm6105, %v5951
      %6169 = vst.msk [vmem:[#allocation4 + $0xfc] sm:$0xf] %vm6105, %v5960
      %6170 = vst.msk [vmem:[#allocation4 + $0x100] sm:$0xf] %vm6105, %v5969
      %6171 = vst.msk [vmem:[#allocation4 + $0x104] sm:$0xf] %vm6105, %v5978
      %6172 = vst.msk [vmem:[#allocation4 + $0x108] sm:$0xf] %vm6105, %v5987
      %6173 = vst.msk [vmem:[#allocation4 + $0x10c] sm:$0xf] %vm6105, %v5996
      %6174 = vst.msk [vmem:[#allocation4 + $0x110] sm:$0xf] %vm6105, %v6005
      %6175 = vst.msk [vmem:[#allocation4 + $0x114] sm:$0xf] %vm6105, %v6014
      %6176 = vst.msk [vmem:[#allocation4 + $0x118] sm:$0xf] %vm6105, %v6023
      %6177 = vst.msk [vmem:[#allocation4 + $0x11c] sm:$0xf] %vm6105, %v6032
      %v6178 = vld [vmem:[#allocation4] sm:$0xf]
      %v6179 = vld [vmem:[#allocation4 + $0x4] sm:$0xf]
      %v6180 = vld [vmem:[#allocation4 + $0x8] sm:$0xf]
      %v6181 = vld [vmem:[#allocation4 + $0xc] sm:$0xf]
      %v6182 = vld [vmem:[#allocation4 + $0x10] sm:$0xf]
      %v6183 = vld [vmem:[#allocation4 + $0x14] sm:$0xf]
      %v6184 = vld [vmem:[#allocation4 + $0x18] sm:$0xf]
      %v6185 = vld [vmem:[#allocation4 + $0x1c] sm:$0xf]
      %v6186 = vld [vmem:[#allocation4 + $0x20] sm:$0xf]
      %v6187 = vld [vmem:[#allocation4 + $0x24] sm:$0xf]
      %v6188 = vld [vmem:[#allocation4 + $0x28] sm:$0xf]
      %v6189 = vld [vmem:[#allocation4 + $0x2c] sm:$0xf]
      %v6190 = vld [vmem:[#allocation4 + $0x30] sm:$0xf]
      %v6191 = vld [vmem:[#allocation4 + $0x34] sm:$0xf]
      %v6192 = vld [vmem:[#allocation4 + $0x38] sm:$0xf]
      %v6193 = vld [vmem:[#allocation4 + $0x3c] sm:$0xf]
      %v6194 = vld [vmem:[#allocation4 + $0x40] sm:$0xf]
      %v6195 = vld [vmem:[#allocation4 + $0x44] sm:$0xf]
      %v6196 = vld [vmem:[#allocation4 + $0x48] sm:$0xf]
      %v6197 = vld [vmem:[#allocation4 + $0x4c] sm:$0xf]
      %v6198 = vld [vmem:[#allocation4 + $0x50] sm:$0xf]
      %v6199 = vld [vmem:[#allocation4 + $0x54] sm:$0xf]
      %v6200 = vld [vmem:[#allocation4 + $0x58] sm:$0xf]
      %v6201 = vld [vmem:[#allocation4 + $0x5c] sm:$0xf]
      %v6202 = vld [vmem:[#allocation4 + $0x60] sm:$0xf]
      %v6203 = vld [vmem:[#allocation4 + $0x64] sm:$0xf]
      %v6204 = vld [vmem:[#allocation4 + $0x68] sm:$0xf]
      %v6205 = vld [vmem:[#allocation4 + $0x6c] sm:$0xf]
      %v6206 = vld [vmem:[#allocation4 + $0x70] sm:$0xf]
      %v6207 = vld [vmem:[#allocation4 + $0x74] sm:$0xf]
      %v6208 = vld [vmem:[#allocation4 + $0x78] sm:$0xf]
      %v6209 = vld [vmem:[#allocation4 + $0x7c] sm:$0xf]
      %v6210 = vld [vmem:[#allocation4 + $0x80] sm:$0xf]
      %v6211 = vld [vmem:[#allocation4 + $0x84] sm:$0xf]
      %v6212 = vld [vmem:[#allocation4 + $0x88] sm:$0xf]
      %v6213 = vld [vmem:[#allocation4 + $0x8c] sm:$0xf]
      %v6214 = vld [vmem:[#allocation4 + $0x90] sm:$0xf]
      %v6215 = vld [vmem:[#allocation4 + $0x94] sm:$0xf]
      %v6216 = vld [vmem:[#allocation4 + $0x98] sm:$0xf]
      %v6217 = vld [vmem:[#allocation4 + $0x9c] sm:$0xf]
      %v6218 = vld [vmem:[#allocation4 + $0xa0] sm:$0xf]
      %v6219 = vld [vmem:[#allocation4 + $0xa4] sm:$0xf]
      %v6220 = vld [vmem:[#allocation4 + $0xa8] sm:$0xf]
      %v6221 = vld [vmem:[#allocation4 + $0xac] sm:$0xf]
      %v6222 = vld [vmem:[#allocation4 + $0xb0] sm:$0xf]
      %v6223 = vld [vmem:[#allocation4 + $0xb4] sm:$0xf]
      %v6224 = vld [vmem:[#allocation4 + $0xb8] sm:$0xf]
      %v6225 = vld [vmem:[#allocation4 + $0xbc] sm:$0xf]
      %v6226 = vld [vmem:[#allocation4 + $0xc0] sm:$0xf]
      %v6227 = vld [vmem:[#allocation4 + $0xc4] sm:$0xf]
      %v6228 = vld [vmem:[#allocation4 + $0xc8] sm:$0xf]
      %v6229 = vld [vmem:[#allocation4 + $0xcc] sm:$0xf]
      %v6230 = vld [vmem:[#allocation4 + $0xd0] sm:$0xf]
      %v6231 = vld [vmem:[#allocation4 + $0xd4] sm:$0xf]
      %v6232 = vld [vmem:[#allocation4 + $0xd8] sm:$0xf]
      %v6233 = vld [vmem:[#allocation4 + $0xdc] sm:$0xf]
      %v6234 = vld [vmem:[#allocation4 + $0xe0] sm:$0xf]
      %v6235 = vld [vmem:[#allocation4 + $0xe4] sm:$0xf]
      %v6236 = vld [vmem:[#allocation4 + $0xe8] sm:$0xf]
      %v6237 = vld [vmem:[#allocation4 + $0xec] sm:$0xf]
      %v6238 = vld [vmem:[#allocation4 + $0xf0] sm:$0xf]
      %v6239 = vld [vmem:[#allocation4 + $0xf4] sm:$0xf]
      %v6240 = vld [vmem:[#allocation4 + $0xf8] sm:$0xf]
      %v6241 = vld [vmem:[#allocation4 + $0xfc] sm:$0xf]
      %v6242 = vld [vmem:[%s3] sm:$0xf]
      %v6243 = vld [vmem:[%s3 + $0x4] sm:$0xf]
      %v6244 = vld [vmem:[%s3 + $0x8] sm:$0xf]
      %v6245 = vld [vmem:[#allocation4 + $0x100] sm:$0xf]
      %v6246 = vld [vmem:[#allocation4 + $0x104] sm:$0xf]
      %v6247 = vld [vmem:[#allocation4 + $0x108] sm:$0xf]
      %v6248 = vld [vmem:[#allocation4 + $0x10c] sm:$0xf]
      %s6249 = scalar_lea.vmem %s3, 12
      %v6250 = vld [vmem:[%s6249] sm:$0xf]
      %v6251 = vld [vmem:[%s6249 + $0x4] sm:$0xf]
      %v6252 = vld [vmem:[%s6249 + $0x8] sm:$0xf]
      %v6317 = vunpack.c.l.b16 %v6182
      %v6318 = vunpack.c.l.b16 %v6183
      %v6319 = vunpack.c.l.b16 %v6184
      %v6320 = vunpack.c.l.b16 %v6185
      %v6321 = vunpack.c.l.b16 %v6186
      %v6322 = vunpack.c.l.b16 %v6187
      %v6323 = vunpack.c.l.b16 %v6188
      %v6324 = vunpack.c.l.b16 %v6189
      %v6325 = vunpack.c.l.b16 %v6190
      %v6326 = vunpack.c.l.b16 %v6191
      %v6327 = vunpack.c.l.b16 %v6192
      %v6328 = vunpack.c.l.b16 %v6193
      %v6329 = vunpack.c.l.b16 %v6194
      %v6330 = vunpack.c.l.b16 %v6195
      %v6331 = vunpack.c.l.b16 %v6196
      %v6332 = vunpack.c.l.b16 %v6197
      %v6333 = vunpack.c.l.b16 %v6198
      %v6334 = vunpack.c.l.b16 %v6199
      %v6335 = vunpack.c.l.b16 %v6200
      %v6336 = vunpack.c.l.b16 %v6201
      %v6337 = vunpack.c.l.b16 %v6202
      %v6338 = vunpack.c.l.b16 %v6203
      %v6339 = vunpack.c.l.b16 %v6204
      %v6340 = vunpack.c.l.b16 %v6205
      %v6341 = vunpack.c.l.b16 %v6206
      %v6342 = vunpack.c.l.b16 %v6207
      %v6343 = vunpack.c.l.b16 %v6208
      %v6344 = vunpack.c.l.b16 %v6209
      %v6345 = vunpack.c.l.b16 %v6210
      %v6346 = vunpack.c.l.b16 %v6211
      %v6347 = vunpack.c.l.b16 %v6212
      %v6348 = vunpack.c.l.b16 %v6213
      %v6349 = vunpack.c.l.b16 %v6214
      %v6350 = vunpack.c.l.b16 %v6215
      %v6351 = vunpack.c.l.b16 %v6216
      %v6352 = vunpack.c.l.b16 %v6217
      %v6353 = vunpack.c.l.b16 %v6218
      %v6354 = vunpack.c.l.b16 %v6219
      %v6355 = vunpack.c.l.b16 %v6220
      %v6356 = vunpack.c.l.b16 %v6221
      %v6357 = vunpack.c.l.b16 %v6222
      %v6358 = vunpack.c.l.b16 %v6223
      %v6359 = vunpack.c.l.b16 %v6224
      %v6360 = vunpack.c.l.b16 %v6225
      %v6361 = vunpack.c.l.b16 %v6226
      %v6362 = vunpack.c.l.b16 %v6227
      %v6363 = vunpack.c.l.b16 %v6228
      %v6364 = vunpack.c.l.b16 %v6229
      %v6365 = vunpack.c.l.b16 %v6230
      %v6366 = vunpack.c.l.b16 %v6231
      %v6367 = vunpack.c.l.b16 %v6232
      %v6368 = vunpack.c.l.b16 %v6233
      %v6369 = vunpack.c.l.b16 %v6234
      %v6370 = vunpack.c.l.b16 %v6235
      %v6371 = vunpack.c.l.b16 %v6236
      %v6372 = vunpack.c.l.b16 %v6237
      %v6373 = vunpack.c.l.b16 %v6238
      %v6374 = vunpack.c.l.b16 %v6239
      %v6375 = vunpack.c.l.b16 %v6240
      %v6376 = vunpack.c.l.b16 %v6241
      %v6377 = vunpack.c.l.b16 %v6245
      %v6378 = vunpack.c.l.b16 %v6246
      %v6379 = vunpack.c.l.b16 %v6247
      %v6380 = vunpack.c.l.b16 %v6248
      %v6381 = vpack.c.b16 %v6318, %v6317
      %v6382 = vpack.c.b16 %v6320, %v6319
      %v6383 = vpack.c.b16 %v6322, %v6321
      %v6384 = vpack.c.b16 %v6324, %v6323
      %v6385 = vpack.c.b16 %v6326, %v6325
      %v6386 = vpack.c.b16 %v6328, %v6327
      %v6387 = vpack.c.b16 %v6330, %v6329
      %v6388 = vpack.c.b16 %v6332, %v6331
      %v6389 = vpack.c.b16 %v6334, %v6333
      %v6390 = vpack.c.b16 %v6336, %v6335
      %v6391 = vpack.c.b16 %v6338, %v6337
      %v6392 = vpack.c.b16 %v6340, %v6339
      %v6393 = vpack.c.b16 %v6342, %v6341
      %v6394 = vpack.c.b16 %v6344, %v6343
      %v6395 = vpack.c.b16 %v6346, %v6345
      %v6396 = vpack.c.b16 %v6348, %v6347
      %v6397 = vpack.c.b16 %v6350, %v6349
      %v6398 = vpack.c.b16 %v6352, %v6351
      %v6399 = vpack.c.b16 %v6354, %v6353
      %v6400 = vpack.c.b16 %v6356, %v6355
      %v6401 = vpack.c.b16 %v6358, %v6357
      %v6402 = vpack.c.b16 %v6360, %v6359
      %v6403 = vpack.c.b16 %v6362, %v6361
      %v6404 = vpack.c.b16 %v6364, %v6363
      %v6405 = vpack.c.b16 %v6366, %v6365
      %v6406 = vpack.c.b16 %v6368, %v6367
      %v6407 = vpack.c.b16 %v6370, %v6369
      %v6408 = vpack.c.b16 %v6372, %v6371
      %v6409 = vpack.c.b16 %v6374, %v6373
      %v6410 = vpack.c.b16 %v6376, %v6375
      %v6411 = vpack.c.b16 %v6378, %v6377
      %v6412 = vpack.c.b16 %v6380, %v6379
      %v6416 = vunpack.c.l.b16 %v6250
      %v6417 = vunpack.c.l.b16 %v6251
      %v6418 = vunpack.c.l.b16 %v6252
      %v6419 = vpack.c.b16 %v6417, %v6416
      %v6420 = vpack.c.b16 %v6418, %v6418
      %vm6422 = vcmask 195584
      %v6424 = vsel %vm6422, %v6381, 0
      %v6427 = vsel %vm6422, %v6382, 0
      %v6430 = vsel %vm6422, %v6383, 0
      %v6433 = vsel %vm6422, %v6384, 0
      %v6436 = vsel %vm6422, %v6385, 0
      %v6439 = vsel %vm6422, %v6386, 0
      %v6442 = vsel %vm6422, %v6387, 0
      %v6445 = vsel %vm6422, %v6388, 0
      %v6448 = vsel %vm6422, %v6389, 0
      %v6451 = vsel %vm6422, %v6390, 0
      %v6454 = vsel %vm6422, %v6391, 0
      %v6457 = vsel %vm6422, %v6392, 0
      %v6460 = vsel %vm6422, %v6393, 0
      %v6463 = vsel %vm6422, %v6394, 0
      %v6466 = vsel %vm6422, %v6395, 0
      %v6469 = vsel %vm6422, %v6396, 0
      %v6472 = vsel %vm6422, %v6397, 0
      %v6475 = vsel %vm6422, %v6398, 0
      %v6478 = vsel %vm6422, %v6399, 0
      %v6481 = vsel %vm6422, %v6400, 0
      %v6484 = vsel %vm6422, %v6401, 0
      %v6487 = vsel %vm6422, %v6402, 0
      %v6490 = vsel %vm6422, %v6403, 0
      %v6493 = vsel %vm6422, %v6404, 0
      %v6496 = vsel %vm6422, %v6405, 0
      %v6499 = vsel %vm6422, %v6406, 0
      %v6502 = vsel %vm6422, %v6407, 0
      %v6505 = vsel %vm6422, %v6408, 0
      %v6508 = vsel %vm6422, %v6409, 0
      %v6511 = vsel %vm6422, %v6410, 0
      %v6514 = vsel %vm6422, %v6411, 0
      %v6517 = vsel %vm6422, %v6412, 0
      %vm6519 = vcmask 1043456
      %v6521 = vsel %vm6519, %v6420, 0
      %6523 = vmatpush.bf16.msra.mxu0 0
      %6524 = vmatpush.bf16.msra.mxu0 0
      %6525 = vmatpush.bf16.msra.mxu0 0
      %6526 = vmatpush.bf16.msra.mxu0 0
      %6527 = vmatpush.bf16.msra.mxu0 0
      %6528 = vmatpush.bf16.msra.mxu0 0
      %6529 = vmatpush.bf16.msra.mxu0 %v6521
      %6530 = vmatpush.bf16.msra.mxu0 %v6419
      %6531 = vmatmul.bf16.gmra.mxu0 %v6424
      %v6532 = vpop.f32.mrf.mxu0
      %v6533 = vadd.f32 0.0, %v6532
      %v6534 = vpop.f32.mrf.mxu0
      %v6535 = vadd.f32 0.0, %v6534
      %6536 = vmatmul.bf16.gmra.mxu0 %v6427
      %v6537 = vpop.f32.mrf.mxu0
      %v6538 = vadd.f32 0.0, %v6537
      %v6539 = vpop.f32.mrf.mxu0
      %v6540 = vadd.f32 0.0, %v6539
      %6541 = vmatmul.bf16.gmra.mxu0 %v6430
      %v6542 = vpop.f32.mrf.mxu0
      %v6543 = vadd.f32 0.0, %v6542
      %v6544 = vpop.f32.mrf.mxu0
      %v6545 = vadd.f32 0.0, %v6544
      %6546 = vmatmul.bf16.gmra.mxu0 %v6433
      %v6547 = vpop.f32.mrf.mxu0
      %v6548 = vadd.f32 0.0, %v6547
      %v6549 = vpop.f32.mrf.mxu0
      %v6550 = vadd.f32 0.0, %v6549
      %6551 = vmatmul.bf16.gmra.mxu0 %v6436
      %v6552 = vpop.f32.mrf.mxu0
      %v6553 = vadd.f32 0.0, %v6552
      %v6554 = vpop.f32.mrf.mxu0
      %v6555 = vadd.f32 0.0, %v6554
      %6556 = vmatmul.bf16.gmra.mxu0 %v6439
      %v6557 = vpop.f32.mrf.mxu0
      %v6558 = vadd.f32 0.0, %v6557
      %v6559 = vpop.f32.mrf.mxu0
      %v6560 = vadd.f32 0.0, %v6559
      %6561 = vmatmul.bf16.gmra.mxu0 %v6442
      %v6562 = vpop.f32.mrf.mxu0
      %v6563 = vadd.f32 0.0, %v6562
      %v6564 = vpop.f32.mrf.mxu0
      %v6565 = vadd.f32 0.0, %v6564
      %6566 = vmatmul.bf16.gmra.mxu0 %v6445
      %v6567 = vpop.f32.mrf.mxu0
      %v6568 = vadd.f32 0.0, %v6567
      %v6569 = vpop.f32.mrf.mxu0
      %v6570 = vadd.f32 0.0, %v6569
      %6571 = vmatmul.bf16.gmra.mxu0 %v6448
      %v6572 = vpop.f32.mrf.mxu0
      %v6573 = vadd.f32 0.0, %v6572
      %v6574 = vpop.f32.mrf.mxu0
      %v6575 = vadd.f32 0.0, %v6574
      %6576 = vmatmul.bf16.gmra.mxu0 %v6451
      %v6577 = vpop.f32.mrf.mxu0
      %v6578 = vadd.f32 0.0, %v6577
      %v6579 = vpop.f32.mrf.mxu0
      %v6580 = vadd.f32 0.0, %v6579
      %6581 = vmatmul.bf16.gmra.mxu0 %v6454
      %v6582 = vpop.f32.mrf.mxu0
      %v6583 = vadd.f32 0.0, %v6582
      %v6584 = vpop.f32.mrf.mxu0
      %v6585 = vadd.f32 0.0, %v6584
      %6586 = vmatmul.bf16.gmra.mxu0 %v6457
      %v6587 = vpop.f32.mrf.mxu0
      %v6588 = vadd.f32 0.0, %v6587
      %v6589 = vpop.f32.mrf.mxu0
      %v6590 = vadd.f32 0.0, %v6589
      %6591 = vmatmul.bf16.gmra.mxu0 %v6460
      %v6592 = vpop.f32.mrf.mxu0
      %v6593 = vadd.f32 0.0, %v6592
      %v6594 = vpop.f32.mrf.mxu0
      %v6595 = vadd.f32 0.0, %v6594
      %6596 = vmatmul.bf16.gmra.mxu0 %v6463
      %v6597 = vpop.f32.mrf.mxu0
      %v6598 = vadd.f32 0.0, %v6597
      %v6599 = vpop.f32.mrf.mxu0
      %v6600 = vadd.f32 0.0, %v6599
      %6601 = vmatmul.bf16.gmra.mxu0 %v6466
      %v6602 = vpop.f32.mrf.mxu0
      %v6603 = vadd.f32 0.0, %v6602
      %v6604 = vpop.f32.mrf.mxu0
      %v6605 = vadd.f32 0.0, %v6604
      %6606 = vmatmul.bf16.gmra.mxu0 %v6469
      %v6607 = vpop.f32.mrf.mxu0
      %v6608 = vadd.f32 0.0, %v6607
      %v6609 = vpop.f32.mrf.mxu0
      %v6610 = vadd.f32 0.0, %v6609
      %6611 = vmatmul.bf16.gmra.mxu0 %v6472
      %v6612 = vpop.f32.mrf.mxu0
      %v6613 = vadd.f32 0.0, %v6612
      %v6614 = vpop.f32.mrf.mxu0
      %v6615 = vadd.f32 0.0, %v6614
      %6616 = vmatmul.bf16.gmra.mxu0 %v6475
      %v6617 = vpop.f32.mrf.mxu0
      %v6618 = vadd.f32 0.0, %v6617
      %v6619 = vpop.f32.mrf.mxu0
      %v6620 = vadd.f32 0.0, %v6619
      %6621 = vmatmul.bf16.gmra.mxu0 %v6478
      %v6622 = vpop.f32.mrf.mxu0
      %v6623 = vadd.f32 0.0, %v6622
      %v6624 = vpop.f32.mrf.mxu0
      %v6625 = vadd.f32 0.0, %v6624
      %6626 = vmatmul.bf16.gmra.mxu0 %v6481
      %v6627 = vpop.f32.mrf.mxu0
      %v6628 = vadd.f32 0.0, %v6627
      %v6629 = vpop.f32.mrf.mxu0
      %v6630 = vadd.f32 0.0, %v6629
      %6631 = vmatmul.bf16.gmra.mxu0 %v6484
      %v6632 = vpop.f32.mrf.mxu0
      %v6633 = vadd.f32 0.0, %v6632
      %v6634 = vpop.f32.mrf.mxu0
      %v6635 = vadd.f32 0.0, %v6634
      %6636 = vmatmul.bf16.gmra.mxu0 %v6487
      %v6637 = vpop.f32.mrf.mxu0
      %v6638 = vadd.f32 0.0, %v6637
      %v6639 = vpop.f32.mrf.mxu0
      %v6640 = vadd.f32 0.0, %v6639
      %6641 = vmatmul.bf16.gmra.mxu0 %v6490
      %v6642 = vpop.f32.mrf.mxu0
      %v6643 = vadd.f32 0.0, %v6642
      %v6644 = vpop.f32.mrf.mxu0
      %v6645 = vadd.f32 0.0, %v6644
      %6646 = vmatmul.bf16.gmra.mxu0 %v6493
      %v6647 = vpop.f32.mrf.mxu0
      %v6648 = vadd.f32 0.0, %v6647
      %v6649 = vpop.f32.mrf.mxu0
      %v6650 = vadd.f32 0.0, %v6649
      %6651 = vmatmul.bf16.gmra.mxu0 %v6496
      %v6652 = vpop.f32.mrf.mxu0
      %v6653 = vadd.f32 0.0, %v6652
      %v6654 = vpop.f32.mrf.mxu0
      %v6655 = vadd.f32 0.0, %v6654
      %6656 = vmatmul.bf16.gmra.mxu0 %v6499
      %v6657 = vpop.f32.mrf.mxu0
      %v6658 = vadd.f32 0.0, %v6657
      %v6659 = vpop.f32.mrf.mxu0
      %v6660 = vadd.f32 0.0, %v6659
      %6661 = vmatmul.bf16.gmra.mxu0 %v6502
      %v6662 = vpop.f32.mrf.mxu0
      %v6663 = vadd.f32 0.0, %v6662
      %v6664 = vpop.f32.mrf.mxu0
      %v6665 = vadd.f32 0.0, %v6664
      %6666 = vmatmul.bf16.gmra.mxu0 %v6505
      %v6667 = vpop.f32.mrf.mxu0
      %v6668 = vadd.f32 0.0, %v6667
      %v6669 = vpop.f32.mrf.mxu0
      %v6670 = vadd.f32 0.0, %v6669
      %6671 = vmatmul.bf16.gmra.mxu0 %v6508
      %v6672 = vpop.f32.mrf.mxu0
      %v6673 = vadd.f32 0.0, %v6672
      %v6674 = vpop.f32.mrf.mxu0
      %v6675 = vadd.f32 0.0, %v6674
      %6676 = vmatmul.bf16.gmra.mxu0 %v6511
      %v6677 = vpop.f32.mrf.mxu0
      %v6678 = vadd.f32 0.0, %v6677
      %v6679 = vpop.f32.mrf.mxu0
      %v6680 = vadd.f32 0.0, %v6679
      %6681 = vmatmul.bf16.gmra.mxu0 %v6514
      %v6682 = vpop.f32.mrf.mxu0
      %v6683 = vadd.f32 0.0, %v6682
      %v6684 = vpop.f32.mrf.mxu0
      %v6685 = vadd.f32 0.0, %v6684
      %6686 = vmatmul.bf16.gmra.mxu0 %v6517
      %v6687 = vpop.f32.mrf.mxu0
      %v6688 = vadd.f32 0.0, %v6687
      %v6689 = vpop.f32.mrf.mxu0
      %v6690 = vadd.f32 0.0, %v6689
      %6691 = vdwg.mxu0
      %v6696 = vunpack.c.l.b16 %v6178
      %v6697 = vunpack.c.l.b16 %v6179
      %v6698 = vunpack.c.l.b16 %v6180
      %v6699 = vunpack.c.l.b16 %v6181
      %v6700 = vpack.c.b16 %v6697, %v6696
      %v6701 = vpack.c.b16 %v6699, %v6698
      %v6705 = vunpack.c.l.b16 %v6242
      %v6706 = vunpack.c.l.b16 %v6243
      %v6707 = vunpack.c.l.b16 %v6244
      %v6708 = vpack.c.b16 %v6706, %v6705
      %v6709 = vpack.c.b16 %v6707, %v6707
      %v6712 = vsel %vm6422, %v6700, 0
      %v6715 = vsel %vm6422, %v6701, 0
      %v6718 = vsel %vm6519, %v6709, 0
      %6720 = vmatpush.bf16.msra.mxu0 0
      %6721 = vmatpush.bf16.msra.mxu0 0
      %6722 = vmatpush.bf16.msra.mxu0 0
      %6723 = vmatpush.bf16.msra.mxu0 0
      %6724 = vmatpush.bf16.msra.mxu0 0
      %6725 = vmatpush.bf16.msra.mxu0 0
      %6726 = vmatpush.bf16.msra.mxu0 %v6718
      %6727 = vmatpush.bf16.msra.mxu0 %v6708
      %6728 = vmatmul.bf16.gmra.mxu0 %v6712
      %v6729 = vpop.f32.mrf.mxu0
      %v6730 = vadd.f32 %v6533, %v6729
      %v6731 = vpop.f32.mrf.mxu0
      %v6732 = vadd.f32 %v6535, %v6731
      %6733 = vmatmul.bf16.gmra.mxu0 %v6715
      %v6734 = vpop.f32.mrf.mxu0
      %v6735 = vadd.f32 %v6538, %v6734
      %v6736 = vpop.f32.mrf.mxu0
      %v6737 = vadd.f32 %v6540, %v6736
      %6738 = vmatmul.bf16.gmra.mxu0 %v6424
      %v6739 = vpop.f32.mrf.mxu0
      %v6740 = vadd.f32 %v6543, %v6739
      %v6741 = vpop.f32.mrf.mxu0
      %v6742 = vadd.f32 %v6545, %v6741
      %6743 = vmatmul.bf16.gmra.mxu0 %v6427
      %v6744 = vpop.f32.mrf.mxu0
      %v6745 = vadd.f32 %v6548, %v6744
      %v6746 = vpop.f32.mrf.mxu0
      %v6747 = vadd.f32 %v6550, %v6746
      %6748 = vmatmul.bf16.gmra.mxu0 %v6430
      %v6749 = vpop.f32.mrf.mxu0
      %v6750 = vadd.f32 %v6553, %v6749
      %v6751 = vpop.f32.mrf.mxu0
      %v6752 = vadd.f32 %v6555, %v6751
      %6753 = vmatmul.bf16.gmra.mxu0 %v6433
      %v6754 = vpop.f32.mrf.mxu0
      %v6755 = vadd.f32 %v6558, %v6754
      %v6756 = vpop.f32.mrf.mxu0
      %v6757 = vadd.f32 %v6560, %v6756
      %6758 = vmatmul.bf16.gmra.mxu0 %v6436
      %v6759 = vpop.f32.mrf.mxu0
      %v6760 = vadd.f32 %v6563, %v6759
      %v6761 = vpop.f32.mrf.mxu0
      %v6762 = vadd.f32 %v6565, %v6761
      %6763 = vmatmul.bf16.gmra.mxu0 %v6439
      %v6764 = vpop.f32.mrf.mxu0
      %v6765 = vadd.f32 %v6568, %v6764
      %v6766 = vpop.f32.mrf.mxu0
      %v6767 = vadd.f32 %v6570, %v6766
      %6768 = vmatmul.bf16.gmra.mxu0 %v6442
      %v6769 = vpop.f32.mrf.mxu0
      %v6770 = vadd.f32 %v6573, %v6769
      %v6771 = vpop.f32.mrf.mxu0
      %v6772 = vadd.f32 %v6575, %v6771
      %6773 = vmatmul.bf16.gmra.mxu0 %v6445
      %v6774 = vpop.f32.mrf.mxu0
      %v6775 = vadd.f32 %v6578, %v6774
      %v6776 = vpop.f32.mrf.mxu0
      %v6777 = vadd.f32 %v6580, %v6776
      %6778 = vmatmul.bf16.gmra.mxu0 %v6448
      %v6779 = vpop.f32.mrf.mxu0
      %v6780 = vadd.f32 %v6583, %v6779
      %v6781 = vpop.f32.mrf.mxu0
      %v6782 = vadd.f32 %v6585, %v6781
      %6783 = vmatmul.bf16.gmra.mxu0 %v6451
      %v6784 = vpop.f32.mrf.mxu0
      %v6785 = vadd.f32 %v6588, %v6784
      %v6786 = vpop.f32.mrf.mxu0
      %v6787 = vadd.f32 %v6590, %v6786
      %6788 = vmatmul.bf16.gmra.mxu0 %v6454
      %v6789 = vpop.f32.mrf.mxu0
      %v6790 = vadd.f32 %v6593, %v6789
      %v6791 = vpop.f32.mrf.mxu0
      %v6792 = vadd.f32 %v6595, %v6791
      %6793 = vmatmul.bf16.gmra.mxu0 %v6457
      %v6794 = vpop.f32.mrf.mxu0
      %v6795 = vadd.f32 %v6598, %v6794
      %v6796 = vpop.f32.mrf.mxu0
      %v6797 = vadd.f32 %v6600, %v6796
      %6798 = vmatmul.bf16.gmra.mxu0 %v6460
      %v6799 = vpop.f32.mrf.mxu0
      %v6800 = vadd.f32 %v6603, %v6799
      %v6801 = vpop.f32.mrf.mxu0
      %v6802 = vadd.f32 %v6605, %v6801
      %6803 = vmatmul.bf16.gmra.mxu0 %v6463
      %v6804 = vpop.f32.mrf.mxu0
      %v6805 = vadd.f32 %v6608, %v6804
      %v6806 = vpop.f32.mrf.mxu0
      %v6807 = vadd.f32 %v6610, %v6806
      %6808 = vmatmul.bf16.gmra.mxu0 %v6466
      %v6809 = vpop.f32.mrf.mxu0
      %v6810 = vadd.f32 %v6613, %v6809
      %v6811 = vpop.f32.mrf.mxu0
      %v6812 = vadd.f32 %v6615, %v6811
      %6813 = vmatmul.bf16.gmra.mxu0 %v6469
      %v6814 = vpop.f32.mrf.mxu0
      %v6815 = vadd.f32 %v6618, %v6814
      %v6816 = vpop.f32.mrf.mxu0
      %v6817 = vadd.f32 %v6620, %v6816
      %6818 = vmatmul.bf16.gmra.mxu0 %v6472
      %v6819 = vpop.f32.mrf.mxu0
      %v6820 = vadd.f32 %v6623, %v6819
      %v6821 = vpop.f32.mrf.mxu0
      %v6822 = vadd.f32 %v6625, %v6821
      %6823 = vmatmul.bf16.gmra.mxu0 %v6475
      %v6824 = vpop.f32.mrf.mxu0
      %v6825 = vadd.f32 %v6628, %v6824
      %v6826 = vpop.f32.mrf.mxu0
      %v6827 = vadd.f32 %v6630, %v6826
      %6828 = vmatmul.bf16.gmra.mxu0 %v6478
      %v6829 = vpop.f32.mrf.mxu0
      %v6830 = vadd.f32 %v6633, %v6829
      %v6831 = vpop.f32.mrf.mxu0
      %v6832 = vadd.f32 %v6635, %v6831
      %6833 = vmatmul.bf16.gmra.mxu0 %v6481
      %v6834 = vpop.f32.mrf.mxu0
      %v6835 = vadd.f32 %v6638, %v6834
      %v6836 = vpop.f32.mrf.mxu0
      %v6837 = vadd.f32 %v6640, %v6836
      %6838 = vmatmul.bf16.gmra.mxu0 %v6484
      %v6839 = vpop.f32.mrf.mxu0
      %v6840 = vadd.f32 %v6643, %v6839
      %v6841 = vpop.f32.mrf.mxu0
      %v6842 = vadd.f32 %v6645, %v6841
      %6843 = vmatmul.bf16.gmra.mxu0 %v6487
      %v6844 = vpop.f32.mrf.mxu0
      %v6845 = vadd.f32 %v6648, %v6844
      %v6846 = vpop.f32.mrf.mxu0
      %v6847 = vadd.f32 %v6650, %v6846
      %6848 = vmatmul.bf16.gmra.mxu0 %v6490
      %v6849 = vpop.f32.mrf.mxu0
      %v6850 = vadd.f32 %v6653, %v6849
      %v6851 = vpop.f32.mrf.mxu0
      %v6852 = vadd.f32 %v6655, %v6851
      %6853 = vmatmul.bf16.gmra.mxu0 %v6493
      %v6854 = vpop.f32.mrf.mxu0
      %v6855 = vadd.f32 %v6658, %v6854
      %v6856 = vpop.f32.mrf.mxu0
      %v6857 = vadd.f32 %v6660, %v6856
      %6858 = vmatmul.bf16.gmra.mxu0 %v6496
      %v6859 = vpop.f32.mrf.mxu0
      %v6860 = vadd.f32 %v6663, %v6859
      %v6861 = vpop.f32.mrf.mxu0
      %v6862 = vadd.f32 %v6665, %v6861
      %6863 = vmatmul.bf16.gmra.mxu0 %v6499
      %v6864 = vpop.f32.mrf.mxu0
      %v6865 = vadd.f32 %v6668, %v6864
      %v6866 = vpop.f32.mrf.mxu0
      %v6867 = vadd.f32 %v6670, %v6866
      %6868 = vmatmul.bf16.gmra.mxu0 %v6502
      %v6869 = vpop.f32.mrf.mxu0
      %v6870 = vadd.f32 %v6673, %v6869
      %v6871 = vpop.f32.mrf.mxu0
      %v6872 = vadd.f32 %v6675, %v6871
      %6873 = vmatmul.bf16.gmra.mxu0 %v6505
      %v6874 = vpop.f32.mrf.mxu0
      %v6875 = vadd.f32 %v6678, %v6874
      %v6876 = vpop.f32.mrf.mxu0
      %v6877 = vadd.f32 %v6680, %v6876
      %6878 = vmatmul.bf16.gmra.mxu0 %v6508
      %v6879 = vpop.f32.mrf.mxu0
      %v6880 = vadd.f32 %v6683, %v6879
      %v6881 = vpop.f32.mrf.mxu0
      %v6882 = vadd.f32 %v6685, %v6881
      %6883 = vmatmul.bf16.gmra.mxu0 %v6511
      %v6884 = vpop.f32.mrf.mxu0
      %v6885 = vadd.f32 %v6688, %v6884
      %v6886 = vpop.f32.mrf.mxu0
      %v6887 = vadd.f32 %v6690, %v6886
      %6888 = vdwg.mxu0
      %v6889 = vld [vmem:[#allocation4 + $0x20] sm:$0xf]
      %v6890 = vld [vmem:[#allocation4 + $0x24] sm:$0xf]
      %v6891 = vld [vmem:[#allocation4 + $0x28] sm:$0xf]
      %v6892 = vld [vmem:[#allocation4 + $0x2c] sm:$0xf]
      %v6893 = vld [vmem:[#allocation4 + $0x30] sm:$0xf]
      %v6894 = vld [vmem:[#allocation4 + $0x34] sm:$0xf]
      %v6895 = vld [vmem:[#allocation4 + $0x38] sm:$0xf]
      %v6896 = vld [vmem:[#allocation4 + $0x3c] sm:$0xf]
      %v6897 = vld [vmem:[#allocation4 + $0x40] sm:$0xf]
      %v6898 = vld [vmem:[#allocation4 + $0x44] sm:$0xf]
      %v6899 = vld [vmem:[#allocation4 + $0x48] sm:$0xf]
      %v6900 = vld [vmem:[#allocation4 + $0x4c] sm:$0xf]
      %v6901 = vld [vmem:[#allocation4 + $0x50] sm:$0xf]
      %v6902 = vld [vmem:[#allocation4 + $0x54] sm:$0xf]
      %v6903 = vld [vmem:[#allocation4 + $0x58] sm:$0xf]
      %v6904 = vld [vmem:[#allocation4 + $0x5c] sm:$0xf]
      %v6905 = vld [vmem:[#allocation4 + $0x60] sm:$0xf]
      %v6906 = vld [vmem:[#allocation4 + $0x64] sm:$0xf]
      %v6907 = vld [vmem:[#allocation4 + $0x68] sm:$0xf]
      %v6908 = vld [vmem:[#allocation4 + $0x6c] sm:$0xf]
      %v6909 = vld [vmem:[#allocation4 + $0x70] sm:$0xf]
      %v6910 = vld [vmem:[#allocation4 + $0x74] sm:$0xf]
      %v6911 = vld [vmem:[#allocation4 + $0x78] sm:$0xf]
      %v6912 = vld [vmem:[#allocation4 + $0x7c] sm:$0xf]
      %v6913 = vld [vmem:[#allocation4 + $0x80] sm:$0xf]
      %v6914 = vld [vmem:[#allocation4 + $0x84] sm:$0xf]
      %v6915 = vld [vmem:[#allocation4 + $0x88] sm:$0xf]
      %v6916 = vld [vmem:[#allocation4 + $0x8c] sm:$0xf]
      %v6917 = vld [vmem:[#allocation4 + $0x90] sm:$0xf]
      %v6918 = vld [vmem:[#allocation4 + $0x94] sm:$0xf]
      %v6919 = vld [vmem:[#allocation4 + $0x98] sm:$0xf]
      %v6920 = vld [vmem:[#allocation4 + $0x9c] sm:$0xf]
      %v6921 = vld [vmem:[#allocation4 + $0xa0] sm:$0xf]
      %v6922 = vld [vmem:[#allocation4 + $0xa4] sm:$0xf]
      %v6923 = vld [vmem:[#allocation4 + $0xa8] sm:$0xf]
      %v6924 = vld [vmem:[#allocation4 + $0xac] sm:$0xf]
      %v6925 = vld [vmem:[#allocation4 + $0xb0] sm:$0xf]
      %v6926 = vld [vmem:[#allocation4 + $0xb4] sm:$0xf]
      %v6927 = vld [vmem:[#allocation4 + $0xb8] sm:$0xf]
      %v6928 = vld [vmem:[#allocation4 + $0xbc] sm:$0xf]
      %v6929 = vld [vmem:[#allocation4 + $0xc0] sm:$0xf]
      %v6930 = vld [vmem:[#allocation4 + $0xc4] sm:$0xf]
      %v6931 = vld [vmem:[#allocation4 + $0xc8] sm:$0xf]
      %v6932 = vld [vmem:[#allocation4 + $0xcc] sm:$0xf]
      %v6933 = vld [vmem:[#allocation4 + $0xd0] sm:$0xf]
      %v6934 = vld [vmem:[#allocation4 + $0xd4] sm:$0xf]
      %v6935 = vld [vmem:[#allocation4 + $0xd8] sm:$0xf]
      %v6936 = vld [vmem:[#allocation4 + $0xdc] sm:$0xf]
      %v6937 = vld [vmem:[#allocation4 + $0xe0] sm:$0xf]
      %v6938 = vld [vmem:[#allocation4 + $0xe4] sm:$0xf]
      %v6939 = vld [vmem:[#allocation4 + $0xe8] sm:$0xf]
      %v6940 = vld [vmem:[#allocation4 + $0xec] sm:$0xf]
      %v6941 = vld [vmem:[#allocation4 + $0xf0] sm:$0xf]
      %v6942 = vld [vmem:[#allocation4 + $0xf4] sm:$0xf]
      %v6943 = vld [vmem:[#allocation4 + $0xf8] sm:$0xf]
      %v6944 = vld [vmem:[#allocation4 + $0xfc] sm:$0xf]
      %v6945 = vld [vmem:[#allocation4 + $0x100] sm:$0xf]
      %v6946 = vld [vmem:[#allocation4 + $0x104] sm:$0xf]
      %v6947 = vld [vmem:[#allocation4 + $0x108] sm:$0xf]
      %v6948 = vld [vmem:[#allocation4 + $0x10c] sm:$0xf]
      %v6949 = vld [vmem:[#allocation4 + $0x110] sm:$0xf]
      %v6950 = vld [vmem:[#allocation4 + $0x114] sm:$0xf]
      %v6951 = vld [vmem:[#allocation4 + $0x118] sm:$0xf]
      %v6952 = vld [vmem:[#allocation4 + $0x11c] sm:$0xf]
      %s6953 = scalar_lea.vmem %s3, 24
      %v6954 = vld [vmem:[%s6953] sm:$0xf]
      %v6955 = vld [vmem:[%s6953 + $0x4] sm:$0xf]
      %v6956 = vld [vmem:[%s6953 + $0x8] sm:$0xf]
      %v7021 = vunpack.c.l.b16 %v6889
      %v7022 = vunpack.c.l.b16 %v6890
      %v7023 = vunpack.c.l.b16 %v6891
      %v7024 = vunpack.c.l.b16 %v6892
      %v7025 = vunpack.c.l.b16 %v6893
      %v7026 = vunpack.c.l.b16 %v6894
      %v7027 = vunpack.c.l.b16 %v6895
      %v7028 = vunpack.c.l.b16 %v6896
      %v7029 = vunpack.c.l.b16 %v6897
      %v7030 = vunpack.c.l.b16 %v6898
      %v7031 = vunpack.c.l.b16 %v6899
      %v7032 = vunpack.c.l.b16 %v6900
      %v7033 = vunpack.c.l.b16 %v6901
      %v7034 = vunpack.c.l.b16 %v6902
      %v7035 = vunpack.c.l.b16 %v6903
      %v7036 = vunpack.c.l.b16 %v6904
      %v7037 = vunpack.c.l.b16 %v6905
      %v7038 = vunpack.c.l.b16 %v6906
      %v7039 = vunpack.c.l.b16 %v6907
      %v7040 = vunpack.c.l.b16 %v6908
      %v7041 = vunpack.c.l.b16 %v6909
      %v7042 = vunpack.c.l.b16 %v6910
      %v7043 = vunpack.c.l.b16 %v6911
      %v7044 = vunpack.c.l.b16 %v6912
      %v7045 = vunpack.c.l.b16 %v6913
      %v7046 = vunpack.c.l.b16 %v6914
      %v7047 = vunpack.c.l.b16 %v6915
      %v7048 = vunpack.c.l.b16 %v6916
      %v7049 = vunpack.c.l.b16 %v6917
      %v7050 = vunpack.c.l.b16 %v6918
      %v7051 = vunpack.c.l.b16 %v6919
      %v7052 = vunpack.c.l.b16 %v6920
      %v7053 = vunpack.c.l.b16 %v6921
      %v7054 = vunpack.c.l.b16 %v6922
      %v7055 = vunpack.c.l.b16 %v6923
      %v7056 = vunpack.c.l.b16 %v6924
      %v7057 = vunpack.c.l.b16 %v6925
      %v7058 = vunpack.c.l.b16 %v6926
      %v7059 = vunpack.c.l.b16 %v6927
      %v7060 = vunpack.c.l.b16 %v6928
      %v7061 = vunpack.c.l.b16 %v6929
      %v7062 = vunpack.c.l.b16 %v6930
      %v7063 = vunpack.c.l.b16 %v6931
      %v7064 = vunpack.c.l.b16 %v6932
      %v7065 = vunpack.c.l.b16 %v6933
      %v7066 = vunpack.c.l.b16 %v6934
      %v7067 = vunpack.c.l.b16 %v6935
      %v7068 = vunpack.c.l.b16 %v6936
      %v7069 = vunpack.c.l.b16 %v6937
      %v7070 = vunpack.c.l.b16 %v6938
      %v7071 = vunpack.c.l.b16 %v6939
      %v7072 = vunpack.c.l.b16 %v6940
      %v7073 = vunpack.c.l.b16 %v6941
      %v7074 = vunpack.c.l.b16 %v6942
      %v7075 = vunpack.c.l.b16 %v6943
      %v7076 = vunpack.c.l.b16 %v6944
      %v7077 = vunpack.c.l.b16 %v6945
      %v7078 = vunpack.c.l.b16 %v6946
      %v7079 = vunpack.c.l.b16 %v6947
      %v7080 = vunpack.c.l.b16 %v6948
      %v7081 = vunpack.c.l.b16 %v6949
      %v7082 = vunpack.c.l.b16 %v6950
      %v7083 = vunpack.c.l.b16 %v6951
      %v7084 = vunpack.c.l.b16 %v6952
      %v7085 = vpack.c.b16 %v7022, %v7021
      %v7086 = vpack.c.b16 %v7024, %v7023
      %v7087 = vpack.c.b16 %v7026, %v7025
      %v7088 = vpack.c.b16 %v7028, %v7027
      %v7089 = vpack.c.b16 %v7030, %v7029
      %v7090 = vpack.c.b16 %v7032, %v7031
      %v7091 = vpack.c.b16 %v7034, %v7033
      %v7092 = vpack.c.b16 %v7036, %v7035
      %v7093 = vpack.c.b16 %v7038, %v7037
      %v7094 = vpack.c.b16 %v7040, %v7039
      %v7095 = vpack.c.b16 %v7042, %v7041
      %v7096 = vpack.c.b16 %v7044, %v7043
      %v7097 = vpack.c.b16 %v7046, %v7045
      %v7098 = vpack.c.b16 %v7048, %v7047
      %v7099 = vpack.c.b16 %v7050, %v7049
      %v7100 = vpack.c.b16 %v7052, %v7051
      %v7101 = vpack.c.b16 %v7054, %v7053
      %v7102 = vpack.c.b16 %v7056, %v7055
      %v7103 = vpack.c.b16 %v7058, %v7057
      %v7104 = vpack.c.b16 %v7060, %v7059
      %v7105 = vpack.c.b16 %v7062, %v7061
      %v7106 = vpack.c.b16 %v7064, %v7063
      %v7107 = vpack.c.b16 %v7066, %v7065
      %v7108 = vpack.c.b16 %v7068, %v7067
      %v7109 = vpack.c.b16 %v7070, %v7069
      %v7110 = vpack.c.b16 %v7072, %v7071
      %v7111 = vpack.c.b16 %v7074, %v7073
      %v7112 = vpack.c.b16 %v7076, %v7075
      %v7113 = vpack.c.b16 %v7078, %v7077
      %v7114 = vpack.c.b16 %v7080, %v7079
      %v7115 = vpack.c.b16 %v7082, %v7081
      %v7116 = vpack.c.b16 %v7084, %v7083
      %v7120 = vunpack.c.l.b16 %v6954
      %v7121 = vunpack.c.l.b16 %v6955
      %v7122 = vunpack.c.l.b16 %v6956
      %v7123 = vpack.c.b16 %v7121, %v7120
      %v7124 = vpack.c.b16 %v7122, %v7122
      %v7127 = vsel %vm6422, %v7085, 0
      %v7130 = vsel %vm6422, %v7086, 0
      %v7133 = vsel %vm6422, %v7087, 0
      %v7136 = vsel %vm6422, %v7088, 0
      %v7139 = vsel %vm6422, %v7089, 0
      %v7142 = vsel %vm6422, %v7090, 0
      %v7145 = vsel %vm6422, %v7091, 0
      %v7148 = vsel %vm6422, %v7092, 0
      %v7151 = vsel %vm6422, %v7093, 0
      %v7154 = vsel %vm6422, %v7094, 0
      %v7157 = vsel %vm6422, %v7095, 0
      %v7160 = vsel %vm6422, %v7096, 0
      %v7163 = vsel %vm6422, %v7097, 0
      %v7166 = vsel %vm6422, %v7098, 0
      %v7169 = vsel %vm6422, %v7099, 0
      %v7172 = vsel %vm6422, %v7100, 0
      %v7175 = vsel %vm6422, %v7101, 0
      %v7178 = vsel %vm6422, %v7102, 0
      %v7181 = vsel %vm6422, %v7103, 0
      %v7184 = vsel %vm6422, %v7104, 0
      %v7187 = vsel %vm6422, %v7105, 0
      %v7190 = vsel %vm6422, %v7106, 0
      %v7193 = vsel %vm6422, %v7107, 0
      %v7196 = vsel %vm6422, %v7108, 0
      %v7199 = vsel %vm6422, %v7109, 0
      %v7202 = vsel %vm6422, %v7110, 0
      %v7205 = vsel %vm6422, %v7111, 0
      %v7208 = vsel %vm6422, %v7112, 0
      %v7211 = vsel %vm6422, %v7113, 0
      %v7214 = vsel %vm6422, %v7114, 0
      %v7217 = vsel %vm6422, %v7115, 0
      %v7220 = vsel %vm6422, %v7116, 0
      %v7223 = vsel %vm6519, %v7124, 0
      %7225 = vmatpush.bf16.msra.mxu0 0
      %7226 = vmatpush.bf16.msra.mxu0 0
      %7227 = vmatpush.bf16.msra.mxu0 0
      %7228 = vmatpush.bf16.msra.mxu0 0
      %7229 = vmatpush.bf16.msra.mxu0 0
      %7230 = vmatpush.bf16.msra.mxu0 0
      %7231 = vmatpush.bf16.msra.mxu0 %v7223
      %7232 = vmatpush.bf16.msra.mxu0 %v7123
      %7233 = vmatmul.bf16.gmra.mxu0 %v7127
      %v7234 = vpop.f32.mrf.mxu0
      %v7235 = vadd.f32 0.0, %v7234
      %v7236 = vpop.f32.mrf.mxu0
      %v7237 = vadd.f32 0.0, %v7236
      %7238 = vmatmul.bf16.gmra.mxu0 %v7130
      %v7239 = vpop.f32.mrf.mxu0
      %v7240 = vadd.f32 0.0, %v7239
      %v7241 = vpop.f32.mrf.mxu0
      %v7242 = vadd.f32 0.0, %v7241
      %7243 = vmatmul.bf16.gmra.mxu0 %v7133
      %v7244 = vpop.f32.mrf.mxu0
      %v7245 = vadd.f32 0.0, %v7244
      %v7246 = vpop.f32.mrf.mxu0
      %v7247 = vadd.f32 0.0, %v7246
      %7248 = vmatmul.bf16.gmra.mxu0 %v7136
      %v7249 = vpop.f32.mrf.mxu0
      %v7250 = vadd.f32 0.0, %v7249
      %v7251 = vpop.f32.mrf.mxu0
      %v7252 = vadd.f32 0.0, %v7251
      %7253 = vmatmul.bf16.gmra.mxu0 %v7139
      %v7254 = vpop.f32.mrf.mxu0
      %v7255 = vadd.f32 0.0, %v7254
      %v7256 = vpop.f32.mrf.mxu0
      %v7257 = vadd.f32 0.0, %v7256
      %7258 = vmatmul.bf16.gmra.mxu0 %v7142
      %v7259 = vpop.f32.mrf.mxu0
      %v7260 = vadd.f32 0.0, %v7259
      %v7261 = vpop.f32.mrf.mxu0
      %v7262 = vadd.f32 0.0, %v7261
      %7263 = vmatmul.bf16.gmra.mxu0 %v7145
      %v7264 = vpop.f32.mrf.mxu0
      %v7265 = vadd.f32 0.0, %v7264
      %v7266 = vpop.f32.mrf.mxu0
      %v7267 = vadd.f32 0.0, %v7266
      %7268 = vmatmul.bf16.gmra.mxu0 %v7148
      %v7269 = vpop.f32.mrf.mxu0
      %v7270 = vadd.f32 0.0, %v7269
      %v7271 = vpop.f32.mrf.mxu0
      %v7272 = vadd.f32 0.0, %v7271
      %7273 = vmatmul.bf16.gmra.mxu0 %v7151
      %v7274 = vpop.f32.mrf.mxu0
      %v7275 = vadd.f32 0.0, %v7274
      %v7276 = vpop.f32.mrf.mxu0
      %v7277 = vadd.f32 0.0, %v7276
      %7278 = vmatmul.bf16.gmra.mxu0 %v7154
      %v7279 = vpop.f32.mrf.mxu0
      %v7280 = vadd.f32 0.0, %v7279
      %v7281 = vpop.f32.mrf.mxu0
      %v7282 = vadd.f32 0.0, %v7281
      %7283 = vmatmul.bf16.gmra.mxu0 %v7157
      %v7284 = vpop.f32.mrf.mxu0
      %v7285 = vadd.f32 0.0, %v7284
      %v7286 = vpop.f32.mrf.mxu0
      %v7287 = vadd.f32 0.0, %v7286
      %7288 = vmatmul.bf16.gmra.mxu0 %v7160
      %v7289 = vpop.f32.mrf.mxu0
      %v7290 = vadd.f32 0.0, %v7289
      %v7291 = vpop.f32.mrf.mxu0
      %v7292 = vadd.f32 0.0, %v7291
      %7293 = vmatmul.bf16.gmra.mxu0 %v7163
      %v7294 = vpop.f32.mrf.mxu0
      %v7295 = vadd.f32 0.0, %v7294
      %v7296 = vpop.f32.mrf.mxu0
      %v7297 = vadd.f32 0.0, %v7296
      %7298 = vmatmul.bf16.gmra.mxu0 %v7166
      %v7299 = vpop.f32.mrf.mxu0
      %v7300 = vadd.f32 0.0, %v7299
      %v7301 = vpop.f32.mrf.mxu0
      %v7302 = vadd.f32 0.0, %v7301
      %7303 = vmatmul.bf16.gmra.mxu0 %v7169
      %v7304 = vpop.f32.mrf.mxu0
      %v7305 = vadd.f32 0.0, %v7304
      %v7306 = vpop.f32.mrf.mxu0
      %v7307 = vadd.f32 0.0, %v7306
      %7308 = vmatmul.bf16.gmra.mxu0 %v7172
      %v7309 = vpop.f32.mrf.mxu0
      %v7310 = vadd.f32 0.0, %v7309
      %v7311 = vpop.f32.mrf.mxu0
      %v7312 = vadd.f32 0.0, %v7311
      %7313 = vmatmul.bf16.gmra.mxu0 %v7175
      %v7314 = vpop.f32.mrf.mxu0
      %v7315 = vadd.f32 0.0, %v7314
      %v7316 = vpop.f32.mrf.mxu0
      %v7317 = vadd.f32 0.0, %v7316
      %7318 = vmatmul.bf16.gmra.mxu0 %v7178
      %v7319 = vpop.f32.mrf.mxu0
      %v7320 = vadd.f32 0.0, %v7319
      %v7321 = vpop.f32.mrf.mxu0
      %v7322 = vadd.f32 0.0, %v7321
      %7323 = vmatmul.bf16.gmra.mxu0 %v7181
      %v7324 = vpop.f32.mrf.mxu0
      %v7325 = vadd.f32 0.0, %v7324
      %v7326 = vpop.f32.mrf.mxu0
      %v7327 = vadd.f32 0.0, %v7326
      %7328 = vmatmul.bf16.gmra.mxu0 %v7184
      %v7329 = vpop.f32.mrf.mxu0
      %v7330 = vadd.f32 0.0, %v7329
      %v7331 = vpop.f32.mrf.mxu0
      %v7332 = vadd.f32 0.0, %v7331
      %7333 = vmatmul.bf16.gmra.mxu0 %v7187
      %v7334 = vpop.f32.mrf.mxu0
      %v7335 = vadd.f32 0.0, %v7334
      %v7336 = vpop.f32.mrf.mxu0
      %v7337 = vadd.f32 0.0, %v7336
      %7338 = vmatmul.bf16.gmra.mxu0 %v7190
      %v7339 = vpop.f32.mrf.mxu0
      %v7340 = vadd.f32 0.0, %v7339
      %v7341 = vpop.f32.mrf.mxu0
      %v7342 = vadd.f32 0.0, %v7341
      %7343 = vmatmul.bf16.gmra.mxu0 %v7193
      %v7344 = vpop.f32.mrf.mxu0
      %v7345 = vadd.f32 0.0, %v7344
      %v7346 = vpop.f32.mrf.mxu0
      %v7347 = vadd.f32 0.0, %v7346
      %7348 = vmatmul.bf16.gmra.mxu0 %v7196
      %v7349 = vpop.f32.mrf.mxu0
      %v7350 = vadd.f32 0.0, %v7349
      %v7351 = vpop.f32.mrf.mxu0
      %v7352 = vadd.f32 0.0, %v7351
      %7353 = vmatmul.bf16.gmra.mxu0 %v7199
      %v7354 = vpop.f32.mrf.mxu0
      %v7355 = vadd.f32 0.0, %v7354
      %v7356 = vpop.f32.mrf.mxu0
      %v7357 = vadd.f32 0.0, %v7356
      %7358 = vmatmul.bf16.gmra.mxu0 %v7202
      %v7359 = vpop.f32.mrf.mxu0
      %v7360 = vadd.f32 0.0, %v7359
      %v7361 = vpop.f32.mrf.mxu0
      %v7362 = vadd.f32 0.0, %v7361
      %7363 = vmatmul.bf16.gmra.mxu0 %v7205
      %v7364 = vpop.f32.mrf.mxu0
      %v7365 = vadd.f32 0.0, %v7364
      %v7366 = vpop.f32.mrf.mxu0
      %v7367 = vadd.f32 0.0, %v7366
      %7368 = vmatmul.bf16.gmra.mxu0 %v7208
      %v7369 = vpop.f32.mrf.mxu0
      %v7370 = vadd.f32 0.0, %v7369
      %v7371 = vpop.f32.mrf.mxu0
      %v7372 = vadd.f32 0.0, %v7371
      %7373 = vmatmul.bf16.gmra.mxu0 %v7211
      %v7374 = vpop.f32.mrf.mxu0
      %v7375 = vadd.f32 0.0, %v7374
      %v7376 = vpop.f32.mrf.mxu0
      %v7377 = vadd.f32 0.0, %v7376
      %7378 = vmatmul.bf16.gmra.mxu0 %v7214
      %v7379 = vpop.f32.mrf.mxu0
      %v7380 = vadd.f32 0.0, %v7379
      %v7381 = vpop.f32.mrf.mxu0
      %v7382 = vadd.f32 0.0, %v7381
      %7383 = vmatmul.bf16.gmra.mxu0 %v7217
      %v7384 = vpop.f32.mrf.mxu0
      %v7385 = vadd.f32 0.0, %v7384
      %v7386 = vpop.f32.mrf.mxu0
      %v7387 = vadd.f32 0.0, %v7386
      %7388 = vmatmul.bf16.gmra.mxu0 %v7220
      %v7389 = vpop.f32.mrf.mxu0
      %v7390 = vadd.f32 0.0, %v7389
      %v7391 = vpop.f32.mrf.mxu0
      %v7392 = vadd.f32 0.0, %v7391
      %7393 = vdwg.mxu0
      %v7394 = vadd.f32 %v6730, %v7235
      %v7395 = vadd.f32 %v6732, %v7237
      %v7396 = vadd.f32 %v6735, %v7240
      %v7397 = vadd.f32 %v6737, %v7242
      %v7398 = vadd.f32 %v6740, %v7245
      %v7399 = vadd.f32 %v6742, %v7247
      %v7400 = vadd.f32 %v6745, %v7250
      %v7401 = vadd.f32 %v6747, %v7252
      %v7402 = vadd.f32 %v6750, %v7255
      %v7403 = vadd.f32 %v6752, %v7257
      %v7404 = vadd.f32 %v6755, %v7260
      %v7405 = vadd.f32 %v6757, %v7262
      %v7406 = vadd.f32 %v6760, %v7265
      %v7407 = vadd.f32 %v6762, %v7267
      %v7408 = vadd.f32 %v6765, %v7270
      %v7409 = vadd.f32 %v6767, %v7272
      %v7410 = vadd.f32 %v6770, %v7275
      %v7411 = vadd.f32 %v6772, %v7277
      %v7412 = vadd.f32 %v6775, %v7280
      %v7413 = vadd.f32 %v6777, %v7282
      %v7414 = vadd.f32 %v6780, %v7285
      %v7415 = vadd.f32 %v6782, %v7287
      %v7416 = vadd.f32 %v6785, %v7290
      %v7417 = vadd.f32 %v6787, %v7292
      %v7418 = vadd.f32 %v6790, %v7295
      %v7419 = vadd.f32 %v6792, %v7297
      %v7420 = vadd.f32 %v6795, %v7300
      %v7421 = vadd.f32 %v6797, %v7302
      %v7422 = vadd.f32 %v6800, %v7305
      %v7423 = vadd.f32 %v6802, %v7307
      %v7424 = vadd.f32 %v6805, %v7310
      %v7425 = vadd.f32 %v6807, %v7312
      %v7426 = vadd.f32 %v6810, %v7315
      %v7427 = vadd.f32 %v6812, %v7317
      %v7428 = vadd.f32 %v6815, %v7320
      %v7429 = vadd.f32 %v6817, %v7322
      %v7430 = vadd.f32 %v6820, %v7325
      %v7431 = vadd.f32 %v6822, %v7327
      %v7432 = vadd.f32 %v6825, %v7330
      %v7433 = vadd.f32 %v6827, %v7332
      %v7434 = vadd.f32 %v6830, %v7335
      %v7435 = vadd.f32 %v6832, %v7337
      %v7436 = vadd.f32 %v6835, %v7340
      %v7437 = vadd.f32 %v6837, %v7342
      %v7438 = vadd.f32 %v6840, %v7345
      %v7439 = vadd.f32 %v6842, %v7347
      %v7440 = vadd.f32 %v6845, %v7350
      %v7441 = vadd.f32 %v6847, %v7352
      %v7442 = vadd.f32 %v6850, %v7355
      %v7443 = vadd.f32 %v6852, %v7357
      %v7444 = vadd.f32 %v6855, %v7360
      %v7445 = vadd.f32 %v6857, %v7362
      %v7446 = vadd.f32 %v6860, %v7365
      %v7447 = vadd.f32 %v6862, %v7367
      %v7448 = vadd.f32 %v6865, %v7370
      %v7449 = vadd.f32 %v6867, %v7372
      %v7450 = vadd.f32 %v6870, %v7375
      %v7451 = vadd.f32 %v6872, %v7377
      %v7452 = vadd.f32 %v6875, %v7380
      %v7453 = vadd.f32 %v6877, %v7382
      %v7454 = vadd.f32 %v6880, %v7385
      %v7455 = vadd.f32 %v6882, %v7387
      %v7456 = vadd.f32 %v6885, %v7390
      %v7457 = vadd.f32 %v6887, %v7392
      %v7458 = vld [vmem:[#allocation2 + $0x10] sm:$0xf]
      %v7459 = vld [vmem:[#allocation2 + $0x14] sm:$0xf]
      %v7460 = vld [vmem:[#allocation2 + $0x18] sm:$0xf]
      %v7461 = vld [vmem:[#allocation2 + $0x1c] sm:$0xf]
      %v7462 = vld [vmem:[#allocation2 + $0x20] sm:$0xf]
      %v7463 = vld [vmem:[#allocation2 + $0x24] sm:$0xf]
      %v7464 = vld [vmem:[#allocation2 + $0x28] sm:$0xf]
      %v7465 = vld [vmem:[#allocation2 + $0x2c] sm:$0xf]
      %v7466 = vld [vmem:[#allocation2 + $0x30] sm:$0xf]
      %v7467 = vld [vmem:[#allocation2 + $0x34] sm:$0xf]
      %v7468 = vld [vmem:[#allocation2 + $0x38] sm:$0xf]
      %v7469 = vld [vmem:[#allocation2 + $0x3c] sm:$0xf]
      %v7470 = vld [vmem:[#allocation2 + $0x40] sm:$0xf]
      %v7471 = vld [vmem:[#allocation2 + $0x44] sm:$0xf]
      %v7472 = vld [vmem:[#allocation2 + $0x48] sm:$0xf]
      %v7473 = vld [vmem:[#allocation2 + $0x4c] sm:$0xf]
      %v7474 = vld [vmem:[#allocation2 + $0x50] sm:$0xf]
      %v7475 = vld [vmem:[#allocation2 + $0x54] sm:$0xf]
      %v7476 = vld [vmem:[#allocation2 + $0x58] sm:$0xf]
      %v7477 = vld [vmem:[#allocation2 + $0x5c] sm:$0xf]
      %v7478 = vld [vmem:[#allocation2 + $0x60] sm:$0xf]
      %v7479 = vld [vmem:[#allocation2 + $0x64] sm:$0xf]
      %v7480 = vld [vmem:[#allocation2 + $0x68] sm:$0xf]
      %v7481 = vld [vmem:[#allocation2 + $0x6c] sm:$0xf]
      %v7482 = vld [vmem:[#allocation2 + $0x70] sm:$0xf]
      %v7483 = vld [vmem:[#allocation2 + $0x74] sm:$0xf]
      %v7484 = vld [vmem:[#allocation2 + $0x78] sm:$0xf]
      %v7485 = vld [vmem:[#allocation2 + $0x7c] sm:$0xf]
      %v7486 = vld [vmem:[#allocation2 + $0x80] sm:$0xf]
      %v7487 = vld [vmem:[#allocation2 + $0x84] sm:$0xf]
      %v7488 = vld [vmem:[#allocation2 + $0x88] sm:$0xf]
      %v7489 = vld [vmem:[#allocation2 + $0x8c] sm:$0xf]
      %v7490 = vld [vmem:[#allocation2 + $0x90] sm:$0xf]
      %v7491 = vld [vmem:[#allocation2 + $0x94] sm:$0xf]
      %v7492 = vld [vmem:[#allocation2 + $0x98] sm:$0xf]
      %v7493 = vld [vmem:[#allocation2 + $0x9c] sm:$0xf]
      %v7494 = vld [vmem:[#allocation2 + $0xa0] sm:$0xf]
      %v7495 = vld [vmem:[#allocation2 + $0xa4] sm:$0xf]
      %v7496 = vld [vmem:[#allocation2 + $0xa8] sm:$0xf]
      %v7497 = vld [vmem:[#allocation2 + $0xac] sm:$0xf]
      %v7498 = vld [vmem:[#allocation2 + $0xb0] sm:$0xf]
      %v7499 = vld [vmem:[#allocation2 + $0xb4] sm:$0xf]
      %v7500 = vld [vmem:[#allocation2 + $0xb8] sm:$0xf]
      %v7501 = vld [vmem:[#allocation2 + $0xbc] sm:$0xf]
      %v7502 = vld [vmem:[#allocation2 + $0xc0] sm:$0xf]
      %v7503 = vld [vmem:[#allocation2 + $0xc4] sm:$0xf]
      %v7504 = vld [vmem:[#allocation2 + $0xc8] sm:$0xf]
      %v7505 = vld [vmem:[#allocation2 + $0xcc] sm:$0xf]
      %v7506 = vld [vmem:[#allocation2 + $0xd0] sm:$0xf]
      %v7507 = vld [vmem:[#allocation2 + $0xd4] sm:$0xf]
      %v7508 = vld [vmem:[#allocation2 + $0xd8] sm:$0xf]
      %v7509 = vld [vmem:[#allocation2 + $0xdc] sm:$0xf]
      %v7510 = vld [vmem:[#allocation2 + $0xe0] sm:$0xf]
      %v7511 = vld [vmem:[#allocation2 + $0xe4] sm:$0xf]
      %v7512 = vld [vmem:[#allocation2 + $0xe8] sm:$0xf]
      %v7513 = vld [vmem:[#allocation2 + $0xec] sm:$0xf]
      %v7514 = vld [vmem:[#allocation2 + $0xf0] sm:$0xf]
      %v7515 = vld [vmem:[#allocation2 + $0xf4] sm:$0xf]
      %v7516 = vld [vmem:[#allocation2 + $0xf8] sm:$0xf]
      %v7517 = vld [vmem:[#allocation2 + $0xfc] sm:$0xf]
      %v7518 = vld [vmem:[#allocation2 + $0x100] sm:$0xf]
      %v7519 = vld [vmem:[#allocation2 + $0x104] sm:$0xf]
      %v7520 = vld [vmem:[#allocation2 + $0x108] sm:$0xf]
      %v7521 = vld [vmem:[#allocation2 + $0x10c] sm:$0xf]
      %v7522 = vld [vmem:[%s4] sm:$0x3]
      %v7587 = vunpack.c.l.b16 %v7458
      %v7588 = vunpack.c.l.b16 %v7459
      %v7589 = vunpack.c.l.b16 %v7460
      %v7590 = vunpack.c.l.b16 %v7461
      %v7591 = vunpack.c.l.b16 %v7462
      %v7592 = vunpack.c.l.b16 %v7463
      %v7593 = vunpack.c.l.b16 %v7464
      %v7594 = vunpack.c.l.b16 %v7465
      %v7595 = vunpack.c.l.b16 %v7466
      %v7596 = vunpack.c.l.b16 %v7467
      %v7597 = vunpack.c.l.b16 %v7468
      %v7598 = vunpack.c.l.b16 %v7469
      %v7599 = vunpack.c.l.b16 %v7470
      %v7600 = vunpack.c.l.b16 %v7471
      %v7601 = vunpack.c.l.b16 %v7472
      %v7602 = vunpack.c.l.b16 %v7473
      %v7603 = vunpack.c.l.b16 %v7474
      %v7604 = vunpack.c.l.b16 %v7475
      %v7605 = vunpack.c.l.b16 %v7476
      %v7606 = vunpack.c.l.b16 %v7477
      %v7607 = vunpack.c.l.b16 %v7478
      %v7608 = vunpack.c.l.b16 %v7479
      %v7609 = vunpack.c.l.b16 %v7480
      %v7610 = vunpack.c.l.b16 %v7481
      %v7611 = vunpack.c.l.b16 %v7482
      %v7612 = vunpack.c.l.b16 %v7483
      %v7613 = vunpack.c.l.b16 %v7484
      %v7614 = vunpack.c.l.b16 %v7485
      %v7615 = vunpack.c.l.b16 %v7486
      %v7616 = vunpack.c.l.b16 %v7487
      %v7617 = vunpack.c.l.b16 %v7488
      %v7618 = vunpack.c.l.b16 %v7489
      %v7619 = vunpack.c.l.b16 %v7490
      %v7620 = vunpack.c.l.b16 %v7491
      %v7621 = vunpack.c.l.b16 %v7492
      %v7622 = vunpack.c.l.b16 %v7493
      %v7623 = vunpack.c.l.b16 %v7494
      %v7624 = vunpack.c.l.b16 %v7495
      %v7625 = vunpack.c.l.b16 %v7496
      %v7626 = vunpack.c.l.b16 %v7497
      %v7627 = vunpack.c.l.b16 %v7498
      %v7628 = vunpack.c.l.b16 %v7499
      %v7629 = vunpack.c.l.b16 %v7500
      %v7630 = vunpack.c.l.b16 %v7501
      %v7631 = vunpack.c.l.b16 %v7502
      %v7632 = vunpack.c.l.b16 %v7503
      %v7633 = vunpack.c.l.b16 %v7504
      %v7634 = vunpack.c.l.b16 %v7505
      %v7635 = vunpack.c.l.b16 %v7506
      %v7636 = vunpack.c.l.b16 %v7507
      %v7637 = vunpack.c.l.b16 %v7508
      %v7638 = vunpack.c.l.b16 %v7509
      %v7639 = vunpack.c.l.b16 %v7510
      %v7640 = vunpack.c.l.b16 %v7511
      %v7641 = vunpack.c.l.b16 %v7512
      %v7642 = vunpack.c.l.b16 %v7513
      %v7643 = vunpack.c.l.b16 %v7514
      %v7644 = vunpack.c.l.b16 %v7515
      %v7645 = vunpack.c.l.b16 %v7516
      %v7646 = vunpack.c.l.b16 %v7517
      %v7647 = vunpack.c.l.b16 %v7518
      %v7648 = vunpack.c.l.b16 %v7519
      %v7649 = vunpack.c.l.b16 %v7520
      %v7650 = vunpack.c.l.b16 %v7521
      %v7651 = vpack.c.b16 %v7588, %v7587
      %v7652 = vpack.c.b16 %v7590, %v7589
      %v7653 = vpack.c.b16 %v7592, %v7591
      %v7654 = vpack.c.b16 %v7594, %v7593
      %v7655 = vpack.c.b16 %v7596, %v7595
      %v7656 = vpack.c.b16 %v7598, %v7597
      %v7657 = vpack.c.b16 %v7600, %v7599
      %v7658 = vpack.c.b16 %v7602, %v7601
      %v7659 = vpack.c.b16 %v7604, %v7603
      %v7660 = vpack.c.b16 %v7606, %v7605
      %v7661 = vpack.c.b16 %v7608, %v7607
      %v7662 = vpack.c.b16 %v7610, %v7609
      %v7663 = vpack.c.b16 %v7612, %v7611
      %v7664 = vpack.c.b16 %v7614, %v7613
      %v7665 = vpack.c.b16 %v7616, %v7615
      %v7666 = vpack.c.b16 %v7618, %v7617
      %v7667 = vpack.c.b16 %v7620, %v7619
      %v7668 = vpack.c.b16 %v7622, %v7621
      %v7669 = vpack.c.b16 %v7624, %v7623
      %v7670 = vpack.c.b16 %v7626, %v7625
      %v7671 = vpack.c.b16 %v7628, %v7627
      %v7672 = vpack.c.b16 %v7630, %v7629
      %v7673 = vpack.c.b16 %v7632, %v7631
      %v7674 = vpack.c.b16 %v7634, %v7633
      %v7675 = vpack.c.b16 %v7636, %v7635
      %v7676 = vpack.c.b16 %v7638, %v7637
      %v7677 = vpack.c.b16 %v7640, %v7639
      %v7678 = vpack.c.b16 %v7642, %v7641
      %v7679 = vpack.c.b16 %v7644, %v7643
      %v7680 = vpack.c.b16 %v7646, %v7645
      %v7681 = vpack.c.b16 %v7648, %v7647
      %v7682 = vpack.c.b16 %v7650, %v7649
      %7683 = vrot.lane.b32.xlu0 %v7651, 124
      %v7684 = vpop.permute.xlu0 %7683
      %7685 = vrot.lane.b32.xlu0 %v7652, 124
      %v7686 = vpop.permute.xlu0 %7685
      %7687 = vrot.lane.b32.xlu0 %v7653, 124
      %v7688 = vpop.permute.xlu0 %7687
      %7689 = vrot.lane.b32.xlu0 %v7654, 124
      %v7690 = vpop.permute.xlu0 %7689
      %7691 = vrot.lane.b32.xlu0 %v7655, 124
      %v7692 = vpop.permute.xlu0 %7691
      %7693 = vrot.lane.b32.xlu0 %v7656, 124
      %v7694 = vpop.permute.xlu0 %7693
      %7695 = vrot.lane.b32.xlu0 %v7657, 124
      %v7696 = vpop.permute.xlu0 %7695
      %7697 = vrot.lane.b32.xlu0 %v7658, 124
      %v7698 = vpop.permute.xlu0 %7697
      %7699 = vrot.lane.b32.xlu0 %v7659, 124
      %v7700 = vpop.permute.xlu0 %7699
      %7701 = vrot.lane.b32.xlu0 %v7660, 124
      %v7702 = vpop.permute.xlu0 %7701
      %7703 = vrot.lane.b32.xlu0 %v7661, 124
      %v7704 = vpop.permute.xlu0 %7703
      %7705 = vrot.lane.b32.xlu0 %v7662, 124
      %v7706 = vpop.permute.xlu0 %7705
      %7707 = vrot.lane.b32.xlu0 %v7663, 124
      %v7708 = vpop.permute.xlu0 %7707
      %7709 = vrot.lane.b32.xlu0 %v7664, 124
      %v7710 = vpop.permute.xlu0 %7709
      %7711 = vrot.lane.b32.xlu0 %v7665, 124
      %v7712 = vpop.permute.xlu0 %7711
      %7713 = vrot.lane.b32.xlu0 %v7666, 124
      %v7714 = vpop.permute.xlu0 %7713
      %7715 = vrot.lane.b32.xlu0 %v7667, 124
      %v7716 = vpop.permute.xlu0 %7715
      %7717 = vrot.lane.b32.xlu0 %v7668, 124
      %v7718 = vpop.permute.xlu0 %7717
      %7719 = vrot.lane.b32.xlu0 %v7669, 124
      %v7720 = vpop.permute.xlu0 %7719
      %7721 = vrot.lane.b32.xlu0 %v7670, 124
      %v7722 = vpop.permute.xlu0 %7721
      %7723 = vrot.lane.b32.xlu0 %v7671, 124
      %v7724 = vpop.permute.xlu0 %7723
      %7725 = vrot.lane.b32.xlu0 %v7672, 124
      %v7726 = vpop.permute.xlu0 %7725
      %7727 = vrot.lane.b32.xlu0 %v7673, 124
      %v7728 = vpop.permute.xlu0 %7727
      %7729 = vrot.lane.b32.xlu0 %v7674, 124
      %v7730 = vpop.permute.xlu0 %7729
      %7731 = vrot.lane.b32.xlu0 %v7675, 124
      %v7732 = vpop.permute.xlu0 %7731
      %7733 = vrot.lane.b32.xlu0 %v7676, 124
      %v7734 = vpop.permute.xlu0 %7733
      %7735 = vrot.lane.b32.xlu0 %v7677, 124
      %v7736 = vpop.permute.xlu0 %7735
      %7737 = vrot.lane.b32.xlu0 %v7678, 124
      %v7738 = vpop.permute.xlu0 %7737
      %7739 = vrot.lane.b32.xlu0 %v7679, 124
      %v7740 = vpop.permute.xlu0 %7739
      %7741 = vrot.lane.b32.xlu0 %v7680, 124
      %v7742 = vpop.permute.xlu0 %7741
      %7743 = vrot.lane.b32.xlu0 %v7681, 124
      %v7744 = vpop.permute.xlu0 %7743
      %7745 = vrot.lane.b32.xlu0 %v7682, 124
      %v7746 = vpop.permute.xlu0 %7745
      %v7748 = vsel %vm1082, %v7684, 0
      %v7751 = vsel %vm1082, %v7686, 0
      %v7754 = vsel %vm1082, %v7688, 0
      %v7757 = vsel %vm1082, %v7690, 0
      %v7760 = vsel %vm1082, %v7692, 0
      %v7763 = vsel %vm1082, %v7694, 0
      %v7766 = vsel %vm1082, %v7696, 0
      %v7769 = vsel %vm1082, %v7698, 0
      %v7772 = vsel %vm1082, %v7700, 0
      %v7775 = vsel %vm1082, %v7702, 0
      %v7778 = vsel %vm1082, %v7704, 0
      %v7781 = vsel %vm1082, %v7706, 0
      %v7784 = vsel %vm1082, %v7708, 0
      %v7787 = vsel %vm1082, %v7710, 0
      %v7790 = vsel %vm1082, %v7712, 0
      %v7793 = vsel %vm1082, %v7714, 0
      %v7796 = vsel %vm1082, %v7716, 0
      %v7799 = vsel %vm1082, %v7718, 0
      %v7802 = vsel %vm1082, %v7720, 0
      %v7805 = vsel %vm1082, %v7722, 0
      %v7808 = vsel %vm1082, %v7724, 0
      %v7811 = vsel %vm1082, %v7726, 0
      %v7814 = vsel %vm1082, %v7728, 0
      %v7817 = vsel %vm1082, %v7730, 0
      %v7820 = vsel %vm1082, %v7732, 0
      %v7823 = vsel %vm1082, %v7734, 0
      %v7826 = vsel %vm1082, %v7736, 0
      %v7829 = vsel %vm1082, %v7738, 0
      %v7832 = vsel %vm1082, %v7740, 0
      %v7835 = vsel %vm1082, %v7742, 0
      %v7838 = vsel %vm1082, %v7744, 0
      %v7841 = vsel %vm1082, %v7746, 0
      %vm7843 = vcmask 1041408
      %v7845 = vsel %vm7843, %v7522, 0
      %7847 = vmatpush.bf16.msra.mxu0 0
      %7848 = vmatpush.bf16.msra.mxu0 0
      %7849 = vmatpush.bf16.msra.mxu0 0
      %7850 = vmatpush.bf16.msra.mxu0 0
      %7851 = vmatpush.bf16.msra.mxu0 0
      %7852 = vmatpush.bf16.msra.mxu0 0
      %7853 = vmatpush.bf16.msra.mxu0 0
      %7854 = vmatpush.bf16.msra.mxu0 %v7845
      %7855 = vmatmul.bf16.gmra.mxu0 %v7748
      %v7856 = vpop.f32.mrf.mxu0
      %v7857 = vadd.f32 0.0, %v7856
      %v7858 = vpop.f32.mrf.mxu0
      %v7859 = vadd.f32 0.0, %v7858
      %7860 = vmatmul.bf16.gmra.mxu0 %v7751
      %v7861 = vpop.f32.mrf.mxu0
      %v7862 = vadd.f32 0.0, %v7861
      %v7863 = vpop.f32.mrf.mxu0
      %v7864 = vadd.f32 0.0, %v7863
      %7865 = vmatmul.bf16.gmra.mxu0 %v7754
      %v7866 = vpop.f32.mrf.mxu0
      %v7867 = vadd.f32 0.0, %v7866
      %v7868 = vpop.f32.mrf.mxu0
      %v7869 = vadd.f32 0.0, %v7868
      %7870 = vmatmul.bf16.gmra.mxu0 %v7757
      %v7871 = vpop.f32.mrf.mxu0
      %v7872 = vadd.f32 0.0, %v7871
      %v7873 = vpop.f32.mrf.mxu0
      %v7874 = vadd.f32 0.0, %v7873
      %7875 = vmatmul.bf16.gmra.mxu0 %v7760
      %v7876 = vpop.f32.mrf.mxu0
      %v7877 = vadd.f32 0.0, %v7876
      %v7878 = vpop.f32.mrf.mxu0
      %v7879 = vadd.f32 0.0, %v7878
      %7880 = vmatmul.bf16.gmra.mxu0 %v7763
      %v7881 = vpop.f32.mrf.mxu0
      %v7882 = vadd.f32 0.0, %v7881
      %v7883 = vpop.f32.mrf.mxu0
      %v7884 = vadd.f32 0.0, %v7883
      %7885 = vmatmul.bf16.gmra.mxu0 %v7766
      %v7886 = vpop.f32.mrf.mxu0
      %v7887 = vadd.f32 0.0, %v7886
      %v7888 = vpop.f32.mrf.mxu0
      %v7889 = vadd.f32 0.0, %v7888
      %7890 = vmatmul.bf16.gmra.mxu0 %v7769
      %v7891 = vpop.f32.mrf.mxu0
      %v7892 = vadd.f32 0.0, %v7891
      %v7893 = vpop.f32.mrf.mxu0
      %v7894 = vadd.f32 0.0, %v7893
      %7895 = vmatmul.bf16.gmra.mxu0 %v7772
      %v7896 = vpop.f32.mrf.mxu0
      %v7897 = vadd.f32 0.0, %v7896
      %v7898 = vpop.f32.mrf.mxu0
      %v7899 = vadd.f32 0.0, %v7898
      %7900 = vmatmul.bf16.gmra.mxu0 %v7775
      %v7901 = vpop.f32.mrf.mxu0
      %v7902 = vadd.f32 0.0, %v7901
      %v7903 = vpop.f32.mrf.mxu0
      %v7904 = vadd.f32 0.0, %v7903
      %7905 = vmatmul.bf16.gmra.mxu0 %v7778
      %v7906 = vpop.f32.mrf.mxu0
      %v7907 = vadd.f32 0.0, %v7906
      %v7908 = vpop.f32.mrf.mxu0
      %v7909 = vadd.f32 0.0, %v7908
      %7910 = vmatmul.bf16.gmra.mxu0 %v7781
      %v7911 = vpop.f32.mrf.mxu0
      %v7912 = vadd.f32 0.0, %v7911
      %v7913 = vpop.f32.mrf.mxu0
      %v7914 = vadd.f32 0.0, %v7913
      %7915 = vmatmul.bf16.gmra.mxu0 %v7784
      %v7916 = vpop.f32.mrf.mxu0
      %v7917 = vadd.f32 0.0, %v7916
      %v7918 = vpop.f32.mrf.mxu0
      %v7919 = vadd.f32 0.0, %v7918
      %7920 = vmatmul.bf16.gmra.mxu0 %v7787
      %v7921 = vpop.f32.mrf.mxu0
      %v7922 = vadd.f32 0.0, %v7921
      %v7923 = vpop.f32.mrf.mxu0
      %v7924 = vadd.f32 0.0, %v7923
      %7925 = vmatmul.bf16.gmra.mxu0 %v7790
      %v7926 = vpop.f32.mrf.mxu0
      %v7927 = vadd.f32 0.0, %v7926
      %v7928 = vpop.f32.mrf.mxu0
      %v7929 = vadd.f32 0.0, %v7928
      %7930 = vmatmul.bf16.gmra.mxu0 %v7793
      %v7931 = vpop.f32.mrf.mxu0
      %v7932 = vadd.f32 0.0, %v7931
      %v7933 = vpop.f32.mrf.mxu0
      %v7934 = vadd.f32 0.0, %v7933
      %7935 = vmatmul.bf16.gmra.mxu0 %v7796
      %v7936 = vpop.f32.mrf.mxu0
      %v7937 = vadd.f32 0.0, %v7936
      %v7938 = vpop.f32.mrf.mxu0
      %v7939 = vadd.f32 0.0, %v7938
      %7940 = vmatmul.bf16.gmra.mxu0 %v7799
      %v7941 = vpop.f32.mrf.mxu0
      %v7942 = vadd.f32 0.0, %v7941
      %v7943 = vpop.f32.mrf.mxu0
      %v7944 = vadd.f32 0.0, %v7943
      %7945 = vmatmul.bf16.gmra.mxu0 %v7802
      %v7946 = vpop.f32.mrf.mxu0
      %v7947 = vadd.f32 0.0, %v7946
      %v7948 = vpop.f32.mrf.mxu0
      %v7949 = vadd.f32 0.0, %v7948
      %7950 = vmatmul.bf16.gmra.mxu0 %v7805
      %v7951 = vpop.f32.mrf.mxu0
      %v7952 = vadd.f32 0.0, %v7951
      %v7953 = vpop.f32.mrf.mxu0
      %v7954 = vadd.f32 0.0, %v7953
      %7955 = vmatmul.bf16.gmra.mxu0 %v7808
      %v7956 = vpop.f32.mrf.mxu0
      %v7957 = vadd.f32 0.0, %v7956
      %v7958 = vpop.f32.mrf.mxu0
      %v7959 = vadd.f32 0.0, %v7958
      %7960 = vmatmul.bf16.gmra.mxu0 %v7811
      %v7961 = vpop.f32.mrf.mxu0
      %v7962 = vadd.f32 0.0, %v7961
      %v7963 = vpop.f32.mrf.mxu0
      %v7964 = vadd.f32 0.0, %v7963
      %7965 = vmatmul.bf16.gmra.mxu0 %v7814
      %v7966 = vpop.f32.mrf.mxu0
      %v7967 = vadd.f32 0.0, %v7966
      %v7968 = vpop.f32.mrf.mxu0
      %v7969 = vadd.f32 0.0, %v7968
      %7970 = vmatmul.bf16.gmra.mxu0 %v7817
      %v7971 = vpop.f32.mrf.mxu0
      %v7972 = vadd.f32 0.0, %v7971
      %v7973 = vpop.f32.mrf.mxu0
      %v7974 = vadd.f32 0.0, %v7973
      %7975 = vmatmul.bf16.gmra.mxu0 %v7820
      %v7976 = vpop.f32.mrf.mxu0
      %v7977 = vadd.f32 0.0, %v7976
      %v7978 = vpop.f32.mrf.mxu0
      %v7979 = vadd.f32 0.0, %v7978
      %7980 = vmatmul.bf16.gmra.mxu0 %v7823
      %v7981 = vpop.f32.mrf.mxu0
      %v7982 = vadd.f32 0.0, %v7981
      %v7983 = vpop.f32.mrf.mxu0
      %v7984 = vadd.f32 0.0, %v7983
      %7985 = vmatmul.bf16.gmra.mxu0 %v7826
      %v7986 = vpop.f32.mrf.mxu0
      %v7987 = vadd.f32 0.0, %v7986
      %v7988 = vpop.f32.mrf.mxu0
      %v7989 = vadd.f32 0.0, %v7988
      %7990 = vmatmul.bf16.gmra.mxu0 %v7829
      %v7991 = vpop.f32.mrf.mxu0
      %v7992 = vadd.f32 0.0, %v7991
      %v7993 = vpop.f32.mrf.mxu0
      %v7994 = vadd.f32 0.0, %v7993
      %7995 = vmatmul.bf16.gmra.mxu0 %v7832
      %v7996 = vpop.f32.mrf.mxu0
      %v7997 = vadd.f32 0.0, %v7996
      %v7998 = vpop.f32.mrf.mxu0
      %v7999 = vadd.f32 0.0, %v7998
      %8000 = vmatmul.bf16.gmra.mxu0 %v7835
      %v8001 = vpop.f32.mrf.mxu0
      %v8002 = vadd.f32 0.0, %v8001
      %v8003 = vpop.f32.mrf.mxu0
      %v8004 = vadd.f32 0.0, %v8003
      %8005 = vmatmul.bf16.gmra.mxu0 %v7838
      %v8006 = vpop.f32.mrf.mxu0
      %v8007 = vadd.f32 0.0, %v8006
      %v8008 = vpop.f32.mrf.mxu0
      %v8009 = vadd.f32 0.0, %v8008
      %8010 = vmatmul.bf16.gmra.mxu0 %v7841
      %v8011 = vpop.f32.mrf.mxu0
      %v8012 = vadd.f32 0.0, %v8011
      %v8013 = vpop.f32.mrf.mxu0
      %v8014 = vadd.f32 0.0, %v8013
      %8015 = vdwg.mxu0
      %v8016 = vld [vmem:[%s5] sm:$0x1]
      %v8018 = vperm.slane %v8016, 0
      %v8020 = vadd.f32 %v7394, %v8018
      %v8021 = vadd.f32 %v7395, %v8018
      %v8022 = vadd.f32 %v7396, %v8018
      %v8023 = vadd.f32 %v7397, %v8018
      %v8024 = vadd.f32 %v7398, %v8018
      %v8025 = vadd.f32 %v7399, %v8018
      %v8026 = vadd.f32 %v7400, %v8018
      %v8027 = vadd.f32 %v7401, %v8018
      %v8028 = vadd.f32 %v7402, %v8018
      %v8029 = vadd.f32 %v7403, %v8018
      %v8030 = vadd.f32 %v7404, %v8018
      %v8031 = vadd.f32 %v7405, %v8018
      %v8032 = vadd.f32 %v7406, %v8018
      %v8033 = vadd.f32 %v7407, %v8018
      %v8034 = vadd.f32 %v7408, %v8018
      %v8035 = vadd.f32 %v7409, %v8018
      %v8036 = vadd.f32 %v7410, %v8018
      %v8037 = vadd.f32 %v7411, %v8018
      %v8038 = vadd.f32 %v7412, %v8018
      %v8039 = vadd.f32 %v7413, %v8018
      %v8040 = vadd.f32 %v7414, %v8018
      %v8041 = vadd.f32 %v7415, %v8018
      %v8042 = vadd.f32 %v7416, %v8018
      %v8043 = vadd.f32 %v7417, %v8018
      %v8044 = vadd.f32 %v7418, %v8018
      %v8045 = vadd.f32 %v7419, %v8018
      %v8046 = vadd.f32 %v7420, %v8018
      %v8047 = vadd.f32 %v7421, %v8018
      %v8048 = vadd.f32 %v7422, %v8018
      %v8049 = vadd.f32 %v7423, %v8018
      %v8050 = vadd.f32 %v7424, %v8018
      %v8051 = vadd.f32 %v7425, %v8018
      %v8052 = vadd.f32 %v7426, %v8018
      %v8053 = vadd.f32 %v7427, %v8018
      %v8054 = vadd.f32 %v7428, %v8018
      %v8055 = vadd.f32 %v7429, %v8018
      %v8056 = vadd.f32 %v7430, %v8018
      %v8057 = vadd.f32 %v7431, %v8018
      %v8058 = vadd.f32 %v7432, %v8018
      %v8059 = vadd.f32 %v7433, %v8018
      %v8060 = vadd.f32 %v7434, %v8018
      %v8061 = vadd.f32 %v7435, %v8018
      %v8062 = vadd.f32 %v7436, %v8018
      %v8063 = vadd.f32 %v7437, %v8018
      %v8064 = vadd.f32 %v7438, %v8018
      %v8065 = vadd.f32 %v7439, %v8018
      %v8066 = vadd.f32 %v7440, %v8018
      %v8067 = vadd.f32 %v7441, %v8018
      %v8068 = vadd.f32 %v7442, %v8018
      %v8069 = vadd.f32 %v7443, %v8018
      %v8070 = vadd.f32 %v7444, %v8018
      %v8071 = vadd.f32 %v7445, %v8018
      %v8072 = vadd.f32 %v7446, %v8018
      %v8073 = vadd.f32 %v7447, %v8018
      %v8074 = vadd.f32 %v7448, %v8018
      %v8075 = vadd.f32 %v7449, %v8018
      %v8076 = vadd.f32 %v7450, %v8018
      %v8077 = vadd.f32 %v7451, %v8018
      %v8078 = vadd.f32 %v7452, %v8018
      %v8079 = vadd.f32 %v7453, %v8018
      %v8080 = vadd.f32 %v7454, %v8018
      %v8081 = vadd.f32 %v7455, %v8018
      %v8082 = vadd.f32 %v7456, %v8018
      %v8083 = vadd.f32 %v7457, %v8018
      %v8084 = vadd.f32 %v8020, %v7857
      %v8085 = vadd.f32 %v8021, %v7859
      %v8086 = vadd.f32 %v8022, %v7862
      %v8087 = vadd.f32 %v8023, %v7864
      %v8088 = vadd.f32 %v8024, %v7867
      %v8089 = vadd.f32 %v8025, %v7869
      %v8090 = vadd.f32 %v8026, %v7872
      %v8091 = vadd.f32 %v8027, %v7874
      %v8092 = vadd.f32 %v8028, %v7877
      %v8093 = vadd.f32 %v8029, %v7879
      %v8094 = vadd.f32 %v8030, %v7882
      %v8095 = vadd.f32 %v8031, %v7884
      %v8096 = vadd.f32 %v8032, %v7887
      %v8097 = vadd.f32 %v8033, %v7889
      %v8098 = vadd.f32 %v8034, %v7892
      %v8099 = vadd.f32 %v8035, %v7894
      %v8100 = vadd.f32 %v8036, %v7897
      %v8101 = vadd.f32 %v8037, %v7899
      %v8102 = vadd.f32 %v8038, %v7902
      %v8103 = vadd.f32 %v8039, %v7904
      %v8104 = vadd.f32 %v8040, %v7907
      %v8105 = vadd.f32 %v8041, %v7909
      %v8106 = vadd.f32 %v8042, %v7912
      %v8107 = vadd.f32 %v8043, %v7914
      %v8108 = vadd.f32 %v8044, %v7917
      %v8109 = vadd.f32 %v8045, %v7919
      %v8110 = vadd.f32 %v8046, %v7922
      %v8111 = vadd.f32 %v8047, %v7924
      %v8112 = vadd.f32 %v8048, %v7927
      %v8113 = vadd.f32 %v8049, %v7929
      %v8114 = vadd.f32 %v8050, %v7932
      %v8115 = vadd.f32 %v8051, %v7934
      %v8116 = vadd.f32 %v8052, %v7937
      %v8117 = vadd.f32 %v8053, %v7939
      %v8118 = vadd.f32 %v8054, %v7942
      %v8119 = vadd.f32 %v8055, %v7944
      %v8120 = vadd.f32 %v8056, %v7947
      %v8121 = vadd.f32 %v8057, %v7949
      %v8122 = vadd.f32 %v8058, %v7952
      %v8123 = vadd.f32 %v8059, %v7954
      %v8124 = vadd.f32 %v8060, %v7957
      %v8125 = vadd.f32 %v8061, %v7959
      %v8126 = vadd.f32 %v8062, %v7962
      %v8127 = vadd.f32 %v8063, %v7964
      %v8128 = vadd.f32 %v8064, %v7967
      %v8129 = vadd.f32 %v8065, %v7969
      %v8130 = vadd.f32 %v8066, %v7972
      %v8131 = vadd.f32 %v8067, %v7974
      %v8132 = vadd.f32 %v8068, %v7977
      %v8133 = vadd.f32 %v8069, %v7979
      %v8134 = vadd.f32 %v8070, %v7982
      %v8135 = vadd.f32 %v8071, %v7984
      %v8136 = vadd.f32 %v8072, %v7987
      %v8137 = vadd.f32 %v8073, %v7989
      %v8138 = vadd.f32 %v8074, %v7992
      %v8139 = vadd.f32 %v8075, %v7994
      %v8140 = vadd.f32 %v8076, %v7997
      %v8141 = vadd.f32 %v8077, %v7999
      %v8142 = vadd.f32 %v8078, %v8002
      %v8143 = vadd.f32 %v8079, %v8004
      %v8144 = vadd.f32 %v8080, %v8007
      %v8145 = vadd.f32 %v8081, %v8009
      %v8146 = vadd.f32 %v8082, %v8012
      %v8147 = vadd.f32 %v8083, %v8014
      %v8148 = vld [vmem:[%s6] sm:$0x1]
      %v8150 = vperm.slane %v8148, 0
      %v8152 = vadd.f32 %v8084, %v8150
      %v8153 = vadd.f32 %v8085, %v8150
      %v8154 = vadd.f32 %v8086, %v8150
      %v8155 = vadd.f32 %v8087, %v8150
      %v8156 = vadd.f32 %v8088, %v8150
      %v8157 = vadd.f32 %v8089, %v8150
      %v8158 = vadd.f32 %v8090, %v8150
      %v8159 = vadd.f32 %v8091, %v8150
      %v8160 = vadd.f32 %v8092, %v8150
      %v8161 = vadd.f32 %v8093, %v8150
      %v8162 = vadd.f32 %v8094, %v8150
      %v8163 = vadd.f32 %v8095, %v8150
      %v8164 = vadd.f32 %v8096, %v8150
      %v8165 = vadd.f32 %v8097, %v8150
      %v8166 = vadd.f32 %v8098, %v8150
      %v8167 = vadd.f32 %v8099, %v8150
      %v8168 = vadd.f32 %v8100, %v8150
      %v8169 = vadd.f32 %v8101, %v8150
      %v8170 = vadd.f32 %v8102, %v8150
      %v8171 = vadd.f32 %v8103, %v8150
      %v8172 = vadd.f32 %v8104, %v8150
      %v8173 = vadd.f32 %v8105, %v8150
      %v8174 = vadd.f32 %v8106, %v8150
      %v8175 = vadd.f32 %v8107, %v8150
      %v8176 = vadd.f32 %v8108, %v8150
      %v8177 = vadd.f32 %v8109, %v8150
      %v8178 = vadd.f32 %v8110, %v8150
      %v8179 = vadd.f32 %v8111, %v8150
      %v8180 = vadd.f32 %v8112, %v8150
      %v8181 = vadd.f32 %v8113, %v8150
      %v8182 = vadd.f32 %v8114, %v8150
      %v8183 = vadd.f32 %v8115, %v8150
      %v8184 = vadd.f32 %v8116, %v8150
      %v8185 = vadd.f32 %v8117, %v8150
      %v8186 = vadd.f32 %v8118, %v8150
      %v8187 = vadd.f32 %v8119, %v8150
      %v8188 = vadd.f32 %v8120, %v8150
      %v8189 = vadd.f32 %v8121, %v8150
      %v8190 = vadd.f32 %v8122, %v8150
      %v8191 = vadd.f32 %v8123, %v8150
      %v8192 = vadd.f32 %v8124, %v8150
      %v8193 = vadd.f32 %v8125, %v8150
      %v8194 = vadd.f32 %v8126, %v8150
      %v8195 = vadd.f32 %v8127, %v8150
      %v8196 = vadd.f32 %v8128, %v8150
      %v8197 = vadd.f32 %v8129, %v8150
      %v8198 = vadd.f32 %v8130, %v8150
      %v8199 = vadd.f32 %v8131, %v8150
      %v8200 = vadd.f32 %v8132, %v8150
      %v8201 = vadd.f32 %v8133, %v8150
      %v8202 = vadd.f32 %v8134, %v8150
      %v8203 = vadd.f32 %v8135, %v8150
      %v8204 = vadd.f32 %v8136, %v8150
      %v8205 = vadd.f32 %v8137, %v8150
      %v8206 = vadd.f32 %v8138, %v8150
      %v8207 = vadd.f32 %v8139, %v8150
      %v8208 = vadd.f32 %v8140, %v8150
      %v8209 = vadd.f32 %v8141, %v8150
      %v8210 = vadd.f32 %v8142, %v8150
      %v8211 = vadd.f32 %v8143, %v8150
      %v8212 = vadd.f32 %v8144, %v8150
      %v8213 = vadd.f32 %v8145, %v8150
      %v8214 = vadd.f32 %v8146, %v8150
      %v8215 = vadd.f32 %v8147, %v8150
      %v8216 = vmax.f32 %v8152, 0.0
      %v8217 = vmax.f32 %v8153, 0.0
      %v8218 = vmax.f32 %v8154, 0.0
      %v8219 = vmax.f32 %v8155, 0.0
      %v8220 = vmax.f32 %v8156, 0.0
      %v8221 = vmax.f32 %v8157, 0.0
      %v8222 = vmax.f32 %v8158, 0.0
      %v8223 = vmax.f32 %v8159, 0.0
      %v8224 = vmax.f32 %v8160, 0.0
      %v8225 = vmax.f32 %v8161, 0.0
      %v8226 = vmax.f32 %v8162, 0.0
      %v8227 = vmax.f32 %v8163, 0.0
      %v8228 = vmax.f32 %v8164, 0.0
      %v8229 = vmax.f32 %v8165, 0.0
      %v8230 = vmax.f32 %v8166, 0.0
      %v8231 = vmax.f32 %v8167, 0.0
      %v8232 = vmax.f32 %v8168, 0.0
      %v8233 = vmax.f32 %v8169, 0.0
      %v8234 = vmax.f32 %v8170, 0.0
      %v8235 = vmax.f32 %v8171, 0.0
      %v8236 = vmax.f32 %v8172, 0.0
      %v8237 = vmax.f32 %v8173, 0.0
      %v8238 = vmax.f32 %v8174, 0.0
      %v8239 = vmax.f32 %v8175, 0.0
      %v8240 = vmax.f32 %v8176, 0.0
      %v8241 = vmax.f32 %v8177, 0.0
      %v8242 = vmax.f32 %v8178, 0.0
      %v8243 = vmax.f32 %v8179, 0.0
      %v8244 = vmax.f32 %v8180, 0.0
      %v8245 = vmax.f32 %v8181, 0.0
      %v8246 = vmax.f32 %v8182, 0.0
      %v8247 = vmax.f32 %v8183, 0.0
      %v8248 = vmax.f32 %v8184, 0.0
      %v8249 = vmax.f32 %v8185, 0.0
      %v8250 = vmax.f32 %v8186, 0.0
      %v8251 = vmax.f32 %v8187, 0.0
      %v8252 = vmax.f32 %v8188, 0.0
      %v8253 = vmax.f32 %v8189, 0.0
      %v8254 = vmax.f32 %v8190, 0.0
      %v8255 = vmax.f32 %v8191, 0.0
      %v8256 = vmax.f32 %v8192, 0.0
      %v8257 = vmax.f32 %v8193, 0.0
      %v8258 = vmax.f32 %v8194, 0.0
      %v8259 = vmax.f32 %v8195, 0.0
      %v8260 = vmax.f32 %v8196, 0.0
      %v8261 = vmax.f32 %v8197, 0.0
      %v8262 = vmax.f32 %v8198, 0.0
      %v8263 = vmax.f32 %v8199, 0.0
      %v8264 = vmax.f32 %v8200, 0.0
      %v8265 = vmax.f32 %v8201, 0.0
      %v8266 = vmax.f32 %v8202, 0.0
      %v8267 = vmax.f32 %v8203, 0.0
      %v8268 = vmax.f32 %v8204, 0.0
      %v8269 = vmax.f32 %v8205, 0.0
      %v8270 = vmax.f32 %v8206, 0.0
      %v8271 = vmax.f32 %v8207, 0.0
      %v8272 = vmax.f32 %v8208, 0.0
      %v8273 = vmax.f32 %v8209, 0.0
      %v8274 = vmax.f32 %v8210, 0.0
      %v8275 = vmax.f32 %v8211, 0.0
      %v8276 = vmax.f32 %v8212, 0.0
      %v8277 = vmax.f32 %v8213, 0.0
      %v8278 = vmax.f32 %v8214, 0.0
      %v8279 = vmax.f32 %v8215, 0.0
      %8280 = vst.msk [vmem:[%s292] sm:$0xff] %vm1155, %v8216
      %8281 = vst.msk [vmem:[%s292 + $0x8] sm:$0xff] %vm1155, %v8217
      %8282 = vst.msk [vmem:[%s292 + $0x10] sm:$0xff] %vm1155, %v8218
      %8283 = vst.msk [vmem:[%s292 + $0x18] sm:$0xff] %vm1155, %v8219
      %8284 = vst.msk [vmem:[%s292 + $0x20] sm:$0xff] %vm1155, %v8220
      %8285 = vst.msk [vmem:[%s292 + $0x28] sm:$0xff] %vm1155, %v8221
      %8286 = vst.msk [vmem:[%s292 + $0x30] sm:$0xff] %vm1155, %v8222
      %8287 = vst.msk [vmem:[%s292 + $0x38] sm:$0xff] %vm1155, %v8223
      %8288 = vst.msk [vmem:[%s292 + $0x40] sm:$0xff] %vm1155, %v8224
      %8289 = vst.msk [vmem:[%s292 + $0x48] sm:$0xff] %vm1155, %v8225
      %8290 = vst.msk [vmem:[%s292 + $0x50] sm:$0xff] %vm1155, %v8226
      %8291 = vst.msk [vmem:[%s292 + $0x58] sm:$0xff] %vm1155, %v8227
      %8292 = vst.msk [vmem:[%s292 + $0x60] sm:$0xff] %vm1155, %v8228
      %8293 = vst.msk [vmem:[%s292 + $0x68] sm:$0xff] %vm1155, %v8229
      %8294 = vst.msk [vmem:[%s292 + $0x70] sm:$0xff] %vm1155, %v8230
      %8295 = vst.msk [vmem:[%s292 + $0x78] sm:$0xff] %vm1155, %v8231
      %8296 = vst.msk [vmem:[%s292 + $0x80] sm:$0xff] %vm1155, %v8232
      %8297 = vst.msk [vmem:[%s292 + $0x88] sm:$0xff] %vm1155, %v8233
      %8298 = vst.msk [vmem:[%s292 + $0x90] sm:$0xff] %vm1155, %v8234
      %8299 = vst.msk [vmem:[%s292 + $0x98] sm:$0xff] %vm1155, %v8235
      %8300 = vst.msk [vmem:[%s292 + $0xa0] sm:$0xff] %vm1155, %v8236
      %8301 = vst.msk [vmem:[%s292 + $0xa8] sm:$0xff] %vm1155, %v8237
      %8302 = vst.msk [vmem:[%s292 + $0xb0] sm:$0xff] %vm1155, %v8238
      %8303 = vst.msk [vmem:[%s292 + $0xb8] sm:$0xff] %vm1155, %v8239
      %8304 = vst.msk [vmem:[%s292 + $0xc0] sm:$0xff] %vm1155, %v8240
      %8305 = vst.msk [vmem:[%s292 + $0xc8] sm:$0xff] %vm1155, %v8241
      %8306 = vst.msk [vmem:[%s292 + $0xd0] sm:$0xff] %vm1155, %v8242
      %8307 = vst.msk [vmem:[%s292 + $0xd8] sm:$0xff] %vm1155, %v8243
      %8308 = vst.msk [vmem:[%s292 + $0xe0] sm:$0xff] %vm1155, %v8244
      %8309 = vst.msk [vmem:[%s292 + $0xe8] sm:$0xff] %vm1155, %v8245
      %8310 = vst.msk [vmem:[%s292 + $0xf0] sm:$0xff] %vm1155, %v8246
      %8311 = vst.msk [vmem:[%s292 + $0xf8] sm:$0xff] %vm1155, %v8247
      %8312 = vst.msk [vmem:[%s292 + $0x100] sm:$0xff] %vm1155, %v8248
      %8313 = vst.msk [vmem:[%s292 + $0x108] sm:$0xff] %vm1155, %v8249
      %8314 = vst.msk [vmem:[%s292 + $0x110] sm:$0xff] %vm1155, %v8250
      %8315 = vst.msk [vmem:[%s292 + $0x118] sm:$0xff] %vm1155, %v8251
      %8316 = vst.msk [vmem:[%s292 + $0x120] sm:$0xff] %vm1155, %v8252
      %8317 = vst.msk [vmem:[%s292 + $0x128] sm:$0xff] %vm1155, %v8253
      %8318 = vst.msk [vmem:[%s292 + $0x130] sm:$0xff] %vm1155, %v8254
      %8319 = vst.msk [vmem:[%s292 + $0x138] sm:$0xff] %vm1155, %v8255
      %8320 = vst.msk [vmem:[%s292 + $0x140] sm:$0xff] %vm1155, %v8256
      %8321 = vst.msk [vmem:[%s292 + $0x148] sm:$0xff] %vm1155, %v8257
      %8322 = vst.msk [vmem:[%s292 + $0x150] sm:$0xff] %vm1155, %v8258
      %8323 = vst.msk [vmem:[%s292 + $0x158] sm:$0xff] %vm1155, %v8259
      %8324 = vst.msk [vmem:[%s292 + $0x160] sm:$0xff] %vm1155, %v8260
      %8325 = vst.msk [vmem:[%s292 + $0x168] sm:$0xff] %vm1155, %v8261
      %8326 = vst.msk [vmem:[%s292 + $0x170] sm:$0xff] %vm1155, %v8262
      %8327 = vst.msk [vmem:[%s292 + $0x178] sm:$0xff] %vm1155, %v8263
      %8328 = vst.msk [vmem:[%s292 + $0x180] sm:$0xff] %vm1155, %v8264
      %8329 = vst.msk [vmem:[%s292 + $0x188] sm:$0xff] %vm1155, %v8265
      %8330 = vst.msk [vmem:[%s292 + $0x190] sm:$0xff] %vm1155, %v8266
      %8331 = vst.msk [vmem:[%s292 + $0x198] sm:$0xff] %vm1155, %v8267
      %8332 = vst.msk [vmem:[%s292 + $0x1a0] sm:$0xff] %vm1155, %v8268
      %8333 = vst.msk [vmem:[%s292 + $0x1a8] sm:$0xff] %vm1155, %v8269
      %8334 = vst.msk [vmem:[%s292 + $0x1b0] sm:$0xff] %vm1155, %v8270
      %8335 = vst.msk [vmem:[%s292 + $0x1b8] sm:$0xff] %vm1155, %v8271
      %8336 = vst.msk [vmem:[%s292 + $0x1c0] sm:$0xff] %vm1155, %v8272
      %8337 = vst.msk [vmem:[%s292 + $0x1c8] sm:$0xff] %vm1155, %v8273
      %8338 = vst.msk [vmem:[%s292 + $0x1d0] sm:$0xff] %vm1155, %v8274
      %8339 = vst.msk [vmem:[%s292 + $0x1d8] sm:$0xff] %vm1155, %v8275
      %8340 = vst.msk [vmem:[%s292 + $0x1e0] sm:$0xff] %vm1155, %v8276
      %8341 = vst.msk [vmem:[%s292 + $0x1e8] sm:$0xff] %vm1155, %v8277
      %8342 = vst.msk [vmem:[%s292 + $0x1f0] sm:$0xff] %vm1155, %v8278
      %8343 = vst.msk [vmem:[%s292 + $0x1f8] sm:$0xff] %vm1155, %v8279
      %p8344 = scmp.lt.s32.totalorder %s18, 1
      %s8345 = scalar_select %p8344, %s18, 1
      %s8346 = smul.addr %s8345, 64
      %s8347 = smul.addr %s8346, 8
      %s8348 = scalar_lea.vmem %s7, %s8347
      // Predicated region
      $region49: #{resnet_block_forward.1} parent=47 // pred_check
        %p8349 = pneg %p193
      $region50: #{resnet_block_forward.1} parent=47 // pred_check_branch
        %8351 = sbr.rel (%p8349) target = $region52
      $region51: #{resnet_block_forward.1} parent=47 // pred_region
        _
      $region52: #{resnet_block_forward.1} parent=47 // pred_fallthru
        _
    $region48: #{resnet_block_forward.1} parent=5 // pred_fallthru
      _
    %p8352 = scmp.le.s32.totalorder 2, %s13
    // Predicated region
    $region53: #{resnet_block_forward.1} parent=5 // pred_check
      %p8353 = pneg %p8352
    $region54: #{resnet_block_forward.1} parent=5 // pred_check_branch
      %8355 = sbr.rel (%p8353) target = $region56
    $region55: #{resnet_block_forward.1} parent=5 // pred_region
      %s8356 = ssub.s32 %s13, 2
      // Predicated region
      $region57: #{resnet_block_forward.1} parent=55 // pred_check
        %p8357 = pneg %p199
      $region58: #{resnet_block_forward.1} parent=55 // pred_check_branch
        %8359 = sbr.rel (%p8357) target = $region60
      $region59: #{resnet_block_forward.1} parent=55 // pred_region
        %p8360 = scmp.lt.s32.totalorder %s19, 1
        %s8361 = scalar_select %p8360, %s19, 1
        %s8362 = smul.addr %s8361, 64
        %s8363 = smul.addr %s8362, 8
        %s8364 = scalar_lea.vmem %s7, %s8363
      $region60: #{resnet_block_forward.1} parent=55 // pred_fallthru
        _
    $region56: #{resnet_block_forward.1} parent=5 // pred_fallthru
      _
  $region6: #{resnet_block_forward.1} parent=0 // loop_footer
    %s17 = sadd.s32 1, %s13
  $region7: #{resnet_block_forward.1} parent=0 // loop_footer_branch
    %12 = sbr.rel target = $region3
  $region8: #{resnet_block_forward.1} parent=0 // loop_exit
    _

</llo_original>
